<compile_context>
chip_gen: v7x
topology: tpu7x:2x2x1
jax: 0.10.0
libtpu: 0.0.40
codegen_flags: <defaults>
</compile_context>

<pallas_src>
import functools

import jax
import jax.numpy as jnp
from jax import lax
from jax.experimental import pallas as pl
from jax.experimental.pallas import tpu as pltpu


# ----------------------------- Pallas kernel ------------------------------ #

def gru_stack_kernel(x_ref,
                     wih0_ref, gib0_ref, whh0_ref, ghb0_ref,
                     wcat1_ref, bcat1_ref,
                     wcat2_ref, bcat2_ref,
                     wlin_ref, blin_ref,
                     out_ref,
                     gi0_scr, h2_scr,
                     *, S, B, GP):
    """3-layer GRU stack + Linear, wavefront-pipelined across layers.

    Layout: every per-gate block is padded to GP (=128) lanes, so gate slices are whole-vreg
    slices.  Hidden state h is (B, GP) with the real H dims in columns [0:H] and exact zeros
    elsewhere (guaranteed by zero-padded weights/biases, preserved by the cell math).
    """
    G3 = 3 * GP
    G4 = 4 * GP

    # Hoisted: layer-0 input-to-hidden projection for ALL timesteps in one MXU op.
    gi0_scr[...] = (
        jnp.dot(x_ref[...], wih0_ref[...], preferred_element_type=jnp.float32)
        + gib0_ref[...]
    )

    # Hoist all bias broadcasts out of the recurrent chain.
    ghb0 = jnp.broadcast_to(ghb0_ref[...], (B, G3))
    bcat1 = jnp.broadcast_to(bcat1_ref[...], (B, G4))
    bcat2 = jnp.broadcast_to(bcat2_ref[...], (B, G4))

    def fused_cell(h_in, h_prev, wcat_ref, bcat):
        # Single fused matmul: columns = [r | z | n_input_part | n_hidden_part].
        #   r = sigmoid(g_r)                       (b_ir + b_hr folded into bias)
        #   z = sigmoid(g_z)                       (b_iz + b_hz folded into bias)
        #   n = tanh(g_ni + r * g_nh)              (b_in in g_ni, b_hn in g_nh)
        #   h = (1 - z) * n + z * h_prev
        g = (jnp.dot(jnp.concatenate([h_in, h_prev], axis=1), wcat_ref[...],
                     preferred_element_type=jnp.float32) + bcat)
        r = jax.nn.sigmoid(g[:, 0:GP])
        z = jax.nn.sigmoid(g[:, GP:2 * GP])
        n = jnp.tanh(g[:, 2 * GP:3 * GP] + r * g[:, 3 * GP:4 * GP])
        return (1.0 - z) * n + z * h_prev

    def l0_cell(gi, gh, h_prev):
        # Layer 0 keeps split gi/gh (gi is the precomputed input projection).
        r = jax.nn.sigmoid(gi[:, 0:GP] + gh[:, 0:GP])
        z = jax.nn.sigmoid(gi[:, GP:2 * GP] + gh[:, GP:2 * GP])
        n = jnp.tanh(gi[:, 2 * GP:3 * GP] + r * gh[:, 2 * GP:3 * GP])
        return (1.0 - z) * n + z * h_prev

    zero_h = jnp.zeros((B, GP), jnp.float32)
    h0, h1, h2 = zero_h, zero_h, zero_h

    # Wavefront: at wave step w, layer2 advances to time w-2, layer1 to w-1, layer0 to w.
    # Deepest layer first so h1 / h0 still hold the previous wave's value at the time index
    # the consumer needs.  Fully unrolled (S static, small) for LLO scheduling visibility.
    for w in range(S + 2):
        t2 = w - 2
        if 0 <= t2 < S:
            h2 = fused_cell(h1, h2, wcat2_ref, bcat2)
            h2_scr[t2 * B:(t2 + 1) * B, :] = h2

        t1 = w - 1
        if 0 <= t1 < S:
            h1 = fused_cell(h0, h1, wcat1_ref, bcat1)

        if w < S:
            gi0 = gi0_scr[w * B:(w + 1) * B, :]
            gh0 = jnp.dot(h0, whh0_ref[...], preferred_element_type=jnp.float32) + ghb0
            h0 = l0_cell(gi0, gh0, h0)

    # Final Linear over all timesteps as one batched matmul; output is lane-dense (GP->VP=128).
    out_ref[...] = (
        jnp.dot(h2_scr[...], wlin_ref[...], preferred_element_type=jnp.float32)
        + blin_ref[...]
    )


# ----------------------- weight re-layout (plain JAX) ---------------------- #

def _pad_gates(w, H, GP):
    """(in, 3H) -> (in, 3*GP); gate g goes to columns [g*GP : g*GP + H], zeros elsewhere."""
    in_dim = w.shape[0]
    out = jnp.zeros((in_dim, 3 * GP), jnp.float32)
    for g in range(3):
        out = out.at[:, g * GP:g * GP + H].set(w[:, g * H:(g + 1) * H])
    return out


def _fold_biases_l0(bih, bhh, H, GP):
    """Layer-0 biases: (gi_bias, gh_bias), each (1, 3*GP).

    gi_bias = [b_ir + b_hr | b_iz + b_hz | b_in]   (added to the precomputed input projection)
    gh_bias = [0           | 0           | b_hn]   (added to the hidden projection)
    """
    gi_vec = jnp.concatenate(
        [bih[:, 0:H] + bhh[:, 0:H],
         bih[:, H:2 * H] + bhh[:, H:2 * H],
         bih[:, 2 * H:3 * H]], axis=1)
    gh_vec = jnp.concatenate(
        [jnp.zeros((1, 2 * H), jnp.float32), bhh[:, 2 * H:3 * H]], axis=1)
    return _pad_gates(gi_vec, H, GP), _pad_gates(gh_vec, H, GP)


def _fused_layer(wih, whh, bih, bhh, H, GP):
    """Fused weight/bias for layers whose input is a hidden state.

    Returns W_cat (2*GP, 4*GP) and b_cat (1, 4*GP) with output blocks
    [r | z | n_from_input | n_from_hidden].  Input rows live in [0:H] of the first GP-row block,
    previous-hidden rows live in [GP:GP+H].  Everything else is exactly zero.
    """
    wcat = jnp.zeros((2 * GP, 4 * GP), jnp.float32)
    # r gate
    wcat = wcat.at[:H, 0:H].set(wih[:, 0:H])
    wcat = wcat.at[GP:GP + H, 0:H].set(whh[:, 0:H])
    # z gate
    wcat = wcat.at[:H, GP:GP + H].set(wih[:, H:2 * H])
    wcat = wcat.at[GP:GP + H, GP:GP + H].set(whh[:, H:2 * H])
    # n gate, input part
    wcat = wcat.at[:H, 2 * GP:2 * GP + H].set(wih[:, 2 * H:3 * H])
    # n gate, hidden part
    wcat = wcat.at[GP:GP + H, 3 * GP:3 * GP + H].set(whh[:, 2 * H:3 * H])

    bcat = jnp.zeros((1, 4 * GP), jnp.float32)
    bcat = bcat.at[:, 0:H].set(bih[:, 0:H] + bhh[:, 0:H])
    bcat = bcat.at[:, GP:GP + H].set(bih[:, H:2 * H] + bhh[:, H:2 * H])
    bcat = bcat.at[:, 2 * GP:2 * GP + H].set(bih[:, 2 * H:3 * H])
    bcat = bcat.at[:, 3 * GP:3 * GP + H].set(bhh[:, 2 * H:3 * H])
    return wcat, bcat


def _pad_rows(w, rows):
    """Zero-pad the first dim to `rows`."""
    return jnp.zeros((rows, w.shape[1]), jnp.float32).at[:w.shape[0], :].set(w)


# ------------------------------ JAX wrapper ------------------------------- #

def hypernym_hyponym_gru_forward(hyponym, params):
    # Embedding lookup is glue (small gather) done in plain JAX.
    emb = params["emb"][hyponym].astype(jnp.float32)          # (S, B, E)
    S, B, E = emb.shape
    H = params["whh0"].shape[0]
    V = params["wlin"].shape[1]

    GP = ((H + 127) // 128) * 128                              # per-gate lane block
    VP = ((V + 127) // 128) * 128                              # padded output lanes
    B_pad = max(8, ((B + 7) // 8) * 8)                         # f32 sublane height

    # Pad batch to sublane height and flatten time into the sublane (M) dimension.
    emb_p = jnp.zeros((S, B_pad, E), jnp.float32).at[:, :B, :].set(emb)
    x_flat = emb_p.reshape(S * B_pad, E)

    # Layer 0: separate (precomputable) input projection + hidden projection.
    wih0_p = _pad_gates(params["wih0"], H, GP)                 # (E, 3*GP)
    whh0_p = _pad_rows(_pad_gates(params["whh0"], H, GP), GP)  # (GP, 3*GP)
    gib0_p, ghb0_p = _fold_biases_l0(params["bih0"], params["bhh0"], H, GP)

    # Layers 1 & 2: fused [input | hidden] -> [r | z | n_i | n_h] weights.
    wcat1_p, bcat1_p = _fused_layer(params["wih1"], params["whh1"],
                                    params["bih1"], params["bhh1"], H, GP)
    wcat2_p, bcat2_p = _fused_layer(params["wih2"], params["whh2"],
                                    params["bih2"], params["bhh2"], H, GP)

    wlin_p = jnp.zeros((GP, VP), jnp.float32).at[:H, :V].set(params["wlin"])
    blin_p = jnp.zeros((1, VP), jnp.float32).at[:, :V].set(params["blin"])

    kernel = functools.partial(gru_stack_kernel, S=S, B=B_pad, GP=GP)
    vmem_spec = pl.BlockSpec(memory_space=pltpu.MemorySpace.VMEM)

    args = [x_flat,
            wih0_p, gib0_p, whh0_p, ghb0_p,
            wcat1_p, bcat1_p,
            wcat2_p, bcat2_p,
            wlin_p, blin_p]

    out = pl.pallas_call(
        kernel,
        out_shape=jax.ShapeDtypeStruct((S * B_pad, VP), jnp.float32),
        in_specs=[vmem_spec for _ in args],
        out_specs=vmem_spec,
        scratch_shapes=[pltpu.VMEM((S * B_pad, 3 * GP), jnp.float32),   # precomputed gi0
                        pltpu.VMEM((S * B_pad, GP), jnp.float32)],      # layer-2 hiddens
    )(*args)

    # Strip the batch / lane padding.
    return out.reshape(S, B_pad, VP)[:, :B, :V]


# ----------------------- deterministic parameter init --------------------- #

def init_params(key, num_hyponyms, num_hypernyms, embedding_dim, hidden_dim):
    ks = list(jax.random.split(key, 16))
    k = 1.0 / jnp.sqrt(hidden_dim)

    def u(key, shape, bound):
        return jax.random.uniform(key, shape, jnp.float32, -bound, bound)

    H, E, V = hidden_dim, embedding_dim, num_hypernyms
    params = {
        # nn.Embedding: N(0, 1)
        "emb": jax.random.normal(ks[0], (num_hyponyms, E), jnp.float32),
        # GRU weights stored pre-transposed: x @ W, shapes (in, 3H); biases (1, 3H); gate order [r,z,n]
        "wih0": u(ks[1], (E, 3 * H), k), "whh0": u(ks[2], (H, 3 * H), k),
        "bih0": u(ks[3], (1, 3 * H), k), "bhh0": u(ks[4], (1, 3 * H), k),
        "wih1": u(ks[5], (H, 3 * H), k), "whh1": u(ks[6], (H, 3 * H), k),
        "bih1": u(ks[7], (1, 3 * H), k), "bhh1": u(ks[8], (1, 3 * H), k),
        "wih2": u(ks[9], (H, 3 * H), k), "whh2": u(ks[10], (H, 3 * H), k),
        "bih2": u(ks[11], (1, 3 * H), k), "bhh2": u(ks[12], (1, 3 * H), k),
        # nn.Linear: stored as (H, V), bias (1, V)
        "wlin": u(ks[13], (H, V), k), "blin": u(ks[14], (1, V), k),
    }
    return params


# ------------------------------ pure-JAX ref ------------------------------ #

def _ref_gru_layer(x, wih, whh, bih, bhh):
    S, B, _ = x.shape
    H = whh.shape[0]

    def step(h, x_t):
        gi = x_t @ wih + bih
        gh = h @ whh + bhh
        r = jax.nn.sigmoid(gi[:, :H] + gh[:, :H])
        z = jax.nn.sigmoid(gi[:, H:2 * H] + gh[:, H:2 * H])
        n = jnp.tanh(gi[:, 2 * H:] + r * gh[:, 2 * H:])
        h_new = (1.0 - z) * n + z * h
        return h_new, h_new

    _, hs = lax.scan(step, jnp.zeros((B, H), jnp.float32), x)
    return hs


def reference_forward(hyponym, params):
    x = params["emb"][hyponym].astype(jnp.float32)
    h0 = _ref_gru_layer(x, params["wih0"], params["whh0"], params["bih0"], params["bhh0"])
    h1 = _ref_gru_layer(h0, params["wih1"], params["whh1"], params["bih1"], params["bhh1"])
    h2 = _ref_gru_layer(h1, params["wih2"], params["whh2"], params["bih2"], params["bhh2"])
    return h2 @ params["wlin"] + params["blin"]


# --------------------------------- main ----------------------------------- #

if __name__ == "__main__":
    num_hyponyms, num_hypernyms = 64, 16
    embedding_dim, hidden_dim = 32, 32
    seq_len, batch = 8, 4

    key = jax.random.PRNGKey(0)
    pkey, ikey = jax.random.split(key)
    params = init_params(pkey, num_hyponyms, num_hypernyms, embedding_dim, hidden_dim)

    hyponym = jax.random.randint(ikey, (seq_len, batch), 0, num_hyponyms, dtype=jnp.int32)

    out = hypernym_hyponym_gru_forward(hyponym, params)
    out = jax.block_until_ready(out)

    ref = jax.block_until_ready(reference_forward(hyponym, params))
    assert out.shape == (seq_len, batch, num_hypernyms)
    assert jnp.allclose(out, ref, rtol=1e-2, atol=1e-2)

    print("KERNEL_OK")
</pallas_src>

<mosaic_0001>
module attributes {stable_mosaic.version = 11 : i64} {
  func.func @gru_stack_kernel(%arg0: memref<64x32xf32, #tpu.memory_space<vmem>>, %arg1: memref<32x384xf32, #tpu.memory_space<vmem>>, %arg2: memref<1x384xf32, #tpu.memory_space<vmem>>, %arg3: memref<128x384xf32, #tpu.memory_space<vmem>>, %arg4: memref<1x384xf32, #tpu.memory_space<vmem>>, %arg5: memref<256x512xf32, #tpu.memory_space<vmem>>, %arg6: memref<1x512xf32, #tpu.memory_space<vmem>>, %arg7: memref<256x512xf32, #tpu.memory_space<vmem>>, %arg8: memref<1x512xf32, #tpu.memory_space<vmem>>, %arg9: memref<128x128xf32, #tpu.memory_space<vmem>>, %arg10: memref<1x128xf32, #tpu.memory_space<vmem>>, %arg11: memref<64x128xf32, #tpu.memory_space<vmem>>, %arg12: memref<64x384xf32, #tpu.memory_space<vmem>>, %arg13: memref<64x128xf32, #tpu.memory_space<vmem>>) attributes {dimension_semantics = [], scalar_prefetch = 0 : i64, scratch_operands = 2 : i64, tpu.core_type = #tpu.core_type<tc>} {
    %c0 = arith.constant 0 : index
    %c0_0 = arith.constant 0 : index
    %0 = vector.load %arg0[%c0, %c0_0] : memref<64x32xf32, #tpu.memory_space<vmem>>, vector<64x32xf32>
    %c0_1 = arith.constant 0 : index
    %c0_2 = arith.constant 0 : index
    %1 = vector.load %arg1[%c0_1, %c0_2] : memref<32x384xf32, #tpu.memory_space<vmem>>, vector<32x384xf32>
    %cst = arith.constant dense<0.000000e+00> : vector<64x384xf32>
    %2 = tpu.matmul %0, %1, %cst {dimension_numbers = #tpu.dot_dimension_numbers<[1], [0], [0], [1], [0, 0, 1, 1], [], []>} : vector<64x32xf32>, vector<32x384xf32>, vector<64x384xf32> -> vector<64x384xf32>
    %c0_3 = arith.constant 0 : index
    %c0_4 = arith.constant 0 : index
    %3 = vector.load %arg2[%c0_3, %c0_4] : memref<1x384xf32, #tpu.memory_space<vmem>>, vector<1x384xf32>
    %4 = vector.broadcast %3 : vector<1x384xf32> to vector<64x384xf32>
    %5 = arith.addf %2, %4 : vector<64x384xf32>
    %c0_5 = arith.constant 0 : index
    %c0_6 = arith.constant 0 : index
    %6 = vector.load %arg12[%c0_5, %c0_6] : memref<64x384xf32, #tpu.memory_space<vmem>>, vector<64x384xf32>
    tpu.vector_store %arg12[%c0_5, %c0_6], %5 {strides = array<i32>} : memref<64x384xf32, #tpu.memory_space<vmem>>, vector<64x384xf32>,
    %c0_7 = arith.constant 0 : index
    %c0_8 = arith.constant 0 : index
    %7 = vector.load %arg4[%c0_7, %c0_8] : memref<1x384xf32, #tpu.memory_space<vmem>>, vector<1x384xf32>
    %8 = vector.shape_cast %7 : vector<1x384xf32> to vector<1x384xf32>
    %9 = vector.broadcast %8 : vector<1x384xf32> to vector<8x384xf32>
    %c0_9 = arith.constant 0 : index
    %c0_10 = arith.constant 0 : index
    %10 = vector.load %arg6[%c0_9, %c0_10] : memref<1x512xf32, #tpu.memory_space<vmem>>, vector<1x512xf32>
    %11 = vector.shape_cast %10 : vector<1x512xf32> to vector<1x512xf32>
    %12 = vector.broadcast %11 : vector<1x512xf32> to vector<8x512xf32>
    %c0_11 = arith.constant 0 : index
    %c0_12 = arith.constant 0 : index
    %13 = vector.load %arg8[%c0_11, %c0_12] : memref<1x512xf32, #tpu.memory_space<vmem>>, vector<1x512xf32>
    %14 = vector.shape_cast %13 : vector<1x512xf32> to vector<1x512xf32>
    %15 = vector.broadcast %14 : vector<1x512xf32> to vector<8x512xf32>
    %cst_13 = arith.constant 0.000000e+00 : f32
    %16 = vector.broadcast %cst_13 : f32 to vector<8x128xf32>
    %c0_14 = arith.constant 0 : index
    %c0_15 = arith.constant 0 : index
    %17 = vector.load %arg12[%c0_14, %c0_15] : memref<64x384xf32, #tpu.memory_space<vmem>>, vector<8x384xf32>
    %c0_16 = arith.constant 0 : index
    %c0_17 = arith.constant 0 : index
    %18 = vector.load %arg3[%c0_16, %c0_17] : memref<128x384xf32, #tpu.memory_space<vmem>>, vector<128x384xf32>
    %cst_18 = arith.constant dense<0.000000e+00> : vector<8x384xf32>
    %19 = tpu.matmul %16, %18, %cst_18 {dimension_numbers = #tpu.dot_dimension_numbers<[1], [0], [0], [1], [0, 0, 1, 1], [], []>} : vector<8x128xf32>, vector<128x384xf32>, vector<8x384xf32> -> vector<8x384xf32>
    %20 = arith.addf %19, %9 : vector<8x384xf32>
    %21 = vector.extract_strided_slice %17 {offsets = [0, 0], sizes = [8, 128], strides = [1, 1]} : vector<8x384xf32> to vector<8x128xf32>
    %22 = vector.extract_strided_slice %20 {offsets = [0, 0], sizes = [8, 128], strides = [1, 1]} : vector<8x384xf32> to vector<8x128xf32>
    %23 = arith.addf %21, %22 : vector<8x128xf32>
    %24 = arith.negf %23 : vector<8x128xf32>
    %25 = math.exp %24 : vector<8x128xf32>
    %cst_19 = arith.constant 1.000000e+00 : f32
    %26 = vector.broadcast %cst_19 : f32 to vector<8x128xf32>
    %27 = arith.addf %26, %25 : vector<8x128xf32>
    %28 = arith.divf %26, %27 : vector<8x128xf32>
    %29 = vector.extract_strided_slice %17 {offsets = [0, 128], sizes = [8, 128], strides = [1, 1]} : vector<8x384xf32> to vector<8x128xf32>
    %30 = vector.extract_strided_slice %20 {offsets = [0, 128], sizes = [8, 128], strides = [1, 1]} : vector<8x384xf32> to vector<8x128xf32>
    %31 = arith.addf %29, %30 : vector<8x128xf32>
    %32 = arith.negf %31 : vector<8x128xf32>
    %33 = math.exp %32 : vector<8x128xf32>
    %cst_20 = arith.constant 1.000000e+00 : f32
    %34 = vector.broadcast %cst_20 : f32 to vector<8x128xf32>
    %35 = arith.addf %34, %33 : vector<8x128xf32>
    %36 = arith.divf %34, %35 : vector<8x128xf32>
    %37 = vector.extract_strided_slice %17 {offsets = [0, 256], sizes = [8, 128], strides = [1, 1]} : vector<8x384xf32> to vector<8x128xf32>
    %38 = vector.extract_strided_slice %20 {offsets = [0, 256], sizes = [8, 128], strides = [1, 1]} : vector<8x384xf32> to vector<8x128xf32>
    %39 = arith.mulf %28, %38 : vector<8x128xf32>
    %40 = arith.addf %37, %39 : vector<8x128xf32>
    %41 = math.tanh %40 : vector<8x128xf32>
    %cst_21 = arith.constant 1.000000e+00 : f32
    %42 = vector.broadcast %cst_21 : f32 to vector<8x128xf32>
    %43 = arith.subf %42, %36 : vector<8x128xf32>
    %44 = arith.mulf %43, %41 : vector<8x128xf32>
    %45 = arith.mulf %36, %16 : vector<8x128xf32>
    %46 = arith.addf %44, %45 : vector<8x128xf32>
    %47 = tpu.concatenate %46, %16 in 1 : vector<8x128xf32>, vector<8x128xf32> -> vector<8x256xf32>
    %c0_22 = arith.constant 0 : index
    %c0_23 = arith.constant 0 : index
    %48 = vector.load %arg5[%c0_22, %c0_23] : memref<256x512xf32, #tpu.memory_space<vmem>>, vector<256x512xf32>
    %cst_24 = arith.constant dense<0.000000e+00> : vector<8x512xf32>
    %49 = tpu.matmul %47, %48, %cst_24 {dimension_numbers = #tpu.dot_dimension_numbers<[1], [0], [0], [1], [0, 0, 1, 1], [], []>} : vector<8x256xf32>, vector<256x512xf32>, vector<8x512xf32> -> vector<8x512xf32>
    %50 = arith.addf %49, %12 : vector<8x512xf32>
    %51 = vector.extract_strided_slice %50 {offsets = [0, 0], sizes = [8, 128], strides = [1, 1]} : vector<8x512xf32> to vector<8x128xf32>
    %52 = arith.negf %51 : vector<8x128xf32>
    %53 = math.exp %52 : vector<8x128xf32>
    %cst_25 = arith.constant 1.000000e+00 : f32
    %54 = vector.broadcast %cst_25 : f32 to vector<8x128xf32>
    %55 = arith.addf %54, %53 : vector<8x128xf32>
    %56 = arith.divf %54, %55 : vector<8x128xf32>
    %57 = vector.extract_strided_slice %50 {offsets = [0, 128], sizes = [8, 128], strides = [1, 1]} : vector<8x512xf32> to vector<8x128xf32>
    %58 = arith.negf %57 : vector<8x128xf32>
    %59 = math.exp %58 : vector<8x128xf32>
    %cst_26 = arith.constant 1.000000e+00 : f32
    %60 = vector.broadcast %cst_26 : f32 to vector<8x128xf32>
    %61 = arith.addf %60, %59 : vector<8x128xf32>
    %62 = arith.divf %60, %61 : vector<8x128xf32>
    %63 = vector.extract_strided_slice %50 {offsets = [0, 256], sizes = [8, 128], strides = [1, 1]} : vector<8x512xf32> to vector<8x128xf32>
    %64 = vector.extract_strided_slice %50 {offsets = [0, 384], sizes = [8, 128], strides = [1, 1]} : vector<8x512xf32> to vector<8x128xf32>
    %65 = arith.mulf %56, %64 : vector<8x128xf32>
    %66 = arith.addf %63, %65 : vector<8x128xf32>
    %67 = math.tanh %66 : vector<8x128xf32>
    %cst_27 = arith.constant 1.000000e+00 : f32
    %68 = vector.broadcast %cst_27 : f32 to vector<8x128xf32>
    %69 = arith.subf %68, %62 : vector<8x128xf32>
    %70 = arith.mulf %69, %67 : vector<8x128xf32>
    %71 = arith.mulf %62, %16 : vector<8x128xf32>
    %72 = arith.addf %70, %71 : vector<8x128xf32>
    %c8 = arith.constant 8 : index
    %c0_28 = arith.constant 0 : index
    %73 = vector.load %arg12[%c8, %c0_28] : memref<64x384xf32, #tpu.memory_space<vmem>>, vector<8x384xf32>
    %c0_29 = arith.constant 0 : index
    %c0_30 = arith.constant 0 : index
    %74 = vector.load %arg3[%c0_29, %c0_30] : memref<128x384xf32, #tpu.memory_space<vmem>>, vector<128x384xf32>
    %cst_31 = arith.constant dense<0.000000e+00> : vector<8x384xf32>
    %75 = tpu.matmul %46, %74, %cst_31 {dimension_numbers = #tpu.dot_dimension_numbers<[1], [0], [0], [1], [0, 0, 1, 1], [], []>} : vector<8x128xf32>, vector<128x384xf32>, vector<8x384xf32> -> vector<8x384xf32>
    %76 = arith.addf %75, %9 : vector<8x384xf32>
    %77 = vector.extract_strided_slice %73 {offsets = [0, 0], sizes = [8, 128], strides = [1, 1]} : vector<8x384xf32> to vector<8x128xf32>
    %78 = vector.extract_strided_slice %76 {offsets = [0, 0], sizes = [8, 128], strides = [1, 1]} : vector<8x384xf32> to vector<8x128xf32>
    %79 = arith.addf %77, %78 : vector<8x128xf32>
    %80 = arith.negf %79 : vector<8x128xf32>
    %81 = math.exp %80 : vector<8x128xf32>
    %cst_32 = arith.constant 1.000000e+00 : f32
    %82 = vector.broadcast %cst_32 : f32 to vector<8x128xf32>
    %83 = arith.addf %82, %81 : vector<8x128xf32>
    %84 = arith.divf %82, %83 : vector<8x128xf32>
    %85 = vector.extract_strided_slice %73 {offsets = [0, 128], sizes = [8, 128], strides = [1, 1]} : vector<8x384xf32> to vector<8x128xf32>
    %86 = vector.extract_strided_slice %76 {offsets = [0, 128], sizes = [8, 128], strides = [1, 1]} : vector<8x384xf32> to vector<8x128xf32>
    %87 = arith.addf %85, %86 : vector<8x128xf32>
    %88 = arith.negf %87 : vector<8x128xf32>
    %89 = math.exp %88 : vector<8x128xf32>
    %cst_33 = arith.constant 1.000000e+00 : f32
    %90 = vector.broadcast %cst_33 : f32 to vector<8x128xf32>
    %91 = arith.addf %90, %89 : vector<8x128xf32>
    %92 = arith.divf %90, %91 : vector<8x128xf32>
    %93 = vector.extract_strided_slice %73 {offsets = [0, 256], sizes = [8, 128], strides = [1, 1]} : vector<8x384xf32> to vector<8x128xf32>
    %94 = vector.extract_strided_slice %76 {offsets = [0, 256], sizes = [8, 128], strides = [1, 1]} : vector<8x384xf32> to vector<8x128xf32>
    %95 = arith.mulf %84, %94 : vector<8x128xf32>
    %96 = arith.addf %93, %95 : vector<8x128xf32>
    %97 = math.tanh %96 : vector<8x128xf32>
    %cst_34 = arith.constant 1.000000e+00 : f32
    %98 = vector.broadcast %cst_34 : f32 to vector<8x128xf32>
    %99 = arith.subf %98, %92 : vector<8x128xf32>
    %100 = arith.mulf %99, %97 : vector<8x128xf32>
    %101 = arith.mulf %92, %46 : vector<8x128xf32>
    %102 = arith.addf %100, %101 : vector<8x128xf32>
    %103 = tpu.concatenate %72, %16 in 1 : vector<8x128xf32>, vector<8x128xf32> -> vector<8x256xf32>
    %c0_35 = arith.constant 0 : index
    %c0_36 = arith.constant 0 : index
    %104 = vector.load %arg7[%c0_35, %c0_36] : memref<256x512xf32, #tpu.memory_space<vmem>>, vector<256x512xf32>
    %cst_37 = arith.constant dense<0.000000e+00> : vector<8x512xf32>
    %105 = tpu.matmul %103, %104, %cst_37 {dimension_numbers = #tpu.dot_dimension_numbers<[1], [0], [0], [1], [0, 0, 1, 1], [], []>} : vector<8x256xf32>, vector<256x512xf32>, vector<8x512xf32> -> vector<8x512xf32>
    %106 = arith.addf %105, %15 : vector<8x512xf32>
    %107 = vector.extract_strided_slice %106 {offsets = [0, 0], sizes = [8, 128], strides = [1, 1]} : vector<8x512xf32> to vector<8x128xf32>
    %108 = arith.negf %107 : vector<8x128xf32>
    %109 = math.exp %108 : vector<8x128xf32>
    %cst_38 = arith.constant 1.000000e+00 : f32
    %110 = vector.broadcast %cst_38 : f32 to vector<8x128xf32>
    %111 = arith.addf %110, %109 : vector<8x128xf32>
    %112 = arith.divf %110, %111 : vector<8x128xf32>
    %113 = vector.extract_strided_slice %106 {offsets = [0, 128], sizes = [8, 128], strides = [1, 1]} : vector<8x512xf32> to vector<8x128xf32>
    %114 = arith.negf %113 : vector<8x128xf32>
    %115 = math.exp %114 : vector<8x128xf32>
    %cst_39 = arith.constant 1.000000e+00 : f32
    %116 = vector.broadcast %cst_39 : f32 to vector<8x128xf32>
    %117 = arith.addf %116, %115 : vector<8x128xf32>
    %118 = arith.divf %116, %117 : vector<8x128xf32>
    %119 = vector.extract_strided_slice %106 {offsets = [0, 256], sizes = [8, 128], strides = [1, 1]} : vector<8x512xf32> to vector<8x128xf32>
    %120 = vector.extract_strided_slice %106 {offsets = [0, 384], sizes = [8, 128], strides = [1, 1]} : vector<8x512xf32> to vector<8x128xf32>
    %121 = arith.mulf %112, %120 : vector<8x128xf32>
    %122 = arith.addf %119, %121 : vector<8x128xf32>
    %123 = math.tanh %122 : vector<8x128xf32>
    %cst_40 = arith.constant 1.000000e+00 : f32
    %124 = vector.broadcast %cst_40 : f32 to vector<8x128xf32>
    %125 = arith.subf %124, %118 : vector<8x128xf32>
    %126 = arith.mulf %125, %123 : vector<8x128xf32>
    %127 = arith.mulf %118, %16 : vector<8x128xf32>
    %128 = arith.addf %126, %127 : vector<8x128xf32>
    %c0_41 = arith.constant 0 : index
    %c0_42 = arith.constant 0 : index
    %129 = vector.load %arg13[%c0_41, %c0_42] : memref<64x128xf32, #tpu.memory_space<vmem>>, vector<8x128xf32>
    tpu.vector_store %arg13[%c0_41, %c0_42], %128 {strides = array<i32>} : memref<64x128xf32, #tpu.memory_space<vmem>>, vector<8x128xf32>,
    %130 = tpu.concatenate %102, %72 in 1 : vector<8x128xf32>, vector<8x128xf32> -> vector<8x256xf32>
    %c0_43 = arith.constant 0 : index
    %c0_44 = arith.constant 0 : index
    %131 = vector.load %arg5[%c0_43, %c0_44] : memref<256x512xf32, #tpu.memory_space<vmem>>, vector<256x512xf32>
    %cst_45 = arith.constant dense<0.000000e+00> : vector<8x512xf32>
    %132 = tpu.matmul %130, %131, %cst_45 {dimension_numbers = #tpu.dot_dimension_numbers<[1], [0], [0], [1], [0, 0, 1, 1], [], []>} : vector<8x256xf32>, vector<256x512xf32>, vector<8x512xf32> -> vector<8x512xf32>
    %133 = arith.addf %132, %12 : vector<8x512xf32>
    %134 = vector.extract_strided_slice %133 {offsets = [0, 0], sizes = [8, 128], strides = [1, 1]} : vector<8x512xf32> to vector<8x128xf32>
    %135 = arith.negf %134 : vector<8x128xf32>
    %136 = math.exp %135 : vector<8x128xf32>
    %cst_46 = arith.constant 1.000000e+00 : f32
    %137 = vector.broadcast %cst_46 : f32 to vector<8x128xf32>
    %138 = arith.addf %137, %136 : vector<8x128xf32>
    %139 = arith.divf %137, %138 : vector<8x128xf32>
    %140 = vector.extract_strided_slice %133 {offsets = [0, 128], sizes = [8, 128], strides = [1, 1]} : vector<8x512xf32> to vector<8x128xf32>
    %141 = arith.negf %140 : vector<8x128xf32>
    %142 = math.exp %141 : vector<8x128xf32>
    %cst_47 = arith.constant 1.000000e+00 : f32
    %143 = vector.broadcast %cst_47 : f32 to vector<8x128xf32>
    %144 = arith.addf %143, %142 : vector<8x128xf32>
    %145 = arith.divf %143, %144 : vector<8x128xf32>
    %146 = vector.extract_strided_slice %133 {offsets = [0, 256], sizes = [8, 128], strides = [1, 1]} : vector<8x512xf32> to vector<8x128xf32>
    %147 = vector.extract_strided_slice %133 {offsets = [0, 384], sizes = [8, 128], strides = [1, 1]} : vector<8x512xf32> to vector<8x128xf32>
    %148 = arith.mulf %139, %147 : vector<8x128xf32>
    %149 = arith.addf %146, %148 : vector<8x128xf32>
    %150 = math.tanh %149 : vector<8x128xf32>
    %cst_48 = arith.constant 1.000000e+00 : f32
    %151 = vector.broadcast %cst_48 : f32 to vector<8x128xf32>
    %152 = arith.subf %151, %145 : vector<8x128xf32>
    %153 = arith.mulf %152, %150 : vector<8x128xf32>
    %154 = arith.mulf %145, %72 : vector<8x128xf32>
    %155 = arith.addf %153, %154 : vector<8x128xf32>
    %c16 = arith.constant 16 : index
    %c0_49 = arith.constant 0 : index
    %156 = vector.load %arg12[%c16, %c0_49] : memref<64x384xf32, #tpu.memory_space<vmem>>, vector<8x384xf32>
    %c0_50 = arith.constant 0 : index
    %c0_51 = arith.constant 0 : index
    %157 = vector.load %arg3[%c0_50, %c0_51] : memref<128x384xf32, #tpu.memory_space<vmem>>, vector<128x384xf32>
    %cst_52 = arith.constant dense<0.000000e+00> : vector<8x384xf32>
    %158 = tpu.matmul %102, %157, %cst_52 {dimension_numbers = #tpu.dot_dimension_numbers<[1], [0], [0], [1], [0, 0, 1, 1], [], []>} : vector<8x128xf32>, vector<128x384xf32>, vector<8x384xf32> -> vector<8x384xf32>
    %159 = arith.addf %158, %9 : vector<8x384xf32>
    %160 = vector.extract_strided_slice %156 {offsets = [0, 0], sizes = [8, 128], strides = [1, 1]} : vector<8x384xf32> to vector<8x128xf32>
    %161 = vector.extract_strided_slice %159 {offsets = [0, 0], sizes = [8, 128], strides = [1, 1]} : vector<8x384xf32> to vector<8x128xf32>
    %162 = arith.addf %160, %161 : vector<8x128xf32>
    %163 = arith.negf %162 : vector<8x128xf32>
    %164 = math.exp %163 : vector<8x128xf32>
    %cst_53 = arith.constant 1.000000e+00 : f32
    %165 = vector.broadcast %cst_53 : f32 to vector<8x128xf32>
    %166 = arith.addf %165, %164 : vector<8x128xf32>
    %167 = arith.divf %165, %166 : vector<8x128xf32>
    %168 = vector.extract_strided_slice %156 {offsets = [0, 128], sizes = [8, 128], strides = [1, 1]} : vector<8x384xf32> to vector<8x128xf32>
    %169 = vector.extract_strided_slice %159 {offsets = [0, 128], sizes = [8, 128], strides = [1, 1]} : vector<8x384xf32> to vector<8x128xf32>
    %170 = arith.addf %168, %169 : vector<8x128xf32>
    %171 = arith.negf %170 : vector<8x128xf32>
    %172 = math.exp %171 : vector<8x128xf32>
    %cst_54 = arith.constant 1.000000e+00 : f32
    %173 = vector.broadcast %cst_54 : f32 to vector<8x128xf32>
    %174 = arith.addf %173, %172 : vector<8x128xf32>
    %175 = arith.divf %173, %174 : vector<8x128xf32>
    %176 = vector.extract_strided_slice %156 {offsets = [0, 256], sizes = [8, 128], strides = [1, 1]} : vector<8x384xf32> to vector<8x128xf32>
    %177 = vector.extract_strided_slice %159 {offsets = [0, 256], sizes = [8, 128], strides = [1, 1]} : vector<8x384xf32> to vector<8x128xf32>
    %178 = arith.mulf %167, %177 : vector<8x128xf32>
    %179 = arith.addf %176, %178 : vector<8x128xf32>
    %180 = math.tanh %179 : vector<8x128xf32>
    %cst_55 = arith.constant 1.000000e+00 : f32
    %181 = vector.broadcast %cst_55 : f32 to vector<8x128xf32>
    %182 = arith.subf %181, %175 : vector<8x128xf32>
    %183 = arith.mulf %182, %180 : vector<8x128xf32>
    %184 = arith.mulf %175, %102 : vector<8x128xf32>
    %185 = arith.addf %183, %184 : vector<8x128xf32>
    %186 = tpu.concatenate %155, %128 in 1 : vector<8x128xf32>, vector<8x128xf32> -> vector<8x256xf32>
    %c0_56 = arith.constant 0 : index
    %c0_57 = arith.constant 0 : index
    %187 = vector.load %arg7[%c0_56, %c0_57] : memref<256x512xf32, #tpu.memory_space<vmem>>, vector<256x512xf32>
    %cst_58 = arith.constant dense<0.000000e+00> : vector<8x512xf32>
    %188 = tpu.matmul %186, %187, %cst_58 {dimension_numbers = #tpu.dot_dimension_numbers<[1], [0], [0], [1], [0, 0, 1, 1], [], []>} : vector<8x256xf32>, vector<256x512xf32>, vector<8x512xf32> -> vector<8x512xf32>
    %189 = arith.addf %188, %15 : vector<8x512xf32>
    %190 = vector.extract_strided_slice %189 {offsets = [0, 0], sizes = [8, 128], strides = [1, 1]} : vector<8x512xf32> to vector<8x128xf32>
    %191 = arith.negf %190 : vector<8x128xf32>
    %192 = math.exp %191 : vector<8x128xf32>
    %cst_59 = arith.constant 1.000000e+00 : f32
    %193 = vector.broadcast %cst_59 : f32 to vector<8x128xf32>
    %194 = arith.addf %193, %192 : vector<8x128xf32>
    %195 = arith.divf %193, %194 : vector<8x128xf32>
    %196 = vector.extract_strided_slice %189 {offsets = [0, 128], sizes = [8, 128], strides = [1, 1]} : vector<8x512xf32> to vector<8x128xf32>
    %197 = arith.negf %196 : vector<8x128xf32>
    %198 = math.exp %197 : vector<8x128xf32>
    %cst_60 = arith.constant 1.000000e+00 : f32
    %199 = vector.broadcast %cst_60 : f32 to vector<8x128xf32>
    %200 = arith.addf %199, %198 : vector<8x128xf32>
    %201 = arith.divf %199, %200 : vector<8x128xf32>
    %202 = vector.extract_strided_slice %189 {offsets = [0, 256], sizes = [8, 128], strides = [1, 1]} : vector<8x512xf32> to vector<8x128xf32>
    %203 = vector.extract_strided_slice %189 {offsets = [0, 384], sizes = [8, 128], strides = [1, 1]} : vector<8x512xf32> to vector<8x128xf32>
    %204 = arith.mulf %195, %203 : vector<8x128xf32>
    %205 = arith.addf %202, %204 : vector<8x128xf32>
    %206 = math.tanh %205 : vector<8x128xf32>
    %cst_61 = arith.constant 1.000000e+00 : f32
    %207 = vector.broadcast %cst_61 : f32 to vector<8x128xf32>
    %208 = arith.subf %207, %201 : vector<8x128xf32>
    %209 = arith.mulf %208, %206 : vector<8x128xf32>
    %210 = arith.mulf %201, %128 : vector<8x128xf32>
    %211 = arith.addf %209, %210 : vector<8x128xf32>
    %c8_62 = arith.constant 8 : index
    %c0_63 = arith.constant 0 : index
    %212 = vector.load %arg13[%c8_62, %c0_63] : memref<64x128xf32, #tpu.memory_space<vmem>>, vector<8x128xf32>
    tpu.vector_store %arg13[%c8_62, %c0_63], %211 {strides = array<i32>} : memref<64x128xf32, #tpu.memory_space<vmem>>, vector<8x128xf32>,
    %213 = tpu.concatenate %185, %155 in 1 : vector<8x128xf32>, vector<8x128xf32> -> vector<8x256xf32>
    %c0_64 = arith.constant 0 : index
    %c0_65 = arith.constant 0 : index
    %214 = vector.load %arg5[%c0_64, %c0_65] : memref<256x512xf32, #tpu.memory_space<vmem>>, vector<256x512xf32>
    %cst_66 = arith.constant dense<0.000000e+00> : vector<8x512xf32>
    %215 = tpu.matmul %213, %214, %cst_66 {dimension_numbers = #tpu.dot_dimension_numbers<[1], [0], [0], [1], [0, 0, 1, 1], [], []>} : vector<8x256xf32>, vector<256x512xf32>, vector<8x512xf32> -> vector<8x512xf32>
    %216 = arith.addf %215, %12 : vector<8x512xf32>
    %217 = vector.extract_strided_slice %216 {offsets = [0, 0], sizes = [8, 128], strides = [1, 1]} : vector<8x512xf32> to vector<8x128xf32>
    %218 = arith.negf %217 : vector<8x128xf32>
    %219 = math.exp %218 : vector<8x128xf32>
    %cst_67 = arith.constant 1.000000e+00 : f32
    %220 = vector.broadcast %cst_67 : f32 to vector<8x128xf32>
    %221 = arith.addf %220, %219 : vector<8x128xf32>
    %222 = arith.divf %220, %221 : vector<8x128xf32>
    %223 = vector.extract_strided_slice %216 {offsets = [0, 128], sizes = [8, 128], strides = [1, 1]} : vector<8x512xf32> to vector<8x128xf32>
    %224 = arith.negf %223 : vector<8x128xf32>
    %225 = math.exp %224 : vector<8x128xf32>
    %cst_68 = arith.constant 1.000000e+00 : f32
    %226 = vector.broadcast %cst_68 : f32 to vector<8x128xf32>
    %227 = arith.addf %226, %225 : vector<8x128xf32>
    %228 = arith.divf %226, %227 : vector<8x128xf32>
    %229 = vector.extract_strided_slice %216 {offsets = [0, 256], sizes = [8, 128], strides = [1, 1]} : vector<8x512xf32> to vector<8x128xf32>
    %230 = vector.extract_strided_slice %216 {offsets = [0, 384], sizes = [8, 128], strides = [1, 1]} : vector<8x512xf32> to vector<8x128xf32>
    %231 = arith.mulf %222, %230 : vector<8x128xf32>
    %232 = arith.addf %229, %231 : vector<8x128xf32>
    %233 = math.tanh %232 : vector<8x128xf32>
    %cst_69 = arith.constant 1.000000e+00 : f32
    %234 = vector.broadcast %cst_69 : f32 to vector<8x128xf32>
    %235 = arith.subf %234, %228 : vector<8x128xf32>
    %236 = arith.mulf %235, %233 : vector<8x128xf32>
    %237 = arith.mulf %228, %155 : vector<8x128xf32>
    %238 = arith.addf %236, %237 : vector<8x128xf32>
    %c24 = arith.constant 24 : index
    %c0_70 = arith.constant 0 : index
    %239 = vector.load %arg12[%c24, %c0_70] : memref<64x384xf32, #tpu.memory_space<vmem>>, vector<8x384xf32>
    %c0_71 = arith.constant 0 : index
    %c0_72 = arith.constant 0 : index
    %240 = vector.load %arg3[%c0_71, %c0_72] : memref<128x384xf32, #tpu.memory_space<vmem>>, vector<128x384xf32>
    %cst_73 = arith.constant dense<0.000000e+00> : vector<8x384xf32>
    %241 = tpu.matmul %185, %240, %cst_73 {dimension_numbers = #tpu.dot_dimension_numbers<[1], [0], [0], [1], [0, 0, 1, 1], [], []>} : vector<8x128xf32>, vector<128x384xf32>, vector<8x384xf32> -> vector<8x384xf32>
    %242 = arith.addf %241, %9 : vector<8x384xf32>
    %243 = vector.extract_strided_slice %239 {offsets = [0, 0], sizes = [8, 128], strides = [1, 1]} : vector<8x384xf32> to vector<8x128xf32>
    %244 = vector.extract_strided_slice %242 {offsets = [0, 0], sizes = [8, 128], strides = [1, 1]} : vector<8x384xf32> to vector<8x128xf32>
    %245 = arith.addf %243, %244 : vector<8x128xf32>
    %246 = arith.negf %245 : vector<8x128xf32>
    %247 = math.exp %246 : vector<8x128xf32>
    %cst_74 = arith.constant 1.000000e+00 : f32
    %248 = vector.broadcast %cst_74 : f32 to vector<8x128xf32>
    %249 = arith.addf %248, %247 : vector<8x128xf32>
    %250 = arith.divf %248, %249 : vector<8x128xf32>
    %251 = vector.extract_strided_slice %239 {offsets = [0, 128], sizes = [8, 128], strides = [1, 1]} : vector<8x384xf32> to vector<8x128xf32>
    %252 = vector.extract_strided_slice %242 {offsets = [0, 128], sizes = [8, 128], strides = [1, 1]} : vector<8x384xf32> to vector<8x128xf32>
    %253 = arith.addf %251, %252 : vector<8x128xf32>
    %254 = arith.negf %253 : vector<8x128xf32>
    %255 = math.exp %254 : vector<8x128xf32>
    %cst_75 = arith.constant 1.000000e+00 : f32
    %256 = vector.broadcast %cst_75 : f32 to vector<8x128xf32>
    %257 = arith.addf %256, %255 : vector<8x128xf32>
    %258 = arith.divf %256, %257 : vector<8x128xf32>
    %259 = vector.extract_strided_slice %239 {offsets = [0, 256], sizes = [8, 128], strides = [1, 1]} : vector<8x384xf32> to vector<8x128xf32>
    %260 = vector.extract_strided_slice %242 {offsets = [0, 256], sizes = [8, 128], strides = [1, 1]} : vector<8x384xf32> to vector<8x128xf32>
    %261 = arith.mulf %250, %260 : vector<8x128xf32>
    %262 = arith.addf %259, %261 : vector<8x128xf32>
    %263 = math.tanh %262 : vector<8x128xf32>
    %cst_76 = arith.constant 1.000000e+00 : f32
    %264 = vector.broadcast %cst_76 : f32 to vector<8x128xf32>
    %265 = arith.subf %264, %258 : vector<8x128xf32>
    %266 = arith.mulf %265, %263 : vector<8x128xf32>
    %267 = arith.mulf %258, %185 : vector<8x128xf32>
    %268 = arith.addf %266, %267 : vector<8x128xf32>
    %269 = tpu.concatenate %238, %211 in 1 : vector<8x128xf32>, vector<8x128xf32> -> vector<8x256xf32>
    %c0_77 = arith.constant 0 : index
    %c0_78 = arith.constant 0 : index
    %270 = vector.load %arg7[%c0_77, %c0_78] : memref<256x512xf32, #tpu.memory_space<vmem>>, vector<256x512xf32>
    %cst_79 = arith.constant dense<0.000000e+00> : vector<8x512xf32>
    %271 = tpu.matmul %269, %270, %cst_79 {dimension_numbers = #tpu.dot_dimension_numbers<[1], [0], [0], [1], [0, 0, 1, 1], [], []>} : vector<8x256xf32>, vector<256x512xf32>, vector<8x512xf32> -> vector<8x512xf32>
    %272 = arith.addf %271, %15 : vector<8x512xf32>
    %273 = vector.extract_strided_slice %272 {offsets = [0, 0], sizes = [8, 128], strides = [1, 1]} : vector<8x512xf32> to vector<8x128xf32>
    %274 = arith.negf %273 : vector<8x128xf32>
    %275 = math.exp %274 : vector<8x128xf32>
    %cst_80 = arith.constant 1.000000e+00 : f32
    %276 = vector.broadcast %cst_80 : f32 to vector<8x128xf32>
    %277 = arith.addf %276, %275 : vector<8x128xf32>
    %278 = arith.divf %276, %277 : vector<8x128xf32>
    %279 = vector.extract_strided_slice %272 {offsets = [0, 128], sizes = [8, 128], strides = [1, 1]} : vector<8x512xf32> to vector<8x128xf32>
    %280 = arith.negf %279 : vector<8x128xf32>
    %281 = math.exp %280 : vector<8x128xf32>
    %cst_81 = arith.constant 1.000000e+00 : f32
    %282 = vector.broadcast %cst_81 : f32 to vector<8x128xf32>
    %283 = arith.addf %282, %281 : vector<8x128xf32>
    %284 = arith.divf %282, %283 : vector<8x128xf32>
    %285 = vector.extract_strided_slice %272 {offsets = [0, 256], sizes = [8, 128], strides = [1, 1]} : vector<8x512xf32> to vector<8x128xf32>
    %286 = vector.extract_strided_slice %272 {offsets = [0, 384], sizes = [8, 128], strides = [1, 1]} : vector<8x512xf32> to vector<8x128xf32>
    %287 = arith.mulf %278, %286 : vector<8x128xf32>
    %288 = arith.addf %285, %287 : vector<8x128xf32>
    %289 = math.tanh %288 : vector<8x128xf32>
    %cst_82 = arith.constant 1.000000e+00 : f32
    %290 = vector.broadcast %cst_82 : f32 to vector<8x128xf32>
    %291 = arith.subf %290, %284 : vector<8x128xf32>
    %292 = arith.mulf %291, %289 : vector<8x128xf32>
    %293 = arith.mulf %284, %211 : vector<8x128xf32>
    %294 = arith.addf %292, %293 : vector<8x128xf32>
    %c16_83 = arith.constant 16 : index
    %c0_84 = arith.constant 0 : index
    %295 = vector.load %arg13[%c16_83, %c0_84] : memref<64x128xf32, #tpu.memory_space<vmem>>, vector<8x128xf32>
    tpu.vector_store %arg13[%c16_83, %c0_84], %294 {strides = array<i32>} : memref<64x128xf32, #tpu.memory_space<vmem>>, vector<8x128xf32>,
    %296 = tpu.concatenate %268, %238 in 1 : vector<8x128xf32>, vector<8x128xf32> -> vector<8x256xf32>
    %c0_85 = arith.constant 0 : index
    %c0_86 = arith.constant 0 : index
    %297 = vector.load %arg5[%c0_85, %c0_86] : memref<256x512xf32, #tpu.memory_space<vmem>>, vector<256x512xf32>
    %cst_87 = arith.constant dense<0.000000e+00> : vector<8x512xf32>
    %298 = tpu.matmul %296, %297, %cst_87 {dimension_numbers = #tpu.dot_dimension_numbers<[1], [0], [0], [1], [0, 0, 1, 1], [], []>} : vector<8x256xf32>, vector<256x512xf32>, vector<8x512xf32> -> vector<8x512xf32>
    %299 = arith.addf %298, %12 : vector<8x512xf32>
    %300 = vector.extract_strided_slice %299 {offsets = [0, 0], sizes = [8, 128], strides = [1, 1]} : vector<8x512xf32> to vector<8x128xf32>
    %301 = arith.negf %300 : vector<8x128xf32>
    %302 = math.exp %301 : vector<8x128xf32>
    %cst_88 = arith.constant 1.000000e+00 : f32
    %303 = vector.broadcast %cst_88 : f32 to vector<8x128xf32>
    %304 = arith.addf %303, %302 : vector<8x128xf32>
    %305 = arith.divf %303, %304 : vector<8x128xf32>
    %306 = vector.extract_strided_slice %299 {offsets = [0, 128], sizes = [8, 128], strides = [1, 1]} : vector<8x512xf32> to vector<8x128xf32>
    %307 = arith.negf %306 : vector<8x128xf32>
    %308 = math.exp %307 : vector<8x128xf32>
    %cst_89 = arith.constant 1.000000e+00 : f32
    %309 = vector.broadcast %cst_89 : f32 to vector<8x128xf32>
    %310 = arith.addf %309, %308 : vector<8x128xf32>
    %311 = arith.divf %309, %310 : vector<8x128xf32>
    %312 = vector.extract_strided_slice %299 {offsets = [0, 256], sizes = [8, 128], strides = [1, 1]} : vector<8x512xf32> to vector<8x128xf32>
    %313 = vector.extract_strided_slice %299 {offsets = [0, 384], sizes = [8, 128], strides = [1, 1]} : vector<8x512xf32> to vector<8x128xf32>
    %314 = arith.mulf %305, %313 : vector<8x128xf32>
    %315 = arith.addf %312, %314 : vector<8x128xf32>
    %316 = math.tanh %315 : vector<8x128xf32>
    %cst_90 = arith.constant 1.000000e+00 : f32
    %317 = vector.broadcast %cst_90 : f32 to vector<8x128xf32>
    %318 = arith.subf %317, %311 : vector<8x128xf32>
    %319 = arith.mulf %318, %316 : vector<8x128xf32>
    %320 = arith.mulf %311, %238 : vector<8x128xf32>
    %321 = arith.addf %319, %320 : vector<8x128xf32>
    %c32 = arith.constant 32 : index
    %c0_91 = arith.constant 0 : index
    %322 = vector.load %arg12[%c32, %c0_91] : memref<64x384xf32, #tpu.memory_space<vmem>>, vector<8x384xf32>
    %c0_92 = arith.constant 0 : index
    %c0_93 = arith.constant 0 : index
    %323 = vector.load %arg3[%c0_92, %c0_93] : memref<128x384xf32, #tpu.memory_space<vmem>>, vector<128x384xf32>
    %cst_94 = arith.constant dense<0.000000e+00> : vector<8x384xf32>
    %324 = tpu.matmul %268, %323, %cst_94 {dimension_numbers = #tpu.dot_dimension_numbers<[1], [0], [0], [1], [0, 0, 1, 1], [], []>} : vector<8x128xf32>, vector<128x384xf32>, vector<8x384xf32> -> vector<8x384xf32>
    %325 = arith.addf %324, %9 : vector<8x384xf32>
    %326 = vector.extract_strided_slice %322 {offsets = [0, 0], sizes = [8, 128], strides = [1, 1]} : vector<8x384xf32> to vector<8x128xf32>
    %327 = vector.extract_strided_slice %325 {offsets = [0, 0], sizes = [8, 128], strides = [1, 1]} : vector<8x384xf32> to vector<8x128xf32>
    %328 = arith.addf %326, %327 : vector<8x128xf32>
    %329 = arith.negf %328 : vector<8x128xf32>
    %330 = math.exp %329 : vector<8x128xf32>
    %cst_95 = arith.constant 1.000000e+00 : f32
    %331 = vector.broadcast %cst_95 : f32 to vector<8x128xf32>
    %332 = arith.addf %331, %330 : vector<8x128xf32>
    %333 = arith.divf %331, %332 : vector<8x128xf32>
    %334 = vector.extract_strided_slice %322 {offsets = [0, 128], sizes = [8, 128], strides = [1, 1]} : vector<8x384xf32> to vector<8x128xf32>
    %335 = vector.extract_strided_slice %325 {offsets = [0, 128], sizes = [8, 128], strides = [1, 1]} : vector<8x384xf32> to vector<8x128xf32>
    %336 = arith.addf %334, %335 : vector<8x128xf32>
    %337 = arith.negf %336 : vector<8x128xf32>
    %338 = math.exp %337 : vector<8x128xf32>
    %cst_96 = arith.constant 1.000000e+00 : f32
    %339 = vector.broadcast %cst_96 : f32 to vector<8x128xf32>
    %340 = arith.addf %339, %338 : vector<8x128xf32>
    %341 = arith.divf %339, %340 : vector<8x128xf32>
    %342 = vector.extract_strided_slice %322 {offsets = [0, 256], sizes = [8, 128], strides = [1, 1]} : vector<8x384xf32> to vector<8x128xf32>
    %343 = vector.extract_strided_slice %325 {offsets = [0, 256], sizes = [8, 128], strides = [1, 1]} : vector<8x384xf32> to vector<8x128xf32>
    %344 = arith.mulf %333, %343 : vector<8x128xf32>
    %345 = arith.addf %342, %344 : vector<8x128xf32>
    %346 = math.tanh %345 : vector<8x128xf32>
    %cst_97 = arith.constant 1.000000e+00 : f32
    %347 = vector.broadcast %cst_97 : f32 to vector<8x128xf32>
    %348 = arith.subf %347, %341 : vector<8x128xf32>
    %349 = arith.mulf %348, %346 : vector<8x128xf32>
    %350 = arith.mulf %341, %268 : vector<8x128xf32>
    %351 = arith.addf %349, %350 : vector<8x128xf32>
    %352 = tpu.concatenate %321, %294 in 1 : vector<8x128xf32>, vector<8x128xf32> -> vector<8x256xf32>
    %c0_98 = arith.constant 0 : index
    %c0_99 = arith.constant 0 : index
    %353 = vector.load %arg7[%c0_98, %c0_99] : memref<256x512xf32, #tpu.memory_space<vmem>>, vector<256x512xf32>
    %cst_100 = arith.constant dense<0.000000e+00> : vector<8x512xf32>
    %354 = tpu.matmul %352, %353, %cst_100 {dimension_numbers = #tpu.dot_dimension_numbers<[1], [0], [0], [1], [0, 0, 1, 1], [], []>} : vector<8x256xf32>, vector<256x512xf32>, vector<8x512xf32> -> vector<8x512xf32>
    %355 = arith.addf %354, %15 : vector<8x512xf32>
    %356 = vector.extract_strided_slice %355 {offsets = [0, 0], sizes = [8, 128], strides = [1, 1]} : vector<8x512xf32> to vector<8x128xf32>
    %357 = arith.negf %356 : vector<8x128xf32>
    %358 = math.exp %357 : vector<8x128xf32>
    %cst_101 = arith.constant 1.000000e+00 : f32
    %359 = vector.broadcast %cst_101 : f32 to vector<8x128xf32>
    %360 = arith.addf %359, %358 : vector<8x128xf32>
    %361 = arith.divf %359, %360 : vector<8x128xf32>
    %362 = vector.extract_strided_slice %355 {offsets = [0, 128], sizes = [8, 128], strides = [1, 1]} : vector<8x512xf32> to vector<8x128xf32>
    %363 = arith.negf %362 : vector<8x128xf32>
    %364 = math.exp %363 : vector<8x128xf32>
    %cst_102 = arith.constant 1.000000e+00 : f32
    %365 = vector.broadcast %cst_102 : f32 to vector<8x128xf32>
    %366 = arith.addf %365, %364 : vector<8x128xf32>
    %367 = arith.divf %365, %366 : vector<8x128xf32>
    %368 = vector.extract_strided_slice %355 {offsets = [0, 256], sizes = [8, 128], strides = [1, 1]} : vector<8x512xf32> to vector<8x128xf32>
    %369 = vector.extract_strided_slice %355 {offsets = [0, 384], sizes = [8, 128], strides = [1, 1]} : vector<8x512xf32> to vector<8x128xf32>
    %370 = arith.mulf %361, %369 : vector<8x128xf32>
    %371 = arith.addf %368, %370 : vector<8x128xf32>
    %372 = math.tanh %371 : vector<8x128xf32>
    %cst_103 = arith.constant 1.000000e+00 : f32
    %373 = vector.broadcast %cst_103 : f32 to vector<8x128xf32>
    %374 = arith.subf %373, %367 : vector<8x128xf32>
    %375 = arith.mulf %374, %372 : vector<8x128xf32>
    %376 = arith.mulf %367, %294 : vector<8x128xf32>
    %377 = arith.addf %375, %376 : vector<8x128xf32>
    %c24_104 = arith.constant 24 : index
    %c0_105 = arith.constant 0 : index
    %378 = vector.load %arg13[%c24_104, %c0_105] : memref<64x128xf32, #tpu.memory_space<vmem>>, vector<8x128xf32>
    tpu.vector_store %arg13[%c24_104, %c0_105], %377 {strides = array<i32>} : memref<64x128xf32, #tpu.memory_space<vmem>>, vector<8x128xf32>,
    %379 = tpu.concatenate %351, %321 in 1 : vector<8x128xf32>, vector<8x128xf32> -> vector<8x256xf32>
    %c0_106 = arith.constant 0 : index
    %c0_107 = arith.constant 0 : index
    %380 = vector.load %arg5[%c0_106, %c0_107] : memref<256x512xf32, #tpu.memory_space<vmem>>, vector<256x512xf32>
    %cst_108 = arith.constant dense<0.000000e+00> : vector<8x512xf32>
    %381 = tpu.matmul %379, %380, %cst_108 {dimension_numbers = #tpu.dot_dimension_numbers<[1], [0], [0], [1], [0, 0, 1, 1], [], []>} : vector<8x256xf32>, vector<256x512xf32>, vector<8x512xf32> -> vector<8x512xf32>
    %382 = arith.addf %381, %12 : vector<8x512xf32>
    %383 = vector.extract_strided_slice %382 {offsets = [0, 0], sizes = [8, 128], strides = [1, 1]} : vector<8x512xf32> to vector<8x128xf32>
    %384 = arith.negf %383 : vector<8x128xf32>
    %385 = math.exp %384 : vector<8x128xf32>
    %cst_109 = arith.constant 1.000000e+00 : f32
    %386 = vector.broadcast %cst_109 : f32 to vector<8x128xf32>
    %387 = arith.addf %386, %385 : vector<8x128xf32>
    %388 = arith.divf %386, %387 : vector<8x128xf32>
    %389 = vector.extract_strided_slice %382 {offsets = [0, 128], sizes = [8, 128], strides = [1, 1]} : vector<8x512xf32> to vector<8x128xf32>
    %390 = arith.negf %389 : vector<8x128xf32>
    %391 = math.exp %390 : vector<8x128xf32>
    %cst_110 = arith.constant 1.000000e+00 : f32
    %392 = vector.broadcast %cst_110 : f32 to vector<8x128xf32>
    %393 = arith.addf %392, %391 : vector<8x128xf32>
    %394 = arith.divf %392, %393 : vector<8x128xf32>
    %395 = vector.extract_strided_slice %382 {offsets = [0, 256], sizes = [8, 128], strides = [1, 1]} : vector<8x512xf32> to vector<8x128xf32>
    %396 = vector.extract_strided_slice %382 {offsets = [0, 384], sizes = [8, 128], strides = [1, 1]} : vector<8x512xf32> to vector<8x128xf32>
    %397 = arith.mulf %388, %396 : vector<8x128xf32>
    %398 = arith.addf %395, %397 : vector<8x128xf32>
    %399 = math.tanh %398 : vector<8x128xf32>
    %cst_111 = arith.constant 1.000000e+00 : f32
    %400 = vector.broadcast %cst_111 : f32 to vector<8x128xf32>
    %401 = arith.subf %400, %394 : vector<8x128xf32>
    %402 = arith.mulf %401, %399 : vector<8x128xf32>
    %403 = arith.mulf %394, %321 : vector<8x128xf32>
    %404 = arith.addf %402, %403 : vector<8x128xf32>
    %c40 = arith.constant 40 : index
    %c0_112 = arith.constant 0 : index
    %405 = vector.load %arg12[%c40, %c0_112] : memref<64x384xf32, #tpu.memory_space<vmem>>, vector<8x384xf32>
    %c0_113 = arith.constant 0 : index
    %c0_114 = arith.constant 0 : index
    %406 = vector.load %arg3[%c0_113, %c0_114] : memref<128x384xf32, #tpu.memory_space<vmem>>, vector<128x384xf32>
    %cst_115 = arith.constant dense<0.000000e+00> : vector<8x384xf32>
    %407 = tpu.matmul %351, %406, %cst_115 {dimension_numbers = #tpu.dot_dimension_numbers<[1], [0], [0], [1], [0, 0, 1, 1], [], []>} : vector<8x128xf32>, vector<128x384xf32>, vector<8x384xf32> -> vector<8x384xf32>
    %408 = arith.addf %407, %9 : vector<8x384xf32>
    %409 = vector.extract_strided_slice %405 {offsets = [0, 0], sizes = [8, 128], strides = [1, 1]} : vector<8x384xf32> to vector<8x128xf32>
    %410 = vector.extract_strided_slice %408 {offsets = [0, 0], sizes = [8, 128], strides = [1, 1]} : vector<8x384xf32> to vector<8x128xf32>
    %411 = arith.addf %409, %410 : vector<8x128xf32>
    %412 = arith.negf %411 : vector<8x128xf32>
    %413 = math.exp %412 : vector<8x128xf32>
    %cst_116 = arith.constant 1.000000e+00 : f32
    %414 = vector.broadcast %cst_116 : f32 to vector<8x128xf32>
    %415 = arith.addf %414, %413 : vector<8x128xf32>
    %416 = arith.divf %414, %415 : vector<8x128xf32>
    %417 = vector.extract_strided_slice %405 {offsets = [0, 128], sizes = [8, 128], strides = [1, 1]} : vector<8x384xf32> to vector<8x128xf32>
    %418 = vector.extract_strided_slice %408 {offsets = [0, 128], sizes = [8, 128], strides = [1, 1]} : vector<8x384xf32> to vector<8x128xf32>
    %419 = arith.addf %417, %418 : vector<8x128xf32>
    %420 = arith.negf %419 : vector<8x128xf32>
    %421 = math.exp %420 : vector<8x128xf32>
    %cst_117 = arith.constant 1.000000e+00 : f32
    %422 = vector.broadcast %cst_117 : f32 to vector<8x128xf32>
    %423 = arith.addf %422, %421 : vector<8x128xf32>
    %424 = arith.divf %422, %423 : vector<8x128xf32>
    %425 = vector.extract_strided_slice %405 {offsets = [0, 256], sizes = [8, 128], strides = [1, 1]} : vector<8x384xf32> to vector<8x128xf32>
    %426 = vector.extract_strided_slice %408 {offsets = [0, 256], sizes = [8, 128], strides = [1, 1]} : vector<8x384xf32> to vector<8x128xf32>
    %427 = arith.mulf %416, %426 : vector<8x128xf32>
    %428 = arith.addf %425, %427 : vector<8x128xf32>
    %429 = math.tanh %428 : vector<8x128xf32>
    %cst_118 = arith.constant 1.000000e+00 : f32
    %430 = vector.broadcast %cst_118 : f32 to vector<8x128xf32>
    %431 = arith.subf %430, %424 : vector<8x128xf32>
    %432 = arith.mulf %431, %429 : vector<8x128xf32>
    %433 = arith.mulf %424, %351 : vector<8x128xf32>
    %434 = arith.addf %432, %433 : vector<8x128xf32>
    %435 = tpu.concatenate %404, %377 in 1 : vector<8x128xf32>, vector<8x128xf32> -> vector<8x256xf32>
    %c0_119 = arith.constant 0 : index
    %c0_120 = arith.constant 0 : index
    %436 = vector.load %arg7[%c0_119, %c0_120] : memref<256x512xf32, #tpu.memory_space<vmem>>, vector<256x512xf32>
    %cst_121 = arith.constant dense<0.000000e+00> : vector<8x512xf32>
    %437 = tpu.matmul %435, %436, %cst_121 {dimension_numbers = #tpu.dot_dimension_numbers<[1], [0], [0], [1], [0, 0, 1, 1], [], []>} : vector<8x256xf32>, vector<256x512xf32>, vector<8x512xf32> -> vector<8x512xf32>
    %438 = arith.addf %437, %15 : vector<8x512xf32>
    %439 = vector.extract_strided_slice %438 {offsets = [0, 0], sizes = [8, 128], strides = [1, 1]} : vector<8x512xf32> to vector<8x128xf32>
    %440 = arith.negf %439 : vector<8x128xf32>
    %441 = math.exp %440 : vector<8x128xf32>
    %cst_122 = arith.constant 1.000000e+00 : f32
    %442 = vector.broadcast %cst_122 : f32 to vector<8x128xf32>
    %443 = arith.addf %442, %441 : vector<8x128xf32>
    %444 = arith.divf %442, %443 : vector<8x128xf32>
    %445 = vector.extract_strided_slice %438 {offsets = [0, 128], sizes = [8, 128], strides = [1, 1]} : vector<8x512xf32> to vector<8x128xf32>
    %446 = arith.negf %445 : vector<8x128xf32>
    %447 = math.exp %446 : vector<8x128xf32>
    %cst_123 = arith.constant 1.000000e+00 : f32
    %448 = vector.broadcast %cst_123 : f32 to vector<8x128xf32>
    %449 = arith.addf %448, %447 : vector<8x128xf32>
    %450 = arith.divf %448, %449 : vector<8x128xf32>
    %451 = vector.extract_strided_slice %438 {offsets = [0, 256], sizes = [8, 128], strides = [1, 1]} : vector<8x512xf32> to vector<8x128xf32>
    %452 = vector.extract_strided_slice %438 {offsets = [0, 384], sizes = [8, 128], strides = [1, 1]} : vector<8x512xf32> to vector<8x128xf32>
    %453 = arith.mulf %444, %452 : vector<8x128xf32>
    %454 = arith.addf %451, %453 : vector<8x128xf32>
    %455 = math.tanh %454 : vector<8x128xf32>
    %cst_124 = arith.constant 1.000000e+00 : f32
    %456 = vector.broadcast %cst_124 : f32 to vector<8x128xf32>
    %457 = arith.subf %456, %450 : vector<8x128xf32>
    %458 = arith.mulf %457, %455 : vector<8x128xf32>
    %459 = arith.mulf %450, %377 : vector<8x128xf32>
    %460 = arith.addf %458, %459 : vector<8x128xf32>
    %c32_125 = arith.constant 32 : index
    %c0_126 = arith.constant 0 : index
    %461 = vector.load %arg13[%c32_125, %c0_126] : memref<64x128xf32, #tpu.memory_space<vmem>>, vector<8x128xf32>
    tpu.vector_store %arg13[%c32_125, %c0_126], %460 {strides = array<i32>} : memref<64x128xf32, #tpu.memory_space<vmem>>, vector<8x128xf32>,
    %462 = tpu.concatenate %434, %404 in 1 : vector<8x128xf32>, vector<8x128xf32> -> vector<8x256xf32>
    %c0_127 = arith.constant 0 : index
    %c0_128 = arith.constant 0 : index
    %463 = vector.load %arg5[%c0_127, %c0_128] : memref<256x512xf32, #tpu.memory_space<vmem>>, vector<256x512xf32>
    %cst_129 = arith.constant dense<0.000000e+00> : vector<8x512xf32>
    %464 = tpu.matmul %462, %463, %cst_129 {dimension_numbers = #tpu.dot_dimension_numbers<[1], [0], [0], [1], [0, 0, 1, 1], [], []>} : vector<8x256xf32>, vector<256x512xf32>, vector<8x512xf32> -> vector<8x512xf32>
    %465 = arith.addf %464, %12 : vector<8x512xf32>
    %466 = vector.extract_strided_slice %465 {offsets = [0, 0], sizes = [8, 128], strides = [1, 1]} : vector<8x512xf32> to vector<8x128xf32>
    %467 = arith.negf %466 : vector<8x128xf32>
    %468 = math.exp %467 : vector<8x128xf32>
    %cst_130 = arith.constant 1.000000e+00 : f32
    %469 = vector.broadcast %cst_130 : f32 to vector<8x128xf32>
    %470 = arith.addf %469, %468 : vector<8x128xf32>
    %471 = arith.divf %469, %470 : vector<8x128xf32>
    %472 = vector.extract_strided_slice %465 {offsets = [0, 128], sizes = [8, 128], strides = [1, 1]} : vector<8x512xf32> to vector<8x128xf32>
    %473 = arith.negf %472 : vector<8x128xf32>
    %474 = math.exp %473 : vector<8x128xf32>
    %cst_131 = arith.constant 1.000000e+00 : f32
    %475 = vector.broadcast %cst_131 : f32 to vector<8x128xf32>
    %476 = arith.addf %475, %474 : vector<8x128xf32>
    %477 = arith.divf %475, %476 : vector<8x128xf32>
    %478 = vector.extract_strided_slice %465 {offsets = [0, 256], sizes = [8, 128], strides = [1, 1]} : vector<8x512xf32> to vector<8x128xf32>
    %479 = vector.extract_strided_slice %465 {offsets = [0, 384], sizes = [8, 128], strides = [1, 1]} : vector<8x512xf32> to vector<8x128xf32>
    %480 = arith.mulf %471, %479 : vector<8x128xf32>
    %481 = arith.addf %478, %480 : vector<8x128xf32>
    %482 = math.tanh %481 : vector<8x128xf32>
    %cst_132 = arith.constant 1.000000e+00 : f32
    %483 = vector.broadcast %cst_132 : f32 to vector<8x128xf32>
    %484 = arith.subf %483, %477 : vector<8x128xf32>
    %485 = arith.mulf %484, %482 : vector<8x128xf32>
    %486 = arith.mulf %477, %404 : vector<8x128xf32>
    %487 = arith.addf %485, %486 : vector<8x128xf32>
    %c48 = arith.constant 48 : index
    %c0_133 = arith.constant 0 : index
    %488 = vector.load %arg12[%c48, %c0_133] : memref<64x384xf32, #tpu.memory_space<vmem>>, vector<8x384xf32>
    %c0_134 = arith.constant 0 : index
    %c0_135 = arith.constant 0 : index
    %489 = vector.load %arg3[%c0_134, %c0_135] : memref<128x384xf32, #tpu.memory_space<vmem>>, vector<128x384xf32>
    %cst_136 = arith.constant dense<0.000000e+00> : vector<8x384xf32>
    %490 = tpu.matmul %434, %489, %cst_136 {dimension_numbers = #tpu.dot_dimension_numbers<[1], [0], [0], [1], [0, 0, 1, 1], [], []>} : vector<8x128xf32>, vector<128x384xf32>, vector<8x384xf32> -> vector<8x384xf32>
    %491 = arith.addf %490, %9 : vector<8x384xf32>
    %492 = vector.extract_strided_slice %488 {offsets = [0, 0], sizes = [8, 128], strides = [1, 1]} : vector<8x384xf32> to vector<8x128xf32>
    %493 = vector.extract_strided_slice %491 {offsets = [0, 0], sizes = [8, 128], strides = [1, 1]} : vector<8x384xf32> to vector<8x128xf32>
    %494 = arith.addf %492, %493 : vector<8x128xf32>
    %495 = arith.negf %494 : vector<8x128xf32>
    %496 = math.exp %495 : vector<8x128xf32>
    %cst_137 = arith.constant 1.000000e+00 : f32
    %497 = vector.broadcast %cst_137 : f32 to vector<8x128xf32>
    %498 = arith.addf %497, %496 : vector<8x128xf32>
    %499 = arith.divf %497, %498 : vector<8x128xf32>
    %500 = vector.extract_strided_slice %488 {offsets = [0, 128], sizes = [8, 128], strides = [1, 1]} : vector<8x384xf32> to vector<8x128xf32>
    %501 = vector.extract_strided_slice %491 {offsets = [0, 128], sizes = [8, 128], strides = [1, 1]} : vector<8x384xf32> to vector<8x128xf32>
    %502 = arith.addf %500, %501 : vector<8x128xf32>
    %503 = arith.negf %502 : vector<8x128xf32>
    %504 = math.exp %503 : vector<8x128xf32>
    %cst_138 = arith.constant 1.000000e+00 : f32
    %505 = vector.broadcast %cst_138 : f32 to vector<8x128xf32>
    %506 = arith.addf %505, %504 : vector<8x128xf32>
    %507 = arith.divf %505, %506 : vector<8x128xf32>
    %508 = vector.extract_strided_slice %488 {offsets = [0, 256], sizes = [8, 128], strides = [1, 1]} : vector<8x384xf32> to vector<8x128xf32>
    %509 = vector.extract_strided_slice %491 {offsets = [0, 256], sizes = [8, 128], strides = [1, 1]} : vector<8x384xf32> to vector<8x128xf32>
    %510 = arith.mulf %499, %509 : vector<8x128xf32>
    %511 = arith.addf %508, %510 : vector<8x128xf32>
    %512 = math.tanh %511 : vector<8x128xf32>
    %cst_139 = arith.constant 1.000000e+00 : f32
    %513 = vector.broadcast %cst_139 : f32 to vector<8x128xf32>
    %514 = arith.subf %513, %507 : vector<8x128xf32>
    %515 = arith.mulf %514, %512 : vector<8x128xf32>
    %516 = arith.mulf %507, %434 : vector<8x128xf32>
    %517 = arith.addf %515, %516 : vector<8x128xf32>
    %518 = tpu.concatenate %487, %460 in 1 : vector<8x128xf32>, vector<8x128xf32> -> vector<8x256xf32>
    %c0_140 = arith.constant 0 : index
    %c0_141 = arith.constant 0 : index
    %519 = vector.load %arg7[%c0_140, %c0_141] : memref<256x512xf32, #tpu.memory_space<vmem>>, vector<256x512xf32>
    %cst_142 = arith.constant dense<0.000000e+00> : vector<8x512xf32>
    %520 = tpu.matmul %518, %519, %cst_142 {dimension_numbers = #tpu.dot_dimension_numbers<[1], [0], [0], [1], [0, 0, 1, 1], [], []>} : vector<8x256xf32>, vector<256x512xf32>, vector<8x512xf32> -> vector<8x512xf32>
    %521 = arith.addf %520, %15 : vector<8x512xf32>
    %522 = vector.extract_strided_slice %521 {offsets = [0, 0], sizes = [8, 128], strides = [1, 1]} : vector<8x512xf32> to vector<8x128xf32>
    %523 = arith.negf %522 : vector<8x128xf32>
    %524 = math.exp %523 : vector<8x128xf32>
    %cst_143 = arith.constant 1.000000e+00 : f32
    %525 = vector.broadcast %cst_143 : f32 to vector<8x128xf32>
    %526 = arith.addf %525, %524 : vector<8x128xf32>
    %527 = arith.divf %525, %526 : vector<8x128xf32>
    %528 = vector.extract_strided_slice %521 {offsets = [0, 128], sizes = [8, 128], strides = [1, 1]} : vector<8x512xf32> to vector<8x128xf32>
    %529 = arith.negf %528 : vector<8x128xf32>
    %530 = math.exp %529 : vector<8x128xf32>
    %cst_144 = arith.constant 1.000000e+00 : f32
    %531 = vector.broadcast %cst_144 : f32 to vector<8x128xf32>
    %532 = arith.addf %531, %530 : vector<8x128xf32>
    %533 = arith.divf %531, %532 : vector<8x128xf32>
    %534 = vector.extract_strided_slice %521 {offsets = [0, 256], sizes = [8, 128], strides = [1, 1]} : vector<8x512xf32> to vector<8x128xf32>
    %535 = vector.extract_strided_slice %521 {offsets = [0, 384], sizes = [8, 128], strides = [1, 1]} : vector<8x512xf32> to vector<8x128xf32>
    %536 = arith.mulf %527, %535 : vector<8x128xf32>
    %537 = arith.addf %534, %536 : vector<8x128xf32>
    %538 = math.tanh %537 : vector<8x128xf32>
    %cst_145 = arith.constant 1.000000e+00 : f32
    %539 = vector.broadcast %cst_145 : f32 to vector<8x128xf32>
    %540 = arith.subf %539, %533 : vector<8x128xf32>
    %541 = arith.mulf %540, %538 : vector<8x128xf32>
    %542 = arith.mulf %533, %460 : vector<8x128xf32>
    %543 = arith.addf %541, %542 : vector<8x128xf32>
    %c40_146 = arith.constant 40 : index
    %c0_147 = arith.constant 0 : index
    %544 = vector.load %arg13[%c40_146, %c0_147] : memref<64x128xf32, #tpu.memory_space<vmem>>, vector<8x128xf32>
    tpu.vector_store %arg13[%c40_146, %c0_147], %543 {strides = array<i32>} : memref<64x128xf32, #tpu.memory_space<vmem>>, vector<8x128xf32>,
    %545 = tpu.concatenate %517, %487 in 1 : vector<8x128xf32>, vector<8x128xf32> -> vector<8x256xf32>
    %c0_148 = arith.constant 0 : index
    %c0_149 = arith.constant 0 : index
    %546 = vector.load %arg5[%c0_148, %c0_149] : memref<256x512xf32, #tpu.memory_space<vmem>>, vector<256x512xf32>
    %cst_150 = arith.constant dense<0.000000e+00> : vector<8x512xf32>
    %547 = tpu.matmul %545, %546, %cst_150 {dimension_numbers = #tpu.dot_dimension_numbers<[1], [0], [0], [1], [0, 0, 1, 1], [], []>} : vector<8x256xf32>, vector<256x512xf32>, vector<8x512xf32> -> vector<8x512xf32>
    %548 = arith.addf %547, %12 : vector<8x512xf32>
    %549 = vector.extract_strided_slice %548 {offsets = [0, 0], sizes = [8, 128], strides = [1, 1]} : vector<8x512xf32> to vector<8x128xf32>
    %550 = arith.negf %549 : vector<8x128xf32>
    %551 = math.exp %550 : vector<8x128xf32>
    %cst_151 = arith.constant 1.000000e+00 : f32
    %552 = vector.broadcast %cst_151 : f32 to vector<8x128xf32>
    %553 = arith.addf %552, %551 : vector<8x128xf32>
    %554 = arith.divf %552, %553 : vector<8x128xf32>
    %555 = vector.extract_strided_slice %548 {offsets = [0, 128], sizes = [8, 128], strides = [1, 1]} : vector<8x512xf32> to vector<8x128xf32>
    %556 = arith.negf %555 : vector<8x128xf32>
    %557 = math.exp %556 : vector<8x128xf32>
    %cst_152 = arith.constant 1.000000e+00 : f32
    %558 = vector.broadcast %cst_152 : f32 to vector<8x128xf32>
    %559 = arith.addf %558, %557 : vector<8x128xf32>
    %560 = arith.divf %558, %559 : vector<8x128xf32>
    %561 = vector.extract_strided_slice %548 {offsets = [0, 256], sizes = [8, 128], strides = [1, 1]} : vector<8x512xf32> to vector<8x128xf32>
    %562 = vector.extract_strided_slice %548 {offsets = [0, 384], sizes = [8, 128], strides = [1, 1]} : vector<8x512xf32> to vector<8x128xf32>
    %563 = arith.mulf %554, %562 : vector<8x128xf32>
    %564 = arith.addf %561, %563 : vector<8x128xf32>
    %565 = math.tanh %564 : vector<8x128xf32>
    %cst_153 = arith.constant 1.000000e+00 : f32
    %566 = vector.broadcast %cst_153 : f32 to vector<8x128xf32>
    %567 = arith.subf %566, %560 : vector<8x128xf32>
    %568 = arith.mulf %567, %565 : vector<8x128xf32>
    %569 = arith.mulf %560, %487 : vector<8x128xf32>
    %570 = arith.addf %568, %569 : vector<8x128xf32>
    %c56 = arith.constant 56 : index
    %c0_154 = arith.constant 0 : index
    %571 = vector.load %arg12[%c56, %c0_154] : memref<64x384xf32, #tpu.memory_space<vmem>>, vector<8x384xf32>
    %c0_155 = arith.constant 0 : index
    %c0_156 = arith.constant 0 : index
    %572 = vector.load %arg3[%c0_155, %c0_156] : memref<128x384xf32, #tpu.memory_space<vmem>>, vector<128x384xf32>
    %cst_157 = arith.constant dense<0.000000e+00> : vector<8x384xf32>
    %573 = tpu.matmul %517, %572, %cst_157 {dimension_numbers = #tpu.dot_dimension_numbers<[1], [0], [0], [1], [0, 0, 1, 1], [], []>} : vector<8x128xf32>, vector<128x384xf32>, vector<8x384xf32> -> vector<8x384xf32>
    %574 = arith.addf %573, %9 : vector<8x384xf32>
    %575 = vector.extract_strided_slice %571 {offsets = [0, 0], sizes = [8, 128], strides = [1, 1]} : vector<8x384xf32> to vector<8x128xf32>
    %576 = vector.extract_strided_slice %574 {offsets = [0, 0], sizes = [8, 128], strides = [1, 1]} : vector<8x384xf32> to vector<8x128xf32>
    %577 = arith.addf %575, %576 : vector<8x128xf32>
    %578 = arith.negf %577 : vector<8x128xf32>
    %579 = math.exp %578 : vector<8x128xf32>
    %cst_158 = arith.constant 1.000000e+00 : f32
    %580 = vector.broadcast %cst_158 : f32 to vector<8x128xf32>
    %581 = arith.addf %580, %579 : vector<8x128xf32>
    %582 = arith.divf %580, %581 : vector<8x128xf32>
    %583 = vector.extract_strided_slice %571 {offsets = [0, 128], sizes = [8, 128], strides = [1, 1]} : vector<8x384xf32> to vector<8x128xf32>
    %584 = vector.extract_strided_slice %574 {offsets = [0, 128], sizes = [8, 128], strides = [1, 1]} : vector<8x384xf32> to vector<8x128xf32>
    %585 = arith.addf %583, %584 : vector<8x128xf32>
    %586 = arith.negf %585 : vector<8x128xf32>
    %587 = math.exp %586 : vector<8x128xf32>
    %cst_159 = arith.constant 1.000000e+00 : f32
    %588 = vector.broadcast %cst_159 : f32 to vector<8x128xf32>
    %589 = arith.addf %588, %587 : vector<8x128xf32>
    %590 = arith.divf %588, %589 : vector<8x128xf32>
    %591 = vector.extract_strided_slice %571 {offsets = [0, 256], sizes = [8, 128], strides = [1, 1]} : vector<8x384xf32> to vector<8x128xf32>
    %592 = vector.extract_strided_slice %574 {offsets = [0, 256], sizes = [8, 128], strides = [1, 1]} : vector<8x384xf32> to vector<8x128xf32>
    %593 = arith.mulf %582, %592 : vector<8x128xf32>
    %594 = arith.addf %591, %593 : vector<8x128xf32>
    %595 = math.tanh %594 : vector<8x128xf32>
    %cst_160 = arith.constant 1.000000e+00 : f32
    %596 = vector.broadcast %cst_160 : f32 to vector<8x128xf32>
    %597 = arith.subf %596, %590 : vector<8x128xf32>
    %598 = arith.mulf %597, %595 : vector<8x128xf32>
    %599 = arith.mulf %590, %517 : vector<8x128xf32>
    %600 = arith.addf %598, %599 : vector<8x128xf32>
    %601 = tpu.concatenate %570, %543 in 1 : vector<8x128xf32>, vector<8x128xf32> -> vector<8x256xf32>
    %c0_161 = arith.constant 0 : index
    %c0_162 = arith.constant 0 : index
    %602 = vector.load %arg7[%c0_161, %c0_162] : memref<256x512xf32, #tpu.memory_space<vmem>>, vector<256x512xf32>
    %cst_163 = arith.constant dense<0.000000e+00> : vector<8x512xf32>
    %603 = tpu.matmul %601, %602, %cst_163 {dimension_numbers = #tpu.dot_dimension_numbers<[1], [0], [0], [1], [0, 0, 1, 1], [], []>} : vector<8x256xf32>, vector<256x512xf32>, vector<8x512xf32> -> vector<8x512xf32>
    %604 = arith.addf %603, %15 : vector<8x512xf32>
    %605 = vector.extract_strided_slice %604 {offsets = [0, 0], sizes = [8, 128], strides = [1, 1]} : vector<8x512xf32> to vector<8x128xf32>
    %606 = arith.negf %605 : vector<8x128xf32>
    %607 = math.exp %606 : vector<8x128xf32>
    %cst_164 = arith.constant 1.000000e+00 : f32
    %608 = vector.broadcast %cst_164 : f32 to vector<8x128xf32>
    %609 = arith.addf %608, %607 : vector<8x128xf32>
    %610 = arith.divf %608, %609 : vector<8x128xf32>
    %611 = vector.extract_strided_slice %604 {offsets = [0, 128], sizes = [8, 128], strides = [1, 1]} : vector<8x512xf32> to vector<8x128xf32>
    %612 = arith.negf %611 : vector<8x128xf32>
    %613 = math.exp %612 : vector<8x128xf32>
    %cst_165 = arith.constant 1.000000e+00 : f32
    %614 = vector.broadcast %cst_165 : f32 to vector<8x128xf32>
    %615 = arith.addf %614, %613 : vector<8x128xf32>
    %616 = arith.divf %614, %615 : vector<8x128xf32>
    %617 = vector.extract_strided_slice %604 {offsets = [0, 256], sizes = [8, 128], strides = [1, 1]} : vector<8x512xf32> to vector<8x128xf32>
    %618 = vector.extract_strided_slice %604 {offsets = [0, 384], sizes = [8, 128], strides = [1, 1]} : vector<8x512xf32> to vector<8x128xf32>
    %619 = arith.mulf %610, %618 : vector<8x128xf32>
    %620 = arith.addf %617, %619 : vector<8x128xf32>
    %621 = math.tanh %620 : vector<8x128xf32>
    %cst_166 = arith.constant 1.000000e+00 : f32
    %622 = vector.broadcast %cst_166 : f32 to vector<8x128xf32>
    %623 = arith.subf %622, %616 : vector<8x128xf32>
    %624 = arith.mulf %623, %621 : vector<8x128xf32>
    %625 = arith.mulf %616, %543 : vector<8x128xf32>
    %626 = arith.addf %624, %625 : vector<8x128xf32>
    %c48_167 = arith.constant 48 : index
    %c0_168 = arith.constant 0 : index
    %627 = vector.load %arg13[%c48_167, %c0_168] : memref<64x128xf32, #tpu.memory_space<vmem>>, vector<8x128xf32>
    tpu.vector_store %arg13[%c48_167, %c0_168], %626 {strides = array<i32>} : memref<64x128xf32, #tpu.memory_space<vmem>>, vector<8x128xf32>,
    %628 = tpu.concatenate %600, %570 in 1 : vector<8x128xf32>, vector<8x128xf32> -> vector<8x256xf32>
    %c0_169 = arith.constant 0 : index
    %c0_170 = arith.constant 0 : index
    %629 = vector.load %arg5[%c0_169, %c0_170] : memref<256x512xf32, #tpu.memory_space<vmem>>, vector<256x512xf32>
    %cst_171 = arith.constant dense<0.000000e+00> : vector<8x512xf32>
    %630 = tpu.matmul %628, %629, %cst_171 {dimension_numbers = #tpu.dot_dimension_numbers<[1], [0], [0], [1], [0, 0, 1, 1], [], []>} : vector<8x256xf32>, vector<256x512xf32>, vector<8x512xf32> -> vector<8x512xf32>
    %631 = arith.addf %630, %12 : vector<8x512xf32>
    %632 = vector.extract_strided_slice %631 {offsets = [0, 0], sizes = [8, 128], strides = [1, 1]} : vector<8x512xf32> to vector<8x128xf32>
    %633 = arith.negf %632 : vector<8x128xf32>
    %634 = math.exp %633 : vector<8x128xf32>
    %cst_172 = arith.constant 1.000000e+00 : f32
    %635 = vector.broadcast %cst_172 : f32 to vector<8x128xf32>
    %636 = arith.addf %635, %634 : vector<8x128xf32>
    %637 = arith.divf %635, %636 : vector<8x128xf32>
    %638 = vector.extract_strided_slice %631 {offsets = [0, 128], sizes = [8, 128], strides = [1, 1]} : vector<8x512xf32> to vector<8x128xf32>
    %639 = arith.negf %638 : vector<8x128xf32>
    %640 = math.exp %639 : vector<8x128xf32>
    %cst_173 = arith.constant 1.000000e+00 : f32
    %641 = vector.broadcast %cst_173 : f32 to vector<8x128xf32>
    %642 = arith.addf %641, %640 : vector<8x128xf32>
    %643 = arith.divf %641, %642 : vector<8x128xf32>
    %644 = vector.extract_strided_slice %631 {offsets = [0, 256], sizes = [8, 128], strides = [1, 1]} : vector<8x512xf32> to vector<8x128xf32>
    %645 = vector.extract_strided_slice %631 {offsets = [0, 384], sizes = [8, 128], strides = [1, 1]} : vector<8x512xf32> to vector<8x128xf32>
    %646 = arith.mulf %637, %645 : vector<8x128xf32>
    %647 = arith.addf %644, %646 : vector<8x128xf32>
    %648 = math.tanh %647 : vector<8x128xf32>
    %cst_174 = arith.constant 1.000000e+00 : f32
    %649 = vector.broadcast %cst_174 : f32 to vector<8x128xf32>
    %650 = arith.subf %649, %643 : vector<8x128xf32>
    %651 = arith.mulf %650, %648 : vector<8x128xf32>
    %652 = arith.mulf %643, %570 : vector<8x128xf32>
    %653 = arith.addf %651, %652 : vector<8x128xf32>
    %654 = tpu.concatenate %653, %626 in 1 : vector<8x128xf32>, vector<8x128xf32> -> vector<8x256xf32>
    %c0_175 = arith.constant 0 : index
    %c0_176 = arith.constant 0 : index
    %655 = vector.load %arg7[%c0_175, %c0_176] : memref<256x512xf32, #tpu.memory_space<vmem>>, vector<256x512xf32>
    %cst_177 = arith.constant dense<0.000000e+00> : vector<8x512xf32>
    %656 = tpu.matmul %654, %655, %cst_177 {dimension_numbers = #tpu.dot_dimension_numbers<[1], [0], [0], [1], [0, 0, 1, 1], [], []>} : vector<8x256xf32>, vector<256x512xf32>, vector<8x512xf32> -> vector<8x512xf32>
    %657 = arith.addf %656, %15 : vector<8x512xf32>
    %658 = vector.extract_strided_slice %657 {offsets = [0, 0], sizes = [8, 128], strides = [1, 1]} : vector<8x512xf32> to vector<8x128xf32>
    %659 = arith.negf %658 : vector<8x128xf32>
    %660 = math.exp %659 : vector<8x128xf32>
    %cst_178 = arith.constant 1.000000e+00 : f32
    %661 = vector.broadcast %cst_178 : f32 to vector<8x128xf32>
    %662 = arith.addf %661, %660 : vector<8x128xf32>
    %663 = arith.divf %661, %662 : vector<8x128xf32>
    %664 = vector.extract_strided_slice %657 {offsets = [0, 128], sizes = [8, 128], strides = [1, 1]} : vector<8x512xf32> to vector<8x128xf32>
    %665 = arith.negf %664 : vector<8x128xf32>
    %666 = math.exp %665 : vector<8x128xf32>
    %cst_179 = arith.constant 1.000000e+00 : f32
    %667 = vector.broadcast %cst_179 : f32 to vector<8x128xf32>
    %668 = arith.addf %667, %666 : vector<8x128xf32>
    %669 = arith.divf %667, %668 : vector<8x128xf32>
    %670 = vector.extract_strided_slice %657 {offsets = [0, 256], sizes = [8, 128], strides = [1, 1]} : vector<8x512xf32> to vector<8x128xf32>
    %671 = vector.extract_strided_slice %657 {offsets = [0, 384], sizes = [8, 128], strides = [1, 1]} : vector<8x512xf32> to vector<8x128xf32>
    %672 = arith.mulf %663, %671 : vector<8x128xf32>
    %673 = arith.addf %670, %672 : vector<8x128xf32>
    %674 = math.tanh %673 : vector<8x128xf32>
    %cst_180 = arith.constant 1.000000e+00 : f32
    %675 = vector.broadcast %cst_180 : f32 to vector<8x128xf32>
    %676 = arith.subf %675, %669 : vector<8x128xf32>
    %677 = arith.mulf %676, %674 : vector<8x128xf32>
    %678 = arith.mulf %669, %626 : vector<8x128xf32>
    %679 = arith.addf %677, %678 : vector<8x128xf32>
    %c56_181 = arith.constant 56 : index
    %c0_182 = arith.constant 0 : index
    %680 = vector.load %arg13[%c56_181, %c0_182] : memref<64x128xf32, #tpu.memory_space<vmem>>, vector<8x128xf32>
    tpu.vector_store %arg13[%c56_181, %c0_182], %679 {strides = array<i32>} : memref<64x128xf32, #tpu.memory_space<vmem>>, vector<8x128xf32>,
    %c0_183 = arith.constant 0 : index
    %c0_184 = arith.constant 0 : index
    %681 = vector.load %arg13[%c0_183, %c0_184] : memref<64x128xf32, #tpu.memory_space<vmem>>, vector<64x128xf32>
    %c0_185 = arith.constant 0 : index
    %c0_186 = arith.constant 0 : index
    %682 = vector.load %arg9[%c0_185, %c0_186] : memref<128x128xf32, #tpu.memory_space<vmem>>, vector<128x128xf32>
    %cst_187 = arith.constant dense<0.000000e+00> : vector<64x128xf32>
    %683 = tpu.matmul %681, %682, %cst_187 {dimension_numbers = #tpu.dot_dimension_numbers<[1], [0], [0], [1], [0, 0, 1, 1], [], []>} : vector<64x128xf32>, vector<128x128xf32>, vector<64x128xf32> -> vector<64x128xf32>
    %c0_188 = arith.constant 0 : index
    %c0_189 = arith.constant 0 : index
    %684 = vector.load %arg10[%c0_188, %c0_189] : memref<1x128xf32, #tpu.memory_space<vmem>>, vector<1x128xf32>
    %685 = vector.broadcast %684 : vector<1x128xf32> to vector<64x128xf32>
    %686 = arith.addf %683, %685 : vector<64x128xf32>
    %c0_190 = arith.constant 0 : index
    %c0_191 = arith.constant 0 : index
    %687 = vector.load %arg11[%c0_190, %c0_191] : memref<64x128xf32, #tpu.memory_space<vmem>>, vector<64x128xf32>
    tpu.vector_store %arg11[%c0_190, %c0_191], %686 {strides = array<i32>} : memref<64x128xf32, #tpu.memory_space<vmem>>, vector<64x128xf32>,
    return
  }
}

</mosaic_0001>

<llo_original>
// kernel: tpu_custom_call.1
$region0: #{tpu_custom_call.1}
  #allocation0 [shape = 'u32[]', space=smem, size = 0x4, offset = 0x4, fixed_abs, tag = 'smem constant byte address 0x4 - core index']
  #allocation1 [shape = 'u32[144,128]{1,0:T(1,128)}', space=vmem, size = 0x12000, scoped, tag = 'internal scratch']
  #allocation2 [shape = 'f32[64,384]{1,0:T(8,128)}', space=vmem, size = 0x18000, scoped, tag = 'scratch operand']
  #allocation3 [shape = 'f32[64,128]{1,0:T(8,128)}', space=vmem, size = 0x8000, scoped, tag = 'scratch operand']
  %s0 = inlined_call_operand.vmem [shape: f32[64,32], index: 0, kind: input, shape index: {}]
  %s1 = inlined_call_operand.hbm [shape: f32[32,384], index: 1, kind: input, shape index: {}]
  %s2 = inlined_call_operand.hbm [shape: f32[1,384], index: 2, kind: input, shape index: {}]
  %s3 = inlined_call_operand.hbm [shape: f32[128,384], index: 3, kind: input, shape index: {}]
  %s4 = inlined_call_operand.hbm [shape: f32[1,384], index: 4, kind: input, shape index: {}]
  %s5 = inlined_call_operand.hbm [shape: f32[256,512], index: 5, kind: input, shape index: {}]
  %s6 = inlined_call_operand.hbm [shape: f32[1,512], index: 6, kind: input, shape index: {}]
  %s7 = inlined_call_operand.hbm [shape: f32[256,512], index: 7, kind: input, shape index: {}]
  %s8 = inlined_call_operand.hbm [shape: f32[1,512], index: 8, kind: input, shape index: {}]
  %s9 = inlined_call_operand.vmem [shape: f32[128,128], index: 9, kind: input, shape index: {}]
  %s10 = inlined_call_operand.vmem [shape: f32[1,128], index: 10, kind: input, shape index: {}]
  %s11 = inlined_call_operand.hbm [shape: f32[64,128], index: 11, kind: output, shape index: {}]
  %s12 = sld [smem:[#allocation0]]
  $region86: #{tpu_custom_call.1} parent=0
    _
  %s14 = ssub.s32 1, %s12
  %s15 = scalar_select 0, %s14, %s12
  $region1: #{tpu_custom_call.1} parent=0
    #allocation4 [shape = 'u8[49152]{0}', space=vmem, size = 0xc000, scoped, tag = 'input window, operand 1, single buffered']
    #allocation5 [shape = 's32[1]{0}', space=sflag, size = 0x4, scoped, tag = 'scoped memory for tpu_custom_call.1']
    #allocation6 [shape = 's32[1]{0}', space=sflag, size = 0x4, scoped, tag = 'scoped memory for tpu_custom_call.1']
    #allocation7 [shape = 'u8[1536]{0}', space=vmem, size = 0x800, scoped, tag = 'input window, operand 2, single buffered']
    #allocation8 [shape = 's32[1]{0}', space=sflag, size = 0x4, scoped, tag = 'scoped memory for tpu_custom_call.1']
    #allocation9 [shape = 'u8[196608]{0}', space=vmem, size = 0x30000, scoped, tag = 'input window, operand 3, single buffered']
    #allocation10 [shape = 'u8[1536]{0}', space=vmem, size = 0x800, scoped, tag = 'input window, operand 4, single buffered']
    #allocation11 [shape = 's32[1]{0}', space=sflag, size = 0x4, scoped, tag = 'scoped memory for tpu_custom_call.1']
    #allocation12 [shape = 'u8[524288]{0}', space=vmem, size = 0x80000, scoped, tag = 'input window, operand 5, single buffered']
    #allocation13 [shape = 'u8[2048]{0}', space=vmem, size = 0x800, scoped, tag = 'input window, operand 6, single buffered']
    #allocation14 [shape = 's32[1]{0}', space=sflag, size = 0x4, scoped, tag = 'scoped memory for tpu_custom_call.1']
    #allocation15 [shape = 'u8[524288]{0}', space=vmem, size = 0x80000, scoped, tag = 'input window, operand 7, single buffered']
    #allocation16 [shape = 'u8[2048]{0}', space=vmem, size = 0x800, scoped, tag = 'input window, operand 8, single buffered']
    #allocation17 [shape = 's32[1]{0}', space=sflag, size = 0x4, scoped, tag = 'scoped memory for tpu_custom_call.1']
    #allocation18 [shape = 'u8[32768]{0}', space=vmem, size = 0x8000, scoped, tag = 'output window, operand 0, single buffered']
    %16 = vsyncpa [#allocation5], 0
    %17 = vsyncpa [#allocation8], 0
    %18 = vsyncpa [#allocation11], 0
    %19 = vsyncpa [#allocation14], 0
    %20 = vsyncpa [#allocation17], 0
    %21 = vsyncpa [#allocation6], 0
    // Predicated region
    $region2: #{tpu_custom_call.1} parent=1 // pred_check
      _
    $region3: #{tpu_custom_call.1} parent=1 // pred_check_branch
      %23 = sbr.rel (0) target = $region5
    $region4: #{tpu_custom_call.1} parent=1 // pred_region
      _
    $region5: #{tpu_custom_call.1} parent=1 // pred_fallthru
      _
    // Predicated region
    $region6: #{tpu_custom_call.1} parent=1 // pred_check
      _
    $region7: #{tpu_custom_call.1} parent=1 // pred_check_branch
      %25 = sbr.rel (0) target = $region9
    $region8: #{tpu_custom_call.1} parent=1 // pred_region
      %s27 = ssub.s32 1536, 1536
      %28 = vsyncadd [#allocation5], %s27
      %s29 = sshll.u32 [#allocation4], 4
      %s30 = int_to_ptr.vmem [resolvable:$true] %s29
      %35 = dma.hbm_to_vmem [thread:$0]  %s1, 1536, %s30, [#allocation5], 384, 384, 24
    $region9: #{tpu_custom_call.1} parent=1 // pred_fallthru
      _
    // Predicated region
    $region10: #{tpu_custom_call.1} parent=1 // pred_check
      _
    $region11: #{tpu_custom_call.1} parent=1 // pred_check_branch
      %37 = sbr.rel (0) target = $region13
    $region12: #{tpu_custom_call.1} parent=1 // pred_region
      %s39 = ssub.s32 48, 48
      %40 = vsyncadd [#allocation8], %s39
      %s42 = sshll.u32 [#allocation7], 4
      %s43 = int_to_ptr.vmem [resolvable:$true] %s42
      %45 = dma.hbm_to_vmem [thread:$0]  %s2, 48, %s43, [#allocation8]
    $region13: #{tpu_custom_call.1} parent=1 // pred_fallthru
      _
    // Predicated region
    $region14: #{tpu_custom_call.1} parent=1 // pred_check
      _
    $region15: #{tpu_custom_call.1} parent=1 // pred_check_branch
      %47 = sbr.rel (0) target = $region17
    $region16: #{tpu_custom_call.1} parent=1 // pred_region
      %s49 = ssub.s32 6144, 6144
      %50 = vsyncadd [#allocation8], %s49
      %s51 = sshll.u32 [#allocation9], 4
      %s52 = int_to_ptr.vmem [resolvable:$true] %s51
      %57 = dma.hbm_to_vmem [thread:$0]  %s3, 6144, %s52, [#allocation8], 384, 384, 24
    $region17: #{tpu_custom_call.1} parent=1 // pred_fallthru
      _
    // Predicated region
    $region18: #{tpu_custom_call.1} parent=1 // pred_check
      _
    $region19: #{tpu_custom_call.1} parent=1 // pred_check_branch
      %59 = sbr.rel (0) target = $region21
    $region20: #{tpu_custom_call.1} parent=1 // pred_region
      %s61 = ssub.s32 48, 48
      %62 = vsyncadd [#allocation11], %s61
      %s64 = sshll.u32 [#allocation10], 4
      %s65 = int_to_ptr.vmem [resolvable:$true] %s64
      %67 = dma.hbm_to_vmem [thread:$0]  %s4, 48, %s65, [#allocation11]
    $region21: #{tpu_custom_call.1} parent=1 // pred_fallthru
      _
    // Predicated region
    $region22: #{tpu_custom_call.1} parent=1 // pred_check
      _
    $region23: #{tpu_custom_call.1} parent=1 // pred_check_branch
      %69 = sbr.rel (0) target = $region25
    $region24: #{tpu_custom_call.1} parent=1 // pred_region
      %s71 = ssub.s32 16384, 16384
      %72 = vsyncadd [#allocation11], %s71
      %s73 = sshll.u32 [#allocation12], 4
      %s74 = int_to_ptr.vmem [resolvable:$true] %s73
      %79 = dma.hbm_to_vmem [thread:$0]  %s5, 16384, %s74, [#allocation11], 512, 512, 32
    $region25: #{tpu_custom_call.1} parent=1 // pred_fallthru
      _
    // Predicated region
    $region26: #{tpu_custom_call.1} parent=1 // pred_check
      _
    $region27: #{tpu_custom_call.1} parent=1 // pred_check_branch
      %81 = sbr.rel (0) target = $region29
    $region28: #{tpu_custom_call.1} parent=1 // pred_region
      %s83 = ssub.s32 64, 64
      %84 = vsyncadd [#allocation14], %s83
      %s86 = sshll.u32 [#allocation13], 4
      %s87 = int_to_ptr.vmem [resolvable:$true] %s86
      %89 = dma.hbm_to_vmem [thread:$0]  %s6, 64, %s87, [#allocation14]
    $region29: #{tpu_custom_call.1} parent=1 // pred_fallthru
      _
    // Predicated region
    $region30: #{tpu_custom_call.1} parent=1 // pred_check
      _
    $region31: #{tpu_custom_call.1} parent=1 // pred_check_branch
      %91 = sbr.rel (0) target = $region33
    $region32: #{tpu_custom_call.1} parent=1 // pred_region
      %s93 = ssub.s32 16384, 16384
      %94 = vsyncadd [#allocation14], %s93
      %s95 = sshll.u32 [#allocation15], 4
      %s96 = int_to_ptr.vmem [resolvable:$true] %s95
      %101 = dma.hbm_to_vmem [thread:$0]  %s7, 16384, %s96, [#allocation14], 512, 512, 32
    $region33: #{tpu_custom_call.1} parent=1 // pred_fallthru
      _
    // Predicated region
    $region34: #{tpu_custom_call.1} parent=1 // pred_check
      _
    $region35: #{tpu_custom_call.1} parent=1 // pred_check_branch
      %103 = sbr.rel (0) target = $region37
    $region36: #{tpu_custom_call.1} parent=1 // pred_region
      %s105 = ssub.s32 64, 64
      %106 = vsyncadd [#allocation17], %s105
      %s108 = sshll.u32 [#allocation16], 4
      %s109 = int_to_ptr.vmem [resolvable:$true] %s108
      %111 = dma.hbm_to_vmem [thread:$0]  %s8, 64, %s109, [#allocation17]
    $region37: #{tpu_custom_call.1} parent=1 // pred_fallthru
      _
    // Predicated region
    $region38: #{tpu_custom_call.1} parent=1 // pred_check
      _
    $region39: #{tpu_custom_call.1} parent=1 // pred_check_branch
      %113 = sbr.rel (0) target = $region41
    $region40: #{tpu_custom_call.1} parent=1 // pred_region
      _
    $region41: #{tpu_custom_call.1} parent=1 // pred_fallthru
      _
    // Predicated region
    $region42: #{tpu_custom_call.1} parent=1 // pred_check
      _
    $region43: #{tpu_custom_call.1} parent=1 // pred_check_branch
      %115 = sbr.rel (0) target = $region45
    $region44: #{tpu_custom_call.1} parent=1 // pred_region
      _
    $region45: #{tpu_custom_call.1} parent=1 // pred_fallthru
      _
    // Predicated region
    $region46: #{tpu_custom_call.1} parent=1 // pred_check
      _
    $region47: #{tpu_custom_call.1} parent=1 // pred_check_branch
      %117 = sbr.rel (0) target = $region49
    $region48: #{tpu_custom_call.1} parent=1 // pred_region
      %118 = dma.done [#allocation5], 1536
    $region49: #{tpu_custom_call.1} parent=1 // pred_fallthru
      _
    // Predicated region
    $region50: #{tpu_custom_call.1} parent=1 // pred_check
      _
    $region51: #{tpu_custom_call.1} parent=1 // pred_check_branch
      %120 = sbr.rel (0) target = $region53
    $region52: #{tpu_custom_call.1} parent=1 // pred_region
      %121 = dma.done [#allocation8], 48
    $region53: #{tpu_custom_call.1} parent=1 // pred_fallthru
      _
    // Predicated region
    $region54: #{tpu_custom_call.1} parent=1 // pred_check
      _
    $region55: #{tpu_custom_call.1} parent=1 // pred_check_branch
      %123 = sbr.rel (0) target = $region57
    $region56: #{tpu_custom_call.1} parent=1 // pred_region
      %124 = dma.done [#allocation8], 6144
    $region57: #{tpu_custom_call.1} parent=1 // pred_fallthru
      _
    // Predicated region
    $region58: #{tpu_custom_call.1} parent=1 // pred_check
      _
    $region59: #{tpu_custom_call.1} parent=1 // pred_check_branch
      %126 = sbr.rel (0) target = $region61
    $region60: #{tpu_custom_call.1} parent=1 // pred_region
      %127 = dma.done [#allocation11], 48
    $region61: #{tpu_custom_call.1} parent=1 // pred_fallthru
      _
    // Predicated region
    $region62: #{tpu_custom_call.1} parent=1 // pred_check
      _
    $region63: #{tpu_custom_call.1} parent=1 // pred_check_branch
      %129 = sbr.rel (0) target = $region65
    $region64: #{tpu_custom_call.1} parent=1 // pred_region
      %130 = dma.done [#allocation11], 16384
    $region65: #{tpu_custom_call.1} parent=1 // pred_fallthru
      _
    // Predicated region
    $region66: #{tpu_custom_call.1} parent=1 // pred_check
      _
    $region67: #{tpu_custom_call.1} parent=1 // pred_check_branch
      %132 = sbr.rel (0) target = $region69
    $region68: #{tpu_custom_call.1} parent=1 // pred_region
      %133 = dma.done [#allocation14], 64
    $region69: #{tpu_custom_call.1} parent=1 // pred_fallthru
      _
    // Predicated region
    $region70: #{tpu_custom_call.1} parent=1 // pred_check
      _
    $region71: #{tpu_custom_call.1} parent=1 // pred_check_branch
      %135 = sbr.rel (0) target = $region73
    $region72: #{tpu_custom_call.1} parent=1 // pred_region
      %136 = dma.done [#allocation14], 16384
    $region73: #{tpu_custom_call.1} parent=1 // pred_fallthru
      _
    // Predicated region
    $region74: #{tpu_custom_call.1} parent=1 // pred_check
      _
    $region75: #{tpu_custom_call.1} parent=1 // pred_check_branch
      %138 = sbr.rel (0) target = $region77
    $region76: #{tpu_custom_call.1} parent=1 // pred_region
      %139 = dma.done [#allocation17], 64
    $region77: #{tpu_custom_call.1} parent=1 // pred_fallthru
      _
    %v140 = vld [vmem:[%s0] sm:$0xff]
    %v141 = vld [vmem:[%s0 + $0x8] sm:$0xff]
    %v142 = vld [vmem:[%s0 + $0x10] sm:$0xff]
    %v143 = vld [vmem:[%s0 + $0x18] sm:$0xff]
    %v144 = vld [vmem:[%s0 + $0x20] sm:$0xff]
    %v145 = vld [vmem:[%s0 + $0x28] sm:$0xff]
    %v146 = vld [vmem:[%s0 + $0x30] sm:$0xff]
    %v147 = vld [vmem:[%s0 + $0x38] sm:$0xff]
    %v148 = vld [vmem:[#allocation4] sm:$0xff]
    %v149 = vld [vmem:[#allocation4 + $0x8] sm:$0xff]
    %v150 = vld [vmem:[#allocation4 + $0x10] sm:$0xff]
    %v151 = vld [vmem:[#allocation4 + $0x18] sm:$0xff]
    %v152 = vld [vmem:[#allocation4 + $0x20] sm:$0xff]
    %v153 = vld [vmem:[#allocation4 + $0x28] sm:$0xff]
    %v154 = vld [vmem:[#allocation4 + $0x30] sm:$0xff]
    %v155 = vld [vmem:[#allocation4 + $0x38] sm:$0xff]
    %v156 = vld [vmem:[#allocation4 + $0x40] sm:$0xff]
    %v157 = vld [vmem:[#allocation4 + $0x48] sm:$0xff]
    %v158 = vld [vmem:[#allocation4 + $0x50] sm:$0xff]
    %v159 = vld [vmem:[#allocation4 + $0x58] sm:$0xff]
    %v160 = vld [vmem:[#allocation7] sm:$0x7]
    %v162 = vlaneseq
    %v163 = vshrl.u32 %v162, 7
    %v164 = vsub.s32 0, %v163
    %v165 = vrot.slane %v160, %v164
    %v166 = vlaneseq
    %v167 = vshrl.u32 %v166, 7
    %v168 = vsub.s32 1, %v167
    %v169 = vrot.slane %v160, %v168
    %v170 = vlaneseq
    %v171 = vshrl.u32 %v170, 7
    %v172 = vsub.s32 2, %v171
    %v173 = vrot.slane %v160, %v172
    %vm177 = vcmask 261120
    %v179 = vsel %vm177, %v140, 0
    %v182 = vsel %vm177, %v141, 0
    %v185 = vsel %vm177, %v142, 0
    %v188 = vsel %vm177, %v143, 0
    %v191 = vsel %vm177, %v144, 0
    %v194 = vsel %vm177, %v145, 0
    %v197 = vsel %vm177, %v146, 0
    %v200 = vsel %vm177, %v147, 0
    %202 = vmatprep.subr.mxu0 %v149
    %203 = vmatpush1.msra.mxu0 %v148
    %204 = vmatprep.subr.mxu0 %v152
    %205 = vmatpush1.msra.mxu0 %v151
    %206 = vmatprep.subr.mxu0 %v155
    %207 = vmatpush1.msra.mxu0 %v154
    %208 = vmatprep.subr.mxu0 %v158
    %209 = vmatpush1.msra.mxu0 %v157
    %210 = vmatprep.subr.mxu0 0.0
    %211 = vmatpush1.msra.mxu0 0.0
    %212 = vmatprep.subr.mxu0 0.0
    %213 = vmatpush1.msra.mxu0 0.0
    %214 = vmatprep.subr.mxu0 0.0
    %215 = vmatpush1.msra.mxu0 0.0
    %216 = vmatprep.subr.mxu0 0.0
    %217 = vmatpush1.msra.mxu0 0.0
    %218 = vmatprep.subr.mxu0 0.0
    %219 = vmatpush1.msra.mxu0 0.0
    %220 = vmatprep.subr.mxu0 0.0
    %221 = vmatpush1.msra.mxu0 0.0
    %222 = vmatprep.subr.mxu0 0.0
    %223 = vmatpush1.msra.mxu0 0.0
    %224 = vmatprep.subr.mxu0 0.0
    %225 = vmatpush1.msra.mxu0 0.0
    %226 = vmatprep.subr.mxu0 0.0
    %227 = vmatpush1.msra.mxu0 0.0
    %228 = vmatprep.subr.mxu0 0.0
    %229 = vmatpush1.msra.mxu0 0.0
    %230 = vmatprep.subr.mxu0 0.0
    %231 = vmatpush1.msra.mxu0 0.0
    %232 = vmatprep.subr.mxu0 0.0
    %233 = vmatpush1.msra.mxu0 0.0
    %234 = vmatprep.subr.mxu0 0.0
    %235 = vmatpush1.msra.mxu0 0.0
    %236 = vmatprep.subr.mxu0 0.0
    %237 = vmatpush1.msra.mxu0 0.0
    %238 = vmatprep.subr.mxu0 0.0
    %239 = vmatpush1.msra.mxu0 0.0
    %240 = vmatprep.subr.mxu0 0.0
    %241 = vmatpush1.msra.mxu0 0.0
    %242 = vmatprep.subr.mxu0 0.0
    %243 = vmatpush1.msra.mxu0 0.0
    %244 = vmatprep.subr.mxu0 0.0
    %245 = vmatpush1.msra.mxu0 0.0
    %246 = vmatprep.subr.mxu0 0.0
    %247 = vmatpush1.msra.mxu0 0.0
    %248 = vmatprep.subr.mxu0 0.0
    %249 = vmatpush1.msra.mxu0 0.0
    %250 = vmatprep.subr.mxu0 0.0
    %251 = vmatpush1.msra.mxu0 0.0
    %252 = vmatprep.subr.mxu0 0.0
    %253 = vmatpush1.msra.mxu0 0.0
    %254 = vmatprep.subr.mxu0 0.0
    %255 = vmatpush1.msra.mxu0 0.0
    %256 = vmatprep.subr.mxu0 0.0
    %257 = vmatpush1.msra.mxu0 0.0
    %258 = vmatprep.subr.mxu0 0.0
    %259 = vmatpush1.msra.mxu0 0.0
    %260 = vmatprep.subr.mxu0 0.0
    %261 = vmatpush1.msra.mxu0 0.0
    %262 = vmatprep.subr.mxu0 0.0
    %263 = vmatpush1.msra.mxu0 0.0
    %264 = vmatprep.subr.mxu0 0.0
    %265 = vmatpush1.msra.mxu0 0.0
    %266 = vmatprep.mubr.f32.mxu0 0.0
    %267 = vmatmul.mubr.f32.gmra.mrb[0].mxu0 %v179
    %v268 = vpop.f32.mrb[0].mxu0
    %v269 = vadd.f32 %v165, %v268
    %v270 = vpop.f32.mrb[0].mxu0
    %v271 = vadd.f32 %v169, %v270
    %272 = vmatprep.mubr.f32.mxu0 0.0
    %273 = vmatmul.mubr.f32.gmra.mrb[0].mxu0 %v182
    %v274 = vpop.f32.mrb[0].mxu0
    %v275 = vadd.f32 %v165, %v274
    %v276 = vpop.f32.mrb[0].mxu0
    %v277 = vadd.f32 %v169, %v276
    %278 = vmatprep.mubr.f32.mxu0 0.0
    %279 = vmatmul.mubr.f32.gmra.mrb[0].mxu0 %v185
    %v280 = vpop.f32.mrb[0].mxu0
    %v281 = vadd.f32 %v165, %v280
    %v282 = vpop.f32.mrb[0].mxu0
    %v283 = vadd.f32 %v169, %v282
    %284 = vmatprep.mubr.f32.mxu0 0.0
    %285 = vmatmul.mubr.f32.gmra.mrb[0].mxu0 %v188
    %v286 = vpop.f32.mrb[0].mxu0
    %v287 = vadd.f32 %v165, %v286
    %v288 = vpop.f32.mrb[0].mxu0
    %v289 = vadd.f32 %v169, %v288
    %290 = vmatprep.mubr.f32.mxu0 0.0
    %291 = vmatmul.mubr.f32.gmra.mrb[0].mxu0 %v191
    %v292 = vpop.f32.mrb[0].mxu0
    %v293 = vadd.f32 %v165, %v292
    %v294 = vpop.f32.mrb[0].mxu0
    %v295 = vadd.f32 %v169, %v294
    %296 = vmatprep.mubr.f32.mxu0 0.0
    %297 = vmatmul.mubr.f32.gmra.mrb[0].mxu0 %v194
    %v298 = vpop.f32.mrb[0].mxu0
    %v299 = vadd.f32 %v165, %v298
    %v300 = vpop.f32.mrb[0].mxu0
    %v301 = vadd.f32 %v169, %v300
    %302 = vmatprep.mubr.f32.mxu0 0.0
    %303 = vmatmul.mubr.f32.gmra.mrb[0].mxu0 %v197
    %v304 = vpop.f32.mrb[0].mxu0
    %v305 = vadd.f32 %v165, %v304
    %v306 = vpop.f32.mrb[0].mxu0
    %v307 = vadd.f32 %v169, %v306
    %308 = vmatprep.mubr.f32.mxu0 0.0
    %309 = vmatmul.mubr.f32.gmra.mrb[0].mxu0 %v200
    %v310 = vpop.f32.mrb[0].mxu0
    %v311 = vadd.f32 %v165, %v310
    %v312 = vpop.f32.mrb[0].mxu0
    %v313 = vadd.f32 %v169, %v312
    %314 = vdwg.mxu0
    %315 = vmatprep.subr.mxu0 0.0
    %316 = vmatpush1.msra.mxu0 %v150
    %317 = vmatprep.subr.mxu0 0.0
    %318 = vmatpush1.msra.mxu0 %v153
    %319 = vmatprep.subr.mxu0 0.0
    %320 = vmatpush1.msra.mxu0 %v156
    %321 = vmatprep.subr.mxu0 0.0
    %322 = vmatpush1.msra.mxu0 %v159
    %323 = vmatprep.subr.mxu0 0.0
    %324 = vmatpush1.msra.mxu0 0.0
    %325 = vmatprep.subr.mxu0 0.0
    %326 = vmatpush1.msra.mxu0 0.0
    %327 = vmatprep.subr.mxu0 0.0
    %328 = vmatpush1.msra.mxu0 0.0
    %329 = vmatprep.subr.mxu0 0.0
    %330 = vmatpush1.msra.mxu0 0.0
    %331 = vmatprep.subr.mxu0 0.0
    %332 = vmatpush1.msra.mxu0 0.0
    %333 = vmatprep.subr.mxu0 0.0
    %334 = vmatpush1.msra.mxu0 0.0
    %335 = vmatprep.subr.mxu0 0.0
    %336 = vmatpush1.msra.mxu0 0.0
    %337 = vmatprep.subr.mxu0 0.0
    %338 = vmatpush1.msra.mxu0 0.0
    %339 = vmatprep.subr.mxu0 0.0
    %340 = vmatpush1.msra.mxu0 0.0
    %341 = vmatprep.subr.mxu0 0.0
    %342 = vmatpush1.msra.mxu0 0.0
    %343 = vmatprep.subr.mxu0 0.0
    %344 = vmatpush1.msra.mxu0 0.0
    %345 = vmatprep.subr.mxu0 0.0
    %346 = vmatpush1.msra.mxu0 0.0
    %347 = vmatprep.subr.mxu0 0.0
    %348 = vmatpush1.msra.mxu0 0.0
    %349 = vmatprep.subr.mxu0 0.0
    %350 = vmatpush1.msra.mxu0 0.0
    %351 = vmatprep.subr.mxu0 0.0
    %352 = vmatpush1.msra.mxu0 0.0
    %353 = vmatprep.subr.mxu0 0.0
    %354 = vmatpush1.msra.mxu0 0.0
    %355 = vmatprep.subr.mxu0 0.0
    %356 = vmatpush1.msra.mxu0 0.0
    %357 = vmatprep.subr.mxu0 0.0
    %358 = vmatpush1.msra.mxu0 0.0
    %359 = vmatprep.subr.mxu0 0.0
    %360 = vmatpush1.msra.mxu0 0.0
    %361 = vmatprep.subr.mxu0 0.0
    %362 = vmatpush1.msra.mxu0 0.0
    %363 = vmatprep.subr.mxu0 0.0
    %364 = vmatpush1.msra.mxu0 0.0
    %365 = vmatprep.subr.mxu0 0.0
    %366 = vmatpush1.msra.mxu0 0.0
    %367 = vmatprep.subr.mxu0 0.0
    %368 = vmatpush1.msra.mxu0 0.0
    %369 = vmatprep.subr.mxu0 0.0
    %370 = vmatpush1.msra.mxu0 0.0
    %371 = vmatprep.subr.mxu0 0.0
    %372 = vmatpush1.msra.mxu0 0.0
    %373 = vmatprep.subr.mxu0 0.0
    %374 = vmatpush1.msra.mxu0 0.0
    %375 = vmatprep.subr.mxu0 0.0
    %376 = vmatpush1.msra.mxu0 0.0
    %377 = vmatprep.subr.mxu0 0.0
    %378 = vmatpush1.msra.mxu0 0.0
    %379 = vmatprep.mubr.f32.mxu0 0.0
    %380 = vmatmul.mubr.f32.gmra.mrb[0].mxu0 %v179
    %v381 = vpop.f32.mrb[0].mxu0
    %v382 = vadd.f32 %v173, %v381
    %v383 = vpop.f32.mrb[0].mxu0
    %384 = vmatprep.mubr.f32.mxu0 0.0
    %385 = vmatmul.mubr.f32.gmra.mrb[0].mxu0 %v182
    %v386 = vpop.f32.mrb[0].mxu0
    %v387 = vadd.f32 %v173, %v386
    %v388 = vpop.f32.mrb[0].mxu0
    %389 = vmatprep.mubr.f32.mxu0 0.0
    %390 = vmatmul.mubr.f32.gmra.mrb[0].mxu0 %v185
    %v391 = vpop.f32.mrb[0].mxu0
    %v392 = vadd.f32 %v173, %v391
    %v393 = vpop.f32.mrb[0].mxu0
    %394 = vmatprep.mubr.f32.mxu0 0.0
    %395 = vmatmul.mubr.f32.gmra.mrb[0].mxu0 %v188
    %v396 = vpop.f32.mrb[0].mxu0
    %v397 = vadd.f32 %v173, %v396
    %v398 = vpop.f32.mrb[0].mxu0
    %399 = vmatprep.mubr.f32.mxu0 0.0
    %400 = vmatmul.mubr.f32.gmra.mrb[0].mxu0 %v191
    %v401 = vpop.f32.mrb[0].mxu0
    %v402 = vadd.f32 %v173, %v401
    %v403 = vpop.f32.mrb[0].mxu0
    %404 = vmatprep.mubr.f32.mxu0 0.0
    %405 = vmatmul.mubr.f32.gmra.mrb[0].mxu0 %v194
    %v406 = vpop.f32.mrb[0].mxu0
    %v407 = vadd.f32 %v173, %v406
    %v408 = vpop.f32.mrb[0].mxu0
    %409 = vmatprep.mubr.f32.mxu0 0.0
    %410 = vmatmul.mubr.f32.gmra.mrb[0].mxu0 %v197
    %v411 = vpop.f32.mrb[0].mxu0
    %v412 = vadd.f32 %v173, %v411
    %v413 = vpop.f32.mrb[0].mxu0
    %414 = vmatprep.mubr.f32.mxu0 0.0
    %415 = vmatmul.mubr.f32.gmra.mrb[0].mxu0 %v200
    %v416 = vpop.f32.mrb[0].mxu0
    %v417 = vadd.f32 %v173, %v416
    %v418 = vpop.f32.mrb[0].mxu0
    %419 = vdwg.mxu0
    %420 = vst [vmem:[#allocation2] sm:$0xff] %v269
    %421 = vst [vmem:[#allocation2 + $0x8] sm:$0xff] %v271
    %422 = vst [vmem:[#allocation2 + $0x10] sm:$0xff] %v382
    %423 = vst [vmem:[#allocation2 + $0x18] sm:$0xff] %v275
    %424 = vst [vmem:[#allocation2 + $0x20] sm:$0xff] %v277
    %425 = vst [vmem:[#allocation2 + $0x28] sm:$0xff] %v387
    %426 = vst [vmem:[#allocation2 + $0x30] sm:$0xff] %v281
    %427 = vst [vmem:[#allocation2 + $0x38] sm:$0xff] %v283
    %428 = vst [vmem:[#allocation2 + $0x40] sm:$0xff] %v392
    %429 = vst [vmem:[#allocation2 + $0x48] sm:$0xff] %v287
    %430 = vst [vmem:[#allocation2 + $0x50] sm:$0xff] %v289
    %431 = vst [vmem:[#allocation2 + $0x58] sm:$0xff] %v397
    %432 = vst [vmem:[#allocation2 + $0x60] sm:$0xff] %v293
    %433 = vst [vmem:[#allocation2 + $0x68] sm:$0xff] %v295
    %434 = vst [vmem:[#allocation2 + $0x70] sm:$0xff] %v402
    %435 = vst [vmem:[#allocation2 + $0x78] sm:$0xff] %v299
    %436 = vst [vmem:[#allocation2 + $0x80] sm:$0xff] %v301
    %437 = vst [vmem:[#allocation2 + $0x88] sm:$0xff] %v407
    %438 = vst [vmem:[#allocation2 + $0x90] sm:$0xff] %v305
    %439 = vst [vmem:[#allocation2 + $0x98] sm:$0xff] %v307
    %440 = vst [vmem:[#allocation2 + $0xa0] sm:$0xff] %v412
    %441 = vst [vmem:[#allocation2 + $0xa8] sm:$0xff] %v311
    %442 = vst [vmem:[#allocation2 + $0xb0] sm:$0xff] %v313
    %443 = vst [vmem:[#allocation2 + $0xb8] sm:$0xff] %v417
    %v444 = vld [vmem:[#allocation10] sm:$0x7]
    %v446 = vlaneseq
    %v447 = vshrl.u32 %v446, 7
    %v448 = vsub.s32 0, %v447
    %v449 = vrot.slane %v444, %v448
    %v450 = vlaneseq
    %v451 = vshrl.u32 %v450, 7
    %v452 = vsub.s32 1, %v451
    %v453 = vrot.slane %v444, %v452
    %v454 = vlaneseq
    %v455 = vshrl.u32 %v454, 7
    %v456 = vsub.s32 2, %v455
    %v457 = vrot.slane %v444, %v456
    %v461 = vld [vmem:[#allocation13] sm:$0xf]
    %v463 = vlaneseq
    %v464 = vshrl.u32 %v463, 7
    %v465 = vsub.s32 0, %v464
    %v466 = vrot.slane %v461, %v465
    %v467 = vlaneseq
    %v468 = vshrl.u32 %v467, 7
    %v469 = vsub.s32 1, %v468
    %v470 = vrot.slane %v461, %v469
    %v471 = vlaneseq
    %v472 = vshrl.u32 %v471, 7
    %v473 = vsub.s32 2, %v472
    %v474 = vrot.slane %v461, %v473
    %v475 = vlaneseq
    %v476 = vshrl.u32 %v475, 7
    %v477 = vsub.s32 3, %v476
    %v478 = vrot.slane %v461, %v477
    %v483 = vld [vmem:[#allocation16] sm:$0xf]
    %v485 = vlaneseq
    %v486 = vshrl.u32 %v485, 7
    %v487 = vsub.s32 0, %v486
    %v488 = vrot.slane %v483, %v487
    %v489 = vlaneseq
    %v490 = vshrl.u32 %v489, 7
    %v491 = vsub.s32 1, %v490
    %v492 = vrot.slane %v483, %v491
    %v493 = vlaneseq
    %v494 = vshrl.u32 %v493, 7
    %v495 = vsub.s32 2, %v494
    %v496 = vrot.slane %v483, %v495
    %v497 = vlaneseq
    %v498 = vshrl.u32 %v497, 7
    %v499 = vsub.s32 3, %v498
    %v500 = vrot.slane %v483, %v499
    %v505 = vld [vmem:[#allocation2] sm:$0xff]
    %v506 = vld [vmem:[#allocation2 + $0x8] sm:$0xff]
    %v507 = vld [vmem:[#allocation2 + $0x10] sm:$0xff]
    %v508 = vld [vmem:[#allocation9] sm:$0xff]
    %v509 = vld [vmem:[#allocation9 + $0x8] sm:$0xff]
    %v510 = vld [vmem:[#allocation9 + $0x10] sm:$0xff]
    %v511 = vld [vmem:[#allocation9 + $0x18] sm:$0xff]
    %v512 = vld [vmem:[#allocation9 + $0x20] sm:$0xff]
    %v513 = vld [vmem:[#allocation9 + $0x28] sm:$0xff]
    %v514 = vld [vmem:[#allocation9 + $0x30] sm:$0xff]
    %v515 = vld [vmem:[#allocation9 + $0x38] sm:$0xff]
    %v516 = vld [vmem:[#allocation9 + $0x40] sm:$0xff]
    %v517 = vld [vmem:[#allocation9 + $0x48] sm:$0xff]
    %v518 = vld [vmem:[#allocation9 + $0x50] sm:$0xff]
    %v519 = vld [vmem:[#allocation9 + $0x58] sm:$0xff]
    %v520 = vld [vmem:[#allocation9 + $0x60] sm:$0xff]
    %v521 = vld [vmem:[#allocation9 + $0x68] sm:$0xff]
    %v522 = vld [vmem:[#allocation9 + $0x70] sm:$0xff]
    %v523 = vld [vmem:[#allocation9 + $0x78] sm:$0xff]
    %v524 = vld [vmem:[#allocation9 + $0x80] sm:$0xff]
    %v525 = vld [vmem:[#allocation9 + $0x88] sm:$0xff]
    %v526 = vld [vmem:[#allocation9 + $0x90] sm:$0xff]
    %v527 = vld [vmem:[#allocation9 + $0x98] sm:$0xff]
    %v528 = vld [vmem:[#allocation9 + $0xa0] sm:$0xff]
    %v529 = vld [vmem:[#allocation9 + $0xa8] sm:$0xff]
    %v530 = vld [vmem:[#allocation9 + $0xb0] sm:$0xff]
    %v531 = vld [vmem:[#allocation9 + $0xb8] sm:$0xff]
    %v532 = vld [vmem:[#allocation9 + $0xc0] sm:$0xff]
    %v533 = vld [vmem:[#allocation9 + $0xc8] sm:$0xff]
    %v534 = vld [vmem:[#allocation9 + $0xd0] sm:$0xff]
    %v535 = vld [vmem:[#allocation9 + $0xd8] sm:$0xff]
    %v536 = vld [vmem:[#allocation9 + $0xe0] sm:$0xff]
    %v537 = vld [vmem:[#allocation9 + $0xe8] sm:$0xff]
    %v538 = vld [vmem:[#allocation9 + $0xf0] sm:$0xff]
    %v539 = vld [vmem:[#allocation9 + $0xf8] sm:$0xff]
    %v540 = vld [vmem:[#allocation9 + $0x100] sm:$0xff]
    %v541 = vld [vmem:[#allocation9 + $0x108] sm:$0xff]
    %v542 = vld [vmem:[#allocation9 + $0x110] sm:$0xff]
    %v543 = vld [vmem:[#allocation9 + $0x118] sm:$0xff]
    %v544 = vld [vmem:[#allocation9 + $0x120] sm:$0xff]
    %v545 = vld [vmem:[#allocation9 + $0x128] sm:$0xff]
    %v546 = vld [vmem:[#allocation9 + $0x130] sm:$0xff]
    %v547 = vld [vmem:[#allocation9 + $0x138] sm:$0xff]
    %v548 = vld [vmem:[#allocation9 + $0x140] sm:$0xff]
    %v549 = vld [vmem:[#allocation9 + $0x148] sm:$0xff]
    %v550 = vld [vmem:[#allocation9 + $0x150] sm:$0xff]
    %v551 = vld [vmem:[#allocation9 + $0x158] sm:$0xff]
    %v552 = vld [vmem:[#allocation9 + $0x160] sm:$0xff]
    %v553 = vld [vmem:[#allocation9 + $0x168] sm:$0xff]
    %v554 = vld [vmem:[#allocation9 + $0x170] sm:$0xff]
    %v555 = vld [vmem:[#allocation9 + $0x178] sm:$0xff]
    %556 = vmatprep.subr.mxu0 %v509
    %557 = vmatpush1.msra.mxu0 %v508
    %558 = vmatprep.subr.mxu0 %v512
    %559 = vmatpush1.msra.mxu0 %v511
    %560 = vmatprep.subr.mxu0 %v515
    %561 = vmatpush1.msra.mxu0 %v514
    %562 = vmatprep.subr.mxu0 %v518
    %563 = vmatpush1.msra.mxu0 %v517
    %564 = vmatprep.subr.mxu0 %v521
    %565 = vmatpush1.msra.mxu0 %v520
    %566 = vmatprep.subr.mxu0 %v524
    %567 = vmatpush1.msra.mxu0 %v523
    %568 = vmatprep.subr.mxu0 %v527
    %569 = vmatpush1.msra.mxu0 %v526
    %570 = vmatprep.subr.mxu0 %v530
    %571 = vmatpush1.msra.mxu0 %v529
    %572 = vmatprep.subr.mxu0 %v533
    %573 = vmatpush1.msra.mxu0 %v532
    %574 = vmatprep.subr.mxu0 %v536
    %575 = vmatpush1.msra.mxu0 %v535
    %576 = vmatprep.subr.mxu0 %v539
    %577 = vmatpush1.msra.mxu0 %v538
    %578 = vmatprep.subr.mxu0 %v542
    %579 = vmatpush1.msra.mxu0 %v541
    %580 = vmatprep.subr.mxu0 %v545
    %581 = vmatpush1.msra.mxu0 %v544
    %582 = vmatprep.subr.mxu0 %v548
    %583 = vmatpush1.msra.mxu0 %v547
    %584 = vmatprep.subr.mxu0 %v551
    %585 = vmatpush1.msra.mxu0 %v550
    %586 = vmatprep.subr.mxu0 %v554
    %587 = vmatpush1.msra.mxu0 %v553
    %588 = vmatprep.subr.mxu0 0.0
    %589 = vmatpush1.msra.mxu0 0.0
    %590 = vmatprep.subr.mxu0 0.0
    %591 = vmatpush1.msra.mxu0 0.0
    %592 = vmatprep.subr.mxu0 0.0
    %593 = vmatpush1.msra.mxu0 0.0
    %594 = vmatprep.subr.mxu0 0.0
    %595 = vmatpush1.msra.mxu0 0.0
    %596 = vmatprep.subr.mxu0 0.0
    %597 = vmatpush1.msra.mxu0 0.0
    %598 = vmatprep.subr.mxu0 0.0
    %599 = vmatpush1.msra.mxu0 0.0
    %600 = vmatprep.subr.mxu0 0.0
    %601 = vmatpush1.msra.mxu0 0.0
    %602 = vmatprep.subr.mxu0 0.0
    %603 = vmatpush1.msra.mxu0 0.0
    %604 = vmatprep.subr.mxu0 0.0
    %605 = vmatpush1.msra.mxu0 0.0
    %606 = vmatprep.subr.mxu0 0.0
    %607 = vmatpush1.msra.mxu0 0.0
    %608 = vmatprep.subr.mxu0 0.0
    %609 = vmatpush1.msra.mxu0 0.0
    %610 = vmatprep.subr.mxu0 0.0
    %611 = vmatpush1.msra.mxu0 0.0
    %612 = vmatprep.subr.mxu0 0.0
    %613 = vmatpush1.msra.mxu0 0.0
    %614 = vmatprep.subr.mxu0 0.0
    %615 = vmatpush1.msra.mxu0 0.0
    %616 = vmatprep.subr.mxu0 0.0
    %617 = vmatpush1.msra.mxu0 0.0
    %618 = vmatprep.subr.mxu0 0.0
    %619 = vmatpush1.msra.mxu0 0.0
    %620 = vmatprep.mubr.f32.mxu0 0.0
    %621 = vmatmul.mubr.f32.gmra.mrb[0].mxu0 0.0
    %v622 = vpop.f32.mrb[0].mxu0
    %v623 = vadd.f32 %v449, %v622
    %v624 = vpop.f32.mrb[0].mxu0
    %v625 = vadd.f32 %v453, %v624
    %626 = vdwg.mxu0
    %627 = vmatprep.subr.mxu0 0.0
    %628 = vmatpush1.msra.mxu0 %v510
    %629 = vmatprep.subr.mxu0 0.0
    %630 = vmatpush1.msra.mxu0 %v513
    %631 = vmatprep.subr.mxu0 0.0
    %632 = vmatpush1.msra.mxu0 %v516
    %633 = vmatprep.subr.mxu0 0.0
    %634 = vmatpush1.msra.mxu0 %v519
    %635 = vmatprep.subr.mxu0 0.0
    %636 = vmatpush1.msra.mxu0 %v522
    %637 = vmatprep.subr.mxu0 0.0
    %638 = vmatpush1.msra.mxu0 %v525
    %639 = vmatprep.subr.mxu0 0.0
    %640 = vmatpush1.msra.mxu0 %v528
    %641 = vmatprep.subr.mxu0 0.0
    %642 = vmatpush1.msra.mxu0 %v531
    %643 = vmatprep.subr.mxu0 0.0
    %644 = vmatpush1.msra.mxu0 %v534
    %645 = vmatprep.subr.mxu0 0.0
    %646 = vmatpush1.msra.mxu0 %v537
    %647 = vmatprep.subr.mxu0 0.0
    %648 = vmatpush1.msra.mxu0 %v540
    %649 = vmatprep.subr.mxu0 0.0
    %650 = vmatpush1.msra.mxu0 %v543
    %651 = vmatprep.subr.mxu0 0.0
    %652 = vmatpush1.msra.mxu0 %v546
    %653 = vmatprep.subr.mxu0 0.0
    %654 = vmatpush1.msra.mxu0 %v549
    %655 = vmatprep.subr.mxu0 0.0
    %656 = vmatpush1.msra.mxu0 %v552
    %657 = vmatprep.subr.mxu0 0.0
    %658 = vmatpush1.msra.mxu0 %v555
    %659 = vmatprep.subr.mxu0 0.0
    %660 = vmatpush1.msra.mxu0 0.0
    %661 = vmatprep.subr.mxu0 0.0
    %662 = vmatpush1.msra.mxu0 0.0
    %663 = vmatprep.subr.mxu0 0.0
    %664 = vmatpush1.msra.mxu0 0.0
    %665 = vmatprep.subr.mxu0 0.0
    %666 = vmatpush1.msra.mxu0 0.0
    %667 = vmatprep.subr.mxu0 0.0
    %668 = vmatpush1.msra.mxu0 0.0
    %669 = vmatprep.subr.mxu0 0.0
    %670 = vmatpush1.msra.mxu0 0.0
    %671 = vmatprep.subr.mxu0 0.0
    %672 = vmatpush1.msra.mxu0 0.0
    %673 = vmatprep.subr.mxu0 0.0
    %674 = vmatpush1.msra.mxu0 0.0
    %675 = vmatprep.subr.mxu0 0.0
    %676 = vmatpush1.msra.mxu0 0.0
    %677 = vmatprep.subr.mxu0 0.0
    %678 = vmatpush1.msra.mxu0 0.0
    %679 = vmatprep.subr.mxu0 0.0
    %680 = vmatpush1.msra.mxu0 0.0
    %681 = vmatprep.subr.mxu0 0.0
    %682 = vmatpush1.msra.mxu0 0.0
    %683 = vmatprep.subr.mxu0 0.0
    %684 = vmatpush1.msra.mxu0 0.0
    %685 = vmatprep.subr.mxu0 0.0
    %686 = vmatpush1.msra.mxu0 0.0
    %687 = vmatprep.subr.mxu0 0.0
    %688 = vmatpush1.msra.mxu0 0.0
    %689 = vmatprep.subr.mxu0 0.0
    %690 = vmatpush1.msra.mxu0 0.0
    %691 = vmatprep.mubr.f32.mxu0 0.0
    %692 = vmatmul.mubr.f32.gmra.mrb[0].mxu0 0.0
    %v693 = vpop.f32.mrb[0].mxu0
    %v694 = vadd.f32 %v457, %v693
    %v695 = vpop.f32.mrb[0].mxu0
    %696 = vdwg.mxu0
    %v697 = vadd.f32 %v505, %v623
    %v698 = vxor.u32 %v697, 2147483648
    %v699 = vmul.f32 %v698, 1.442695
    %v700 = vpow.pop %v699
    %v701 = vadd.f32 %v700, 1.0
    %v702 = vrcp.pop %v701
    %v703 = vmul.f32 1.0, %v702
    %v704 = vadd.f32 %v506, %v625
    %v705 = vxor.u32 %v704, 2147483648
    %v706 = vmul.f32 %v705, 1.442695
    %v707 = vpow.pop %v706
    %v708 = vadd.f32 %v707, 1.0
    %v709 = vrcp.pop %v708
    %v710 = vmul.f32 1.0, %v709
    %v711 = vmul.f32 %v703, %v694
    %v712 = vadd.f32 %v507, %v711
    %v713 = vtanh.pop %v712
    %v714 = vsub.f32 1.0, %v710
    %v715 = vmul.f32 %v714, %v713
    %v716 = vmul.f32 %v710, 0.0
    %v717 = vadd.f32 %v715, %v716
    %v718 = vld [vmem:[#allocation12] sm:$0xff]
    %v719 = vld [vmem:[#allocation12 + $0x8] sm:$0xff]
    %v720 = vld [vmem:[#allocation12 + $0x10] sm:$0xff]
    %v721 = vld [vmem:[#allocation12 + $0x18] sm:$0xff]
    %v722 = vld [vmem:[#allocation12 + $0x20] sm:$0xff]
    %v723 = vld [vmem:[#allocation12 + $0x28] sm:$0xff]
    %v724 = vld [vmem:[#allocation12 + $0x30] sm:$0xff]
    %v725 = vld [vmem:[#allocation12 + $0x38] sm:$0xff]
    %v726 = vld [vmem:[#allocation12 + $0x40] sm:$0xff]
    %v727 = vld [vmem:[#allocation12 + $0x48] sm:$0xff]
    %v728 = vld [vmem:[#allocation12 + $0x50] sm:$0xff]
    %v729 = vld [vmem:[#allocation12 + $0x58] sm:$0xff]
    %v730 = vld [vmem:[#allocation12 + $0x60] sm:$0xff]
    %v731 = vld [vmem:[#allocation12 + $0x68] sm:$0xff]
    %v732 = vld [vmem:[#allocation12 + $0x70] sm:$0xff]
    %v733 = vld [vmem:[#allocation12 + $0x78] sm:$0xff]
    %v734 = vld [vmem:[#allocation12 + $0x80] sm:$0xff]
    %v735 = vld [vmem:[#allocation12 + $0x88] sm:$0xff]
    %v736 = vld [vmem:[#allocation12 + $0x90] sm:$0xff]
    %v737 = vld [vmem:[#allocation12 + $0x98] sm:$0xff]
    %v738 = vld [vmem:[#allocation12 + $0xa0] sm:$0xff]
    %v739 = vld [vmem:[#allocation12 + $0xa8] sm:$0xff]
    %v740 = vld [vmem:[#allocation12 + $0xb0] sm:$0xff]
    %v741 = vld [vmem:[#allocation12 + $0xb8] sm:$0xff]
    %v742 = vld [vmem:[#allocation12 + $0xc0] sm:$0xff]
    %v743 = vld [vmem:[#allocation12 + $0xc8] sm:$0xff]
    %v744 = vld [vmem:[#allocation12 + $0xd0] sm:$0xff]
    %v745 = vld [vmem:[#allocation12 + $0xd8] sm:$0xff]
    %v746 = vld [vmem:[#allocation12 + $0xe0] sm:$0xff]
    %v747 = vld [vmem:[#allocation12 + $0xe8] sm:$0xff]
    %v748 = vld [vmem:[#allocation12 + $0xf0] sm:$0xff]
    %v749 = vld [vmem:[#allocation12 + $0xf8] sm:$0xff]
    %v750 = vld [vmem:[#allocation12 + $0x100] sm:$0xff]
    %v751 = vld [vmem:[#allocation12 + $0x108] sm:$0xff]
    %v752 = vld [vmem:[#allocation12 + $0x110] sm:$0xff]
    %v753 = vld [vmem:[#allocation12 + $0x118] sm:$0xff]
    %v754 = vld [vmem:[#allocation12 + $0x120] sm:$0xff]
    %v755 = vld [vmem:[#allocation12 + $0x128] sm:$0xff]
    %v756 = vld [vmem:[#allocation12 + $0x130] sm:$0xff]
    %v757 = vld [vmem:[#allocation12 + $0x138] sm:$0xff]
    %v758 = vld [vmem:[#allocation12 + $0x140] sm:$0xff]
    %v759 = vld [vmem:[#allocation12 + $0x148] sm:$0xff]
    %v760 = vld [vmem:[#allocation12 + $0x150] sm:$0xff]
    %v761 = vld [vmem:[#allocation12 + $0x158] sm:$0xff]
    %v762 = vld [vmem:[#allocation12 + $0x160] sm:$0xff]
    %v763 = vld [vmem:[#allocation12 + $0x168] sm:$0xff]
    %v764 = vld [vmem:[#allocation12 + $0x170] sm:$0xff]
    %v765 = vld [vmem:[#allocation12 + $0x178] sm:$0xff]
    %v766 = vld [vmem:[#allocation12 + $0x180] sm:$0xff]
    %v767 = vld [vmem:[#allocation12 + $0x188] sm:$0xff]
    %v768 = vld [vmem:[#allocation12 + $0x190] sm:$0xff]
    %v769 = vld [vmem:[#allocation12 + $0x198] sm:$0xff]
    %v770 = vld [vmem:[#allocation12 + $0x1a0] sm:$0xff]
    %v771 = vld [vmem:[#allocation12 + $0x1a8] sm:$0xff]
    %v772 = vld [vmem:[#allocation12 + $0x1b0] sm:$0xff]
    %v773 = vld [vmem:[#allocation12 + $0x1b8] sm:$0xff]
    %v774 = vld [vmem:[#allocation12 + $0x1c0] sm:$0xff]
    %v775 = vld [vmem:[#allocation12 + $0x1c8] sm:$0xff]
    %v776 = vld [vmem:[#allocation12 + $0x1d0] sm:$0xff]
    %v777 = vld [vmem:[#allocation12 + $0x1d8] sm:$0xff]
    %v778 = vld [vmem:[#allocation12 + $0x1e0] sm:$0xff]
    %v779 = vld [vmem:[#allocation12 + $0x1e8] sm:$0xff]
    %v780 = vld [vmem:[#allocation12 + $0x1f0] sm:$0xff]
    %v781 = vld [vmem:[#allocation12 + $0x1f8] sm:$0xff]
    %v782 = vld [vmem:[#allocation12 + $0x200] sm:$0xff]
    %v783 = vld [vmem:[#allocation12 + $0x208] sm:$0xff]
    %v784 = vld [vmem:[#allocation12 + $0x210] sm:$0xff]
    %v785 = vld [vmem:[#allocation12 + $0x218] sm:$0xff]
    %v786 = vld [vmem:[#allocation12 + $0x220] sm:$0xff]
    %v787 = vld [vmem:[#allocation12 + $0x228] sm:$0xff]
    %v788 = vld [vmem:[#allocation12 + $0x230] sm:$0xff]
    %v789 = vld [vmem:[#allocation12 + $0x238] sm:$0xff]
    %v790 = vld [vmem:[#allocation12 + $0x240] sm:$0xff]
    %v791 = vld [vmem:[#allocation12 + $0x248] sm:$0xff]
    %v792 = vld [vmem:[#allocation12 + $0x250] sm:$0xff]
    %v793 = vld [vmem:[#allocation12 + $0x258] sm:$0xff]
    %v794 = vld [vmem:[#allocation12 + $0x260] sm:$0xff]
    %v795 = vld [vmem:[#allocation12 + $0x268] sm:$0xff]
    %v796 = vld [vmem:[#allocation12 + $0x270] sm:$0xff]
    %v797 = vld [vmem:[#allocation12 + $0x278] sm:$0xff]
    %v798 = vld [vmem:[#allocation12 + $0x280] sm:$0xff]
    %v799 = vld [vmem:[#allocation12 + $0x288] sm:$0xff]
    %v800 = vld [vmem:[#allocation12 + $0x290] sm:$0xff]
    %v801 = vld [vmem:[#allocation12 + $0x298] sm:$0xff]
    %v802 = vld [vmem:[#allocation12 + $0x2a0] sm:$0xff]
    %v803 = vld [vmem:[#allocation12 + $0x2a8] sm:$0xff]
    %v804 = vld [vmem:[#allocation12 + $0x2b0] sm:$0xff]
    %v805 = vld [vmem:[#allocation12 + $0x2b8] sm:$0xff]
    %v806 = vld [vmem:[#allocation12 + $0x2c0] sm:$0xff]
    %v807 = vld [vmem:[#allocation12 + $0x2c8] sm:$0xff]
    %v808 = vld [vmem:[#allocation12 + $0x2d0] sm:$0xff]
    %v809 = vld [vmem:[#allocation12 + $0x2d8] sm:$0xff]
    %v810 = vld [vmem:[#allocation12 + $0x2e0] sm:$0xff]
    %v811 = vld [vmem:[#allocation12 + $0x2e8] sm:$0xff]
    %v812 = vld [vmem:[#allocation12 + $0x2f0] sm:$0xff]
    %v813 = vld [vmem:[#allocation12 + $0x2f8] sm:$0xff]
    %v814 = vld [vmem:[#allocation12 + $0x300] sm:$0xff]
    %v815 = vld [vmem:[#allocation12 + $0x308] sm:$0xff]
    %v816 = vld [vmem:[#allocation12 + $0x310] sm:$0xff]
    %v817 = vld [vmem:[#allocation12 + $0x318] sm:$0xff]
    %v818 = vld [vmem:[#allocation12 + $0x320] sm:$0xff]
    %v819 = vld [vmem:[#allocation12 + $0x328] sm:$0xff]
    %v820 = vld [vmem:[#allocation12 + $0x330] sm:$0xff]
    %v821 = vld [vmem:[#allocation12 + $0x338] sm:$0xff]
    %v822 = vld [vmem:[#allocation12 + $0x340] sm:$0xff]
    %v823 = vld [vmem:[#allocation12 + $0x348] sm:$0xff]
    %v824 = vld [vmem:[#allocation12 + $0x350] sm:$0xff]
    %v825 = vld [vmem:[#allocation12 + $0x358] sm:$0xff]
    %v826 = vld [vmem:[#allocation12 + $0x360] sm:$0xff]
    %v827 = vld [vmem:[#allocation12 + $0x368] sm:$0xff]
    %v828 = vld [vmem:[#allocation12 + $0x370] sm:$0xff]
    %v829 = vld [vmem:[#allocation12 + $0x378] sm:$0xff]
    %v830 = vld [vmem:[#allocation12 + $0x380] sm:$0xff]
    %v831 = vld [vmem:[#allocation12 + $0x388] sm:$0xff]
    %v832 = vld [vmem:[#allocation12 + $0x390] sm:$0xff]
    %v833 = vld [vmem:[#allocation12 + $0x398] sm:$0xff]
    %v834 = vld [vmem:[#allocation12 + $0x3a0] sm:$0xff]
    %v835 = vld [vmem:[#allocation12 + $0x3a8] sm:$0xff]
    %v836 = vld [vmem:[#allocation12 + $0x3b0] sm:$0xff]
    %v837 = vld [vmem:[#allocation12 + $0x3b8] sm:$0xff]
    %v838 = vld [vmem:[#allocation12 + $0x3c0] sm:$0xff]
    %v839 = vld [vmem:[#allocation12 + $0x3c8] sm:$0xff]
    %v840 = vld [vmem:[#allocation12 + $0x3d0] sm:$0xff]
    %v841 = vld [vmem:[#allocation12 + $0x3d8] sm:$0xff]
    %v842 = vld [vmem:[#allocation12 + $0x3e0] sm:$0xff]
    %v843 = vld [vmem:[#allocation12 + $0x3e8] sm:$0xff]
    %v844 = vld [vmem:[#allocation12 + $0x3f0] sm:$0xff]
    %v845 = vld [vmem:[#allocation12 + $0x3f8] sm:$0xff]
    %846 = vmatprep.subr.mxu0 %v719
    %847 = vmatpush1.msra.mxu0 %v718
    %848 = vmatprep.subr.mxu0 %v723
    %849 = vmatpush1.msra.mxu0 %v722
    %850 = vmatprep.subr.mxu0 %v727
    %851 = vmatpush1.msra.mxu0 %v726
    %852 = vmatprep.subr.mxu0 %v731
    %853 = vmatpush1.msra.mxu0 %v730
    %854 = vmatprep.subr.mxu0 %v735
    %855 = vmatpush1.msra.mxu0 %v734
    %856 = vmatprep.subr.mxu0 %v739
    %857 = vmatpush1.msra.mxu0 %v738
    %858 = vmatprep.subr.mxu0 %v743
    %859 = vmatpush1.msra.mxu0 %v742
    %860 = vmatprep.subr.mxu0 %v747
    %861 = vmatpush1.msra.mxu0 %v746
    %862 = vmatprep.subr.mxu0 %v751
    %863 = vmatpush1.msra.mxu0 %v750
    %864 = vmatprep.subr.mxu0 %v755
    %865 = vmatpush1.msra.mxu0 %v754
    %866 = vmatprep.subr.mxu0 %v759
    %867 = vmatpush1.msra.mxu0 %v758
    %868 = vmatprep.subr.mxu0 %v763
    %869 = vmatpush1.msra.mxu0 %v762
    %870 = vmatprep.subr.mxu0 %v767
    %871 = vmatpush1.msra.mxu0 %v766
    %872 = vmatprep.subr.mxu0 %v771
    %873 = vmatpush1.msra.mxu0 %v770
    %874 = vmatprep.subr.mxu0 %v775
    %875 = vmatpush1.msra.mxu0 %v774
    %876 = vmatprep.subr.mxu0 %v779
    %877 = vmatpush1.msra.mxu0 %v778
    %878 = vmatprep.subr.mxu0 %v783
    %879 = vmatpush1.msra.mxu0 %v782
    %880 = vmatprep.subr.mxu0 %v787
    %881 = vmatpush1.msra.mxu0 %v786
    %882 = vmatprep.subr.mxu0 %v791
    %883 = vmatpush1.msra.mxu0 %v790
    %884 = vmatprep.subr.mxu0 %v795
    %885 = vmatpush1.msra.mxu0 %v794
    %886 = vmatprep.subr.mxu0 %v799
    %887 = vmatpush1.msra.mxu0 %v798
    %888 = vmatprep.subr.mxu0 %v803
    %889 = vmatpush1.msra.mxu0 %v802
    %890 = vmatprep.subr.mxu0 %v807
    %891 = vmatpush1.msra.mxu0 %v806
    %892 = vmatprep.subr.mxu0 %v811
    %893 = vmatpush1.msra.mxu0 %v810
    %894 = vmatprep.subr.mxu0 %v815
    %895 = vmatpush1.msra.mxu0 %v814
    %896 = vmatprep.subr.mxu0 %v819
    %897 = vmatpush1.msra.mxu0 %v818
    %898 = vmatprep.subr.mxu0 %v823
    %899 = vmatpush1.msra.mxu0 %v822
    %900 = vmatprep.subr.mxu0 %v827
    %901 = vmatpush1.msra.mxu0 %v826
    %902 = vmatprep.subr.mxu0 %v831
    %903 = vmatpush1.msra.mxu0 %v830
    %904 = vmatprep.subr.mxu0 %v835
    %905 = vmatpush1.msra.mxu0 %v834
    %906 = vmatprep.subr.mxu0 %v839
    %907 = vmatpush1.msra.mxu0 %v838
    %908 = vmatprep.subr.mxu0 %v843
    %909 = vmatpush1.msra.mxu0 %v842
    %910 = vmatprep.mubr.f32.mxu0 0.0
    %911 = vmatmul.mubr.f32.gmra.mrb[0].mxu0 %v717
    %v912 = vpop.f32.mrb[0].mxu0
    %v913 = vadd.f32 %v466, %v912
    %v914 = vpop.f32.mrb[0].mxu0
    %v915 = vadd.f32 %v470, %v914
    %916 = vdwg.mxu0
    %917 = vmatprep.subr.mxu0 %v721
    %918 = vmatpush1.msra.mxu0 %v720
    %919 = vmatprep.subr.mxu0 %v725
    %920 = vmatpush1.msra.mxu0 %v724
    %921 = vmatprep.subr.mxu0 %v729
    %922 = vmatpush1.msra.mxu0 %v728
    %923 = vmatprep.subr.mxu0 %v733
    %924 = vmatpush1.msra.mxu0 %v732
    %925 = vmatprep.subr.mxu0 %v737
    %926 = vmatpush1.msra.mxu0 %v736
    %927 = vmatprep.subr.mxu0 %v741
    %928 = vmatpush1.msra.mxu0 %v740
    %929 = vmatprep.subr.mxu0 %v745
    %930 = vmatpush1.msra.mxu0 %v744
    %931 = vmatprep.subr.mxu0 %v749
    %932 = vmatpush1.msra.mxu0 %v748
    %933 = vmatprep.subr.mxu0 %v753
    %934 = vmatpush1.msra.mxu0 %v752
    %935 = vmatprep.subr.mxu0 %v757
    %936 = vmatpush1.msra.mxu0 %v756
    %937 = vmatprep.subr.mxu0 %v761
    %938 = vmatpush1.msra.mxu0 %v760
    %939 = vmatprep.subr.mxu0 %v765
    %940 = vmatpush1.msra.mxu0 %v764
    %941 = vmatprep.subr.mxu0 %v769
    %942 = vmatpush1.msra.mxu0 %v768
    %943 = vmatprep.subr.mxu0 %v773
    %944 = vmatpush1.msra.mxu0 %v772
    %945 = vmatprep.subr.mxu0 %v777
    %946 = vmatpush1.msra.mxu0 %v776
    %947 = vmatprep.subr.mxu0 %v781
    %948 = vmatpush1.msra.mxu0 %v780
    %949 = vmatprep.subr.mxu0 %v785
    %950 = vmatpush1.msra.mxu0 %v784
    %951 = vmatprep.subr.mxu0 %v789
    %952 = vmatpush1.msra.mxu0 %v788
    %953 = vmatprep.subr.mxu0 %v793
    %954 = vmatpush1.msra.mxu0 %v792
    %955 = vmatprep.subr.mxu0 %v797
    %956 = vmatpush1.msra.mxu0 %v796
    %957 = vmatprep.subr.mxu0 %v801
    %958 = vmatpush1.msra.mxu0 %v800
    %959 = vmatprep.subr.mxu0 %v805
    %960 = vmatpush1.msra.mxu0 %v804
    %961 = vmatprep.subr.mxu0 %v809
    %962 = vmatpush1.msra.mxu0 %v808
    %963 = vmatprep.subr.mxu0 %v813
    %964 = vmatpush1.msra.mxu0 %v812
    %965 = vmatprep.subr.mxu0 %v817
    %966 = vmatpush1.msra.mxu0 %v816
    %967 = vmatprep.subr.mxu0 %v821
    %968 = vmatpush1.msra.mxu0 %v820
    %969 = vmatprep.subr.mxu0 %v825
    %970 = vmatpush1.msra.mxu0 %v824
    %971 = vmatprep.subr.mxu0 %v829
    %972 = vmatpush1.msra.mxu0 %v828
    %973 = vmatprep.subr.mxu0 %v833
    %974 = vmatpush1.msra.mxu0 %v832
    %975 = vmatprep.subr.mxu0 %v837
    %976 = vmatpush1.msra.mxu0 %v836
    %977 = vmatprep.subr.mxu0 %v841
    %978 = vmatpush1.msra.mxu0 %v840
    %979 = vmatprep.subr.mxu0 %v845
    %980 = vmatpush1.msra.mxu0 %v844
    %981 = vmatprep.mubr.f32.mxu0 0.0
    %982 = vmatmul.mubr.f32.gmra.mrb[0].mxu0 %v717
    %v983 = vpop.f32.mrb[0].mxu0
    %v984 = vadd.f32 %v474, %v983
    %v985 = vpop.f32.mrb[0].mxu0
    %v986 = vadd.f32 %v478, %v985
    %987 = vdwg.mxu0
    %v988 = vxor.u32 %v913, 2147483648
    %v989 = vmul.f32 %v988, 1.442695
    %v990 = vpow.pop %v989
    %v991 = vadd.f32 %v990, 1.0
    %v992 = vrcp.pop %v991
    %v993 = vmul.f32 1.0, %v992
    %v994 = vxor.u32 %v915, 2147483648
    %v995 = vmul.f32 %v994, 1.442695
    %v996 = vpow.pop %v995
    %v997 = vadd.f32 %v996, 1.0
    %v998 = vrcp.pop %v997
    %v999 = vmul.f32 1.0, %v998
    %v1000 = vmul.f32 %v993, %v986
    %v1001 = vadd.f32 %v984, %v1000
    %v1002 = vtanh.pop %v1001
    %v1003 = vsub.f32 1.0, %v999
    %v1004 = vmul.f32 %v1003, %v1002
    %v1005 = vmul.f32 %v999, 0.0
    %v1006 = vadd.f32 %v1004, %v1005
    %v1007 = vld [vmem:[#allocation2 + $0x18] sm:$0xff]
    %v1008 = vld [vmem:[#allocation2 + $0x20] sm:$0xff]
    %v1009 = vld [vmem:[#allocation2 + $0x28] sm:$0xff]
    %1010 = vmatprep.subr.mxu0 %v509
    %1011 = vmatpush1.msra.mxu0 %v508
    %1012 = vmatprep.subr.mxu0 %v512
    %1013 = vmatpush1.msra.mxu0 %v511
    %1014 = vmatprep.subr.mxu0 %v515
    %1015 = vmatpush1.msra.mxu0 %v514
    %1016 = vmatprep.subr.mxu0 %v518
    %1017 = vmatpush1.msra.mxu0 %v517
    %1018 = vmatprep.subr.mxu0 %v521
    %1019 = vmatpush1.msra.mxu0 %v520
    %1020 = vmatprep.subr.mxu0 %v524
    %1021 = vmatpush1.msra.mxu0 %v523
    %1022 = vmatprep.subr.mxu0 %v527
    %1023 = vmatpush1.msra.mxu0 %v526
    %1024 = vmatprep.subr.mxu0 %v530
    %1025 = vmatpush1.msra.mxu0 %v529
    %1026 = vmatprep.subr.mxu0 %v533
    %1027 = vmatpush1.msra.mxu0 %v532
    %1028 = vmatprep.subr.mxu0 %v536
    %1029 = vmatpush1.msra.mxu0 %v535
    %1030 = vmatprep.subr.mxu0 %v539
    %1031 = vmatpush1.msra.mxu0 %v538
    %1032 = vmatprep.subr.mxu0 %v542
    %1033 = vmatpush1.msra.mxu0 %v541
    %1034 = vmatprep.subr.mxu0 %v545
    %1035 = vmatpush1.msra.mxu0 %v544
    %1036 = vmatprep.subr.mxu0 %v548
    %1037 = vmatpush1.msra.mxu0 %v547
    %1038 = vmatprep.subr.mxu0 %v551
    %1039 = vmatpush1.msra.mxu0 %v550
    %1040 = vmatprep.subr.mxu0 %v554
    %1041 = vmatpush1.msra.mxu0 %v553
    %1042 = vmatprep.subr.mxu0 0.0
    %1043 = vmatpush1.msra.mxu0 0.0
    %1044 = vmatprep.subr.mxu0 0.0
    %1045 = vmatpush1.msra.mxu0 0.0
    %1046 = vmatprep.subr.mxu0 0.0
    %1047 = vmatpush1.msra.mxu0 0.0
    %1048 = vmatprep.subr.mxu0 0.0
    %1049 = vmatpush1.msra.mxu0 0.0
    %1050 = vmatprep.subr.mxu0 0.0
    %1051 = vmatpush1.msra.mxu0 0.0
    %1052 = vmatprep.subr.mxu0 0.0
    %1053 = vmatpush1.msra.mxu0 0.0
    %1054 = vmatprep.subr.mxu0 0.0
    %1055 = vmatpush1.msra.mxu0 0.0
    %1056 = vmatprep.subr.mxu0 0.0
    %1057 = vmatpush1.msra.mxu0 0.0
    %1058 = vmatprep.subr.mxu0 0.0
    %1059 = vmatpush1.msra.mxu0 0.0
    %1060 = vmatprep.subr.mxu0 0.0
    %1061 = vmatpush1.msra.mxu0 0.0
    %1062 = vmatprep.subr.mxu0 0.0
    %1063 = vmatpush1.msra.mxu0 0.0
    %1064 = vmatprep.subr.mxu0 0.0
    %1065 = vmatpush1.msra.mxu0 0.0
    %1066 = vmatprep.subr.mxu0 0.0
    %1067 = vmatpush1.msra.mxu0 0.0
    %1068 = vmatprep.subr.mxu0 0.0
    %1069 = vmatpush1.msra.mxu0 0.0
    %1070 = vmatprep.subr.mxu0 0.0
    %1071 = vmatpush1.msra.mxu0 0.0
    %1072 = vmatprep.subr.mxu0 0.0
    %1073 = vmatpush1.msra.mxu0 0.0
    %1074 = vmatprep.mubr.f32.mxu0 0.0
    %1075 = vmatmul.mubr.f32.gmra.mrb[0].mxu0 %v717
    %v1076 = vpop.f32.mrb[0].mxu0
    %v1077 = vadd.f32 %v449, %v1076
    %v1078 = vpop.f32.mrb[0].mxu0
    %v1079 = vadd.f32 %v453, %v1078
    %1080 = vdwg.mxu0
    %1081 = vmatprep.subr.mxu0 0.0
    %1082 = vmatpush1.msra.mxu0 %v510
    %1083 = vmatprep.subr.mxu0 0.0
    %1084 = vmatpush1.msra.mxu0 %v513
    %1085 = vmatprep.subr.mxu0 0.0
    %1086 = vmatpush1.msra.mxu0 %v516
    %1087 = vmatprep.subr.mxu0 0.0
    %1088 = vmatpush1.msra.mxu0 %v519
    %1089 = vmatprep.subr.mxu0 0.0
    %1090 = vmatpush1.msra.mxu0 %v522
    %1091 = vmatprep.subr.mxu0 0.0
    %1092 = vmatpush1.msra.mxu0 %v525
    %1093 = vmatprep.subr.mxu0 0.0
    %1094 = vmatpush1.msra.mxu0 %v528
    %1095 = vmatprep.subr.mxu0 0.0
    %1096 = vmatpush1.msra.mxu0 %v531
    %1097 = vmatprep.subr.mxu0 0.0
    %1098 = vmatpush1.msra.mxu0 %v534
    %1099 = vmatprep.subr.mxu0 0.0
    %1100 = vmatpush1.msra.mxu0 %v537
    %1101 = vmatprep.subr.mxu0 0.0
    %1102 = vmatpush1.msra.mxu0 %v540
    %1103 = vmatprep.subr.mxu0 0.0
    %1104 = vmatpush1.msra.mxu0 %v543
    %1105 = vmatprep.subr.mxu0 0.0
    %1106 = vmatpush1.msra.mxu0 %v546
    %1107 = vmatprep.subr.mxu0 0.0
    %1108 = vmatpush1.msra.mxu0 %v549
    %1109 = vmatprep.subr.mxu0 0.0
    %1110 = vmatpush1.msra.mxu0 %v552
    %1111 = vmatprep.subr.mxu0 0.0
    %1112 = vmatpush1.msra.mxu0 %v555
    %1113 = vmatprep.subr.mxu0 0.0
    %1114 = vmatpush1.msra.mxu0 0.0
    %1115 = vmatprep.subr.mxu0 0.0
    %1116 = vmatpush1.msra.mxu0 0.0
    %1117 = vmatprep.subr.mxu0 0.0
    %1118 = vmatpush1.msra.mxu0 0.0
    %1119 = vmatprep.subr.mxu0 0.0
    %1120 = vmatpush1.msra.mxu0 0.0
    %1121 = vmatprep.subr.mxu0 0.0
    %1122 = vmatpush1.msra.mxu0 0.0
    %1123 = vmatprep.subr.mxu0 0.0
    %1124 = vmatpush1.msra.mxu0 0.0
    %1125 = vmatprep.subr.mxu0 0.0
    %1126 = vmatpush1.msra.mxu0 0.0
    %1127 = vmatprep.subr.mxu0 0.0
    %1128 = vmatpush1.msra.mxu0 0.0
    %1129 = vmatprep.subr.mxu0 0.0
    %1130 = vmatpush1.msra.mxu0 0.0
    %1131 = vmatprep.subr.mxu0 0.0
    %1132 = vmatpush1.msra.mxu0 0.0
    %1133 = vmatprep.subr.mxu0 0.0
    %1134 = vmatpush1.msra.mxu0 0.0
    %1135 = vmatprep.subr.mxu0 0.0
    %1136 = vmatpush1.msra.mxu0 0.0
    %1137 = vmatprep.subr.mxu0 0.0
    %1138 = vmatpush1.msra.mxu0 0.0
    %1139 = vmatprep.subr.mxu0 0.0
    %1140 = vmatpush1.msra.mxu0 0.0
    %1141 = vmatprep.subr.mxu0 0.0
    %1142 = vmatpush1.msra.mxu0 0.0
    %1143 = vmatprep.subr.mxu0 0.0
    %1144 = vmatpush1.msra.mxu0 0.0
    %1145 = vmatprep.mubr.f32.mxu0 0.0
    %1146 = vmatmul.mubr.f32.gmra.mrb[0].mxu0 %v717
    %v1147 = vpop.f32.mrb[0].mxu0
    %v1148 = vadd.f32 %v457, %v1147
    %v1149 = vpop.f32.mrb[0].mxu0
    %1150 = vdwg.mxu0
    %v1151 = vadd.f32 %v1007, %v1077
    %v1152 = vxor.u32 %v1151, 2147483648
    %v1153 = vmul.f32 %v1152, 1.442695
    %v1154 = vpow.pop %v1153
    %v1155 = vadd.f32 %v1154, 1.0
    %v1156 = vrcp.pop %v1155
    %v1157 = vmul.f32 1.0, %v1156
    %v1158 = vadd.f32 %v1008, %v1079
    %v1159 = vxor.u32 %v1158, 2147483648
    %v1160 = vmul.f32 %v1159, 1.442695
    %v1161 = vpow.pop %v1160
    %v1162 = vadd.f32 %v1161, 1.0
    %v1163 = vrcp.pop %v1162
    %v1164 = vmul.f32 1.0, %v1163
    %v1165 = vmul.f32 %v1157, %v1148
    %v1166 = vadd.f32 %v1009, %v1165
    %v1167 = vtanh.pop %v1166
    %v1168 = vsub.f32 1.0, %v1164
    %v1169 = vmul.f32 %v1168, %v1167
    %v1170 = vmul.f32 %v1164, %v717
    %v1171 = vadd.f32 %v1169, %v1170
    %v1172 = vld [vmem:[#allocation15] sm:$0xff]
    %v1173 = vld [vmem:[#allocation15 + $0x8] sm:$0xff]
    %v1174 = vld [vmem:[#allocation15 + $0x10] sm:$0xff]
    %v1175 = vld [vmem:[#allocation15 + $0x18] sm:$0xff]
    %v1176 = vld [vmem:[#allocation15 + $0x20] sm:$0xff]
    %v1177 = vld [vmem:[#allocation15 + $0x28] sm:$0xff]
    %v1178 = vld [vmem:[#allocation15 + $0x30] sm:$0xff]
    %v1179 = vld [vmem:[#allocation15 + $0x38] sm:$0xff]
    %v1180 = vld [vmem:[#allocation15 + $0x40] sm:$0xff]
    %v1181 = vld [vmem:[#allocation15 + $0x48] sm:$0xff]
    %v1182 = vld [vmem:[#allocation15 + $0x50] sm:$0xff]
    %v1183 = vld [vmem:[#allocation15 + $0x58] sm:$0xff]
    %v1184 = vld [vmem:[#allocation15 + $0x60] sm:$0xff]
    %v1185 = vld [vmem:[#allocation15 + $0x68] sm:$0xff]
    %v1186 = vld [vmem:[#allocation15 + $0x70] sm:$0xff]
    %v1187 = vld [vmem:[#allocation15 + $0x78] sm:$0xff]
    %v1188 = vld [vmem:[#allocation15 + $0x80] sm:$0xff]
    %v1189 = vld [vmem:[#allocation15 + $0x88] sm:$0xff]
    %v1190 = vld [vmem:[#allocation15 + $0x90] sm:$0xff]
    %v1191 = vld [vmem:[#allocation15 + $0x98] sm:$0xff]
    %v1192 = vld [vmem:[#allocation15 + $0xa0] sm:$0xff]
    %v1193 = vld [vmem:[#allocation15 + $0xa8] sm:$0xff]
    %v1194 = vld [vmem:[#allocation15 + $0xb0] sm:$0xff]
    %v1195 = vld [vmem:[#allocation15 + $0xb8] sm:$0xff]
    %v1196 = vld [vmem:[#allocation15 + $0xc0] sm:$0xff]
    %v1197 = vld [vmem:[#allocation15 + $0xc8] sm:$0xff]
    %v1198 = vld [vmem:[#allocation15 + $0xd0] sm:$0xff]
    %v1199 = vld [vmem:[#allocation15 + $0xd8] sm:$0xff]
    %v1200 = vld [vmem:[#allocation15 + $0xe0] sm:$0xff]
    %v1201 = vld [vmem:[#allocation15 + $0xe8] sm:$0xff]
    %v1202 = vld [vmem:[#allocation15 + $0xf0] sm:$0xff]
    %v1203 = vld [vmem:[#allocation15 + $0xf8] sm:$0xff]
    %v1204 = vld [vmem:[#allocation15 + $0x100] sm:$0xff]
    %v1205 = vld [vmem:[#allocation15 + $0x108] sm:$0xff]
    %v1206 = vld [vmem:[#allocation15 + $0x110] sm:$0xff]
    %v1207 = vld [vmem:[#allocation15 + $0x118] sm:$0xff]
    %v1208 = vld [vmem:[#allocation15 + $0x120] sm:$0xff]
    %v1209 = vld [vmem:[#allocation15 + $0x128] sm:$0xff]
    %v1210 = vld [vmem:[#allocation15 + $0x130] sm:$0xff]
    %v1211 = vld [vmem:[#allocation15 + $0x138] sm:$0xff]
    %v1212 = vld [vmem:[#allocation15 + $0x140] sm:$0xff]
    %v1213 = vld [vmem:[#allocation15 + $0x148] sm:$0xff]
    %v1214 = vld [vmem:[#allocation15 + $0x150] sm:$0xff]
    %v1215 = vld [vmem:[#allocation15 + $0x158] sm:$0xff]
    %v1216 = vld [vmem:[#allocation15 + $0x160] sm:$0xff]
    %v1217 = vld [vmem:[#allocation15 + $0x168] sm:$0xff]
    %v1218 = vld [vmem:[#allocation15 + $0x170] sm:$0xff]
    %v1219 = vld [vmem:[#allocation15 + $0x178] sm:$0xff]
    %v1220 = vld [vmem:[#allocation15 + $0x180] sm:$0xff]
    %v1221 = vld [vmem:[#allocation15 + $0x188] sm:$0xff]
    %v1222 = vld [vmem:[#allocation15 + $0x190] sm:$0xff]
    %v1223 = vld [vmem:[#allocation15 + $0x198] sm:$0xff]
    %v1224 = vld [vmem:[#allocation15 + $0x1a0] sm:$0xff]
    %v1225 = vld [vmem:[#allocation15 + $0x1a8] sm:$0xff]
    %v1226 = vld [vmem:[#allocation15 + $0x1b0] sm:$0xff]
    %v1227 = vld [vmem:[#allocation15 + $0x1b8] sm:$0xff]
    %v1228 = vld [vmem:[#allocation15 + $0x1c0] sm:$0xff]
    %v1229 = vld [vmem:[#allocation15 + $0x1c8] sm:$0xff]
    %v1230 = vld [vmem:[#allocation15 + $0x1d0] sm:$0xff]
    %v1231 = vld [vmem:[#allocation15 + $0x1d8] sm:$0xff]
    %v1232 = vld [vmem:[#allocation15 + $0x1e0] sm:$0xff]
    %v1233 = vld [vmem:[#allocation15 + $0x1e8] sm:$0xff]
    %v1234 = vld [vmem:[#allocation15 + $0x1f0] sm:$0xff]
    %v1235 = vld [vmem:[#allocation15 + $0x1f8] sm:$0xff]
    %v1236 = vld [vmem:[#allocation15 + $0x200] sm:$0xff]
    %v1237 = vld [vmem:[#allocation15 + $0x208] sm:$0xff]
    %v1238 = vld [vmem:[#allocation15 + $0x210] sm:$0xff]
    %v1239 = vld [vmem:[#allocation15 + $0x218] sm:$0xff]
    %v1240 = vld [vmem:[#allocation15 + $0x220] sm:$0xff]
    %v1241 = vld [vmem:[#allocation15 + $0x228] sm:$0xff]
    %v1242 = vld [vmem:[#allocation15 + $0x230] sm:$0xff]
    %v1243 = vld [vmem:[#allocation15 + $0x238] sm:$0xff]
    %v1244 = vld [vmem:[#allocation15 + $0x240] sm:$0xff]
    %v1245 = vld [vmem:[#allocation15 + $0x248] sm:$0xff]
    %v1246 = vld [vmem:[#allocation15 + $0x250] sm:$0xff]
    %v1247 = vld [vmem:[#allocation15 + $0x258] sm:$0xff]
    %v1248 = vld [vmem:[#allocation15 + $0x260] sm:$0xff]
    %v1249 = vld [vmem:[#allocation15 + $0x268] sm:$0xff]
    %v1250 = vld [vmem:[#allocation15 + $0x270] sm:$0xff]
    %v1251 = vld [vmem:[#allocation15 + $0x278] sm:$0xff]
    %v1252 = vld [vmem:[#allocation15 + $0x280] sm:$0xff]
    %v1253 = vld [vmem:[#allocation15 + $0x288] sm:$0xff]
    %v1254 = vld [vmem:[#allocation15 + $0x290] sm:$0xff]
    %v1255 = vld [vmem:[#allocation15 + $0x298] sm:$0xff]
    %v1256 = vld [vmem:[#allocation15 + $0x2a0] sm:$0xff]
    %v1257 = vld [vmem:[#allocation15 + $0x2a8] sm:$0xff]
    %v1258 = vld [vmem:[#allocation15 + $0x2b0] sm:$0xff]
    %v1259 = vld [vmem:[#allocation15 + $0x2b8] sm:$0xff]
    %v1260 = vld [vmem:[#allocation15 + $0x2c0] sm:$0xff]
    %v1261 = vld [vmem:[#allocation15 + $0x2c8] sm:$0xff]
    %v1262 = vld [vmem:[#allocation15 + $0x2d0] sm:$0xff]
    %v1263 = vld [vmem:[#allocation15 + $0x2d8] sm:$0xff]
    %v1264 = vld [vmem:[#allocation15 + $0x2e0] sm:$0xff]
    %v1265 = vld [vmem:[#allocation15 + $0x2e8] sm:$0xff]
    %v1266 = vld [vmem:[#allocation15 + $0x2f0] sm:$0xff]
    %v1267 = vld [vmem:[#allocation15 + $0x2f8] sm:$0xff]
    %v1268 = vld [vmem:[#allocation15 + $0x300] sm:$0xff]
    %v1269 = vld [vmem:[#allocation15 + $0x308] sm:$0xff]
    %v1270 = vld [vmem:[#allocation15 + $0x310] sm:$0xff]
    %v1271 = vld [vmem:[#allocation15 + $0x318] sm:$0xff]
    %v1272 = vld [vmem:[#allocation15 + $0x320] sm:$0xff]
    %v1273 = vld [vmem:[#allocation15 + $0x328] sm:$0xff]
    %v1274 = vld [vmem:[#allocation15 + $0x330] sm:$0xff]
    %v1275 = vld [vmem:[#allocation15 + $0x338] sm:$0xff]
    %v1276 = vld [vmem:[#allocation15 + $0x340] sm:$0xff]
    %v1277 = vld [vmem:[#allocation15 + $0x348] sm:$0xff]
    %v1278 = vld [vmem:[#allocation15 + $0x350] sm:$0xff]
    %v1279 = vld [vmem:[#allocation15 + $0x358] sm:$0xff]
    %v1280 = vld [vmem:[#allocation15 + $0x360] sm:$0xff]
    %v1281 = vld [vmem:[#allocation15 + $0x368] sm:$0xff]
    %v1282 = vld [vmem:[#allocation15 + $0x370] sm:$0xff]
    %v1283 = vld [vmem:[#allocation15 + $0x378] sm:$0xff]
    %v1284 = vld [vmem:[#allocation15 + $0x380] sm:$0xff]
    %v1285 = vld [vmem:[#allocation15 + $0x388] sm:$0xff]
    %v1286 = vld [vmem:[#allocation15 + $0x390] sm:$0xff]
    %v1287 = vld [vmem:[#allocation15 + $0x398] sm:$0xff]
    %v1288 = vld [vmem:[#allocation15 + $0x3a0] sm:$0xff]
    %v1289 = vld [vmem:[#allocation15 + $0x3a8] sm:$0xff]
    %v1290 = vld [vmem:[#allocation15 + $0x3b0] sm:$0xff]
    %v1291 = vld [vmem:[#allocation15 + $0x3b8] sm:$0xff]
    %v1292 = vld [vmem:[#allocation15 + $0x3c0] sm:$0xff]
    %v1293 = vld [vmem:[#allocation15 + $0x3c8] sm:$0xff]
    %v1294 = vld [vmem:[#allocation15 + $0x3d0] sm:$0xff]
    %v1295 = vld [vmem:[#allocation15 + $0x3d8] sm:$0xff]
    %v1296 = vld [vmem:[#allocation15 + $0x3e0] sm:$0xff]
    %v1297 = vld [vmem:[#allocation15 + $0x3e8] sm:$0xff]
    %v1298 = vld [vmem:[#allocation15 + $0x3f0] sm:$0xff]
    %v1299 = vld [vmem:[#allocation15 + $0x3f8] sm:$0xff]
    %1300 = vmatprep.subr.mxu0 %v1173
    %1301 = vmatpush1.msra.mxu0 %v1172
    %1302 = vmatprep.subr.mxu0 %v1177
    %1303 = vmatpush1.msra.mxu0 %v1176
    %1304 = vmatprep.subr.mxu0 %v1181
    %1305 = vmatpush1.msra.mxu0 %v1180
    %1306 = vmatprep.subr.mxu0 %v1185
    %1307 = vmatpush1.msra.mxu0 %v1184
    %1308 = vmatprep.subr.mxu0 %v1189
    %1309 = vmatpush1.msra.mxu0 %v1188
    %1310 = vmatprep.subr.mxu0 %v1193
    %1311 = vmatpush1.msra.mxu0 %v1192
    %1312 = vmatprep.subr.mxu0 %v1197
    %1313 = vmatpush1.msra.mxu0 %v1196
    %1314 = vmatprep.subr.mxu0 %v1201
    %1315 = vmatpush1.msra.mxu0 %v1200
    %1316 = vmatprep.subr.mxu0 %v1205
    %1317 = vmatpush1.msra.mxu0 %v1204
    %1318 = vmatprep.subr.mxu0 %v1209
    %1319 = vmatpush1.msra.mxu0 %v1208
    %1320 = vmatprep.subr.mxu0 %v1213
    %1321 = vmatpush1.msra.mxu0 %v1212
    %1322 = vmatprep.subr.mxu0 %v1217
    %1323 = vmatpush1.msra.mxu0 %v1216
    %1324 = vmatprep.subr.mxu0 %v1221
    %1325 = vmatpush1.msra.mxu0 %v1220
    %1326 = vmatprep.subr.mxu0 %v1225
    %1327 = vmatpush1.msra.mxu0 %v1224
    %1328 = vmatprep.subr.mxu0 %v1229
    %1329 = vmatpush1.msra.mxu0 %v1228
    %1330 = vmatprep.subr.mxu0 %v1233
    %1331 = vmatpush1.msra.mxu0 %v1232
    %1332 = vmatprep.subr.mxu0 %v1237
    %1333 = vmatpush1.msra.mxu0 %v1236
    %1334 = vmatprep.subr.mxu0 %v1241
    %1335 = vmatpush1.msra.mxu0 %v1240
    %1336 = vmatprep.subr.mxu0 %v1245
    %1337 = vmatpush1.msra.mxu0 %v1244
    %1338 = vmatprep.subr.mxu0 %v1249
    %1339 = vmatpush1.msra.mxu0 %v1248
    %1340 = vmatprep.subr.mxu0 %v1253
    %1341 = vmatpush1.msra.mxu0 %v1252
    %1342 = vmatprep.subr.mxu0 %v1257
    %1343 = vmatpush1.msra.mxu0 %v1256
    %1344 = vmatprep.subr.mxu0 %v1261
    %1345 = vmatpush1.msra.mxu0 %v1260
    %1346 = vmatprep.subr.mxu0 %v1265
    %1347 = vmatpush1.msra.mxu0 %v1264
    %1348 = vmatprep.subr.mxu0 %v1269
    %1349 = vmatpush1.msra.mxu0 %v1268
    %1350 = vmatprep.subr.mxu0 %v1273
    %1351 = vmatpush1.msra.mxu0 %v1272
    %1352 = vmatprep.subr.mxu0 %v1277
    %1353 = vmatpush1.msra.mxu0 %v1276
    %1354 = vmatprep.subr.mxu0 %v1281
    %1355 = vmatpush1.msra.mxu0 %v1280
    %1356 = vmatprep.subr.mxu0 %v1285
    %1357 = vmatpush1.msra.mxu0 %v1284
    %1358 = vmatprep.subr.mxu0 %v1289
    %1359 = vmatpush1.msra.mxu0 %v1288
    %1360 = vmatprep.subr.mxu0 %v1293
    %1361 = vmatpush1.msra.mxu0 %v1292
    %1362 = vmatprep.subr.mxu0 %v1297
    %1363 = vmatpush1.msra.mxu0 %v1296
    %1364 = vmatprep.mubr.f32.mxu0 0.0
    %1365 = vmatmul.mubr.f32.gmra.mrb[0].mxu0 %v1006
    %v1366 = vpop.f32.mrb[0].mxu0
    %v1367 = vadd.f32 %v488, %v1366
    %v1368 = vpop.f32.mrb[0].mxu0
    %v1369 = vadd.f32 %v492, %v1368
    %1370 = vdwg.mxu0
    %1371 = vmatprep.subr.mxu0 %v1175
    %1372 = vmatpush1.msra.mxu0 %v1174
    %1373 = vmatprep.subr.mxu0 %v1179
    %1374 = vmatpush1.msra.mxu0 %v1178
    %1375 = vmatprep.subr.mxu0 %v1183
    %1376 = vmatpush1.msra.mxu0 %v1182
    %1377 = vmatprep.subr.mxu0 %v1187
    %1378 = vmatpush1.msra.mxu0 %v1186
    %1379 = vmatprep.subr.mxu0 %v1191
    %1380 = vmatpush1.msra.mxu0 %v1190
    %1381 = vmatprep.subr.mxu0 %v1195
    %1382 = vmatpush1.msra.mxu0 %v1194
    %1383 = vmatprep.subr.mxu0 %v1199
    %1384 = vmatpush1.msra.mxu0 %v1198
    %1385 = vmatprep.subr.mxu0 %v1203
    %1386 = vmatpush1.msra.mxu0 %v1202
    %1387 = vmatprep.subr.mxu0 %v1207
    %1388 = vmatpush1.msra.mxu0 %v1206
    %1389 = vmatprep.subr.mxu0 %v1211
    %1390 = vmatpush1.msra.mxu0 %v1210
    %1391 = vmatprep.subr.mxu0 %v1215
    %1392 = vmatpush1.msra.mxu0 %v1214
    %1393 = vmatprep.subr.mxu0 %v1219
    %1394 = vmatpush1.msra.mxu0 %v1218
    %1395 = vmatprep.subr.mxu0 %v1223
    %1396 = vmatpush1.msra.mxu0 %v1222
    %1397 = vmatprep.subr.mxu0 %v1227
    %1398 = vmatpush1.msra.mxu0 %v1226
    %1399 = vmatprep.subr.mxu0 %v1231
    %1400 = vmatpush1.msra.mxu0 %v1230
    %1401 = vmatprep.subr.mxu0 %v1235
    %1402 = vmatpush1.msra.mxu0 %v1234
    %1403 = vmatprep.subr.mxu0 %v1239
    %1404 = vmatpush1.msra.mxu0 %v1238
    %1405 = vmatprep.subr.mxu0 %v1243
    %1406 = vmatpush1.msra.mxu0 %v1242
    %1407 = vmatprep.subr.mxu0 %v1247
    %1408 = vmatpush1.msra.mxu0 %v1246
    %1409 = vmatprep.subr.mxu0 %v1251
    %1410 = vmatpush1.msra.mxu0 %v1250
    %1411 = vmatprep.subr.mxu0 %v1255
    %1412 = vmatpush1.msra.mxu0 %v1254
    %1413 = vmatprep.subr.mxu0 %v1259
    %1414 = vmatpush1.msra.mxu0 %v1258
    %1415 = vmatprep.subr.mxu0 %v1263
    %1416 = vmatpush1.msra.mxu0 %v1262
    %1417 = vmatprep.subr.mxu0 %v1267
    %1418 = vmatpush1.msra.mxu0 %v1266
    %1419 = vmatprep.subr.mxu0 %v1271
    %1420 = vmatpush1.msra.mxu0 %v1270
    %1421 = vmatprep.subr.mxu0 %v1275
    %1422 = vmatpush1.msra.mxu0 %v1274
    %1423 = vmatprep.subr.mxu0 %v1279
    %1424 = vmatpush1.msra.mxu0 %v1278
    %1425 = vmatprep.subr.mxu0 %v1283
    %1426 = vmatpush1.msra.mxu0 %v1282
    %1427 = vmatprep.subr.mxu0 %v1287
    %1428 = vmatpush1.msra.mxu0 %v1286
    %1429 = vmatprep.subr.mxu0 %v1291
    %1430 = vmatpush1.msra.mxu0 %v1290
    %1431 = vmatprep.subr.mxu0 %v1295
    %1432 = vmatpush1.msra.mxu0 %v1294
    %1433 = vmatprep.subr.mxu0 %v1299
    %1434 = vmatpush1.msra.mxu0 %v1298
    %1435 = vmatprep.mubr.f32.mxu0 0.0
    %1436 = vmatmul.mubr.f32.gmra.mrb[0].mxu0 %v1006
    %v1437 = vpop.f32.mrb[0].mxu0
    %v1438 = vadd.f32 %v496, %v1437
    %v1439 = vpop.f32.mrb[0].mxu0
    %v1440 = vadd.f32 %v500, %v1439
    %1441 = vdwg.mxu0
    %v1442 = vxor.u32 %v1367, 2147483648
    %v1443 = vmul.f32 %v1442, 1.442695
    %v1444 = vpow.pop %v1443
    %v1445 = vadd.f32 %v1444, 1.0
    %v1446 = vrcp.pop %v1445
    %v1447 = vmul.f32 1.0, %v1446
    %v1448 = vxor.u32 %v1369, 2147483648
    %v1449 = vmul.f32 %v1448, 1.442695
    %v1450 = vpow.pop %v1449
    %v1451 = vadd.f32 %v1450, 1.0
    %v1452 = vrcp.pop %v1451
    %v1453 = vmul.f32 1.0, %v1452
    %v1454 = vmul.f32 %v1447, %v1440
    %v1455 = vadd.f32 %v1438, %v1454
    %v1456 = vtanh.pop %v1455
    %v1457 = vsub.f32 1.0, %v1453
    %v1458 = vmul.f32 %v1457, %v1456
    %v1459 = vmul.f32 %v1453, 0.0
    %v1460 = vadd.f32 %v1458, %v1459
    %1461 = vst [vmem:[#allocation3] sm:$0xff] %v1460
    %v1462 = vld [vmem:[#allocation12] sm:$0xff]
    %v1463 = vld [vmem:[#allocation12 + $0x8] sm:$0xff]
    %v1464 = vld [vmem:[#allocation12 + $0x10] sm:$0xff]
    %v1465 = vld [vmem:[#allocation12 + $0x18] sm:$0xff]
    %v1466 = vld [vmem:[#allocation12 + $0x20] sm:$0xff]
    %v1467 = vld [vmem:[#allocation12 + $0x28] sm:$0xff]
    %v1468 = vld [vmem:[#allocation12 + $0x30] sm:$0xff]
    %v1469 = vld [vmem:[#allocation12 + $0x38] sm:$0xff]
    %v1470 = vld [vmem:[#allocation12 + $0x40] sm:$0xff]
    %v1471 = vld [vmem:[#allocation12 + $0x48] sm:$0xff]
    %v1472 = vld [vmem:[#allocation12 + $0x50] sm:$0xff]
    %v1473 = vld [vmem:[#allocation12 + $0x58] sm:$0xff]
    %v1474 = vld [vmem:[#allocation12 + $0x60] sm:$0xff]
    %v1475 = vld [vmem:[#allocation12 + $0x68] sm:$0xff]
    %v1476 = vld [vmem:[#allocation12 + $0x70] sm:$0xff]
    %v1477 = vld [vmem:[#allocation12 + $0x78] sm:$0xff]
    %v1478 = vld [vmem:[#allocation12 + $0x80] sm:$0xff]
    %v1479 = vld [vmem:[#allocation12 + $0x88] sm:$0xff]
    %v1480 = vld [vmem:[#allocation12 + $0x90] sm:$0xff]
    %v1481 = vld [vmem:[#allocation12 + $0x98] sm:$0xff]
    %v1482 = vld [vmem:[#allocation12 + $0xa0] sm:$0xff]
    %v1483 = vld [vmem:[#allocation12 + $0xa8] sm:$0xff]
    %v1484 = vld [vmem:[#allocation12 + $0xb0] sm:$0xff]
    %v1485 = vld [vmem:[#allocation12 + $0xb8] sm:$0xff]
    %v1486 = vld [vmem:[#allocation12 + $0xc0] sm:$0xff]
    %v1487 = vld [vmem:[#allocation12 + $0xc8] sm:$0xff]
    %v1488 = vld [vmem:[#allocation12 + $0xd0] sm:$0xff]
    %v1489 = vld [vmem:[#allocation12 + $0xd8] sm:$0xff]
    %v1490 = vld [vmem:[#allocation12 + $0xe0] sm:$0xff]
    %v1491 = vld [vmem:[#allocation12 + $0xe8] sm:$0xff]
    %v1492 = vld [vmem:[#allocation12 + $0xf0] sm:$0xff]
    %v1493 = vld [vmem:[#allocation12 + $0xf8] sm:$0xff]
    %v1494 = vld [vmem:[#allocation12 + $0x100] sm:$0xff]
    %v1495 = vld [vmem:[#allocation12 + $0x108] sm:$0xff]
    %v1496 = vld [vmem:[#allocation12 + $0x110] sm:$0xff]
    %v1497 = vld [vmem:[#allocation12 + $0x118] sm:$0xff]
    %v1498 = vld [vmem:[#allocation12 + $0x120] sm:$0xff]
    %v1499 = vld [vmem:[#allocation12 + $0x128] sm:$0xff]
    %v1500 = vld [vmem:[#allocation12 + $0x130] sm:$0xff]
    %v1501 = vld [vmem:[#allocation12 + $0x138] sm:$0xff]
    %v1502 = vld [vmem:[#allocation12 + $0x140] sm:$0xff]
    %v1503 = vld [vmem:[#allocation12 + $0x148] sm:$0xff]
    %v1504 = vld [vmem:[#allocation12 + $0x150] sm:$0xff]
    %v1505 = vld [vmem:[#allocation12 + $0x158] sm:$0xff]
    %v1506 = vld [vmem:[#allocation12 + $0x160] sm:$0xff]
    %v1507 = vld [vmem:[#allocation12 + $0x168] sm:$0xff]
    %v1508 = vld [vmem:[#allocation12 + $0x170] sm:$0xff]
    %v1509 = vld [vmem:[#allocation12 + $0x178] sm:$0xff]
    %v1510 = vld [vmem:[#allocation12 + $0x180] sm:$0xff]
    %v1511 = vld [vmem:[#allocation12 + $0x188] sm:$0xff]
    %v1512 = vld [vmem:[#allocation12 + $0x190] sm:$0xff]
    %v1513 = vld [vmem:[#allocation12 + $0x198] sm:$0xff]
    %v1514 = vld [vmem:[#allocation12 + $0x1a0] sm:$0xff]
    %v1515 = vld [vmem:[#allocation12 + $0x1a8] sm:$0xff]
    %v1516 = vld [vmem:[#allocation12 + $0x1b0] sm:$0xff]
    %v1517 = vld [vmem:[#allocation12 + $0x1b8] sm:$0xff]
    %v1518 = vld [vmem:[#allocation12 + $0x1c0] sm:$0xff]
    %v1519 = vld [vmem:[#allocation12 + $0x1c8] sm:$0xff]
    %v1520 = vld [vmem:[#allocation12 + $0x1d0] sm:$0xff]
    %v1521 = vld [vmem:[#allocation12 + $0x1d8] sm:$0xff]
    %v1522 = vld [vmem:[#allocation12 + $0x1e0] sm:$0xff]
    %v1523 = vld [vmem:[#allocation12 + $0x1e8] sm:$0xff]
    %v1524 = vld [vmem:[#allocation12 + $0x1f0] sm:$0xff]
    %v1525 = vld [vmem:[#allocation12 + $0x1f8] sm:$0xff]
    %v1526 = vld [vmem:[#allocation12 + $0x200] sm:$0xff]
    %v1527 = vld [vmem:[#allocation12 + $0x208] sm:$0xff]
    %v1528 = vld [vmem:[#allocation12 + $0x210] sm:$0xff]
    %v1529 = vld [vmem:[#allocation12 + $0x218] sm:$0xff]
    %v1530 = vld [vmem:[#allocation12 + $0x220] sm:$0xff]
    %v1531 = vld [vmem:[#allocation12 + $0x228] sm:$0xff]
    %v1532 = vld [vmem:[#allocation12 + $0x230] sm:$0xff]
    %v1533 = vld [vmem:[#allocation12 + $0x238] sm:$0xff]
    %v1534 = vld [vmem:[#allocation12 + $0x240] sm:$0xff]
    %v1535 = vld [vmem:[#allocation12 + $0x248] sm:$0xff]
    %v1536 = vld [vmem:[#allocation12 + $0x250] sm:$0xff]
    %v1537 = vld [vmem:[#allocation12 + $0x258] sm:$0xff]
    %v1538 = vld [vmem:[#allocation12 + $0x260] sm:$0xff]
    %v1539 = vld [vmem:[#allocation12 + $0x268] sm:$0xff]
    %v1540 = vld [vmem:[#allocation12 + $0x270] sm:$0xff]
    %v1541 = vld [vmem:[#allocation12 + $0x278] sm:$0xff]
    %v1542 = vld [vmem:[#allocation12 + $0x280] sm:$0xff]
    %v1543 = vld [vmem:[#allocation12 + $0x288] sm:$0xff]
    %v1544 = vld [vmem:[#allocation12 + $0x290] sm:$0xff]
    %v1545 = vld [vmem:[#allocation12 + $0x298] sm:$0xff]
    %v1546 = vld [vmem:[#allocation12 + $0x2a0] sm:$0xff]
    %v1547 = vld [vmem:[#allocation12 + $0x2a8] sm:$0xff]
    %v1548 = vld [vmem:[#allocation12 + $0x2b0] sm:$0xff]
    %v1549 = vld [vmem:[#allocation12 + $0x2b8] sm:$0xff]
    %v1550 = vld [vmem:[#allocation12 + $0x2c0] sm:$0xff]
    %v1551 = vld [vmem:[#allocation12 + $0x2c8] sm:$0xff]
    %v1552 = vld [vmem:[#allocation12 + $0x2d0] sm:$0xff]
    %v1553 = vld [vmem:[#allocation12 + $0x2d8] sm:$0xff]
    %v1554 = vld [vmem:[#allocation12 + $0x2e0] sm:$0xff]
    %v1555 = vld [vmem:[#allocation12 + $0x2e8] sm:$0xff]
    %v1556 = vld [vmem:[#allocation12 + $0x2f0] sm:$0xff]
    %v1557 = vld [vmem:[#allocation12 + $0x2f8] sm:$0xff]
    %v1558 = vld [vmem:[#allocation12 + $0x300] sm:$0xff]
    %v1559 = vld [vmem:[#allocation12 + $0x308] sm:$0xff]
    %v1560 = vld [vmem:[#allocation12 + $0x310] sm:$0xff]
    %v1561 = vld [vmem:[#allocation12 + $0x318] sm:$0xff]
    %v1562 = vld [vmem:[#allocation12 + $0x320] sm:$0xff]
    %v1563 = vld [vmem:[#allocation12 + $0x328] sm:$0xff]
    %v1564 = vld [vmem:[#allocation12 + $0x330] sm:$0xff]
    %v1565 = vld [vmem:[#allocation12 + $0x338] sm:$0xff]
    %v1566 = vld [vmem:[#allocation12 + $0x340] sm:$0xff]
    %v1567 = vld [vmem:[#allocation12 + $0x348] sm:$0xff]
    %v1568 = vld [vmem:[#allocation12 + $0x350] sm:$0xff]
    %v1569 = vld [vmem:[#allocation12 + $0x358] sm:$0xff]
    %v1570 = vld [vmem:[#allocation12 + $0x360] sm:$0xff]
    %v1571 = vld [vmem:[#allocation12 + $0x368] sm:$0xff]
    %v1572 = vld [vmem:[#allocation12 + $0x370] sm:$0xff]
    %v1573 = vld [vmem:[#allocation12 + $0x378] sm:$0xff]
    %v1574 = vld [vmem:[#allocation12 + $0x380] sm:$0xff]
    %v1575 = vld [vmem:[#allocation12 + $0x388] sm:$0xff]
    %v1576 = vld [vmem:[#allocation12 + $0x390] sm:$0xff]
    %v1577 = vld [vmem:[#allocation12 + $0x398] sm:$0xff]
    %v1578 = vld [vmem:[#allocation12 + $0x3a0] sm:$0xff]
    %v1579 = vld [vmem:[#allocation12 + $0x3a8] sm:$0xff]
    %v1580 = vld [vmem:[#allocation12 + $0x3b0] sm:$0xff]
    %v1581 = vld [vmem:[#allocation12 + $0x3b8] sm:$0xff]
    %v1582 = vld [vmem:[#allocation12 + $0x3c0] sm:$0xff]
    %v1583 = vld [vmem:[#allocation12 + $0x3c8] sm:$0xff]
    %v1584 = vld [vmem:[#allocation12 + $0x3d0] sm:$0xff]
    %v1585 = vld [vmem:[#allocation12 + $0x3d8] sm:$0xff]
    %v1586 = vld [vmem:[#allocation12 + $0x3e0] sm:$0xff]
    %v1587 = vld [vmem:[#allocation12 + $0x3e8] sm:$0xff]
    %v1588 = vld [vmem:[#allocation12 + $0x3f0] sm:$0xff]
    %v1589 = vld [vmem:[#allocation12 + $0x3f8] sm:$0xff]
    %1590 = vmatprep.subr.mxu0 %v1463
    %1591 = vmatpush1.msra.mxu0 %v1462
    %1592 = vmatprep.subr.mxu0 %v1467
    %1593 = vmatpush1.msra.mxu0 %v1466
    %1594 = vmatprep.subr.mxu0 %v1471
    %1595 = vmatpush1.msra.mxu0 %v1470
    %1596 = vmatprep.subr.mxu0 %v1475
    %1597 = vmatpush1.msra.mxu0 %v1474
    %1598 = vmatprep.subr.mxu0 %v1479
    %1599 = vmatpush1.msra.mxu0 %v1478
    %1600 = vmatprep.subr.mxu0 %v1483
    %1601 = vmatpush1.msra.mxu0 %v1482
    %1602 = vmatprep.subr.mxu0 %v1487
    %1603 = vmatpush1.msra.mxu0 %v1486
    %1604 = vmatprep.subr.mxu0 %v1491
    %1605 = vmatpush1.msra.mxu0 %v1490
    %1606 = vmatprep.subr.mxu0 %v1495
    %1607 = vmatpush1.msra.mxu0 %v1494
    %1608 = vmatprep.subr.mxu0 %v1499
    %1609 = vmatpush1.msra.mxu0 %v1498
    %1610 = vmatprep.subr.mxu0 %v1503
    %1611 = vmatpush1.msra.mxu0 %v1502
    %1612 = vmatprep.subr.mxu0 %v1507
    %1613 = vmatpush1.msra.mxu0 %v1506
    %1614 = vmatprep.subr.mxu0 %v1511
    %1615 = vmatpush1.msra.mxu0 %v1510
    %1616 = vmatprep.subr.mxu0 %v1515
    %1617 = vmatpush1.msra.mxu0 %v1514
    %1618 = vmatprep.subr.mxu0 %v1519
    %1619 = vmatpush1.msra.mxu0 %v1518
    %1620 = vmatprep.subr.mxu0 %v1523
    %1621 = vmatpush1.msra.mxu0 %v1522
    %1622 = vmatprep.subr.mxu0 %v1527
    %1623 = vmatpush1.msra.mxu0 %v1526
    %1624 = vmatprep.subr.mxu0 %v1531
    %1625 = vmatpush1.msra.mxu0 %v1530
    %1626 = vmatprep.subr.mxu0 %v1535
    %1627 = vmatpush1.msra.mxu0 %v1534
    %1628 = vmatprep.subr.mxu0 %v1539
    %1629 = vmatpush1.msra.mxu0 %v1538
    %1630 = vmatprep.subr.mxu0 %v1543
    %1631 = vmatpush1.msra.mxu0 %v1542
    %1632 = vmatprep.subr.mxu0 %v1547
    %1633 = vmatpush1.msra.mxu0 %v1546
    %1634 = vmatprep.subr.mxu0 %v1551
    %1635 = vmatpush1.msra.mxu0 %v1550
    %1636 = vmatprep.subr.mxu0 %v1555
    %1637 = vmatpush1.msra.mxu0 %v1554
    %1638 = vmatprep.subr.mxu0 %v1559
    %1639 = vmatpush1.msra.mxu0 %v1558
    %1640 = vmatprep.subr.mxu0 %v1563
    %1641 = vmatpush1.msra.mxu0 %v1562
    %1642 = vmatprep.subr.mxu0 %v1567
    %1643 = vmatpush1.msra.mxu0 %v1566
    %1644 = vmatprep.subr.mxu0 %v1571
    %1645 = vmatpush1.msra.mxu0 %v1570
    %1646 = vmatprep.subr.mxu0 %v1575
    %1647 = vmatpush1.msra.mxu0 %v1574
    %1648 = vmatprep.subr.mxu0 %v1579
    %1649 = vmatpush1.msra.mxu0 %v1578
    %1650 = vmatprep.subr.mxu0 %v1583
    %1651 = vmatpush1.msra.mxu0 %v1582
    %1652 = vmatprep.subr.mxu0 %v1587
    %1653 = vmatpush1.msra.mxu0 %v1586
    %1654 = vmatprep.mubr.f32.mxu0 %v1006
    %1655 = vmatmul.mubr.f32.gmra.mrb[0].mxu0 %v1171
    %v1656 = vpop.f32.mrb[0].mxu0
    %v1657 = vadd.f32 %v466, %v1656
    %v1658 = vpop.f32.mrb[0].mxu0
    %v1659 = vadd.f32 %v470, %v1658
    %1660 = vdwg.mxu0
    %1661 = vmatprep.subr.mxu0 %v1465
    %1662 = vmatpush1.msra.mxu0 %v1464
    %1663 = vmatprep.subr.mxu0 %v1469
    %1664 = vmatpush1.msra.mxu0 %v1468
    %1665 = vmatprep.subr.mxu0 %v1473
    %1666 = vmatpush1.msra.mxu0 %v1472
    %1667 = vmatprep.subr.mxu0 %v1477
    %1668 = vmatpush1.msra.mxu0 %v1476
    %1669 = vmatprep.subr.mxu0 %v1481
    %1670 = vmatpush1.msra.mxu0 %v1480
    %1671 = vmatprep.subr.mxu0 %v1485
    %1672 = vmatpush1.msra.mxu0 %v1484
    %1673 = vmatprep.subr.mxu0 %v1489
    %1674 = vmatpush1.msra.mxu0 %v1488
    %1675 = vmatprep.subr.mxu0 %v1493
    %1676 = vmatpush1.msra.mxu0 %v1492
    %1677 = vmatprep.subr.mxu0 %v1497
    %1678 = vmatpush1.msra.mxu0 %v1496
    %1679 = vmatprep.subr.mxu0 %v1501
    %1680 = vmatpush1.msra.mxu0 %v1500
    %1681 = vmatprep.subr.mxu0 %v1505
    %1682 = vmatpush1.msra.mxu0 %v1504
    %1683 = vmatprep.subr.mxu0 %v1509
    %1684 = vmatpush1.msra.mxu0 %v1508
    %1685 = vmatprep.subr.mxu0 %v1513
    %1686 = vmatpush1.msra.mxu0 %v1512
    %1687 = vmatprep.subr.mxu0 %v1517
    %1688 = vmatpush1.msra.mxu0 %v1516
    %1689 = vmatprep.subr.mxu0 %v1521
    %1690 = vmatpush1.msra.mxu0 %v1520
    %1691 = vmatprep.subr.mxu0 %v1525
    %1692 = vmatpush1.msra.mxu0 %v1524
    %1693 = vmatprep.subr.mxu0 %v1529
    %1694 = vmatpush1.msra.mxu0 %v1528
    %1695 = vmatprep.subr.mxu0 %v1533
    %1696 = vmatpush1.msra.mxu0 %v1532
    %1697 = vmatprep.subr.mxu0 %v1537
    %1698 = vmatpush1.msra.mxu0 %v1536
    %1699 = vmatprep.subr.mxu0 %v1541
    %1700 = vmatpush1.msra.mxu0 %v1540
    %1701 = vmatprep.subr.mxu0 %v1545
    %1702 = vmatpush1.msra.mxu0 %v1544
    %1703 = vmatprep.subr.mxu0 %v1549
    %1704 = vmatpush1.msra.mxu0 %v1548
    %1705 = vmatprep.subr.mxu0 %v1553
    %1706 = vmatpush1.msra.mxu0 %v1552
    %1707 = vmatprep.subr.mxu0 %v1557
    %1708 = vmatpush1.msra.mxu0 %v1556
    %1709 = vmatprep.subr.mxu0 %v1561
    %1710 = vmatpush1.msra.mxu0 %v1560
    %1711 = vmatprep.subr.mxu0 %v1565
    %1712 = vmatpush1.msra.mxu0 %v1564
    %1713 = vmatprep.subr.mxu0 %v1569
    %1714 = vmatpush1.msra.mxu0 %v1568
    %1715 = vmatprep.subr.mxu0 %v1573
    %1716 = vmatpush1.msra.mxu0 %v1572
    %1717 = vmatprep.subr.mxu0 %v1577
    %1718 = vmatpush1.msra.mxu0 %v1576
    %1719 = vmatprep.subr.mxu0 %v1581
    %1720 = vmatpush1.msra.mxu0 %v1580
    %1721 = vmatprep.subr.mxu0 %v1585
    %1722 = vmatpush1.msra.mxu0 %v1584
    %1723 = vmatprep.subr.mxu0 %v1589
    %1724 = vmatpush1.msra.mxu0 %v1588
    %1725 = vmatprep.mubr.f32.mxu0 %v1006
    %1726 = vmatmul.mubr.f32.gmra.mrb[0].mxu0 %v1171
    %v1727 = vpop.f32.mrb[0].mxu0
    %v1728 = vadd.f32 %v474, %v1727
    %v1729 = vpop.f32.mrb[0].mxu0
    %v1730 = vadd.f32 %v478, %v1729
    %1731 = vdwg.mxu0
    %v1732 = vxor.u32 %v1657, 2147483648
    %v1733 = vmul.f32 %v1732, 1.442695
    %v1734 = vpow.pop %v1733
    %v1735 = vadd.f32 %v1734, 1.0
    %v1736 = vrcp.pop %v1735
    %v1737 = vmul.f32 1.0, %v1736
    %v1738 = vxor.u32 %v1659, 2147483648
    %v1739 = vmul.f32 %v1738, 1.442695
    %v1740 = vpow.pop %v1739
    %v1741 = vadd.f32 %v1740, 1.0
    %v1742 = vrcp.pop %v1741
    %v1743 = vmul.f32 1.0, %v1742
    %v1744 = vmul.f32 %v1737, %v1730
    %v1745 = vadd.f32 %v1728, %v1744
    %v1746 = vtanh.pop %v1745
    %v1747 = vsub.f32 1.0, %v1743
    %v1748 = vmul.f32 %v1747, %v1746
    %v1749 = vmul.f32 %v1743, %v1006
    %v1750 = vadd.f32 %v1748, %v1749
    %v1751 = vld [vmem:[#allocation2 + $0x30] sm:$0xff]
    %v1752 = vld [vmem:[#allocation2 + $0x38] sm:$0xff]
    %v1753 = vld [vmem:[#allocation2 + $0x40] sm:$0xff]
    %v1754 = vld [vmem:[#allocation9] sm:$0xff]
    %v1755 = vld [vmem:[#allocation9 + $0x8] sm:$0xff]
    %v1756 = vld [vmem:[#allocation9 + $0x10] sm:$0xff]
    %v1757 = vld [vmem:[#allocation9 + $0x18] sm:$0xff]
    %v1758 = vld [vmem:[#allocation9 + $0x20] sm:$0xff]
    %v1759 = vld [vmem:[#allocation9 + $0x28] sm:$0xff]
    %v1760 = vld [vmem:[#allocation9 + $0x30] sm:$0xff]
    %v1761 = vld [vmem:[#allocation9 + $0x38] sm:$0xff]
    %v1762 = vld [vmem:[#allocation9 + $0x40] sm:$0xff]
    %v1763 = vld [vmem:[#allocation9 + $0x48] sm:$0xff]
    %v1764 = vld [vmem:[#allocation9 + $0x50] sm:$0xff]
    %v1765 = vld [vmem:[#allocation9 + $0x58] sm:$0xff]
    %v1766 = vld [vmem:[#allocation9 + $0x60] sm:$0xff]
    %v1767 = vld [vmem:[#allocation9 + $0x68] sm:$0xff]
    %v1768 = vld [vmem:[#allocation9 + $0x70] sm:$0xff]
    %v1769 = vld [vmem:[#allocation9 + $0x78] sm:$0xff]
    %v1770 = vld [vmem:[#allocation9 + $0x80] sm:$0xff]
    %v1771 = vld [vmem:[#allocation9 + $0x88] sm:$0xff]
    %v1772 = vld [vmem:[#allocation9 + $0x90] sm:$0xff]
    %v1773 = vld [vmem:[#allocation9 + $0x98] sm:$0xff]
    %v1774 = vld [vmem:[#allocation9 + $0xa0] sm:$0xff]
    %v1775 = vld [vmem:[#allocation9 + $0xa8] sm:$0xff]
    %v1776 = vld [vmem:[#allocation9 + $0xb0] sm:$0xff]
    %v1777 = vld [vmem:[#allocation9 + $0xb8] sm:$0xff]
    %v1778 = vld [vmem:[#allocation9 + $0xc0] sm:$0xff]
    %v1779 = vld [vmem:[#allocation9 + $0xc8] sm:$0xff]
    %v1780 = vld [vmem:[#allocation9 + $0xd0] sm:$0xff]
    %v1781 = vld [vmem:[#allocation9 + $0xd8] sm:$0xff]
    %v1782 = vld [vmem:[#allocation9 + $0xe0] sm:$0xff]
    %v1783 = vld [vmem:[#allocation9 + $0xe8] sm:$0xff]
    %v1784 = vld [vmem:[#allocation9 + $0xf0] sm:$0xff]
    %v1785 = vld [vmem:[#allocation9 + $0xf8] sm:$0xff]
    %v1786 = vld [vmem:[#allocation9 + $0x100] sm:$0xff]
    %v1787 = vld [vmem:[#allocation9 + $0x108] sm:$0xff]
    %v1788 = vld [vmem:[#allocation9 + $0x110] sm:$0xff]
    %v1789 = vld [vmem:[#allocation9 + $0x118] sm:$0xff]
    %v1790 = vld [vmem:[#allocation9 + $0x120] sm:$0xff]
    %v1791 = vld [vmem:[#allocation9 + $0x128] sm:$0xff]
    %v1792 = vld [vmem:[#allocation9 + $0x130] sm:$0xff]
    %v1793 = vld [vmem:[#allocation9 + $0x138] sm:$0xff]
    %v1794 = vld [vmem:[#allocation9 + $0x140] sm:$0xff]
    %v1795 = vld [vmem:[#allocation9 + $0x148] sm:$0xff]
    %v1796 = vld [vmem:[#allocation9 + $0x150] sm:$0xff]
    %v1797 = vld [vmem:[#allocation9 + $0x158] sm:$0xff]
    %v1798 = vld [vmem:[#allocation9 + $0x160] sm:$0xff]
    %v1799 = vld [vmem:[#allocation9 + $0x168] sm:$0xff]
    %v1800 = vld [vmem:[#allocation9 + $0x170] sm:$0xff]
    %v1801 = vld [vmem:[#allocation9 + $0x178] sm:$0xff]
    %1802 = vmatprep.subr.mxu0 %v1755
    %1803 = vmatpush1.msra.mxu0 %v1754
    %1804 = vmatprep.subr.mxu0 %v1758
    %1805 = vmatpush1.msra.mxu0 %v1757
    %1806 = vmatprep.subr.mxu0 %v1761
    %1807 = vmatpush1.msra.mxu0 %v1760
    %1808 = vmatprep.subr.mxu0 %v1764
    %1809 = vmatpush1.msra.mxu0 %v1763
    %1810 = vmatprep.subr.mxu0 %v1767
    %1811 = vmatpush1.msra.mxu0 %v1766
    %1812 = vmatprep.subr.mxu0 %v1770
    %1813 = vmatpush1.msra.mxu0 %v1769
    %1814 = vmatprep.subr.mxu0 %v1773
    %1815 = vmatpush1.msra.mxu0 %v1772
    %1816 = vmatprep.subr.mxu0 %v1776
    %1817 = vmatpush1.msra.mxu0 %v1775
    %1818 = vmatprep.subr.mxu0 %v1779
    %1819 = vmatpush1.msra.mxu0 %v1778
    %1820 = vmatprep.subr.mxu0 %v1782
    %1821 = vmatpush1.msra.mxu0 %v1781
    %1822 = vmatprep.subr.mxu0 %v1785
    %1823 = vmatpush1.msra.mxu0 %v1784
    %1824 = vmatprep.subr.mxu0 %v1788
    %1825 = vmatpush1.msra.mxu0 %v1787
    %1826 = vmatprep.subr.mxu0 %v1791
    %1827 = vmatpush1.msra.mxu0 %v1790
    %1828 = vmatprep.subr.mxu0 %v1794
    %1829 = vmatpush1.msra.mxu0 %v1793
    %1830 = vmatprep.subr.mxu0 %v1797
    %1831 = vmatpush1.msra.mxu0 %v1796
    %1832 = vmatprep.subr.mxu0 %v1800
    %1833 = vmatpush1.msra.mxu0 %v1799
    %1834 = vmatprep.subr.mxu0 0.0
    %1835 = vmatpush1.msra.mxu0 0.0
    %1836 = vmatprep.subr.mxu0 0.0
    %1837 = vmatpush1.msra.mxu0 0.0
    %1838 = vmatprep.subr.mxu0 0.0
    %1839 = vmatpush1.msra.mxu0 0.0
    %1840 = vmatprep.subr.mxu0 0.0
    %1841 = vmatpush1.msra.mxu0 0.0
    %1842 = vmatprep.subr.mxu0 0.0
    %1843 = vmatpush1.msra.mxu0 0.0
    %1844 = vmatprep.subr.mxu0 0.0
    %1845 = vmatpush1.msra.mxu0 0.0
    %1846 = vmatprep.subr.mxu0 0.0
    %1847 = vmatpush1.msra.mxu0 0.0
    %1848 = vmatprep.subr.mxu0 0.0
    %1849 = vmatpush1.msra.mxu0 0.0
    %1850 = vmatprep.subr.mxu0 0.0
    %1851 = vmatpush1.msra.mxu0 0.0
    %1852 = vmatprep.subr.mxu0 0.0
    %1853 = vmatpush1.msra.mxu0 0.0
    %1854 = vmatprep.subr.mxu0 0.0
    %1855 = vmatpush1.msra.mxu0 0.0
    %1856 = vmatprep.subr.mxu0 0.0
    %1857 = vmatpush1.msra.mxu0 0.0
    %1858 = vmatprep.subr.mxu0 0.0
    %1859 = vmatpush1.msra.mxu0 0.0
    %1860 = vmatprep.subr.mxu0 0.0
    %1861 = vmatpush1.msra.mxu0 0.0
    %1862 = vmatprep.subr.mxu0 0.0
    %1863 = vmatpush1.msra.mxu0 0.0
    %1864 = vmatprep.subr.mxu0 0.0
    %1865 = vmatpush1.msra.mxu0 0.0
    %1866 = vmatprep.mubr.f32.mxu0 0.0
    %1867 = vmatmul.mubr.f32.gmra.mrb[0].mxu0 %v1171
    %v1868 = vpop.f32.mrb[0].mxu0
    %v1869 = vadd.f32 %v449, %v1868
    %v1870 = vpop.f32.mrb[0].mxu0
    %v1871 = vadd.f32 %v453, %v1870
    %1872 = vdwg.mxu0
    %1873 = vmatprep.subr.mxu0 0.0
    %1874 = vmatpush1.msra.mxu0 %v1756
    %1875 = vmatprep.subr.mxu0 0.0
    %1876 = vmatpush1.msra.mxu0 %v1759
    %1877 = vmatprep.subr.mxu0 0.0
    %1878 = vmatpush1.msra.mxu0 %v1762
    %1879 = vmatprep.subr.mxu0 0.0
    %1880 = vmatpush1.msra.mxu0 %v1765
    %1881 = vmatprep.subr.mxu0 0.0
    %1882 = vmatpush1.msra.mxu0 %v1768
    %1883 = vmatprep.subr.mxu0 0.0
    %1884 = vmatpush1.msra.mxu0 %v1771
    %1885 = vmatprep.subr.mxu0 0.0
    %1886 = vmatpush1.msra.mxu0 %v1774
    %1887 = vmatprep.subr.mxu0 0.0
    %1888 = vmatpush1.msra.mxu0 %v1777
    %1889 = vmatprep.subr.mxu0 0.0
    %1890 = vmatpush1.msra.mxu0 %v1780
    %1891 = vmatprep.subr.mxu0 0.0
    %1892 = vmatpush1.msra.mxu0 %v1783
    %1893 = vmatprep.subr.mxu0 0.0
    %1894 = vmatpush1.msra.mxu0 %v1786
    %1895 = vmatprep.subr.mxu0 0.0
    %1896 = vmatpush1.msra.mxu0 %v1789
    %1897 = vmatprep.subr.mxu0 0.0
    %1898 = vmatpush1.msra.mxu0 %v1792
    %1899 = vmatprep.subr.mxu0 0.0
    %1900 = vmatpush1.msra.mxu0 %v1795
    %1901 = vmatprep.subr.mxu0 0.0
    %1902 = vmatpush1.msra.mxu0 %v1798
    %1903 = vmatprep.subr.mxu0 0.0
    %1904 = vmatpush1.msra.mxu0 %v1801
    %1905 = vmatprep.subr.mxu0 0.0
    %1906 = vmatpush1.msra.mxu0 0.0
    %1907 = vmatprep.subr.mxu0 0.0
    %1908 = vmatpush1.msra.mxu0 0.0
    %1909 = vmatprep.subr.mxu0 0.0
    %1910 = vmatpush1.msra.mxu0 0.0
    %1911 = vmatprep.subr.mxu0 0.0
    %1912 = vmatpush1.msra.mxu0 0.0
    %1913 = vmatprep.subr.mxu0 0.0
    %1914 = vmatpush1.msra.mxu0 0.0
    %1915 = vmatprep.subr.mxu0 0.0
    %1916 = vmatpush1.msra.mxu0 0.0
    %1917 = vmatprep.subr.mxu0 0.0
    %1918 = vmatpush1.msra.mxu0 0.0
    %1919 = vmatprep.subr.mxu0 0.0
    %1920 = vmatpush1.msra.mxu0 0.0
    %1921 = vmatprep.subr.mxu0 0.0
    %1922 = vmatpush1.msra.mxu0 0.0
    %1923 = vmatprep.subr.mxu0 0.0
    %1924 = vmatpush1.msra.mxu0 0.0
    %1925 = vmatprep.subr.mxu0 0.0
    %1926 = vmatpush1.msra.mxu0 0.0
    %1927 = vmatprep.subr.mxu0 0.0
    %1928 = vmatpush1.msra.mxu0 0.0
    %1929 = vmatprep.subr.mxu0 0.0
    %1930 = vmatpush1.msra.mxu0 0.0
    %1931 = vmatprep.subr.mxu0 0.0
    %1932 = vmatpush1.msra.mxu0 0.0
    %1933 = vmatprep.subr.mxu0 0.0
    %1934 = vmatpush1.msra.mxu0 0.0
    %1935 = vmatprep.subr.mxu0 0.0
    %1936 = vmatpush1.msra.mxu0 0.0
    %1937 = vmatprep.mubr.f32.mxu0 0.0
    %1938 = vmatmul.mubr.f32.gmra.mrb[0].mxu0 %v1171
    %v1939 = vpop.f32.mrb[0].mxu0
    %v1940 = vadd.f32 %v457, %v1939
    %v1941 = vpop.f32.mrb[0].mxu0
    %1942 = vdwg.mxu0
    %v1943 = vadd.f32 %v1751, %v1869
    %v1944 = vxor.u32 %v1943, 2147483648
    %v1945 = vmul.f32 %v1944, 1.442695
    %v1946 = vpow.pop %v1945
    %v1947 = vadd.f32 %v1946, 1.0
    %v1948 = vrcp.pop %v1947
    %v1949 = vmul.f32 1.0, %v1948
    %v1950 = vadd.f32 %v1752, %v1871
    %v1951 = vxor.u32 %v1950, 2147483648
    %v1952 = vmul.f32 %v1951, 1.442695
    %v1953 = vpow.pop %v1952
    %v1954 = vadd.f32 %v1953, 1.0
    %v1955 = vrcp.pop %v1954
    %v1956 = vmul.f32 1.0, %v1955
    %v1957 = vmul.f32 %v1949, %v1940
    %v1958 = vadd.f32 %v1753, %v1957
    %v1959 = vtanh.pop %v1958
    %v1960 = vsub.f32 1.0, %v1956
    %v1961 = vmul.f32 %v1960, %v1959
    %v1962 = vmul.f32 %v1956, %v1171
    %v1963 = vadd.f32 %v1961, %v1962
    %v1964 = vld [vmem:[#allocation15] sm:$0xff]
    %v1965 = vld [vmem:[#allocation15 + $0x8] sm:$0xff]
    %v1966 = vld [vmem:[#allocation15 + $0x10] sm:$0xff]
    %v1967 = vld [vmem:[#allocation15 + $0x18] sm:$0xff]
    %v1968 = vld [vmem:[#allocation15 + $0x20] sm:$0xff]
    %v1969 = vld [vmem:[#allocation15 + $0x28] sm:$0xff]
    %v1970 = vld [vmem:[#allocation15 + $0x30] sm:$0xff]
    %v1971 = vld [vmem:[#allocation15 + $0x38] sm:$0xff]
    %v1972 = vld [vmem:[#allocation15 + $0x40] sm:$0xff]
    %v1973 = vld [vmem:[#allocation15 + $0x48] sm:$0xff]
    %v1974 = vld [vmem:[#allocation15 + $0x50] sm:$0xff]
    %v1975 = vld [vmem:[#allocation15 + $0x58] sm:$0xff]
    %v1976 = vld [vmem:[#allocation15 + $0x60] sm:$0xff]
    %v1977 = vld [vmem:[#allocation15 + $0x68] sm:$0xff]
    %v1978 = vld [vmem:[#allocation15 + $0x70] sm:$0xff]
    %v1979 = vld [vmem:[#allocation15 + $0x78] sm:$0xff]
    %v1980 = vld [vmem:[#allocation15 + $0x80] sm:$0xff]
    %v1981 = vld [vmem:[#allocation15 + $0x88] sm:$0xff]
    %v1982 = vld [vmem:[#allocation15 + $0x90] sm:$0xff]
    %v1983 = vld [vmem:[#allocation15 + $0x98] sm:$0xff]
    %v1984 = vld [vmem:[#allocation15 + $0xa0] sm:$0xff]
    %v1985 = vld [vmem:[#allocation15 + $0xa8] sm:$0xff]
    %v1986 = vld [vmem:[#allocation15 + $0xb0] sm:$0xff]
    %v1987 = vld [vmem:[#allocation15 + $0xb8] sm:$0xff]
    %v1988 = vld [vmem:[#allocation15 + $0xc0] sm:$0xff]
    %v1989 = vld [vmem:[#allocation15 + $0xc8] sm:$0xff]
    %v1990 = vld [vmem:[#allocation15 + $0xd0] sm:$0xff]
    %v1991 = vld [vmem:[#allocation15 + $0xd8] sm:$0xff]
    %v1992 = vld [vmem:[#allocation15 + $0xe0] sm:$0xff]
    %v1993 = vld [vmem:[#allocation15 + $0xe8] sm:$0xff]
    %v1994 = vld [vmem:[#allocation15 + $0xf0] sm:$0xff]
    %v1995 = vld [vmem:[#allocation15 + $0xf8] sm:$0xff]
    %v1996 = vld [vmem:[#allocation15 + $0x100] sm:$0xff]
    %v1997 = vld [vmem:[#allocation15 + $0x108] sm:$0xff]
    %v1998 = vld [vmem:[#allocation15 + $0x110] sm:$0xff]
    %v1999 = vld [vmem:[#allocation15 + $0x118] sm:$0xff]
    %v2000 = vld [vmem:[#allocation15 + $0x120] sm:$0xff]
    %v2001 = vld [vmem:[#allocation15 + $0x128] sm:$0xff]
    %v2002 = vld [vmem:[#allocation15 + $0x130] sm:$0xff]
    %v2003 = vld [vmem:[#allocation15 + $0x138] sm:$0xff]
    %v2004 = vld [vmem:[#allocation15 + $0x140] sm:$0xff]
    %v2005 = vld [vmem:[#allocation15 + $0x148] sm:$0xff]
    %v2006 = vld [vmem:[#allocation15 + $0x150] sm:$0xff]
    %v2007 = vld [vmem:[#allocation15 + $0x158] sm:$0xff]
    %v2008 = vld [vmem:[#allocation15 + $0x160] sm:$0xff]
    %v2009 = vld [vmem:[#allocation15 + $0x168] sm:$0xff]
    %v2010 = vld [vmem:[#allocation15 + $0x170] sm:$0xff]
    %v2011 = vld [vmem:[#allocation15 + $0x178] sm:$0xff]
    %v2012 = vld [vmem:[#allocation15 + $0x180] sm:$0xff]
    %v2013 = vld [vmem:[#allocation15 + $0x188] sm:$0xff]
    %v2014 = vld [vmem:[#allocation15 + $0x190] sm:$0xff]
    %v2015 = vld [vmem:[#allocation15 + $0x198] sm:$0xff]
    %v2016 = vld [vmem:[#allocation15 + $0x1a0] sm:$0xff]
    %v2017 = vld [vmem:[#allocation15 + $0x1a8] sm:$0xff]
    %v2018 = vld [vmem:[#allocation15 + $0x1b0] sm:$0xff]
    %v2019 = vld [vmem:[#allocation15 + $0x1b8] sm:$0xff]
    %v2020 = vld [vmem:[#allocation15 + $0x1c0] sm:$0xff]
    %v2021 = vld [vmem:[#allocation15 + $0x1c8] sm:$0xff]
    %v2022 = vld [vmem:[#allocation15 + $0x1d0] sm:$0xff]
    %v2023 = vld [vmem:[#allocation15 + $0x1d8] sm:$0xff]
    %v2024 = vld [vmem:[#allocation15 + $0x1e0] sm:$0xff]
    %v2025 = vld [vmem:[#allocation15 + $0x1e8] sm:$0xff]
    %v2026 = vld [vmem:[#allocation15 + $0x1f0] sm:$0xff]
    %v2027 = vld [vmem:[#allocation15 + $0x1f8] sm:$0xff]
    %v2028 = vld [vmem:[#allocation15 + $0x200] sm:$0xff]
    %v2029 = vld [vmem:[#allocation15 + $0x208] sm:$0xff]
    %v2030 = vld [vmem:[#allocation15 + $0x210] sm:$0xff]
    %v2031 = vld [vmem:[#allocation15 + $0x218] sm:$0xff]
    %v2032 = vld [vmem:[#allocation15 + $0x220] sm:$0xff]
    %v2033 = vld [vmem:[#allocation15 + $0x228] sm:$0xff]
    %v2034 = vld [vmem:[#allocation15 + $0x230] sm:$0xff]
    %v2035 = vld [vmem:[#allocation15 + $0x238] sm:$0xff]
    %v2036 = vld [vmem:[#allocation15 + $0x240] sm:$0xff]
    %v2037 = vld [vmem:[#allocation15 + $0x248] sm:$0xff]
    %v2038 = vld [vmem:[#allocation15 + $0x250] sm:$0xff]
    %v2039 = vld [vmem:[#allocation15 + $0x258] sm:$0xff]
    %v2040 = vld [vmem:[#allocation15 + $0x260] sm:$0xff]
    %v2041 = vld [vmem:[#allocation15 + $0x268] sm:$0xff]
    %v2042 = vld [vmem:[#allocation15 + $0x270] sm:$0xff]
    %v2043 = vld [vmem:[#allocation15 + $0x278] sm:$0xff]
    %v2044 = vld [vmem:[#allocation15 + $0x280] sm:$0xff]
    %v2045 = vld [vmem:[#allocation15 + $0x288] sm:$0xff]
    %v2046 = vld [vmem:[#allocation15 + $0x290] sm:$0xff]
    %v2047 = vld [vmem:[#allocation15 + $0x298] sm:$0xff]
    %v2048 = vld [vmem:[#allocation15 + $0x2a0] sm:$0xff]
    %v2049 = vld [vmem:[#allocation15 + $0x2a8] sm:$0xff]
    %v2050 = vld [vmem:[#allocation15 + $0x2b0] sm:$0xff]
    %v2051 = vld [vmem:[#allocation15 + $0x2b8] sm:$0xff]
    %v2052 = vld [vmem:[#allocation15 + $0x2c0] sm:$0xff]
    %v2053 = vld [vmem:[#allocation15 + $0x2c8] sm:$0xff]
    %v2054 = vld [vmem:[#allocation15 + $0x2d0] sm:$0xff]
    %v2055 = vld [vmem:[#allocation15 + $0x2d8] sm:$0xff]
    %v2056 = vld [vmem:[#allocation15 + $0x2e0] sm:$0xff]
    %v2057 = vld [vmem:[#allocation15 + $0x2e8] sm:$0xff]
    %v2058 = vld [vmem:[#allocation15 + $0x2f0] sm:$0xff]
    %v2059 = vld [vmem:[#allocation15 + $0x2f8] sm:$0xff]
    %v2060 = vld [vmem:[#allocation15 + $0x300] sm:$0xff]
    %v2061 = vld [vmem:[#allocation15 + $0x308] sm:$0xff]
    %v2062 = vld [vmem:[#allocation15 + $0x310] sm:$0xff]
    %v2063 = vld [vmem:[#allocation15 + $0x318] sm:$0xff]
    %v2064 = vld [vmem:[#allocation15 + $0x320] sm:$0xff]
    %v2065 = vld [vmem:[#allocation15 + $0x328] sm:$0xff]
    %v2066 = vld [vmem:[#allocation15 + $0x330] sm:$0xff]
    %v2067 = vld [vmem:[#allocation15 + $0x338] sm:$0xff]
    %v2068 = vld [vmem:[#allocation15 + $0x340] sm:$0xff]
    %v2069 = vld [vmem:[#allocation15 + $0x348] sm:$0xff]
    %v2070 = vld [vmem:[#allocation15 + $0x350] sm:$0xff]
    %v2071 = vld [vmem:[#allocation15 + $0x358] sm:$0xff]
    %v2072 = vld [vmem:[#allocation15 + $0x360] sm:$0xff]
    %v2073 = vld [vmem:[#allocation15 + $0x368] sm:$0xff]
    %v2074 = vld [vmem:[#allocation15 + $0x370] sm:$0xff]
    %v2075 = vld [vmem:[#allocation15 + $0x378] sm:$0xff]
    %v2076 = vld [vmem:[#allocation15 + $0x380] sm:$0xff]
    %v2077 = vld [vmem:[#allocation15 + $0x388] sm:$0xff]
    %v2078 = vld [vmem:[#allocation15 + $0x390] sm:$0xff]
    %v2079 = vld [vmem:[#allocation15 + $0x398] sm:$0xff]
    %v2080 = vld [vmem:[#allocation15 + $0x3a0] sm:$0xff]
    %v2081 = vld [vmem:[#allocation15 + $0x3a8] sm:$0xff]
    %v2082 = vld [vmem:[#allocation15 + $0x3b0] sm:$0xff]
    %v2083 = vld [vmem:[#allocation15 + $0x3b8] sm:$0xff]
    %v2084 = vld [vmem:[#allocation15 + $0x3c0] sm:$0xff]
    %v2085 = vld [vmem:[#allocation15 + $0x3c8] sm:$0xff]
    %v2086 = vld [vmem:[#allocation15 + $0x3d0] sm:$0xff]
    %v2087 = vld [vmem:[#allocation15 + $0x3d8] sm:$0xff]
    %v2088 = vld [vmem:[#allocation15 + $0x3e0] sm:$0xff]
    %v2089 = vld [vmem:[#allocation15 + $0x3e8] sm:$0xff]
    %v2090 = vld [vmem:[#allocation15 + $0x3f0] sm:$0xff]
    %v2091 = vld [vmem:[#allocation15 + $0x3f8] sm:$0xff]
    %2092 = vmatprep.subr.mxu0 %v1965
    %2093 = vmatpush1.msra.mxu0 %v1964
    %2094 = vmatprep.subr.mxu0 %v1969
    %2095 = vmatpush1.msra.mxu0 %v1968
    %2096 = vmatprep.subr.mxu0 %v1973
    %2097 = vmatpush1.msra.mxu0 %v1972
    %2098 = vmatprep.subr.mxu0 %v1977
    %2099 = vmatpush1.msra.mxu0 %v1976
    %2100 = vmatprep.subr.mxu0 %v1981
    %2101 = vmatpush1.msra.mxu0 %v1980
    %2102 = vmatprep.subr.mxu0 %v1985
    %2103 = vmatpush1.msra.mxu0 %v1984
    %2104 = vmatprep.subr.mxu0 %v1989
    %2105 = vmatpush1.msra.mxu0 %v1988
    %2106 = vmatprep.subr.mxu0 %v1993
    %2107 = vmatpush1.msra.mxu0 %v1992
    %2108 = vmatprep.subr.mxu0 %v1997
    %2109 = vmatpush1.msra.mxu0 %v1996
    %2110 = vmatprep.subr.mxu0 %v2001
    %2111 = vmatpush1.msra.mxu0 %v2000
    %2112 = vmatprep.subr.mxu0 %v2005
    %2113 = vmatpush1.msra.mxu0 %v2004
    %2114 = vmatprep.subr.mxu0 %v2009
    %2115 = vmatpush1.msra.mxu0 %v2008
    %2116 = vmatprep.subr.mxu0 %v2013
    %2117 = vmatpush1.msra.mxu0 %v2012
    %2118 = vmatprep.subr.mxu0 %v2017
    %2119 = vmatpush1.msra.mxu0 %v2016
    %2120 = vmatprep.subr.mxu0 %v2021
    %2121 = vmatpush1.msra.mxu0 %v2020
    %2122 = vmatprep.subr.mxu0 %v2025
    %2123 = vmatpush1.msra.mxu0 %v2024
    %2124 = vmatprep.subr.mxu0 %v2029
    %2125 = vmatpush1.msra.mxu0 %v2028
    %2126 = vmatprep.subr.mxu0 %v2033
    %2127 = vmatpush1.msra.mxu0 %v2032
    %2128 = vmatprep.subr.mxu0 %v2037
    %2129 = vmatpush1.msra.mxu0 %v2036
    %2130 = vmatprep.subr.mxu0 %v2041
    %2131 = vmatpush1.msra.mxu0 %v2040
    %2132 = vmatprep.subr.mxu0 %v2045
    %2133 = vmatpush1.msra.mxu0 %v2044
    %2134 = vmatprep.subr.mxu0 %v2049
    %2135 = vmatpush1.msra.mxu0 %v2048
    %2136 = vmatprep.subr.mxu0 %v2053
    %2137 = vmatpush1.msra.mxu0 %v2052
    %2138 = vmatprep.subr.mxu0 %v2057
    %2139 = vmatpush1.msra.mxu0 %v2056
    %2140 = vmatprep.subr.mxu0 %v2061
    %2141 = vmatpush1.msra.mxu0 %v2060
    %2142 = vmatprep.subr.mxu0 %v2065
    %2143 = vmatpush1.msra.mxu0 %v2064
    %2144 = vmatprep.subr.mxu0 %v2069
    %2145 = vmatpush1.msra.mxu0 %v2068
    %2146 = vmatprep.subr.mxu0 %v2073
    %2147 = vmatpush1.msra.mxu0 %v2072
    %2148 = vmatprep.subr.mxu0 %v2077
    %2149 = vmatpush1.msra.mxu0 %v2076
    %2150 = vmatprep.subr.mxu0 %v2081
    %2151 = vmatpush1.msra.mxu0 %v2080
    %2152 = vmatprep.subr.mxu0 %v2085
    %2153 = vmatpush1.msra.mxu0 %v2084
    %2154 = vmatprep.subr.mxu0 %v2089
    %2155 = vmatpush1.msra.mxu0 %v2088
    %2156 = vmatprep.mubr.f32.mxu0 %v1460
    %2157 = vmatmul.mubr.f32.gmra.mrb[0].mxu0 %v1750
    %v2158 = vpop.f32.mrb[0].mxu0
    %v2159 = vadd.f32 %v488, %v2158
    %v2160 = vpop.f32.mrb[0].mxu0
    %v2161 = vadd.f32 %v492, %v2160
    %2162 = vdwg.mxu0
    %2163 = vmatprep.subr.mxu0 %v1967
    %2164 = vmatpush1.msra.mxu0 %v1966
    %2165 = vmatprep.subr.mxu0 %v1971
    %2166 = vmatpush1.msra.mxu0 %v1970
    %2167 = vmatprep.subr.mxu0 %v1975
    %2168 = vmatpush1.msra.mxu0 %v1974
    %2169 = vmatprep.subr.mxu0 %v1979
    %2170 = vmatpush1.msra.mxu0 %v1978
    %2171 = vmatprep.subr.mxu0 %v1983
    %2172 = vmatpush1.msra.mxu0 %v1982
    %2173 = vmatprep.subr.mxu0 %v1987
    %2174 = vmatpush1.msra.mxu0 %v1986
    %2175 = vmatprep.subr.mxu0 %v1991
    %2176 = vmatpush1.msra.mxu0 %v1990
    %2177 = vmatprep.subr.mxu0 %v1995
    %2178 = vmatpush1.msra.mxu0 %v1994
    %2179 = vmatprep.subr.mxu0 %v1999
    %2180 = vmatpush1.msra.mxu0 %v1998
    %2181 = vmatprep.subr.mxu0 %v2003
    %2182 = vmatpush1.msra.mxu0 %v2002
    %2183 = vmatprep.subr.mxu0 %v2007
    %2184 = vmatpush1.msra.mxu0 %v2006
    %2185 = vmatprep.subr.mxu0 %v2011
    %2186 = vmatpush1.msra.mxu0 %v2010
    %2187 = vmatprep.subr.mxu0 %v2015
    %2188 = vmatpush1.msra.mxu0 %v2014
    %2189 = vmatprep.subr.mxu0 %v2019
    %2190 = vmatpush1.msra.mxu0 %v2018
    %2191 = vmatprep.subr.mxu0 %v2023
    %2192 = vmatpush1.msra.mxu0 %v2022
    %2193 = vmatprep.subr.mxu0 %v2027
    %2194 = vmatpush1.msra.mxu0 %v2026
    %2195 = vmatprep.subr.mxu0 %v2031
    %2196 = vmatpush1.msra.mxu0 %v2030
    %2197 = vmatprep.subr.mxu0 %v2035
    %2198 = vmatpush1.msra.mxu0 %v2034
    %2199 = vmatprep.subr.mxu0 %v2039
    %2200 = vmatpush1.msra.mxu0 %v2038
    %2201 = vmatprep.subr.mxu0 %v2043
    %2202 = vmatpush1.msra.mxu0 %v2042
    %2203 = vmatprep.subr.mxu0 %v2047
    %2204 = vmatpush1.msra.mxu0 %v2046
    %2205 = vmatprep.subr.mxu0 %v2051
    %2206 = vmatpush1.msra.mxu0 %v2050
    %2207 = vmatprep.subr.mxu0 %v2055
    %2208 = vmatpush1.msra.mxu0 %v2054
    %2209 = vmatprep.subr.mxu0 %v2059
    %2210 = vmatpush1.msra.mxu0 %v2058
    %2211 = vmatprep.subr.mxu0 %v2063
    %2212 = vmatpush1.msra.mxu0 %v2062
    %2213 = vmatprep.subr.mxu0 %v2067
    %2214 = vmatpush1.msra.mxu0 %v2066
    %2215 = vmatprep.subr.mxu0 %v2071
    %2216 = vmatpush1.msra.mxu0 %v2070
    %2217 = vmatprep.subr.mxu0 %v2075
    %2218 = vmatpush1.msra.mxu0 %v2074
    %2219 = vmatprep.subr.mxu0 %v2079
    %2220 = vmatpush1.msra.mxu0 %v2078
    %2221 = vmatprep.subr.mxu0 %v2083
    %2222 = vmatpush1.msra.mxu0 %v2082
    %2223 = vmatprep.subr.mxu0 %v2087
    %2224 = vmatpush1.msra.mxu0 %v2086
    %2225 = vmatprep.subr.mxu0 %v2091
    %2226 = vmatpush1.msra.mxu0 %v2090
    %2227 = vmatprep.mubr.f32.mxu0 %v1460
    %2228 = vmatmul.mubr.f32.gmra.mrb[0].mxu0 %v1750
    %v2229 = vpop.f32.mrb[0].mxu0
    %v2230 = vadd.f32 %v496, %v2229
    %v2231 = vpop.f32.mrb[0].mxu0
    %v2232 = vadd.f32 %v500, %v2231
    %2233 = vdwg.mxu0
    %v2234 = vxor.u32 %v2159, 2147483648
    %v2235 = vmul.f32 %v2234, 1.442695
    %v2236 = vpow.pop %v2235
    %v2237 = vadd.f32 %v2236, 1.0
    %v2238 = vrcp.pop %v2237
    %v2239 = vmul.f32 1.0, %v2238
    %v2240 = vxor.u32 %v2161, 2147483648
    %v2241 = vmul.f32 %v2240, 1.442695
    %v2242 = vpow.pop %v2241
    %v2243 = vadd.f32 %v2242, 1.0
    %v2244 = vrcp.pop %v2243
    %v2245 = vmul.f32 1.0, %v2244
    %v2246 = vmul.f32 %v2239, %v2232
    %v2247 = vadd.f32 %v2230, %v2246
    %v2248 = vtanh.pop %v2247
    %v2249 = vsub.f32 1.0, %v2245
    %v2250 = vmul.f32 %v2249, %v2248
    %v2251 = vmul.f32 %v2245, %v1460
    %v2252 = vadd.f32 %v2250, %v2251
    %2253 = vst [vmem:[#allocation3 + $0x8] sm:$0xff] %v2252
    %v2254 = vld [vmem:[#allocation12] sm:$0xff]
    %v2255 = vld [vmem:[#allocation12 + $0x8] sm:$0xff]
    %v2256 = vld [vmem:[#allocation12 + $0x10] sm:$0xff]
    %v2257 = vld [vmem:[#allocation12 + $0x18] sm:$0xff]
    %v2258 = vld [vmem:[#allocation12 + $0x20] sm:$0xff]
    %v2259 = vld [vmem:[#allocation12 + $0x28] sm:$0xff]
    %v2260 = vld [vmem:[#allocation12 + $0x30] sm:$0xff]
    %v2261 = vld [vmem:[#allocation12 + $0x38] sm:$0xff]
    %v2262 = vld [vmem:[#allocation12 + $0x40] sm:$0xff]
    %v2263 = vld [vmem:[#allocation12 + $0x48] sm:$0xff]
    %v2264 = vld [vmem:[#allocation12 + $0x50] sm:$0xff]
    %v2265 = vld [vmem:[#allocation12 + $0x58] sm:$0xff]
    %v2266 = vld [vmem:[#allocation12 + $0x60] sm:$0xff]
    %v2267 = vld [vmem:[#allocation12 + $0x68] sm:$0xff]
    %v2268 = vld [vmem:[#allocation12 + $0x70] sm:$0xff]
    %v2269 = vld [vmem:[#allocation12 + $0x78] sm:$0xff]
    %v2270 = vld [vmem:[#allocation12 + $0x80] sm:$0xff]
    %v2271 = vld [vmem:[#allocation12 + $0x88] sm:$0xff]
    %v2272 = vld [vmem:[#allocation12 + $0x90] sm:$0xff]
    %v2273 = vld [vmem:[#allocation12 + $0x98] sm:$0xff]
    %v2274 = vld [vmem:[#allocation12 + $0xa0] sm:$0xff]
    %v2275 = vld [vmem:[#allocation12 + $0xa8] sm:$0xff]
    %v2276 = vld [vmem:[#allocation12 + $0xb0] sm:$0xff]
    %v2277 = vld [vmem:[#allocation12 + $0xb8] sm:$0xff]
    %v2278 = vld [vmem:[#allocation12 + $0xc0] sm:$0xff]
    %v2279 = vld [vmem:[#allocation12 + $0xc8] sm:$0xff]
    %v2280 = vld [vmem:[#allocation12 + $0xd0] sm:$0xff]
    %v2281 = vld [vmem:[#allocation12 + $0xd8] sm:$0xff]
    %v2282 = vld [vmem:[#allocation12 + $0xe0] sm:$0xff]
    %v2283 = vld [vmem:[#allocation12 + $0xe8] sm:$0xff]
    %v2284 = vld [vmem:[#allocation12 + $0xf0] sm:$0xff]
    %v2285 = vld [vmem:[#allocation12 + $0xf8] sm:$0xff]
    %v2286 = vld [vmem:[#allocation12 + $0x100] sm:$0xff]
    %v2287 = vld [vmem:[#allocation12 + $0x108] sm:$0xff]
    %v2288 = vld [vmem:[#allocation12 + $0x110] sm:$0xff]
    %v2289 = vld [vmem:[#allocation12 + $0x118] sm:$0xff]
    %v2290 = vld [vmem:[#allocation12 + $0x120] sm:$0xff]
    %v2291 = vld [vmem:[#allocation12 + $0x128] sm:$0xff]
    %v2292 = vld [vmem:[#allocation12 + $0x130] sm:$0xff]
    %v2293 = vld [vmem:[#allocation12 + $0x138] sm:$0xff]
    %v2294 = vld [vmem:[#allocation12 + $0x140] sm:$0xff]
    %v2295 = vld [vmem:[#allocation12 + $0x148] sm:$0xff]
    %v2296 = vld [vmem:[#allocation12 + $0x150] sm:$0xff]
    %v2297 = vld [vmem:[#allocation12 + $0x158] sm:$0xff]
    %v2298 = vld [vmem:[#allocation12 + $0x160] sm:$0xff]
    %v2299 = vld [vmem:[#allocation12 + $0x168] sm:$0xff]
    %v2300 = vld [vmem:[#allocation12 + $0x170] sm:$0xff]
    %v2301 = vld [vmem:[#allocation12 + $0x178] sm:$0xff]
    %v2302 = vld [vmem:[#allocation12 + $0x180] sm:$0xff]
    %v2303 = vld [vmem:[#allocation12 + $0x188] sm:$0xff]
    %v2304 = vld [vmem:[#allocation12 + $0x190] sm:$0xff]
    %v2305 = vld [vmem:[#allocation12 + $0x198] sm:$0xff]
    %v2306 = vld [vmem:[#allocation12 + $0x1a0] sm:$0xff]
    %v2307 = vld [vmem:[#allocation12 + $0x1a8] sm:$0xff]
    %v2308 = vld [vmem:[#allocation12 + $0x1b0] sm:$0xff]
    %v2309 = vld [vmem:[#allocation12 + $0x1b8] sm:$0xff]
    %v2310 = vld [vmem:[#allocation12 + $0x1c0] sm:$0xff]
    %v2311 = vld [vmem:[#allocation12 + $0x1c8] sm:$0xff]
    %v2312 = vld [vmem:[#allocation12 + $0x1d0] sm:$0xff]
    %v2313 = vld [vmem:[#allocation12 + $0x1d8] sm:$0xff]
    %v2314 = vld [vmem:[#allocation12 + $0x1e0] sm:$0xff]
    %v2315 = vld [vmem:[#allocation12 + $0x1e8] sm:$0xff]
    %v2316 = vld [vmem:[#allocation12 + $0x1f0] sm:$0xff]
    %v2317 = vld [vmem:[#allocation12 + $0x1f8] sm:$0xff]
    %v2318 = vld [vmem:[#allocation12 + $0x200] sm:$0xff]
    %v2319 = vld [vmem:[#allocation12 + $0x208] sm:$0xff]
    %v2320 = vld [vmem:[#allocation12 + $0x210] sm:$0xff]
    %v2321 = vld [vmem:[#allocation12 + $0x218] sm:$0xff]
    %v2322 = vld [vmem:[#allocation12 + $0x220] sm:$0xff]
    %v2323 = vld [vmem:[#allocation12 + $0x228] sm:$0xff]
    %v2324 = vld [vmem:[#allocation12 + $0x230] sm:$0xff]
    %v2325 = vld [vmem:[#allocation12 + $0x238] sm:$0xff]
    %v2326 = vld [vmem:[#allocation12 + $0x240] sm:$0xff]
    %v2327 = vld [vmem:[#allocation12 + $0x248] sm:$0xff]
    %v2328 = vld [vmem:[#allocation12 + $0x250] sm:$0xff]
    %v2329 = vld [vmem:[#allocation12 + $0x258] sm:$0xff]
    %v2330 = vld [vmem:[#allocation12 + $0x260] sm:$0xff]
    %v2331 = vld [vmem:[#allocation12 + $0x268] sm:$0xff]
    %v2332 = vld [vmem:[#allocation12 + $0x270] sm:$0xff]
    %v2333 = vld [vmem:[#allocation12 + $0x278] sm:$0xff]
    %v2334 = vld [vmem:[#allocation12 + $0x280] sm:$0xff]
    %v2335 = vld [vmem:[#allocation12 + $0x288] sm:$0xff]
    %v2336 = vld [vmem:[#allocation12 + $0x290] sm:$0xff]
    %v2337 = vld [vmem:[#allocation12 + $0x298] sm:$0xff]
    %v2338 = vld [vmem:[#allocation12 + $0x2a0] sm:$0xff]
    %v2339 = vld [vmem:[#allocation12 + $0x2a8] sm:$0xff]
    %v2340 = vld [vmem:[#allocation12 + $0x2b0] sm:$0xff]
    %v2341 = vld [vmem:[#allocation12 + $0x2b8] sm:$0xff]
    %v2342 = vld [vmem:[#allocation12 + $0x2c0] sm:$0xff]
    %v2343 = vld [vmem:[#allocation12 + $0x2c8] sm:$0xff]
    %v2344 = vld [vmem:[#allocation12 + $0x2d0] sm:$0xff]
    %v2345 = vld [vmem:[#allocation12 + $0x2d8] sm:$0xff]
    %v2346 = vld [vmem:[#allocation12 + $0x2e0] sm:$0xff]
    %v2347 = vld [vmem:[#allocation12 + $0x2e8] sm:$0xff]
    %v2348 = vld [vmem:[#allocation12 + $0x2f0] sm:$0xff]
    %v2349 = vld [vmem:[#allocation12 + $0x2f8] sm:$0xff]
    %v2350 = vld [vmem:[#allocation12 + $0x300] sm:$0xff]
    %v2351 = vld [vmem:[#allocation12 + $0x308] sm:$0xff]
    %v2352 = vld [vmem:[#allocation12 + $0x310] sm:$0xff]
    %v2353 = vld [vmem:[#allocation12 + $0x318] sm:$0xff]
    %v2354 = vld [vmem:[#allocation12 + $0x320] sm:$0xff]
    %v2355 = vld [vmem:[#allocation12 + $0x328] sm:$0xff]
    %v2356 = vld [vmem:[#allocation12 + $0x330] sm:$0xff]
    %v2357 = vld [vmem:[#allocation12 + $0x338] sm:$0xff]
    %v2358 = vld [vmem:[#allocation12 + $0x340] sm:$0xff]
    %v2359 = vld [vmem:[#allocation12 + $0x348] sm:$0xff]
    %v2360 = vld [vmem:[#allocation12 + $0x350] sm:$0xff]
    %v2361 = vld [vmem:[#allocation12 + $0x358] sm:$0xff]
    %v2362 = vld [vmem:[#allocation12 + $0x360] sm:$0xff]
    %v2363 = vld [vmem:[#allocation12 + $0x368] sm:$0xff]
    %v2364 = vld [vmem:[#allocation12 + $0x370] sm:$0xff]
    %v2365 = vld [vmem:[#allocation12 + $0x378] sm:$0xff]
    %v2366 = vld [vmem:[#allocation12 + $0x380] sm:$0xff]
    %v2367 = vld [vmem:[#allocation12 + $0x388] sm:$0xff]
    %v2368 = vld [vmem:[#allocation12 + $0x390] sm:$0xff]
    %v2369 = vld [vmem:[#allocation12 + $0x398] sm:$0xff]
    %v2370 = vld [vmem:[#allocation12 + $0x3a0] sm:$0xff]
    %v2371 = vld [vmem:[#allocation12 + $0x3a8] sm:$0xff]
    %v2372 = vld [vmem:[#allocation12 + $0x3b0] sm:$0xff]
    %v2373 = vld [vmem:[#allocation12 + $0x3b8] sm:$0xff]
    %v2374 = vld [vmem:[#allocation12 + $0x3c0] sm:$0xff]
    %v2375 = vld [vmem:[#allocation12 + $0x3c8] sm:$0xff]
    %v2376 = vld [vmem:[#allocation12 + $0x3d0] sm:$0xff]
    %v2377 = vld [vmem:[#allocation12 + $0x3d8] sm:$0xff]
    %v2378 = vld [vmem:[#allocation12 + $0x3e0] sm:$0xff]
    %v2379 = vld [vmem:[#allocation12 + $0x3e8] sm:$0xff]
    %v2380 = vld [vmem:[#allocation12 + $0x3f0] sm:$0xff]
    %v2381 = vld [vmem:[#allocation12 + $0x3f8] sm:$0xff]
    %2382 = vmatprep.subr.mxu0 %v2255
    %2383 = vmatpush1.msra.mxu0 %v2254
    %2384 = vmatprep.subr.mxu0 %v2259
    %2385 = vmatpush1.msra.mxu0 %v2258
    %2386 = vmatprep.subr.mxu0 %v2263
    %2387 = vmatpush1.msra.mxu0 %v2262
    %2388 = vmatprep.subr.mxu0 %v2267
    %2389 = vmatpush1.msra.mxu0 %v2266
    %2390 = vmatprep.subr.mxu0 %v2271
    %2391 = vmatpush1.msra.mxu0 %v2270
    %2392 = vmatprep.subr.mxu0 %v2275
    %2393 = vmatpush1.msra.mxu0 %v2274
    %2394 = vmatprep.subr.mxu0 %v2279
    %2395 = vmatpush1.msra.mxu0 %v2278
    %2396 = vmatprep.subr.mxu0 %v2283
    %2397 = vmatpush1.msra.mxu0 %v2282
    %2398 = vmatprep.subr.mxu0 %v2287
    %2399 = vmatpush1.msra.mxu0 %v2286
    %2400 = vmatprep.subr.mxu0 %v2291
    %2401 = vmatpush1.msra.mxu0 %v2290
    %2402 = vmatprep.subr.mxu0 %v2295
    %2403 = vmatpush1.msra.mxu0 %v2294
    %2404 = vmatprep.subr.mxu0 %v2299
    %2405 = vmatpush1.msra.mxu0 %v2298
    %2406 = vmatprep.subr.mxu0 %v2303
    %2407 = vmatpush1.msra.mxu0 %v2302
    %2408 = vmatprep.subr.mxu0 %v2307
    %2409 = vmatpush1.msra.mxu0 %v2306
    %2410 = vmatprep.subr.mxu0 %v2311
    %2411 = vmatpush1.msra.mxu0 %v2310
    %2412 = vmatprep.subr.mxu0 %v2315
    %2413 = vmatpush1.msra.mxu0 %v2314
    %2414 = vmatprep.subr.mxu0 %v2319
    %2415 = vmatpush1.msra.mxu0 %v2318
    %2416 = vmatprep.subr.mxu0 %v2323
    %2417 = vmatpush1.msra.mxu0 %v2322
    %2418 = vmatprep.subr.mxu0 %v2327
    %2419 = vmatpush1.msra.mxu0 %v2326
    %2420 = vmatprep.subr.mxu0 %v2331
    %2421 = vmatpush1.msra.mxu0 %v2330
    %2422 = vmatprep.subr.mxu0 %v2335
    %2423 = vmatpush1.msra.mxu0 %v2334
    %2424 = vmatprep.subr.mxu0 %v2339
    %2425 = vmatpush1.msra.mxu0 %v2338
    %2426 = vmatprep.subr.mxu0 %v2343
    %2427 = vmatpush1.msra.mxu0 %v2342
    %2428 = vmatprep.subr.mxu0 %v2347
    %2429 = vmatpush1.msra.mxu0 %v2346
    %2430 = vmatprep.subr.mxu0 %v2351
    %2431 = vmatpush1.msra.mxu0 %v2350
    %2432 = vmatprep.subr.mxu0 %v2355
    %2433 = vmatpush1.msra.mxu0 %v2354
    %2434 = vmatprep.subr.mxu0 %v2359
    %2435 = vmatpush1.msra.mxu0 %v2358
    %2436 = vmatprep.subr.mxu0 %v2363
    %2437 = vmatpush1.msra.mxu0 %v2362
    %2438 = vmatprep.subr.mxu0 %v2367
    %2439 = vmatpush1.msra.mxu0 %v2366
    %2440 = vmatprep.subr.mxu0 %v2371
    %2441 = vmatpush1.msra.mxu0 %v2370
    %2442 = vmatprep.subr.mxu0 %v2375
    %2443 = vmatpush1.msra.mxu0 %v2374
    %2444 = vmatprep.subr.mxu0 %v2379
    %2445 = vmatpush1.msra.mxu0 %v2378
    %2446 = vmatprep.mubr.f32.mxu0 %v1750
    %2447 = vmatmul.mubr.f32.gmra.mrb[0].mxu0 %v1963
    %v2448 = vpop.f32.mrb[0].mxu0
    %v2449 = vadd.f32 %v466, %v2448
    %v2450 = vpop.f32.mrb[0].mxu0
    %v2451 = vadd.f32 %v470, %v2450
    %2452 = vdwg.mxu0
    %2453 = vmatprep.subr.mxu0 %v2257
    %2454 = vmatpush1.msra.mxu0 %v2256
    %2455 = vmatprep.subr.mxu0 %v2261
    %2456 = vmatpush1.msra.mxu0 %v2260
    %2457 = vmatprep.subr.mxu0 %v2265
    %2458 = vmatpush1.msra.mxu0 %v2264
    %2459 = vmatprep.subr.mxu0 %v2269
    %2460 = vmatpush1.msra.mxu0 %v2268
    %2461 = vmatprep.subr.mxu0 %v2273
    %2462 = vmatpush1.msra.mxu0 %v2272
    %2463 = vmatprep.subr.mxu0 %v2277
    %2464 = vmatpush1.msra.mxu0 %v2276
    %2465 = vmatprep.subr.mxu0 %v2281
    %2466 = vmatpush1.msra.mxu0 %v2280
    %2467 = vmatprep.subr.mxu0 %v2285
    %2468 = vmatpush1.msra.mxu0 %v2284
    %2469 = vmatprep.subr.mxu0 %v2289
    %2470 = vmatpush1.msra.mxu0 %v2288
    %2471 = vmatprep.subr.mxu0 %v2293
    %2472 = vmatpush1.msra.mxu0 %v2292
    %2473 = vmatprep.subr.mxu0 %v2297
    %2474 = vmatpush1.msra.mxu0 %v2296
    %2475 = vmatprep.subr.mxu0 %v2301
    %2476 = vmatpush1.msra.mxu0 %v2300
    %2477 = vmatprep.subr.mxu0 %v2305
    %2478 = vmatpush1.msra.mxu0 %v2304
    %2479 = vmatprep.subr.mxu0 %v2309
    %2480 = vmatpush1.msra.mxu0 %v2308
    %2481 = vmatprep.subr.mxu0 %v2313
    %2482 = vmatpush1.msra.mxu0 %v2312
    %2483 = vmatprep.subr.mxu0 %v2317
    %2484 = vmatpush1.msra.mxu0 %v2316
    %2485 = vmatprep.subr.mxu0 %v2321
    %2486 = vmatpush1.msra.mxu0 %v2320
    %2487 = vmatprep.subr.mxu0 %v2325
    %2488 = vmatpush1.msra.mxu0 %v2324
    %2489 = vmatprep.subr.mxu0 %v2329
    %2490 = vmatpush1.msra.mxu0 %v2328
    %2491 = vmatprep.subr.mxu0 %v2333
    %2492 = vmatpush1.msra.mxu0 %v2332
    %2493 = vmatprep.subr.mxu0 %v2337
    %2494 = vmatpush1.msra.mxu0 %v2336
    %2495 = vmatprep.subr.mxu0 %v2341
    %2496 = vmatpush1.msra.mxu0 %v2340
    %2497 = vmatprep.subr.mxu0 %v2345
    %2498 = vmatpush1.msra.mxu0 %v2344
    %2499 = vmatprep.subr.mxu0 %v2349
    %2500 = vmatpush1.msra.mxu0 %v2348
    %2501 = vmatprep.subr.mxu0 %v2353
    %2502 = vmatpush1.msra.mxu0 %v2352
    %2503 = vmatprep.subr.mxu0 %v2357
    %2504 = vmatpush1.msra.mxu0 %v2356
    %2505 = vmatprep.subr.mxu0 %v2361
    %2506 = vmatpush1.msra.mxu0 %v2360
    %2507 = vmatprep.subr.mxu0 %v2365
    %2508 = vmatpush1.msra.mxu0 %v2364
    %2509 = vmatprep.subr.mxu0 %v2369
    %2510 = vmatpush1.msra.mxu0 %v2368
    %2511 = vmatprep.subr.mxu0 %v2373
    %2512 = vmatpush1.msra.mxu0 %v2372
    %2513 = vmatprep.subr.mxu0 %v2377
    %2514 = vmatpush1.msra.mxu0 %v2376
    %2515 = vmatprep.subr.mxu0 %v2381
    %2516 = vmatpush1.msra.mxu0 %v2380
    %2517 = vmatprep.mubr.f32.mxu0 %v1750
    %2518 = vmatmul.mubr.f32.gmra.mrb[0].mxu0 %v1963
    %v2519 = vpop.f32.mrb[0].mxu0
    %v2520 = vadd.f32 %v474, %v2519
    %v2521 = vpop.f32.mrb[0].mxu0
    %v2522 = vadd.f32 %v478, %v2521
    %2523 = vdwg.mxu0
    %v2524 = vxor.u32 %v2449, 2147483648
    %v2525 = vmul.f32 %v2524, 1.442695
    %v2526 = vpow.pop %v2525
    %v2527 = vadd.f32 %v2526, 1.0
    %v2528 = vrcp.pop %v2527
    %v2529 = vmul.f32 1.0, %v2528
    %v2530 = vxor.u32 %v2451, 2147483648
    %v2531 = vmul.f32 %v2530, 1.442695
    %v2532 = vpow.pop %v2531
    %v2533 = vadd.f32 %v2532, 1.0
    %v2534 = vrcp.pop %v2533
    %v2535 = vmul.f32 1.0, %v2534
    %v2536 = vmul.f32 %v2529, %v2522
    %v2537 = vadd.f32 %v2520, %v2536
    %v2538 = vtanh.pop %v2537
    %v2539 = vsub.f32 1.0, %v2535
    %v2540 = vmul.f32 %v2539, %v2538
    %v2541 = vmul.f32 %v2535, %v1750
    %v2542 = vadd.f32 %v2540, %v2541
    %v2543 = vld [vmem:[#allocation2 + $0x48] sm:$0xff]
    %v2544 = vld [vmem:[#allocation2 + $0x50] sm:$0xff]
    %v2545 = vld [vmem:[#allocation2 + $0x58] sm:$0xff]
    %v2546 = vld [vmem:[#allocation9] sm:$0xff]
    %v2547 = vld [vmem:[#allocation9 + $0x8] sm:$0xff]
    %v2548 = vld [vmem:[#allocation9 + $0x10] sm:$0xff]
    %v2549 = vld [vmem:[#allocation9 + $0x18] sm:$0xff]
    %v2550 = vld [vmem:[#allocation9 + $0x20] sm:$0xff]
    %v2551 = vld [vmem:[#allocation9 + $0x28] sm:$0xff]
    %v2552 = vld [vmem:[#allocation9 + $0x30] sm:$0xff]
    %v2553 = vld [vmem:[#allocation9 + $0x38] sm:$0xff]
    %v2554 = vld [vmem:[#allocation9 + $0x40] sm:$0xff]
    %v2555 = vld [vmem:[#allocation9 + $0x48] sm:$0xff]
    %v2556 = vld [vmem:[#allocation9 + $0x50] sm:$0xff]
    %v2557 = vld [vmem:[#allocation9 + $0x58] sm:$0xff]
    %v2558 = vld [vmem:[#allocation9 + $0x60] sm:$0xff]
    %v2559 = vld [vmem:[#allocation9 + $0x68] sm:$0xff]
    %v2560 = vld [vmem:[#allocation9 + $0x70] sm:$0xff]
    %v2561 = vld [vmem:[#allocation9 + $0x78] sm:$0xff]
    %v2562 = vld [vmem:[#allocation9 + $0x80] sm:$0xff]
    %v2563 = vld [vmem:[#allocation9 + $0x88] sm:$0xff]
    %v2564 = vld [vmem:[#allocation9 + $0x90] sm:$0xff]
    %v2565 = vld [vmem:[#allocation9 + $0x98] sm:$0xff]
    %v2566 = vld [vmem:[#allocation9 + $0xa0] sm:$0xff]
    %v2567 = vld [vmem:[#allocation9 + $0xa8] sm:$0xff]
    %v2568 = vld [vmem:[#allocation9 + $0xb0] sm:$0xff]
    %v2569 = vld [vmem:[#allocation9 + $0xb8] sm:$0xff]
    %v2570 = vld [vmem:[#allocation9 + $0xc0] sm:$0xff]
    %v2571 = vld [vmem:[#allocation9 + $0xc8] sm:$0xff]
    %v2572 = vld [vmem:[#allocation9 + $0xd0] sm:$0xff]
    %v2573 = vld [vmem:[#allocation9 + $0xd8] sm:$0xff]
    %v2574 = vld [vmem:[#allocation9 + $0xe0] sm:$0xff]
    %v2575 = vld [vmem:[#allocation9 + $0xe8] sm:$0xff]
    %v2576 = vld [vmem:[#allocation9 + $0xf0] sm:$0xff]
    %v2577 = vld [vmem:[#allocation9 + $0xf8] sm:$0xff]
    %v2578 = vld [vmem:[#allocation9 + $0x100] sm:$0xff]
    %v2579 = vld [vmem:[#allocation9 + $0x108] sm:$0xff]
    %v2580 = vld [vmem:[#allocation9 + $0x110] sm:$0xff]
    %v2581 = vld [vmem:[#allocation9 + $0x118] sm:$0xff]
    %v2582 = vld [vmem:[#allocation9 + $0x120] sm:$0xff]
    %v2583 = vld [vmem:[#allocation9 + $0x128] sm:$0xff]
    %v2584 = vld [vmem:[#allocation9 + $0x130] sm:$0xff]
    %v2585 = vld [vmem:[#allocation9 + $0x138] sm:$0xff]
    %v2586 = vld [vmem:[#allocation9 + $0x140] sm:$0xff]
    %v2587 = vld [vmem:[#allocation9 + $0x148] sm:$0xff]
    %v2588 = vld [vmem:[#allocation9 + $0x150] sm:$0xff]
    %v2589 = vld [vmem:[#allocation9 + $0x158] sm:$0xff]
    %v2590 = vld [vmem:[#allocation9 + $0x160] sm:$0xff]
    %v2591 = vld [vmem:[#allocation9 + $0x168] sm:$0xff]
    %v2592 = vld [vmem:[#allocation9 + $0x170] sm:$0xff]
    %v2593 = vld [vmem:[#allocation9 + $0x178] sm:$0xff]
    %2594 = vmatprep.subr.mxu0 %v2547
    %2595 = vmatpush1.msra.mxu0 %v2546
    %2596 = vmatprep.subr.mxu0 %v2550
    %2597 = vmatpush1.msra.mxu0 %v2549
    %2598 = vmatprep.subr.mxu0 %v2553
    %2599 = vmatpush1.msra.mxu0 %v2552
    %2600 = vmatprep.subr.mxu0 %v2556
    %2601 = vmatpush1.msra.mxu0 %v2555
    %2602 = vmatprep.subr.mxu0 %v2559
    %2603 = vmatpush1.msra.mxu0 %v2558
    %2604 = vmatprep.subr.mxu0 %v2562
    %2605 = vmatpush1.msra.mxu0 %v2561
    %2606 = vmatprep.subr.mxu0 %v2565
    %2607 = vmatpush1.msra.mxu0 %v2564
    %2608 = vmatprep.subr.mxu0 %v2568
    %2609 = vmatpush1.msra.mxu0 %v2567
    %2610 = vmatprep.subr.mxu0 %v2571
    %2611 = vmatpush1.msra.mxu0 %v2570
    %2612 = vmatprep.subr.mxu0 %v2574
    %2613 = vmatpush1.msra.mxu0 %v2573
    %2614 = vmatprep.subr.mxu0 %v2577
    %2615 = vmatpush1.msra.mxu0 %v2576
    %2616 = vmatprep.subr.mxu0 %v2580
    %2617 = vmatpush1.msra.mxu0 %v2579
    %2618 = vmatprep.subr.mxu0 %v2583
    %2619 = vmatpush1.msra.mxu0 %v2582
    %2620 = vmatprep.subr.mxu0 %v2586
    %2621 = vmatpush1.msra.mxu0 %v2585
    %2622 = vmatprep.subr.mxu0 %v2589
    %2623 = vmatpush1.msra.mxu0 %v2588
    %2624 = vmatprep.subr.mxu0 %v2592
    %2625 = vmatpush1.msra.mxu0 %v2591
    %2626 = vmatprep.subr.mxu0 0.0
    %2627 = vmatpush1.msra.mxu0 0.0
    %2628 = vmatprep.subr.mxu0 0.0
    %2629 = vmatpush1.msra.mxu0 0.0
    %2630 = vmatprep.subr.mxu0 0.0
    %2631 = vmatpush1.msra.mxu0 0.0
    %2632 = vmatprep.subr.mxu0 0.0
    %2633 = vmatpush1.msra.mxu0 0.0
    %2634 = vmatprep.subr.mxu0 0.0
    %2635 = vmatpush1.msra.mxu0 0.0
    %2636 = vmatprep.subr.mxu0 0.0
    %2637 = vmatpush1.msra.mxu0 0.0
    %2638 = vmatprep.subr.mxu0 0.0
    %2639 = vmatpush1.msra.mxu0 0.0
    %2640 = vmatprep.subr.mxu0 0.0
    %2641 = vmatpush1.msra.mxu0 0.0
    %2642 = vmatprep.subr.mxu0 0.0
    %2643 = vmatpush1.msra.mxu0 0.0
    %2644 = vmatprep.subr.mxu0 0.0
    %2645 = vmatpush1.msra.mxu0 0.0
    %2646 = vmatprep.subr.mxu0 0.0
    %2647 = vmatpush1.msra.mxu0 0.0
    %2648 = vmatprep.subr.mxu0 0.0
    %2649 = vmatpush1.msra.mxu0 0.0
    %2650 = vmatprep.subr.mxu0 0.0
    %2651 = vmatpush1.msra.mxu0 0.0
    %2652 = vmatprep.subr.mxu0 0.0
    %2653 = vmatpush1.msra.mxu0 0.0
    %2654 = vmatprep.subr.mxu0 0.0
    %2655 = vmatpush1.msra.mxu0 0.0
    %2656 = vmatprep.subr.mxu0 0.0
    %2657 = vmatpush1.msra.mxu0 0.0
    %2658 = vmatprep.mubr.f32.mxu0 0.0
    %2659 = vmatmul.mubr.f32.gmra.mrb[0].mxu0 %v1963
    %v2660 = vpop.f32.mrb[0].mxu0
    %v2661 = vadd.f32 %v449, %v2660
    %v2662 = vpop.f32.mrb[0].mxu0
    %v2663 = vadd.f32 %v453, %v2662
    %2664 = vdwg.mxu0
    %2665 = vmatprep.subr.mxu0 0.0
    %2666 = vmatpush1.msra.mxu0 %v2548
    %2667 = vmatprep.subr.mxu0 0.0
    %2668 = vmatpush1.msra.mxu0 %v2551
    %2669 = vmatprep.subr.mxu0 0.0
    %2670 = vmatpush1.msra.mxu0 %v2554
    %2671 = vmatprep.subr.mxu0 0.0
    %2672 = vmatpush1.msra.mxu0 %v2557
    %2673 = vmatprep.subr.mxu0 0.0
    %2674 = vmatpush1.msra.mxu0 %v2560
    %2675 = vmatprep.subr.mxu0 0.0
    %2676 = vmatpush1.msra.mxu0 %v2563
    %2677 = vmatprep.subr.mxu0 0.0
    %2678 = vmatpush1.msra.mxu0 %v2566
    %2679 = vmatprep.subr.mxu0 0.0
    %2680 = vmatpush1.msra.mxu0 %v2569
    %2681 = vmatprep.subr.mxu0 0.0
    %2682 = vmatpush1.msra.mxu0 %v2572
    %2683 = vmatprep.subr.mxu0 0.0
    %2684 = vmatpush1.msra.mxu0 %v2575
    %2685 = vmatprep.subr.mxu0 0.0
    %2686 = vmatpush1.msra.mxu0 %v2578
    %2687 = vmatprep.subr.mxu0 0.0
    %2688 = vmatpush1.msra.mxu0 %v2581
    %2689 = vmatprep.subr.mxu0 0.0
    %2690 = vmatpush1.msra.mxu0 %v2584
    %2691 = vmatprep.subr.mxu0 0.0
    %2692 = vmatpush1.msra.mxu0 %v2587
    %2693 = vmatprep.subr.mxu0 0.0
    %2694 = vmatpush1.msra.mxu0 %v2590
    %2695 = vmatprep.subr.mxu0 0.0
    %2696 = vmatpush1.msra.mxu0 %v2593
    %2697 = vmatprep.subr.mxu0 0.0
    %2698 = vmatpush1.msra.mxu0 0.0
    %2699 = vmatprep.subr.mxu0 0.0
    %2700 = vmatpush1.msra.mxu0 0.0
    %2701 = vmatprep.subr.mxu0 0.0
    %2702 = vmatpush1.msra.mxu0 0.0
    %2703 = vmatprep.subr.mxu0 0.0
    %2704 = vmatpush1.msra.mxu0 0.0
    %2705 = vmatprep.subr.mxu0 0.0
    %2706 = vmatpush1.msra.mxu0 0.0
    %2707 = vmatprep.subr.mxu0 0.0
    %2708 = vmatpush1.msra.mxu0 0.0
    %2709 = vmatprep.subr.mxu0 0.0
    %2710 = vmatpush1.msra.mxu0 0.0
    %2711 = vmatprep.subr.mxu0 0.0
    %2712 = vmatpush1.msra.mxu0 0.0
    %2713 = vmatprep.subr.mxu0 0.0
    %2714 = vmatpush1.msra.mxu0 0.0
    %2715 = vmatprep.subr.mxu0 0.0
    %2716 = vmatpush1.msra.mxu0 0.0
    %2717 = vmatprep.subr.mxu0 0.0
    %2718 = vmatpush1.msra.mxu0 0.0
    %2719 = vmatprep.subr.mxu0 0.0
    %2720 = vmatpush1.msra.mxu0 0.0
    %2721 = vmatprep.subr.mxu0 0.0
    %2722 = vmatpush1.msra.mxu0 0.0
    %2723 = vmatprep.subr.mxu0 0.0
    %2724 = vmatpush1.msra.mxu0 0.0
    %2725 = vmatprep.subr.mxu0 0.0
    %2726 = vmatpush1.msra.mxu0 0.0
    %2727 = vmatprep.subr.mxu0 0.0
    %2728 = vmatpush1.msra.mxu0 0.0
    %2729 = vmatprep.mubr.f32.mxu0 0.0
    %2730 = vmatmul.mubr.f32.gmra.mrb[0].mxu0 %v1963
    %v2731 = vpop.f32.mrb[0].mxu0
    %v2732 = vadd.f32 %v457, %v2731
    %v2733 = vpop.f32.mrb[0].mxu0
    %2734 = vdwg.mxu0
    %v2735 = vadd.f32 %v2543, %v2661
    %v2736 = vxor.u32 %v2735, 2147483648
    %v2737 = vmul.f32 %v2736, 1.442695
    %v2738 = vpow.pop %v2737
    %v2739 = vadd.f32 %v2738, 1.0
    %v2740 = vrcp.pop %v2739
    %v2741 = vmul.f32 1.0, %v2740
    %v2742 = vadd.f32 %v2544, %v2663
    %v2743 = vxor.u32 %v2742, 2147483648
    %v2744 = vmul.f32 %v2743, 1.442695
    %v2745 = vpow.pop %v2744
    %v2746 = vadd.f32 %v2745, 1.0
    %v2747 = vrcp.pop %v2746
    %v2748 = vmul.f32 1.0, %v2747
    %v2749 = vmul.f32 %v2741, %v2732
    %v2750 = vadd.f32 %v2545, %v2749
    %v2751 = vtanh.pop %v2750
    %v2752 = vsub.f32 1.0, %v2748
    %v2753 = vmul.f32 %v2752, %v2751
    %v2754 = vmul.f32 %v2748, %v1963
    %v2755 = vadd.f32 %v2753, %v2754
    %v2756 = vld [vmem:[#allocation15] sm:$0xff]
    %v2757 = vld [vmem:[#allocation15 + $0x8] sm:$0xff]
    %v2758 = vld [vmem:[#allocation15 + $0x10] sm:$0xff]
    %v2759 = vld [vmem:[#allocation15 + $0x18] sm:$0xff]
    %v2760 = vld [vmem:[#allocation15 + $0x20] sm:$0xff]
    %v2761 = vld [vmem:[#allocation15 + $0x28] sm:$0xff]
    %v2762 = vld [vmem:[#allocation15 + $0x30] sm:$0xff]
    %v2763 = vld [vmem:[#allocation15 + $0x38] sm:$0xff]
    %v2764 = vld [vmem:[#allocation15 + $0x40] sm:$0xff]
    %v2765 = vld [vmem:[#allocation15 + $0x48] sm:$0xff]
    %v2766 = vld [vmem:[#allocation15 + $0x50] sm:$0xff]
    %v2767 = vld [vmem:[#allocation15 + $0x58] sm:$0xff]
    %v2768 = vld [vmem:[#allocation15 + $0x60] sm:$0xff]
    %v2769 = vld [vmem:[#allocation15 + $0x68] sm:$0xff]
    %v2770 = vld [vmem:[#allocation15 + $0x70] sm:$0xff]
    %v2771 = vld [vmem:[#allocation15 + $0x78] sm:$0xff]
    %v2772 = vld [vmem:[#allocation15 + $0x80] sm:$0xff]
    %v2773 = vld [vmem:[#allocation15 + $0x88] sm:$0xff]
    %v2774 = vld [vmem:[#allocation15 + $0x90] sm:$0xff]
    %v2775 = vld [vmem:[#allocation15 + $0x98] sm:$0xff]
    %v2776 = vld [vmem:[#allocation15 + $0xa0] sm:$0xff]
    %v2777 = vld [vmem:[#allocation15 + $0xa8] sm:$0xff]
    %v2778 = vld [vmem:[#allocation15 + $0xb0] sm:$0xff]
    %v2779 = vld [vmem:[#allocation15 + $0xb8] sm:$0xff]
    %v2780 = vld [vmem:[#allocation15 + $0xc0] sm:$0xff]
    %v2781 = vld [vmem:[#allocation15 + $0xc8] sm:$0xff]
    %v2782 = vld [vmem:[#allocation15 + $0xd0] sm:$0xff]
    %v2783 = vld [vmem:[#allocation15 + $0xd8] sm:$0xff]
    %v2784 = vld [vmem:[#allocation15 + $0xe0] sm:$0xff]
    %v2785 = vld [vmem:[#allocation15 + $0xe8] sm:$0xff]
    %v2786 = vld [vmem:[#allocation15 + $0xf0] sm:$0xff]
    %v2787 = vld [vmem:[#allocation15 + $0xf8] sm:$0xff]
    %v2788 = vld [vmem:[#allocation15 + $0x100] sm:$0xff]
    %v2789 = vld [vmem:[#allocation15 + $0x108] sm:$0xff]
    %v2790 = vld [vmem:[#allocation15 + $0x110] sm:$0xff]
    %v2791 = vld [vmem:[#allocation15 + $0x118] sm:$0xff]
    %v2792 = vld [vmem:[#allocation15 + $0x120] sm:$0xff]
    %v2793 = vld [vmem:[#allocation15 + $0x128] sm:$0xff]
    %v2794 = vld [vmem:[#allocation15 + $0x130] sm:$0xff]
    %v2795 = vld [vmem:[#allocation15 + $0x138] sm:$0xff]
    %v2796 = vld [vmem:[#allocation15 + $0x140] sm:$0xff]
    %v2797 = vld [vmem:[#allocation15 + $0x148] sm:$0xff]
    %v2798 = vld [vmem:[#allocation15 + $0x150] sm:$0xff]
    %v2799 = vld [vmem:[#allocation15 + $0x158] sm:$0xff]
    %v2800 = vld [vmem:[#allocation15 + $0x160] sm:$0xff]
    %v2801 = vld [vmem:[#allocation15 + $0x168] sm:$0xff]
    %v2802 = vld [vmem:[#allocation15 + $0x170] sm:$0xff]
    %v2803 = vld [vmem:[#allocation15 + $0x178] sm:$0xff]
    %v2804 = vld [vmem:[#allocation15 + $0x180] sm:$0xff]
    %v2805 = vld [vmem:[#allocation15 + $0x188] sm:$0xff]
    %v2806 = vld [vmem:[#allocation15 + $0x190] sm:$0xff]
    %v2807 = vld [vmem:[#allocation15 + $0x198] sm:$0xff]
    %v2808 = vld [vmem:[#allocation15 + $0x1a0] sm:$0xff]
    %v2809 = vld [vmem:[#allocation15 + $0x1a8] sm:$0xff]
    %v2810 = vld [vmem:[#allocation15 + $0x1b0] sm:$0xff]
    %v2811 = vld [vmem:[#allocation15 + $0x1b8] sm:$0xff]
    %v2812 = vld [vmem:[#allocation15 + $0x1c0] sm:$0xff]
    %v2813 = vld [vmem:[#allocation15 + $0x1c8] sm:$0xff]
    %v2814 = vld [vmem:[#allocation15 + $0x1d0] sm:$0xff]
    %v2815 = vld [vmem:[#allocation15 + $0x1d8] sm:$0xff]
    %v2816 = vld [vmem:[#allocation15 + $0x1e0] sm:$0xff]
    %v2817 = vld [vmem:[#allocation15 + $0x1e8] sm:$0xff]
    %v2818 = vld [vmem:[#allocation15 + $0x1f0] sm:$0xff]
    %v2819 = vld [vmem:[#allocation15 + $0x1f8] sm:$0xff]
    %v2820 = vld [vmem:[#allocation15 + $0x200] sm:$0xff]
    %v2821 = vld [vmem:[#allocation15 + $0x208] sm:$0xff]
    %v2822 = vld [vmem:[#allocation15 + $0x210] sm:$0xff]
    %v2823 = vld [vmem:[#allocation15 + $0x218] sm:$0xff]
    %v2824 = vld [vmem:[#allocation15 + $0x220] sm:$0xff]
    %v2825 = vld [vmem:[#allocation15 + $0x228] sm:$0xff]
    %v2826 = vld [vmem:[#allocation15 + $0x230] sm:$0xff]
    %v2827 = vld [vmem:[#allocation15 + $0x238] sm:$0xff]
    %v2828 = vld [vmem:[#allocation15 + $0x240] sm:$0xff]
    %v2829 = vld [vmem:[#allocation15 + $0x248] sm:$0xff]
    %v2830 = vld [vmem:[#allocation15 + $0x250] sm:$0xff]
    %v2831 = vld [vmem:[#allocation15 + $0x258] sm:$0xff]
    %v2832 = vld [vmem:[#allocation15 + $0x260] sm:$0xff]
    %v2833 = vld [vmem:[#allocation15 + $0x268] sm:$0xff]
    %v2834 = vld [vmem:[#allocation15 + $0x270] sm:$0xff]
    %v2835 = vld [vmem:[#allocation15 + $0x278] sm:$0xff]
    %v2836 = vld [vmem:[#allocation15 + $0x280] sm:$0xff]
    %v2837 = vld [vmem:[#allocation15 + $0x288] sm:$0xff]
    %v2838 = vld [vmem:[#allocation15 + $0x290] sm:$0xff]
    %v2839 = vld [vmem:[#allocation15 + $0x298] sm:$0xff]
    %v2840 = vld [vmem:[#allocation15 + $0x2a0] sm:$0xff]
    %v2841 = vld [vmem:[#allocation15 + $0x2a8] sm:$0xff]
    %v2842 = vld [vmem:[#allocation15 + $0x2b0] sm:$0xff]
    %v2843 = vld [vmem:[#allocation15 + $0x2b8] sm:$0xff]
    %v2844 = vld [vmem:[#allocation15 + $0x2c0] sm:$0xff]
    %v2845 = vld [vmem:[#allocation15 + $0x2c8] sm:$0xff]
    %v2846 = vld [vmem:[#allocation15 + $0x2d0] sm:$0xff]
    %v2847 = vld [vmem:[#allocation15 + $0x2d8] sm:$0xff]
    %v2848 = vld [vmem:[#allocation15 + $0x2e0] sm:$0xff]
    %v2849 = vld [vmem:[#allocation15 + $0x2e8] sm:$0xff]
    %v2850 = vld [vmem:[#allocation15 + $0x2f0] sm:$0xff]
    %v2851 = vld [vmem:[#allocation15 + $0x2f8] sm:$0xff]
    %v2852 = vld [vmem:[#allocation15 + $0x300] sm:$0xff]
    %v2853 = vld [vmem:[#allocation15 + $0x308] sm:$0xff]
    %v2854 = vld [vmem:[#allocation15 + $0x310] sm:$0xff]
    %v2855 = vld [vmem:[#allocation15 + $0x318] sm:$0xff]
    %v2856 = vld [vmem:[#allocation15 + $0x320] sm:$0xff]
    %v2857 = vld [vmem:[#allocation15 + $0x328] sm:$0xff]
    %v2858 = vld [vmem:[#allocation15 + $0x330] sm:$0xff]
    %v2859 = vld [vmem:[#allocation15 + $0x338] sm:$0xff]
    %v2860 = vld [vmem:[#allocation15 + $0x340] sm:$0xff]
    %v2861 = vld [vmem:[#allocation15 + $0x348] sm:$0xff]
    %v2862 = vld [vmem:[#allocation15 + $0x350] sm:$0xff]
    %v2863 = vld [vmem:[#allocation15 + $0x358] sm:$0xff]
    %v2864 = vld [vmem:[#allocation15 + $0x360] sm:$0xff]
    %v2865 = vld [vmem:[#allocation15 + $0x368] sm:$0xff]
    %v2866 = vld [vmem:[#allocation15 + $0x370] sm:$0xff]
    %v2867 = vld [vmem:[#allocation15 + $0x378] sm:$0xff]
    %v2868 = vld [vmem:[#allocation15 + $0x380] sm:$0xff]
    %v2869 = vld [vmem:[#allocation15 + $0x388] sm:$0xff]
    %v2870 = vld [vmem:[#allocation15 + $0x390] sm:$0xff]
    %v2871 = vld [vmem:[#allocation15 + $0x398] sm:$0xff]
    %v2872 = vld [vmem:[#allocation15 + $0x3a0] sm:$0xff]
    %v2873 = vld [vmem:[#allocation15 + $0x3a8] sm:$0xff]
    %v2874 = vld [vmem:[#allocation15 + $0x3b0] sm:$0xff]
    %v2875 = vld [vmem:[#allocation15 + $0x3b8] sm:$0xff]
    %v2876 = vld [vmem:[#allocation15 + $0x3c0] sm:$0xff]
    %v2877 = vld [vmem:[#allocation15 + $0x3c8] sm:$0xff]
    %v2878 = vld [vmem:[#allocation15 + $0x3d0] sm:$0xff]
    %v2879 = vld [vmem:[#allocation15 + $0x3d8] sm:$0xff]
    %v2880 = vld [vmem:[#allocation15 + $0x3e0] sm:$0xff]
    %v2881 = vld [vmem:[#allocation15 + $0x3e8] sm:$0xff]
    %v2882 = vld [vmem:[#allocation15 + $0x3f0] sm:$0xff]
    %v2883 = vld [vmem:[#allocation15 + $0x3f8] sm:$0xff]
    %2884 = vmatprep.subr.mxu0 %v2757
    %2885 = vmatpush1.msra.mxu0 %v2756
    %2886 = vmatprep.subr.mxu0 %v2761
    %2887 = vmatpush1.msra.mxu0 %v2760
    %2888 = vmatprep.subr.mxu0 %v2765
    %2889 = vmatpush1.msra.mxu0 %v2764
    %2890 = vmatprep.subr.mxu0 %v2769
    %2891 = vmatpush1.msra.mxu0 %v2768
    %2892 = vmatprep.subr.mxu0 %v2773
    %2893 = vmatpush1.msra.mxu0 %v2772
    %2894 = vmatprep.subr.mxu0 %v2777
    %2895 = vmatpush1.msra.mxu0 %v2776
    %2896 = vmatprep.subr.mxu0 %v2781
    %2897 = vmatpush1.msra.mxu0 %v2780
    %2898 = vmatprep.subr.mxu0 %v2785
    %2899 = vmatpush1.msra.mxu0 %v2784
    %2900 = vmatprep.subr.mxu0 %v2789
    %2901 = vmatpush1.msra.mxu0 %v2788
    %2902 = vmatprep.subr.mxu0 %v2793
    %2903 = vmatpush1.msra.mxu0 %v2792
    %2904 = vmatprep.subr.mxu0 %v2797
    %2905 = vmatpush1.msra.mxu0 %v2796
    %2906 = vmatprep.subr.mxu0 %v2801
    %2907 = vmatpush1.msra.mxu0 %v2800
    %2908 = vmatprep.subr.mxu0 %v2805
    %2909 = vmatpush1.msra.mxu0 %v2804
    %2910 = vmatprep.subr.mxu0 %v2809
    %2911 = vmatpush1.msra.mxu0 %v2808
    %2912 = vmatprep.subr.mxu0 %v2813
    %2913 = vmatpush1.msra.mxu0 %v2812
    %2914 = vmatprep.subr.mxu0 %v2817
    %2915 = vmatpush1.msra.mxu0 %v2816
    %2916 = vmatprep.subr.mxu0 %v2821
    %2917 = vmatpush1.msra.mxu0 %v2820
    %2918 = vmatprep.subr.mxu0 %v2825
    %2919 = vmatpush1.msra.mxu0 %v2824
    %2920 = vmatprep.subr.mxu0 %v2829
    %2921 = vmatpush1.msra.mxu0 %v2828
    %2922 = vmatprep.subr.mxu0 %v2833
    %2923 = vmatpush1.msra.mxu0 %v2832
    %2924 = vmatprep.subr.mxu0 %v2837
    %2925 = vmatpush1.msra.mxu0 %v2836
    %2926 = vmatprep.subr.mxu0 %v2841
    %2927 = vmatpush1.msra.mxu0 %v2840
    %2928 = vmatprep.subr.mxu0 %v2845
    %2929 = vmatpush1.msra.mxu0 %v2844
    %2930 = vmatprep.subr.mxu0 %v2849
    %2931 = vmatpush1.msra.mxu0 %v2848
    %2932 = vmatprep.subr.mxu0 %v2853
    %2933 = vmatpush1.msra.mxu0 %v2852
    %2934 = vmatprep.subr.mxu0 %v2857
    %2935 = vmatpush1.msra.mxu0 %v2856
    %2936 = vmatprep.subr.mxu0 %v2861
    %2937 = vmatpush1.msra.mxu0 %v2860
    %2938 = vmatprep.subr.mxu0 %v2865
    %2939 = vmatpush1.msra.mxu0 %v2864
    %2940 = vmatprep.subr.mxu0 %v2869
    %2941 = vmatpush1.msra.mxu0 %v2868
    %2942 = vmatprep.subr.mxu0 %v2873
    %2943 = vmatpush1.msra.mxu0 %v2872
    %2944 = vmatprep.subr.mxu0 %v2877
    %2945 = vmatpush1.msra.mxu0 %v2876
    %2946 = vmatprep.subr.mxu0 %v2881
    %2947 = vmatpush1.msra.mxu0 %v2880
    %2948 = vmatprep.mubr.f32.mxu0 %v2252
    %2949 = vmatmul.mubr.f32.gmra.mrb[0].mxu0 %v2542
    %v2950 = vpop.f32.mrb[0].mxu0
    %v2951 = vadd.f32 %v488, %v2950
    %v2952 = vpop.f32.mrb[0].mxu0
    %v2953 = vadd.f32 %v492, %v2952
    %2954 = vdwg.mxu0
    %2955 = vmatprep.subr.mxu0 %v2759
    %2956 = vmatpush1.msra.mxu0 %v2758
    %2957 = vmatprep.subr.mxu0 %v2763
    %2958 = vmatpush1.msra.mxu0 %v2762
    %2959 = vmatprep.subr.mxu0 %v2767
    %2960 = vmatpush1.msra.mxu0 %v2766
    %2961 = vmatprep.subr.mxu0 %v2771
    %2962 = vmatpush1.msra.mxu0 %v2770
    %2963 = vmatprep.subr.mxu0 %v2775
    %2964 = vmatpush1.msra.mxu0 %v2774
    %2965 = vmatprep.subr.mxu0 %v2779
    %2966 = vmatpush1.msra.mxu0 %v2778
    %2967 = vmatprep.subr.mxu0 %v2783
    %2968 = vmatpush1.msra.mxu0 %v2782
    %2969 = vmatprep.subr.mxu0 %v2787
    %2970 = vmatpush1.msra.mxu0 %v2786
    %2971 = vmatprep.subr.mxu0 %v2791
    %2972 = vmatpush1.msra.mxu0 %v2790
    %2973 = vmatprep.subr.mxu0 %v2795
    %2974 = vmatpush1.msra.mxu0 %v2794
    %2975 = vmatprep.subr.mxu0 %v2799
    %2976 = vmatpush1.msra.mxu0 %v2798
    %2977 = vmatprep.subr.mxu0 %v2803
    %2978 = vmatpush1.msra.mxu0 %v2802
    %2979 = vmatprep.subr.mxu0 %v2807
    %2980 = vmatpush1.msra.mxu0 %v2806
    %2981 = vmatprep.subr.mxu0 %v2811
    %2982 = vmatpush1.msra.mxu0 %v2810
    %2983 = vmatprep.subr.mxu0 %v2815
    %2984 = vmatpush1.msra.mxu0 %v2814
    %2985 = vmatprep.subr.mxu0 %v2819
    %2986 = vmatpush1.msra.mxu0 %v2818
    %2987 = vmatprep.subr.mxu0 %v2823
    %2988 = vmatpush1.msra.mxu0 %v2822
    %2989 = vmatprep.subr.mxu0 %v2827
    %2990 = vmatpush1.msra.mxu0 %v2826
    %2991 = vmatprep.subr.mxu0 %v2831
    %2992 = vmatpush1.msra.mxu0 %v2830
    %2993 = vmatprep.subr.mxu0 %v2835
    %2994 = vmatpush1.msra.mxu0 %v2834
    %2995 = vmatprep.subr.mxu0 %v2839
    %2996 = vmatpush1.msra.mxu0 %v2838
    %2997 = vmatprep.subr.mxu0 %v2843
    %2998 = vmatpush1.msra.mxu0 %v2842
    %2999 = vmatprep.subr.mxu0 %v2847
    %3000 = vmatpush1.msra.mxu0 %v2846
    %3001 = vmatprep.subr.mxu0 %v2851
    %3002 = vmatpush1.msra.mxu0 %v2850
    %3003 = vmatprep.subr.mxu0 %v2855
    %3004 = vmatpush1.msra.mxu0 %v2854
    %3005 = vmatprep.subr.mxu0 %v2859
    %3006 = vmatpush1.msra.mxu0 %v2858
    %3007 = vmatprep.subr.mxu0 %v2863
    %3008 = vmatpush1.msra.mxu0 %v2862
    %3009 = vmatprep.subr.mxu0 %v2867
    %3010 = vmatpush1.msra.mxu0 %v2866
    %3011 = vmatprep.subr.mxu0 %v2871
    %3012 = vmatpush1.msra.mxu0 %v2870
    %3013 = vmatprep.subr.mxu0 %v2875
    %3014 = vmatpush1.msra.mxu0 %v2874
    %3015 = vmatprep.subr.mxu0 %v2879
    %3016 = vmatpush1.msra.mxu0 %v2878
    %3017 = vmatprep.subr.mxu0 %v2883
    %3018 = vmatpush1.msra.mxu0 %v2882
    %3019 = vmatprep.mubr.f32.mxu0 %v2252
    %3020 = vmatmul.mubr.f32.gmra.mrb[0].mxu0 %v2542
    %v3021 = vpop.f32.mrb[0].mxu0
    %v3022 = vadd.f32 %v496, %v3021
    %v3023 = vpop.f32.mrb[0].mxu0
    %v3024 = vadd.f32 %v500, %v3023
    %3025 = vdwg.mxu0
    %v3026 = vxor.u32 %v2951, 2147483648
    %v3027 = vmul.f32 %v3026, 1.442695
    %v3028 = vpow.pop %v3027
    %v3029 = vadd.f32 %v3028, 1.0
    %v3030 = vrcp.pop %v3029
    %v3031 = vmul.f32 1.0, %v3030
    %v3032 = vxor.u32 %v2953, 2147483648
    %v3033 = vmul.f32 %v3032, 1.442695
    %v3034 = vpow.pop %v3033
    %v3035 = vadd.f32 %v3034, 1.0
    %v3036 = vrcp.pop %v3035
    %v3037 = vmul.f32 1.0, %v3036
    %v3038 = vmul.f32 %v3031, %v3024
    %v3039 = vadd.f32 %v3022, %v3038
    %v3040 = vtanh.pop %v3039
    %v3041 = vsub.f32 1.0, %v3037
    %v3042 = vmul.f32 %v3041, %v3040
    %v3043 = vmul.f32 %v3037, %v2252
    %v3044 = vadd.f32 %v3042, %v3043
    %3045 = vst [vmem:[#allocation3 + $0x10] sm:$0xff] %v3044
    %v3046 = vld [vmem:[#allocation12] sm:$0xff]
    %v3047 = vld [vmem:[#allocation12 + $0x8] sm:$0xff]
    %v3048 = vld [vmem:[#allocation12 + $0x10] sm:$0xff]
    %v3049 = vld [vmem:[#allocation12 + $0x18] sm:$0xff]
    %v3050 = vld [vmem:[#allocation12 + $0x20] sm:$0xff]
    %v3051 = vld [vmem:[#allocation12 + $0x28] sm:$0xff]
    %v3052 = vld [vmem:[#allocation12 + $0x30] sm:$0xff]
    %v3053 = vld [vmem:[#allocation12 + $0x38] sm:$0xff]
    %v3054 = vld [vmem:[#allocation12 + $0x40] sm:$0xff]
    %v3055 = vld [vmem:[#allocation12 + $0x48] sm:$0xff]
    %v3056 = vld [vmem:[#allocation12 + $0x50] sm:$0xff]
    %v3057 = vld [vmem:[#allocation12 + $0x58] sm:$0xff]
    %v3058 = vld [vmem:[#allocation12 + $0x60] sm:$0xff]
    %v3059 = vld [vmem:[#allocation12 + $0x68] sm:$0xff]
    %v3060 = vld [vmem:[#allocation12 + $0x70] sm:$0xff]
    %v3061 = vld [vmem:[#allocation12 + $0x78] sm:$0xff]
    %v3062 = vld [vmem:[#allocation12 + $0x80] sm:$0xff]
    %v3063 = vld [vmem:[#allocation12 + $0x88] sm:$0xff]
    %v3064 = vld [vmem:[#allocation12 + $0x90] sm:$0xff]
    %v3065 = vld [vmem:[#allocation12 + $0x98] sm:$0xff]
    %v3066 = vld [vmem:[#allocation12 + $0xa0] sm:$0xff]
    %v3067 = vld [vmem:[#allocation12 + $0xa8] sm:$0xff]
    %v3068 = vld [vmem:[#allocation12 + $0xb0] sm:$0xff]
    %v3069 = vld [vmem:[#allocation12 + $0xb8] sm:$0xff]
    %v3070 = vld [vmem:[#allocation12 + $0xc0] sm:$0xff]
    %v3071 = vld [vmem:[#allocation12 + $0xc8] sm:$0xff]
    %v3072 = vld [vmem:[#allocation12 + $0xd0] sm:$0xff]
    %v3073 = vld [vmem:[#allocation12 + $0xd8] sm:$0xff]
    %v3074 = vld [vmem:[#allocation12 + $0xe0] sm:$0xff]
    %v3075 = vld [vmem:[#allocation12 + $0xe8] sm:$0xff]
    %v3076 = vld [vmem:[#allocation12 + $0xf0] sm:$0xff]
    %v3077 = vld [vmem:[#allocation12 + $0xf8] sm:$0xff]
    %v3078 = vld [vmem:[#allocation12 + $0x100] sm:$0xff]
    %v3079 = vld [vmem:[#allocation12 + $0x108] sm:$0xff]
    %v3080 = vld [vmem:[#allocation12 + $0x110] sm:$0xff]
    %v3081 = vld [vmem:[#allocation12 + $0x118] sm:$0xff]
    %v3082 = vld [vmem:[#allocation12 + $0x120] sm:$0xff]
    %v3083 = vld [vmem:[#allocation12 + $0x128] sm:$0xff]
    %v3084 = vld [vmem:[#allocation12 + $0x130] sm:$0xff]
    %v3085 = vld [vmem:[#allocation12 + $0x138] sm:$0xff]
    %v3086 = vld [vmem:[#allocation12 + $0x140] sm:$0xff]
    %v3087 = vld [vmem:[#allocation12 + $0x148] sm:$0xff]
    %v3088 = vld [vmem:[#allocation12 + $0x150] sm:$0xff]
    %v3089 = vld [vmem:[#allocation12 + $0x158] sm:$0xff]
    %v3090 = vld [vmem:[#allocation12 + $0x160] sm:$0xff]
    %v3091 = vld [vmem:[#allocation12 + $0x168] sm:$0xff]
    %v3092 = vld [vmem:[#allocation12 + $0x170] sm:$0xff]
    %v3093 = vld [vmem:[#allocation12 + $0x178] sm:$0xff]
    %v3094 = vld [vmem:[#allocation12 + $0x180] sm:$0xff]
    %v3095 = vld [vmem:[#allocation12 + $0x188] sm:$0xff]
    %v3096 = vld [vmem:[#allocation12 + $0x190] sm:$0xff]
    %v3097 = vld [vmem:[#allocation12 + $0x198] sm:$0xff]
    %v3098 = vld [vmem:[#allocation12 + $0x1a0] sm:$0xff]
    %v3099 = vld [vmem:[#allocation12 + $0x1a8] sm:$0xff]
    %v3100 = vld [vmem:[#allocation12 + $0x1b0] sm:$0xff]
    %v3101 = vld [vmem:[#allocation12 + $0x1b8] sm:$0xff]
    %v3102 = vld [vmem:[#allocation12 + $0x1c0] sm:$0xff]
    %v3103 = vld [vmem:[#allocation12 + $0x1c8] sm:$0xff]
    %v3104 = vld [vmem:[#allocation12 + $0x1d0] sm:$0xff]
    %v3105 = vld [vmem:[#allocation12 + $0x1d8] sm:$0xff]
    %v3106 = vld [vmem:[#allocation12 + $0x1e0] sm:$0xff]
    %v3107 = vld [vmem:[#allocation12 + $0x1e8] sm:$0xff]
    %v3108 = vld [vmem:[#allocation12 + $0x1f0] sm:$0xff]
    %v3109 = vld [vmem:[#allocation12 + $0x1f8] sm:$0xff]
    %v3110 = vld [vmem:[#allocation12 + $0x200] sm:$0xff]
    %v3111 = vld [vmem:[#allocation12 + $0x208] sm:$0xff]
    %v3112 = vld [vmem:[#allocation12 + $0x210] sm:$0xff]
    %v3113 = vld [vmem:[#allocation12 + $0x218] sm:$0xff]
    %v3114 = vld [vmem:[#allocation12 + $0x220] sm:$0xff]
    %v3115 = vld [vmem:[#allocation12 + $0x228] sm:$0xff]
    %v3116 = vld [vmem:[#allocation12 + $0x230] sm:$0xff]
    %v3117 = vld [vmem:[#allocation12 + $0x238] sm:$0xff]
    %v3118 = vld [vmem:[#allocation12 + $0x240] sm:$0xff]
    %v3119 = vld [vmem:[#allocation12 + $0x248] sm:$0xff]
    %v3120 = vld [vmem:[#allocation12 + $0x250] sm:$0xff]
    %v3121 = vld [vmem:[#allocation12 + $0x258] sm:$0xff]
    %v3122 = vld [vmem:[#allocation12 + $0x260] sm:$0xff]
    %v3123 = vld [vmem:[#allocation12 + $0x268] sm:$0xff]
    %v3124 = vld [vmem:[#allocation12 + $0x270] sm:$0xff]
    %v3125 = vld [vmem:[#allocation12 + $0x278] sm:$0xff]
    %v3126 = vld [vmem:[#allocation12 + $0x280] sm:$0xff]
    %v3127 = vld [vmem:[#allocation12 + $0x288] sm:$0xff]
    %v3128 = vld [vmem:[#allocation12 + $0x290] sm:$0xff]
    %v3129 = vld [vmem:[#allocation12 + $0x298] sm:$0xff]
    %v3130 = vld [vmem:[#allocation12 + $0x2a0] sm:$0xff]
    %v3131 = vld [vmem:[#allocation12 + $0x2a8] sm:$0xff]
    %v3132 = vld [vmem:[#allocation12 + $0x2b0] sm:$0xff]
    %v3133 = vld [vmem:[#allocation12 + $0x2b8] sm:$0xff]
    %v3134 = vld [vmem:[#allocation12 + $0x2c0] sm:$0xff]
    %v3135 = vld [vmem:[#allocation12 + $0x2c8] sm:$0xff]
    %v3136 = vld [vmem:[#allocation12 + $0x2d0] sm:$0xff]
    %v3137 = vld [vmem:[#allocation12 + $0x2d8] sm:$0xff]
    %v3138 = vld [vmem:[#allocation12 + $0x2e0] sm:$0xff]
    %v3139 = vld [vmem:[#allocation12 + $0x2e8] sm:$0xff]
    %v3140 = vld [vmem:[#allocation12 + $0x2f0] sm:$0xff]
    %v3141 = vld [vmem:[#allocation12 + $0x2f8] sm:$0xff]
    %v3142 = vld [vmem:[#allocation12 + $0x300] sm:$0xff]
    %v3143 = vld [vmem:[#allocation12 + $0x308] sm:$0xff]
    %v3144 = vld [vmem:[#allocation12 + $0x310] sm:$0xff]
    %v3145 = vld [vmem:[#allocation12 + $0x318] sm:$0xff]
    %v3146 = vld [vmem:[#allocation12 + $0x320] sm:$0xff]
    %v3147 = vld [vmem:[#allocation12 + $0x328] sm:$0xff]
    %v3148 = vld [vmem:[#allocation12 + $0x330] sm:$0xff]
    %v3149 = vld [vmem:[#allocation12 + $0x338] sm:$0xff]
    %v3150 = vld [vmem:[#allocation12 + $0x340] sm:$0xff]
    %v3151 = vld [vmem:[#allocation12 + $0x348] sm:$0xff]
    %v3152 = vld [vmem:[#allocation12 + $0x350] sm:$0xff]
    %v3153 = vld [vmem:[#allocation12 + $0x358] sm:$0xff]
    %v3154 = vld [vmem:[#allocation12 + $0x360] sm:$0xff]
    %v3155 = vld [vmem:[#allocation12 + $0x368] sm:$0xff]
    %v3156 = vld [vmem:[#allocation12 + $0x370] sm:$0xff]
    %v3157 = vld [vmem:[#allocation12 + $0x378] sm:$0xff]
    %v3158 = vld [vmem:[#allocation12 + $0x380] sm:$0xff]
    %v3159 = vld [vmem:[#allocation12 + $0x388] sm:$0xff]
    %v3160 = vld [vmem:[#allocation12 + $0x390] sm:$0xff]
    %v3161 = vld [vmem:[#allocation12 + $0x398] sm:$0xff]
    %v3162 = vld [vmem:[#allocation12 + $0x3a0] sm:$0xff]
    %v3163 = vld [vmem:[#allocation12 + $0x3a8] sm:$0xff]
    %v3164 = vld [vmem:[#allocation12 + $0x3b0] sm:$0xff]
    %v3165 = vld [vmem:[#allocation12 + $0x3b8] sm:$0xff]
    %v3166 = vld [vmem:[#allocation12 + $0x3c0] sm:$0xff]
    %v3167 = vld [vmem:[#allocation12 + $0x3c8] sm:$0xff]
    %v3168 = vld [vmem:[#allocation12 + $0x3d0] sm:$0xff]
    %v3169 = vld [vmem:[#allocation12 + $0x3d8] sm:$0xff]
    %v3170 = vld [vmem:[#allocation12 + $0x3e0] sm:$0xff]
    %v3171 = vld [vmem:[#allocation12 + $0x3e8] sm:$0xff]
    %v3172 = vld [vmem:[#allocation12 + $0x3f0] sm:$0xff]
    %v3173 = vld [vmem:[#allocation12 + $0x3f8] sm:$0xff]
    %3174 = vmatprep.subr.mxu0 %v3047
    %3175 = vmatpush1.msra.mxu0 %v3046
    %3176 = vmatprep.subr.mxu0 %v3051
    %3177 = vmatpush1.msra.mxu0 %v3050
    %3178 = vmatprep.subr.mxu0 %v3055
    %3179 = vmatpush1.msra.mxu0 %v3054
    %3180 = vmatprep.subr.mxu0 %v3059
    %3181 = vmatpush1.msra.mxu0 %v3058
    %3182 = vmatprep.subr.mxu0 %v3063
    %3183 = vmatpush1.msra.mxu0 %v3062
    %3184 = vmatprep.subr.mxu0 %v3067
    %3185 = vmatpush1.msra.mxu0 %v3066
    %3186 = vmatprep.subr.mxu0 %v3071
    %3187 = vmatpush1.msra.mxu0 %v3070
    %3188 = vmatprep.subr.mxu0 %v3075
    %3189 = vmatpush1.msra.mxu0 %v3074
    %3190 = vmatprep.subr.mxu0 %v3079
    %3191 = vmatpush1.msra.mxu0 %v3078
    %3192 = vmatprep.subr.mxu0 %v3083
    %3193 = vmatpush1.msra.mxu0 %v3082
    %3194 = vmatprep.subr.mxu0 %v3087
    %3195 = vmatpush1.msra.mxu0 %v3086
    %3196 = vmatprep.subr.mxu0 %v3091
    %3197 = vmatpush1.msra.mxu0 %v3090
    %3198 = vmatprep.subr.mxu0 %v3095
    %3199 = vmatpush1.msra.mxu0 %v3094
    %3200 = vmatprep.subr.mxu0 %v3099
    %3201 = vmatpush1.msra.mxu0 %v3098
    %3202 = vmatprep.subr.mxu0 %v3103
    %3203 = vmatpush1.msra.mxu0 %v3102
    %3204 = vmatprep.subr.mxu0 %v3107
    %3205 = vmatpush1.msra.mxu0 %v3106
    %3206 = vmatprep.subr.mxu0 %v3111
    %3207 = vmatpush1.msra.mxu0 %v3110
    %3208 = vmatprep.subr.mxu0 %v3115
    %3209 = vmatpush1.msra.mxu0 %v3114
    %3210 = vmatprep.subr.mxu0 %v3119
    %3211 = vmatpush1.msra.mxu0 %v3118
    %3212 = vmatprep.subr.mxu0 %v3123
    %3213 = vmatpush1.msra.mxu0 %v3122
    %3214 = vmatprep.subr.mxu0 %v3127
    %3215 = vmatpush1.msra.mxu0 %v3126
    %3216 = vmatprep.subr.mxu0 %v3131
    %3217 = vmatpush1.msra.mxu0 %v3130
    %3218 = vmatprep.subr.mxu0 %v3135
    %3219 = vmatpush1.msra.mxu0 %v3134
    %3220 = vmatprep.subr.mxu0 %v3139
    %3221 = vmatpush1.msra.mxu0 %v3138
    %3222 = vmatprep.subr.mxu0 %v3143
    %3223 = vmatpush1.msra.mxu0 %v3142
    %3224 = vmatprep.subr.mxu0 %v3147
    %3225 = vmatpush1.msra.mxu0 %v3146
    %3226 = vmatprep.subr.mxu0 %v3151
    %3227 = vmatpush1.msra.mxu0 %v3150
    %3228 = vmatprep.subr.mxu0 %v3155
    %3229 = vmatpush1.msra.mxu0 %v3154
    %3230 = vmatprep.subr.mxu0 %v3159
    %3231 = vmatpush1.msra.mxu0 %v3158
    %3232 = vmatprep.subr.mxu0 %v3163
    %3233 = vmatpush1.msra.mxu0 %v3162
    %3234 = vmatprep.subr.mxu0 %v3167
    %3235 = vmatpush1.msra.mxu0 %v3166
    %3236 = vmatprep.subr.mxu0 %v3171
    %3237 = vmatpush1.msra.mxu0 %v3170
    %3238 = vmatprep.mubr.f32.mxu0 %v2542
    %3239 = vmatmul.mubr.f32.gmra.mrb[0].mxu0 %v2755
    %v3240 = vpop.f32.mrb[0].mxu0
    %v3241 = vadd.f32 %v466, %v3240
    %v3242 = vpop.f32.mrb[0].mxu0
    %v3243 = vadd.f32 %v470, %v3242
    %3244 = vdwg.mxu0
    %3245 = vmatprep.subr.mxu0 %v3049
    %3246 = vmatpush1.msra.mxu0 %v3048
    %3247 = vmatprep.subr.mxu0 %v3053
    %3248 = vmatpush1.msra.mxu0 %v3052
    %3249 = vmatprep.subr.mxu0 %v3057
    %3250 = vmatpush1.msra.mxu0 %v3056
    %3251 = vmatprep.subr.mxu0 %v3061
    %3252 = vmatpush1.msra.mxu0 %v3060
    %3253 = vmatprep.subr.mxu0 %v3065
    %3254 = vmatpush1.msra.mxu0 %v3064
    %3255 = vmatprep.subr.mxu0 %v3069
    %3256 = vmatpush1.msra.mxu0 %v3068
    %3257 = vmatprep.subr.mxu0 %v3073
    %3258 = vmatpush1.msra.mxu0 %v3072
    %3259 = vmatprep.subr.mxu0 %v3077
    %3260 = vmatpush1.msra.mxu0 %v3076
    %3261 = vmatprep.subr.mxu0 %v3081
    %3262 = vmatpush1.msra.mxu0 %v3080
    %3263 = vmatprep.subr.mxu0 %v3085
    %3264 = vmatpush1.msra.mxu0 %v3084
    %3265 = vmatprep.subr.mxu0 %v3089
    %3266 = vmatpush1.msra.mxu0 %v3088
    %3267 = vmatprep.subr.mxu0 %v3093
    %3268 = vmatpush1.msra.mxu0 %v3092
    %3269 = vmatprep.subr.mxu0 %v3097
    %3270 = vmatpush1.msra.mxu0 %v3096
    %3271 = vmatprep.subr.mxu0 %v3101
    %3272 = vmatpush1.msra.mxu0 %v3100
    %3273 = vmatprep.subr.mxu0 %v3105
    %3274 = vmatpush1.msra.mxu0 %v3104
    %3275 = vmatprep.subr.mxu0 %v3109
    %3276 = vmatpush1.msra.mxu0 %v3108
    %3277 = vmatprep.subr.mxu0 %v3113
    %3278 = vmatpush1.msra.mxu0 %v3112
    %3279 = vmatprep.subr.mxu0 %v3117
    %3280 = vmatpush1.msra.mxu0 %v3116
    %3281 = vmatprep.subr.mxu0 %v3121
    %3282 = vmatpush1.msra.mxu0 %v3120
    %3283 = vmatprep.subr.mxu0 %v3125
    %3284 = vmatpush1.msra.mxu0 %v3124
    %3285 = vmatprep.subr.mxu0 %v3129
    %3286 = vmatpush1.msra.mxu0 %v3128
    %3287 = vmatprep.subr.mxu0 %v3133
    %3288 = vmatpush1.msra.mxu0 %v3132
    %3289 = vmatprep.subr.mxu0 %v3137
    %3290 = vmatpush1.msra.mxu0 %v3136
    %3291 = vmatprep.subr.mxu0 %v3141
    %3292 = vmatpush1.msra.mxu0 %v3140
    %3293 = vmatprep.subr.mxu0 %v3145
    %3294 = vmatpush1.msra.mxu0 %v3144
    %3295 = vmatprep.subr.mxu0 %v3149
    %3296 = vmatpush1.msra.mxu0 %v3148
    %3297 = vmatprep.subr.mxu0 %v3153
    %3298 = vmatpush1.msra.mxu0 %v3152
    %3299 = vmatprep.subr.mxu0 %v3157
    %3300 = vmatpush1.msra.mxu0 %v3156
    %3301 = vmatprep.subr.mxu0 %v3161
    %3302 = vmatpush1.msra.mxu0 %v3160
    %3303 = vmatprep.subr.mxu0 %v3165
    %3304 = vmatpush1.msra.mxu0 %v3164
    %3305 = vmatprep.subr.mxu0 %v3169
    %3306 = vmatpush1.msra.mxu0 %v3168
    %3307 = vmatprep.subr.mxu0 %v3173
    %3308 = vmatpush1.msra.mxu0 %v3172
    %3309 = vmatprep.mubr.f32.mxu0 %v2542
    %3310 = vmatmul.mubr.f32.gmra.mrb[0].mxu0 %v2755
    %v3311 = vpop.f32.mrb[0].mxu0
    %v3312 = vadd.f32 %v474, %v3311
    %v3313 = vpop.f32.mrb[0].mxu0
    %v3314 = vadd.f32 %v478, %v3313
    %3315 = vdwg.mxu0
    %v3316 = vxor.u32 %v3241, 2147483648
    %v3317 = vmul.f32 %v3316, 1.442695
    %v3318 = vpow.pop %v3317
    %v3319 = vadd.f32 %v3318, 1.0
    %v3320 = vrcp.pop %v3319
    %v3321 = vmul.f32 1.0, %v3320
    %v3322 = vxor.u32 %v3243, 2147483648
    %v3323 = vmul.f32 %v3322, 1.442695
    %v3324 = vpow.pop %v3323
    %v3325 = vadd.f32 %v3324, 1.0
    %v3326 = vrcp.pop %v3325
    %v3327 = vmul.f32 1.0, %v3326
    %v3328 = vmul.f32 %v3321, %v3314
    %v3329 = vadd.f32 %v3312, %v3328
    %v3330 = vtanh.pop %v3329
    %v3331 = vsub.f32 1.0, %v3327
    %v3332 = vmul.f32 %v3331, %v3330
    %v3333 = vmul.f32 %v3327, %v2542
    %v3334 = vadd.f32 %v3332, %v3333
    %v3335 = vld [vmem:[#allocation2 + $0x60] sm:$0xff]
    %v3336 = vld [vmem:[#allocation2 + $0x68] sm:$0xff]
    %v3337 = vld [vmem:[#allocation2 + $0x70] sm:$0xff]
    %v3338 = vld [vmem:[#allocation9] sm:$0xff]
    %v3339 = vld [vmem:[#allocation9 + $0x8] sm:$0xff]
    %v3340 = vld [vmem:[#allocation9 + $0x10] sm:$0xff]
    %v3341 = vld [vmem:[#allocation9 + $0x18] sm:$0xff]
    %v3342 = vld [vmem:[#allocation9 + $0x20] sm:$0xff]
    %v3343 = vld [vmem:[#allocation9 + $0x28] sm:$0xff]
    %v3344 = vld [vmem:[#allocation9 + $0x30] sm:$0xff]
    %v3345 = vld [vmem:[#allocation9 + $0x38] sm:$0xff]
    %v3346 = vld [vmem:[#allocation9 + $0x40] sm:$0xff]
    %v3347 = vld [vmem:[#allocation9 + $0x48] sm:$0xff]
    %v3348 = vld [vmem:[#allocation9 + $0x50] sm:$0xff]
    %v3349 = vld [vmem:[#allocation9 + $0x58] sm:$0xff]
    %v3350 = vld [vmem:[#allocation9 + $0x60] sm:$0xff]
    %v3351 = vld [vmem:[#allocation9 + $0x68] sm:$0xff]
    %v3352 = vld [vmem:[#allocation9 + $0x70] sm:$0xff]
    %v3353 = vld [vmem:[#allocation9 + $0x78] sm:$0xff]
    %v3354 = vld [vmem:[#allocation9 + $0x80] sm:$0xff]
    %v3355 = vld [vmem:[#allocation9 + $0x88] sm:$0xff]
    %v3356 = vld [vmem:[#allocation9 + $0x90] sm:$0xff]
    %v3357 = vld [vmem:[#allocation9 + $0x98] sm:$0xff]
    %v3358 = vld [vmem:[#allocation9 + $0xa0] sm:$0xff]
    %v3359 = vld [vmem:[#allocation9 + $0xa8] sm:$0xff]
    %v3360 = vld [vmem:[#allocation9 + $0xb0] sm:$0xff]
    %v3361 = vld [vmem:[#allocation9 + $0xb8] sm:$0xff]
    %v3362 = vld [vmem:[#allocation9 + $0xc0] sm:$0xff]
    %v3363 = vld [vmem:[#allocation9 + $0xc8] sm:$0xff]
    %v3364 = vld [vmem:[#allocation9 + $0xd0] sm:$0xff]
    %v3365 = vld [vmem:[#allocation9 + $0xd8] sm:$0xff]
    %v3366 = vld [vmem:[#allocation9 + $0xe0] sm:$0xff]
    %v3367 = vld [vmem:[#allocation9 + $0xe8] sm:$0xff]
    %v3368 = vld [vmem:[#allocation9 + $0xf0] sm:$0xff]
    %v3369 = vld [vmem:[#allocation9 + $0xf8] sm:$0xff]
    %v3370 = vld [vmem:[#allocation9 + $0x100] sm:$0xff]
    %v3371 = vld [vmem:[#allocation9 + $0x108] sm:$0xff]
    %v3372 = vld [vmem:[#allocation9 + $0x110] sm:$0xff]
    %v3373 = vld [vmem:[#allocation9 + $0x118] sm:$0xff]
    %v3374 = vld [vmem:[#allocation9 + $0x120] sm:$0xff]
    %v3375 = vld [vmem:[#allocation9 + $0x128] sm:$0xff]
    %v3376 = vld [vmem:[#allocation9 + $0x130] sm:$0xff]
    %v3377 = vld [vmem:[#allocation9 + $0x138] sm:$0xff]
    %v3378 = vld [vmem:[#allocation9 + $0x140] sm:$0xff]
    %v3379 = vld [vmem:[#allocation9 + $0x148] sm:$0xff]
    %v3380 = vld [vmem:[#allocation9 + $0x150] sm:$0xff]
    %v3381 = vld [vmem:[#allocation9 + $0x158] sm:$0xff]
    %v3382 = vld [vmem:[#allocation9 + $0x160] sm:$0xff]
    %v3383 = vld [vmem:[#allocation9 + $0x168] sm:$0xff]
    %v3384 = vld [vmem:[#allocation9 + $0x170] sm:$0xff]
    %v3385 = vld [vmem:[#allocation9 + $0x178] sm:$0xff]
    %3386 = vmatprep.subr.mxu0 %v3339
    %3387 = vmatpush1.msra.mxu0 %v3338
    %3388 = vmatprep.subr.mxu0 %v3342
    %3389 = vmatpush1.msra.mxu0 %v3341
    %3390 = vmatprep.subr.mxu0 %v3345
    %3391 = vmatpush1.msra.mxu0 %v3344
    %3392 = vmatprep.subr.mxu0 %v3348
    %3393 = vmatpush1.msra.mxu0 %v3347
    %3394 = vmatprep.subr.mxu0 %v3351
    %3395 = vmatpush1.msra.mxu0 %v3350
    %3396 = vmatprep.subr.mxu0 %v3354
    %3397 = vmatpush1.msra.mxu0 %v3353
    %3398 = vmatprep.subr.mxu0 %v3357
    %3399 = vmatpush1.msra.mxu0 %v3356
    %3400 = vmatprep.subr.mxu0 %v3360
    %3401 = vmatpush1.msra.mxu0 %v3359
    %3402 = vmatprep.subr.mxu0 %v3363
    %3403 = vmatpush1.msra.mxu0 %v3362
    %3404 = vmatprep.subr.mxu0 %v3366
    %3405 = vmatpush1.msra.mxu0 %v3365
    %3406 = vmatprep.subr.mxu0 %v3369
    %3407 = vmatpush1.msra.mxu0 %v3368
    %3408 = vmatprep.subr.mxu0 %v3372
    %3409 = vmatpush1.msra.mxu0 %v3371
    %3410 = vmatprep.subr.mxu0 %v3375
    %3411 = vmatpush1.msra.mxu0 %v3374
    %3412 = vmatprep.subr.mxu0 %v3378
    %3413 = vmatpush1.msra.mxu0 %v3377
    %3414 = vmatprep.subr.mxu0 %v3381
    %3415 = vmatpush1.msra.mxu0 %v3380
    %3416 = vmatprep.subr.mxu0 %v3384
    %3417 = vmatpush1.msra.mxu0 %v3383
    %3418 = vmatprep.subr.mxu0 0.0
    %3419 = vmatpush1.msra.mxu0 0.0
    %3420 = vmatprep.subr.mxu0 0.0
    %3421 = vmatpush1.msra.mxu0 0.0
    %3422 = vmatprep.subr.mxu0 0.0
    %3423 = vmatpush1.msra.mxu0 0.0
    %3424 = vmatprep.subr.mxu0 0.0
    %3425 = vmatpush1.msra.mxu0 0.0
    %3426 = vmatprep.subr.mxu0 0.0
    %3427 = vmatpush1.msra.mxu0 0.0
    %3428 = vmatprep.subr.mxu0 0.0
    %3429 = vmatpush1.msra.mxu0 0.0
    %3430 = vmatprep.subr.mxu0 0.0
    %3431 = vmatpush1.msra.mxu0 0.0
    %3432 = vmatprep.subr.mxu0 0.0
    %3433 = vmatpush1.msra.mxu0 0.0
    %3434 = vmatprep.subr.mxu0 0.0
    %3435 = vmatpush1.msra.mxu0 0.0
    %3436 = vmatprep.subr.mxu0 0.0
    %3437 = vmatpush1.msra.mxu0 0.0
    %3438 = vmatprep.subr.mxu0 0.0
    %3439 = vmatpush1.msra.mxu0 0.0
    %3440 = vmatprep.subr.mxu0 0.0
    %3441 = vmatpush1.msra.mxu0 0.0
    %3442 = vmatprep.subr.mxu0 0.0
    %3443 = vmatpush1.msra.mxu0 0.0
    %3444 = vmatprep.subr.mxu0 0.0
    %3445 = vmatpush1.msra.mxu0 0.0
    %3446 = vmatprep.subr.mxu0 0.0
    %3447 = vmatpush1.msra.mxu0 0.0
    %3448 = vmatprep.subr.mxu0 0.0
    %3449 = vmatpush1.msra.mxu0 0.0
    %3450 = vmatprep.mubr.f32.mxu0 0.0
    %3451 = vmatmul.mubr.f32.gmra.mrb[0].mxu0 %v2755
    %v3452 = vpop.f32.mrb[0].mxu0
    %v3453 = vadd.f32 %v449, %v3452
    %v3454 = vpop.f32.mrb[0].mxu0
    %v3455 = vadd.f32 %v453, %v3454
    %3456 = vdwg.mxu0
    %3457 = vmatprep.subr.mxu0 0.0
    %3458 = vmatpush1.msra.mxu0 %v3340
    %3459 = vmatprep.subr.mxu0 0.0
    %3460 = vmatpush1.msra.mxu0 %v3343
    %3461 = vmatprep.subr.mxu0 0.0
    %3462 = vmatpush1.msra.mxu0 %v3346
    %3463 = vmatprep.subr.mxu0 0.0
    %3464 = vmatpush1.msra.mxu0 %v3349
    %3465 = vmatprep.subr.mxu0 0.0
    %3466 = vmatpush1.msra.mxu0 %v3352
    %3467 = vmatprep.subr.mxu0 0.0
    %3468 = vmatpush1.msra.mxu0 %v3355
    %3469 = vmatprep.subr.mxu0 0.0
    %3470 = vmatpush1.msra.mxu0 %v3358
    %3471 = vmatprep.subr.mxu0 0.0
    %3472 = vmatpush1.msra.mxu0 %v3361
    %3473 = vmatprep.subr.mxu0 0.0
    %3474 = vmatpush1.msra.mxu0 %v3364
    %3475 = vmatprep.subr.mxu0 0.0
    %3476 = vmatpush1.msra.mxu0 %v3367
    %3477 = vmatprep.subr.mxu0 0.0
    %3478 = vmatpush1.msra.mxu0 %v3370
    %3479 = vmatprep.subr.mxu0 0.0
    %3480 = vmatpush1.msra.mxu0 %v3373
    %3481 = vmatprep.subr.mxu0 0.0
    %3482 = vmatpush1.msra.mxu0 %v3376
    %3483 = vmatprep.subr.mxu0 0.0
    %3484 = vmatpush1.msra.mxu0 %v3379
    %3485 = vmatprep.subr.mxu0 0.0
    %3486 = vmatpush1.msra.mxu0 %v3382
    %3487 = vmatprep.subr.mxu0 0.0
    %3488 = vmatpush1.msra.mxu0 %v3385
    %3489 = vmatprep.subr.mxu0 0.0
    %3490 = vmatpush1.msra.mxu0 0.0
    %3491 = vmatprep.subr.mxu0 0.0
    %3492 = vmatpush1.msra.mxu0 0.0
    %3493 = vmatprep.subr.mxu0 0.0
    %3494 = vmatpush1.msra.mxu0 0.0
    %3495 = vmatprep.subr.mxu0 0.0
    %3496 = vmatpush1.msra.mxu0 0.0
    %3497 = vmatprep.subr.mxu0 0.0
    %3498 = vmatpush1.msra.mxu0 0.0
    %3499 = vmatprep.subr.mxu0 0.0
    %3500 = vmatpush1.msra.mxu0 0.0
    %3501 = vmatprep.subr.mxu0 0.0
    %3502 = vmatpush1.msra.mxu0 0.0
    %3503 = vmatprep.subr.mxu0 0.0
    %3504 = vmatpush1.msra.mxu0 0.0
    %3505 = vmatprep.subr.mxu0 0.0
    %3506 = vmatpush1.msra.mxu0 0.0
    %3507 = vmatprep.subr.mxu0 0.0
    %3508 = vmatpush1.msra.mxu0 0.0
    %3509 = vmatprep.subr.mxu0 0.0
    %3510 = vmatpush1.msra.mxu0 0.0
    %3511 = vmatprep.subr.mxu0 0.0
    %3512 = vmatpush1.msra.mxu0 0.0
    %3513 = vmatprep.subr.mxu0 0.0
    %3514 = vmatpush1.msra.mxu0 0.0
    %3515 = vmatprep.subr.mxu0 0.0
    %3516 = vmatpush1.msra.mxu0 0.0
    %3517 = vmatprep.subr.mxu0 0.0
    %3518 = vmatpush1.msra.mxu0 0.0
    %3519 = vmatprep.subr.mxu0 0.0
    %3520 = vmatpush1.msra.mxu0 0.0
    %3521 = vmatprep.mubr.f32.mxu0 0.0
    %3522 = vmatmul.mubr.f32.gmra.mrb[0].mxu0 %v2755
    %v3523 = vpop.f32.mrb[0].mxu0
    %v3524 = vadd.f32 %v457, %v3523
    %v3525 = vpop.f32.mrb[0].mxu0
    %3526 = vdwg.mxu0
    %v3527 = vadd.f32 %v3335, %v3453
    %v3528 = vxor.u32 %v3527, 2147483648
    %v3529 = vmul.f32 %v3528, 1.442695
    %v3530 = vpow.pop %v3529
    %v3531 = vadd.f32 %v3530, 1.0
    %v3532 = vrcp.pop %v3531
    %v3533 = vmul.f32 1.0, %v3532
    %v3534 = vadd.f32 %v3336, %v3455
    %v3535 = vxor.u32 %v3534, 2147483648
    %v3536 = vmul.f32 %v3535, 1.442695
    %v3537 = vpow.pop %v3536
    %v3538 = vadd.f32 %v3537, 1.0
    %v3539 = vrcp.pop %v3538
    %v3540 = vmul.f32 1.0, %v3539
    %v3541 = vmul.f32 %v3533, %v3524
    %v3542 = vadd.f32 %v3337, %v3541
    %v3543 = vtanh.pop %v3542
    %v3544 = vsub.f32 1.0, %v3540
    %v3545 = vmul.f32 %v3544, %v3543
    %v3546 = vmul.f32 %v3540, %v2755
    %v3547 = vadd.f32 %v3545, %v3546
    %v3548 = vld [vmem:[#allocation15] sm:$0xff]
    %v3549 = vld [vmem:[#allocation15 + $0x8] sm:$0xff]
    %v3550 = vld [vmem:[#allocation15 + $0x10] sm:$0xff]
    %v3551 = vld [vmem:[#allocation15 + $0x18] sm:$0xff]
    %v3552 = vld [vmem:[#allocation15 + $0x20] sm:$0xff]
    %v3553 = vld [vmem:[#allocation15 + $0x28] sm:$0xff]
    %v3554 = vld [vmem:[#allocation15 + $0x30] sm:$0xff]
    %v3555 = vld [vmem:[#allocation15 + $0x38] sm:$0xff]
    %v3556 = vld [vmem:[#allocation15 + $0x40] sm:$0xff]
    %v3557 = vld [vmem:[#allocation15 + $0x48] sm:$0xff]
    %v3558 = vld [vmem:[#allocation15 + $0x50] sm:$0xff]
    %v3559 = vld [vmem:[#allocation15 + $0x58] sm:$0xff]
    %v3560 = vld [vmem:[#allocation15 + $0x60] sm:$0xff]
    %v3561 = vld [vmem:[#allocation15 + $0x68] sm:$0xff]
    %v3562 = vld [vmem:[#allocation15 + $0x70] sm:$0xff]
    %v3563 = vld [vmem:[#allocation15 + $0x78] sm:$0xff]
    %v3564 = vld [vmem:[#allocation15 + $0x80] sm:$0xff]
    %v3565 = vld [vmem:[#allocation15 + $0x88] sm:$0xff]
    %v3566 = vld [vmem:[#allocation15 + $0x90] sm:$0xff]
    %v3567 = vld [vmem:[#allocation15 + $0x98] sm:$0xff]
    %v3568 = vld [vmem:[#allocation15 + $0xa0] sm:$0xff]
    %v3569 = vld [vmem:[#allocation15 + $0xa8] sm:$0xff]
    %v3570 = vld [vmem:[#allocation15 + $0xb0] sm:$0xff]
    %v3571 = vld [vmem:[#allocation15 + $0xb8] sm:$0xff]
    %v3572 = vld [vmem:[#allocation15 + $0xc0] sm:$0xff]
    %v3573 = vld [vmem:[#allocation15 + $0xc8] sm:$0xff]
    %v3574 = vld [vmem:[#allocation15 + $0xd0] sm:$0xff]
    %v3575 = vld [vmem:[#allocation15 + $0xd8] sm:$0xff]
    %v3576 = vld [vmem:[#allocation15 + $0xe0] sm:$0xff]
    %v3577 = vld [vmem:[#allocation15 + $0xe8] sm:$0xff]
    %v3578 = vld [vmem:[#allocation15 + $0xf0] sm:$0xff]
    %v3579 = vld [vmem:[#allocation15 + $0xf8] sm:$0xff]
    %v3580 = vld [vmem:[#allocation15 + $0x100] sm:$0xff]
    %v3581 = vld [vmem:[#allocation15 + $0x108] sm:$0xff]
    %v3582 = vld [vmem:[#allocation15 + $0x110] sm:$0xff]
    %v3583 = vld [vmem:[#allocation15 + $0x118] sm:$0xff]
    %v3584 = vld [vmem:[#allocation15 + $0x120] sm:$0xff]
    %v3585 = vld [vmem:[#allocation15 + $0x128] sm:$0xff]
    %v3586 = vld [vmem:[#allocation15 + $0x130] sm:$0xff]
    %v3587 = vld [vmem:[#allocation15 + $0x138] sm:$0xff]
    %v3588 = vld [vmem:[#allocation15 + $0x140] sm:$0xff]
    %v3589 = vld [vmem:[#allocation15 + $0x148] sm:$0xff]
    %v3590 = vld [vmem:[#allocation15 + $0x150] sm:$0xff]
    %v3591 = vld [vmem:[#allocation15 + $0x158] sm:$0xff]
    %v3592 = vld [vmem:[#allocation15 + $0x160] sm:$0xff]
    %v3593 = vld [vmem:[#allocation15 + $0x168] sm:$0xff]
    %v3594 = vld [vmem:[#allocation15 + $0x170] sm:$0xff]
    %v3595 = vld [vmem:[#allocation15 + $0x178] sm:$0xff]
    %v3596 = vld [vmem:[#allocation15 + $0x180] sm:$0xff]
    %v3597 = vld [vmem:[#allocation15 + $0x188] sm:$0xff]
    %v3598 = vld [vmem:[#allocation15 + $0x190] sm:$0xff]
    %v3599 = vld [vmem:[#allocation15 + $0x198] sm:$0xff]
    %v3600 = vld [vmem:[#allocation15 + $0x1a0] sm:$0xff]
    %v3601 = vld [vmem:[#allocation15 + $0x1a8] sm:$0xff]
    %v3602 = vld [vmem:[#allocation15 + $0x1b0] sm:$0xff]
    %v3603 = vld [vmem:[#allocation15 + $0x1b8] sm:$0xff]
    %v3604 = vld [vmem:[#allocation15 + $0x1c0] sm:$0xff]
    %v3605 = vld [vmem:[#allocation15 + $0x1c8] sm:$0xff]
    %v3606 = vld [vmem:[#allocation15 + $0x1d0] sm:$0xff]
    %v3607 = vld [vmem:[#allocation15 + $0x1d8] sm:$0xff]
    %v3608 = vld [vmem:[#allocation15 + $0x1e0] sm:$0xff]
    %v3609 = vld [vmem:[#allocation15 + $0x1e8] sm:$0xff]
    %v3610 = vld [vmem:[#allocation15 + $0x1f0] sm:$0xff]
    %v3611 = vld [vmem:[#allocation15 + $0x1f8] sm:$0xff]
    %v3612 = vld [vmem:[#allocation15 + $0x200] sm:$0xff]
    %v3613 = vld [vmem:[#allocation15 + $0x208] sm:$0xff]
    %v3614 = vld [vmem:[#allocation15 + $0x210] sm:$0xff]
    %v3615 = vld [vmem:[#allocation15 + $0x218] sm:$0xff]
    %v3616 = vld [vmem:[#allocation15 + $0x220] sm:$0xff]
    %v3617 = vld [vmem:[#allocation15 + $0x228] sm:$0xff]
    %v3618 = vld [vmem:[#allocation15 + $0x230] sm:$0xff]
    %v3619 = vld [vmem:[#allocation15 + $0x238] sm:$0xff]
    %v3620 = vld [vmem:[#allocation15 + $0x240] sm:$0xff]
    %v3621 = vld [vmem:[#allocation15 + $0x248] sm:$0xff]
    %v3622 = vld [vmem:[#allocation15 + $0x250] sm:$0xff]
    %v3623 = vld [vmem:[#allocation15 + $0x258] sm:$0xff]
    %v3624 = vld [vmem:[#allocation15 + $0x260] sm:$0xff]
    %v3625 = vld [vmem:[#allocation15 + $0x268] sm:$0xff]
    %v3626 = vld [vmem:[#allocation15 + $0x270] sm:$0xff]
    %v3627 = vld [vmem:[#allocation15 + $0x278] sm:$0xff]
    %v3628 = vld [vmem:[#allocation15 + $0x280] sm:$0xff]
    %v3629 = vld [vmem:[#allocation15 + $0x288] sm:$0xff]
    %v3630 = vld [vmem:[#allocation15 + $0x290] sm:$0xff]
    %v3631 = vld [vmem:[#allocation15 + $0x298] sm:$0xff]
    %v3632 = vld [vmem:[#allocation15 + $0x2a0] sm:$0xff]
    %v3633 = vld [vmem:[#allocation15 + $0x2a8] sm:$0xff]
    %v3634 = vld [vmem:[#allocation15 + $0x2b0] sm:$0xff]
    %v3635 = vld [vmem:[#allocation15 + $0x2b8] sm:$0xff]
    %v3636 = vld [vmem:[#allocation15 + $0x2c0] sm:$0xff]
    %v3637 = vld [vmem:[#allocation15 + $0x2c8] sm:$0xff]
    %v3638 = vld [vmem:[#allocation15 + $0x2d0] sm:$0xff]
    %v3639 = vld [vmem:[#allocation15 + $0x2d8] sm:$0xff]
    %v3640 = vld [vmem:[#allocation15 + $0x2e0] sm:$0xff]
    %v3641 = vld [vmem:[#allocation15 + $0x2e8] sm:$0xff]
    %v3642 = vld [vmem:[#allocation15 + $0x2f0] sm:$0xff]
    %v3643 = vld [vmem:[#allocation15 + $0x2f8] sm:$0xff]
    %v3644 = vld [vmem:[#allocation15 + $0x300] sm:$0xff]
    %v3645 = vld [vmem:[#allocation15 + $0x308] sm:$0xff]
    %v3646 = vld [vmem:[#allocation15 + $0x310] sm:$0xff]
    %v3647 = vld [vmem:[#allocation15 + $0x318] sm:$0xff]
    %v3648 = vld [vmem:[#allocation15 + $0x320] sm:$0xff]
    %v3649 = vld [vmem:[#allocation15 + $0x328] sm:$0xff]
    %v3650 = vld [vmem:[#allocation15 + $0x330] sm:$0xff]
    %v3651 = vld [vmem:[#allocation15 + $0x338] sm:$0xff]
    %v3652 = vld [vmem:[#allocation15 + $0x340] sm:$0xff]
    %v3653 = vld [vmem:[#allocation15 + $0x348] sm:$0xff]
    %v3654 = vld [vmem:[#allocation15 + $0x350] sm:$0xff]
    %v3655 = vld [vmem:[#allocation15 + $0x358] sm:$0xff]
    %v3656 = vld [vmem:[#allocation15 + $0x360] sm:$0xff]
    %v3657 = vld [vmem:[#allocation15 + $0x368] sm:$0xff]
    %v3658 = vld [vmem:[#allocation15 + $0x370] sm:$0xff]
    %v3659 = vld [vmem:[#allocation15 + $0x378] sm:$0xff]
    %v3660 = vld [vmem:[#allocation15 + $0x380] sm:$0xff]
    %v3661 = vld [vmem:[#allocation15 + $0x388] sm:$0xff]
    %v3662 = vld [vmem:[#allocation15 + $0x390] sm:$0xff]
    %v3663 = vld [vmem:[#allocation15 + $0x398] sm:$0xff]
    %v3664 = vld [vmem:[#allocation15 + $0x3a0] sm:$0xff]
    %v3665 = vld [vmem:[#allocation15 + $0x3a8] sm:$0xff]
    %v3666 = vld [vmem:[#allocation15 + $0x3b0] sm:$0xff]
    %v3667 = vld [vmem:[#allocation15 + $0x3b8] sm:$0xff]
    %v3668 = vld [vmem:[#allocation15 + $0x3c0] sm:$0xff]
    %v3669 = vld [vmem:[#allocation15 + $0x3c8] sm:$0xff]
    %v3670 = vld [vmem:[#allocation15 + $0x3d0] sm:$0xff]
    %v3671 = vld [vmem:[#allocation15 + $0x3d8] sm:$0xff]
    %v3672 = vld [vmem:[#allocation15 + $0x3e0] sm:$0xff]
    %v3673 = vld [vmem:[#allocation15 + $0x3e8] sm:$0xff]
    %v3674 = vld [vmem:[#allocation15 + $0x3f0] sm:$0xff]
    %v3675 = vld [vmem:[#allocation15 + $0x3f8] sm:$0xff]
    %3676 = vmatprep.subr.mxu0 %v3549
    %3677 = vmatpush1.msra.mxu0 %v3548
    %3678 = vmatprep.subr.mxu0 %v3553
    %3679 = vmatpush1.msra.mxu0 %v3552
    %3680 = vmatprep.subr.mxu0 %v3557
    %3681 = vmatpush1.msra.mxu0 %v3556
    %3682 = vmatprep.subr.mxu0 %v3561
    %3683 = vmatpush1.msra.mxu0 %v3560
    %3684 = vmatprep.subr.mxu0 %v3565
    %3685 = vmatpush1.msra.mxu0 %v3564
    %3686 = vmatprep.subr.mxu0 %v3569
    %3687 = vmatpush1.msra.mxu0 %v3568
    %3688 = vmatprep.subr.mxu0 %v3573
    %3689 = vmatpush1.msra.mxu0 %v3572
    %3690 = vmatprep.subr.mxu0 %v3577
    %3691 = vmatpush1.msra.mxu0 %v3576
    %3692 = vmatprep.subr.mxu0 %v3581
    %3693 = vmatpush1.msra.mxu0 %v3580
    %3694 = vmatprep.subr.mxu0 %v3585
    %3695 = vmatpush1.msra.mxu0 %v3584
    %3696 = vmatprep.subr.mxu0 %v3589
    %3697 = vmatpush1.msra.mxu0 %v3588
    %3698 = vmatprep.subr.mxu0 %v3593
    %3699 = vmatpush1.msra.mxu0 %v3592
    %3700 = vmatprep.subr.mxu0 %v3597
    %3701 = vmatpush1.msra.mxu0 %v3596
    %3702 = vmatprep.subr.mxu0 %v3601
    %3703 = vmatpush1.msra.mxu0 %v3600
    %3704 = vmatprep.subr.mxu0 %v3605
    %3705 = vmatpush1.msra.mxu0 %v3604
    %3706 = vmatprep.subr.mxu0 %v3609
    %3707 = vmatpush1.msra.mxu0 %v3608
    %3708 = vmatprep.subr.mxu0 %v3613
    %3709 = vmatpush1.msra.mxu0 %v3612
    %3710 = vmatprep.subr.mxu0 %v3617
    %3711 = vmatpush1.msra.mxu0 %v3616
    %3712 = vmatprep.subr.mxu0 %v3621
    %3713 = vmatpush1.msra.mxu0 %v3620
    %3714 = vmatprep.subr.mxu0 %v3625
    %3715 = vmatpush1.msra.mxu0 %v3624
    %3716 = vmatprep.subr.mxu0 %v3629
    %3717 = vmatpush1.msra.mxu0 %v3628
    %3718 = vmatprep.subr.mxu0 %v3633
    %3719 = vmatpush1.msra.mxu0 %v3632
    %3720 = vmatprep.subr.mxu0 %v3637
    %3721 = vmatpush1.msra.mxu0 %v3636
    %3722 = vmatprep.subr.mxu0 %v3641
    %3723 = vmatpush1.msra.mxu0 %v3640
    %3724 = vmatprep.subr.mxu0 %v3645
    %3725 = vmatpush1.msra.mxu0 %v3644
    %3726 = vmatprep.subr.mxu0 %v3649
    %3727 = vmatpush1.msra.mxu0 %v3648
    %3728 = vmatprep.subr.mxu0 %v3653
    %3729 = vmatpush1.msra.mxu0 %v3652
    %3730 = vmatprep.subr.mxu0 %v3657
    %3731 = vmatpush1.msra.mxu0 %v3656
    %3732 = vmatprep.subr.mxu0 %v3661
    %3733 = vmatpush1.msra.mxu0 %v3660
    %3734 = vmatprep.subr.mxu0 %v3665
    %3735 = vmatpush1.msra.mxu0 %v3664
    %3736 = vmatprep.subr.mxu0 %v3669
    %3737 = vmatpush1.msra.mxu0 %v3668
    %3738 = vmatprep.subr.mxu0 %v3673
    %3739 = vmatpush1.msra.mxu0 %v3672
    %3740 = vmatprep.mubr.f32.mxu0 %v3044
    %3741 = vmatmul.mubr.f32.gmra.mrb[0].mxu0 %v3334
    %v3742 = vpop.f32.mrb[0].mxu0
    %v3743 = vadd.f32 %v488, %v3742
    %v3744 = vpop.f32.mrb[0].mxu0
    %v3745 = vadd.f32 %v492, %v3744
    %3746 = vdwg.mxu0
    %3747 = vmatprep.subr.mxu0 %v3551
    %3748 = vmatpush1.msra.mxu0 %v3550
    %3749 = vmatprep.subr.mxu0 %v3555
    %3750 = vmatpush1.msra.mxu0 %v3554
    %3751 = vmatprep.subr.mxu0 %v3559
    %3752 = vmatpush1.msra.mxu0 %v3558
    %3753 = vmatprep.subr.mxu0 %v3563
    %3754 = vmatpush1.msra.mxu0 %v3562
    %3755 = vmatprep.subr.mxu0 %v3567
    %3756 = vmatpush1.msra.mxu0 %v3566
    %3757 = vmatprep.subr.mxu0 %v3571
    %3758 = vmatpush1.msra.mxu0 %v3570
    %3759 = vmatprep.subr.mxu0 %v3575
    %3760 = vmatpush1.msra.mxu0 %v3574
    %3761 = vmatprep.subr.mxu0 %v3579
    %3762 = vmatpush1.msra.mxu0 %v3578
    %3763 = vmatprep.subr.mxu0 %v3583
    %3764 = vmatpush1.msra.mxu0 %v3582
    %3765 = vmatprep.subr.mxu0 %v3587
    %3766 = vmatpush1.msra.mxu0 %v3586
    %3767 = vmatprep.subr.mxu0 %v3591
    %3768 = vmatpush1.msra.mxu0 %v3590
    %3769 = vmatprep.subr.mxu0 %v3595
    %3770 = vmatpush1.msra.mxu0 %v3594
    %3771 = vmatprep.subr.mxu0 %v3599
    %3772 = vmatpush1.msra.mxu0 %v3598
    %3773 = vmatprep.subr.mxu0 %v3603
    %3774 = vmatpush1.msra.mxu0 %v3602
    %3775 = vmatprep.subr.mxu0 %v3607
    %3776 = vmatpush1.msra.mxu0 %v3606
    %3777 = vmatprep.subr.mxu0 %v3611
    %3778 = vmatpush1.msra.mxu0 %v3610
    %3779 = vmatprep.subr.mxu0 %v3615
    %3780 = vmatpush1.msra.mxu0 %v3614
    %3781 = vmatprep.subr.mxu0 %v3619
    %3782 = vmatpush1.msra.mxu0 %v3618
    %3783 = vmatprep.subr.mxu0 %v3623
    %3784 = vmatpush1.msra.mxu0 %v3622
    %3785 = vmatprep.subr.mxu0 %v3627
    %3786 = vmatpush1.msra.mxu0 %v3626
    %3787 = vmatprep.subr.mxu0 %v3631
    %3788 = vmatpush1.msra.mxu0 %v3630
    %3789 = vmatprep.subr.mxu0 %v3635
    %3790 = vmatpush1.msra.mxu0 %v3634
    %3791 = vmatprep.subr.mxu0 %v3639
    %3792 = vmatpush1.msra.mxu0 %v3638
    %3793 = vmatprep.subr.mxu0 %v3643
    %3794 = vmatpush1.msra.mxu0 %v3642
    %3795 = vmatprep.subr.mxu0 %v3647
    %3796 = vmatpush1.msra.mxu0 %v3646
    %3797 = vmatprep.subr.mxu0 %v3651
    %3798 = vmatpush1.msra.mxu0 %v3650
    %3799 = vmatprep.subr.mxu0 %v3655
    %3800 = vmatpush1.msra.mxu0 %v3654
    %3801 = vmatprep.subr.mxu0 %v3659
    %3802 = vmatpush1.msra.mxu0 %v3658
    %3803 = vmatprep.subr.mxu0 %v3663
    %3804 = vmatpush1.msra.mxu0 %v3662
    %3805 = vmatprep.subr.mxu0 %v3667
    %3806 = vmatpush1.msra.mxu0 %v3666
    %3807 = vmatprep.subr.mxu0 %v3671
    %3808 = vmatpush1.msra.mxu0 %v3670
    %3809 = vmatprep.subr.mxu0 %v3675
    %3810 = vmatpush1.msra.mxu0 %v3674
    %3811 = vmatprep.mubr.f32.mxu0 %v3044
    %3812 = vmatmul.mubr.f32.gmra.mrb[0].mxu0 %v3334
    %v3813 = vpop.f32.mrb[0].mxu0
    %v3814 = vadd.f32 %v496, %v3813
    %v3815 = vpop.f32.mrb[0].mxu0
    %v3816 = vadd.f32 %v500, %v3815
    %3817 = vdwg.mxu0
    %v3818 = vxor.u32 %v3743, 2147483648
    %v3819 = vmul.f32 %v3818, 1.442695
    %v3820 = vpow.pop %v3819
    %v3821 = vadd.f32 %v3820, 1.0
    %v3822 = vrcp.pop %v3821
    %v3823 = vmul.f32 1.0, %v3822
    %v3824 = vxor.u32 %v3745, 2147483648
    %v3825 = vmul.f32 %v3824, 1.442695
    %v3826 = vpow.pop %v3825
    %v3827 = vadd.f32 %v3826, 1.0
    %v3828 = vrcp.pop %v3827
    %v3829 = vmul.f32 1.0, %v3828
    %v3830 = vmul.f32 %v3823, %v3816
    %v3831 = vadd.f32 %v3814, %v3830
    %v3832 = vtanh.pop %v3831
    %v3833 = vsub.f32 1.0, %v3829
    %v3834 = vmul.f32 %v3833, %v3832
    %v3835 = vmul.f32 %v3829, %v3044
    %v3836 = vadd.f32 %v3834, %v3835
    %3837 = vst [vmem:[#allocation3 + $0x18] sm:$0xff] %v3836
    %v3838 = vld [vmem:[#allocation12] sm:$0xff]
    %v3839 = vld [vmem:[#allocation12 + $0x8] sm:$0xff]
    %v3840 = vld [vmem:[#allocation12 + $0x10] sm:$0xff]
    %v3841 = vld [vmem:[#allocation12 + $0x18] sm:$0xff]
    %v3842 = vld [vmem:[#allocation12 + $0x20] sm:$0xff]
    %v3843 = vld [vmem:[#allocation12 + $0x28] sm:$0xff]
    %v3844 = vld [vmem:[#allocation12 + $0x30] sm:$0xff]
    %v3845 = vld [vmem:[#allocation12 + $0x38] sm:$0xff]
    %v3846 = vld [vmem:[#allocation12 + $0x40] sm:$0xff]
    %v3847 = vld [vmem:[#allocation12 + $0x48] sm:$0xff]
    %v3848 = vld [vmem:[#allocation12 + $0x50] sm:$0xff]
    %v3849 = vld [vmem:[#allocation12 + $0x58] sm:$0xff]
    %v3850 = vld [vmem:[#allocation12 + $0x60] sm:$0xff]
    %v3851 = vld [vmem:[#allocation12 + $0x68] sm:$0xff]
    %v3852 = vld [vmem:[#allocation12 + $0x70] sm:$0xff]
    %v3853 = vld [vmem:[#allocation12 + $0x78] sm:$0xff]
    %v3854 = vld [vmem:[#allocation12 + $0x80] sm:$0xff]
    %v3855 = vld [vmem:[#allocation12 + $0x88] sm:$0xff]
    %v3856 = vld [vmem:[#allocation12 + $0x90] sm:$0xff]
    %v3857 = vld [vmem:[#allocation12 + $0x98] sm:$0xff]
    %v3858 = vld [vmem:[#allocation12 + $0xa0] sm:$0xff]
    %v3859 = vld [vmem:[#allocation12 + $0xa8] sm:$0xff]
    %v3860 = vld [vmem:[#allocation12 + $0xb0] sm:$0xff]
    %v3861 = vld [vmem:[#allocation12 + $0xb8] sm:$0xff]
    %v3862 = vld [vmem:[#allocation12 + $0xc0] sm:$0xff]
    %v3863 = vld [vmem:[#allocation12 + $0xc8] sm:$0xff]
    %v3864 = vld [vmem:[#allocation12 + $0xd0] sm:$0xff]
    %v3865 = vld [vmem:[#allocation12 + $0xd8] sm:$0xff]
    %v3866 = vld [vmem:[#allocation12 + $0xe0] sm:$0xff]
    %v3867 = vld [vmem:[#allocation12 + $0xe8] sm:$0xff]
    %v3868 = vld [vmem:[#allocation12 + $0xf0] sm:$0xff]
    %v3869 = vld [vmem:[#allocation12 + $0xf8] sm:$0xff]
    %v3870 = vld [vmem:[#allocation12 + $0x100] sm:$0xff]
    %v3871 = vld [vmem:[#allocation12 + $0x108] sm:$0xff]
    %v3872 = vld [vmem:[#allocation12 + $0x110] sm:$0xff]
    %v3873 = vld [vmem:[#allocation12 + $0x118] sm:$0xff]
    %v3874 = vld [vmem:[#allocation12 + $0x120] sm:$0xff]
    %v3875 = vld [vmem:[#allocation12 + $0x128] sm:$0xff]
    %v3876 = vld [vmem:[#allocation12 + $0x130] sm:$0xff]
    %v3877 = vld [vmem:[#allocation12 + $0x138] sm:$0xff]
    %v3878 = vld [vmem:[#allocation12 + $0x140] sm:$0xff]
    %v3879 = vld [vmem:[#allocation12 + $0x148] sm:$0xff]
    %v3880 = vld [vmem:[#allocation12 + $0x150] sm:$0xff]
    %v3881 = vld [vmem:[#allocation12 + $0x158] sm:$0xff]
    %v3882 = vld [vmem:[#allocation12 + $0x160] sm:$0xff]
    %v3883 = vld [vmem:[#allocation12 + $0x168] sm:$0xff]
    %v3884 = vld [vmem:[#allocation12 + $0x170] sm:$0xff]
    %v3885 = vld [vmem:[#allocation12 + $0x178] sm:$0xff]
    %v3886 = vld [vmem:[#allocation12 + $0x180] sm:$0xff]
    %v3887 = vld [vmem:[#allocation12 + $0x188] sm:$0xff]
    %v3888 = vld [vmem:[#allocation12 + $0x190] sm:$0xff]
    %v3889 = vld [vmem:[#allocation12 + $0x198] sm:$0xff]
    %v3890 = vld [vmem:[#allocation12 + $0x1a0] sm:$0xff]
    %v3891 = vld [vmem:[#allocation12 + $0x1a8] sm:$0xff]
    %v3892 = vld [vmem:[#allocation12 + $0x1b0] sm:$0xff]
    %v3893 = vld [vmem:[#allocation12 + $0x1b8] sm:$0xff]
    %v3894 = vld [vmem:[#allocation12 + $0x1c0] sm:$0xff]
    %v3895 = vld [vmem:[#allocation12 + $0x1c8] sm:$0xff]
    %v3896 = vld [vmem:[#allocation12 + $0x1d0] sm:$0xff]
    %v3897 = vld [vmem:[#allocation12 + $0x1d8] sm:$0xff]
    %v3898 = vld [vmem:[#allocation12 + $0x1e0] sm:$0xff]
    %v3899 = vld [vmem:[#allocation12 + $0x1e8] sm:$0xff]
    %v3900 = vld [vmem:[#allocation12 + $0x1f0] sm:$0xff]
    %v3901 = vld [vmem:[#allocation12 + $0x1f8] sm:$0xff]
    %v3902 = vld [vmem:[#allocation12 + $0x200] sm:$0xff]
    %v3903 = vld [vmem:[#allocation12 + $0x208] sm:$0xff]
    %v3904 = vld [vmem:[#allocation12 + $0x210] sm:$0xff]
    %v3905 = vld [vmem:[#allocation12 + $0x218] sm:$0xff]
    %v3906 = vld [vmem:[#allocation12 + $0x220] sm:$0xff]
    %v3907 = vld [vmem:[#allocation12 + $0x228] sm:$0xff]
    %v3908 = vld [vmem:[#allocation12 + $0x230] sm:$0xff]
    %v3909 = vld [vmem:[#allocation12 + $0x238] sm:$0xff]
    %v3910 = vld [vmem:[#allocation12 + $0x240] sm:$0xff]
    %v3911 = vld [vmem:[#allocation12 + $0x248] sm:$0xff]
    %v3912 = vld [vmem:[#allocation12 + $0x250] sm:$0xff]
    %v3913 = vld [vmem:[#allocation12 + $0x258] sm:$0xff]
    %v3914 = vld [vmem:[#allocation12 + $0x260] sm:$0xff]
    %v3915 = vld [vmem:[#allocation12 + $0x268] sm:$0xff]
    %v3916 = vld [vmem:[#allocation12 + $0x270] sm:$0xff]
    %v3917 = vld [vmem:[#allocation12 + $0x278] sm:$0xff]
    %v3918 = vld [vmem:[#allocation12 + $0x280] sm:$0xff]
    %v3919 = vld [vmem:[#allocation12 + $0x288] sm:$0xff]
    %v3920 = vld [vmem:[#allocation12 + $0x290] sm:$0xff]
    %v3921 = vld [vmem:[#allocation12 + $0x298] sm:$0xff]
    %v3922 = vld [vmem:[#allocation12 + $0x2a0] sm:$0xff]
    %v3923 = vld [vmem:[#allocation12 + $0x2a8] sm:$0xff]
    %v3924 = vld [vmem:[#allocation12 + $0x2b0] sm:$0xff]
    %v3925 = vld [vmem:[#allocation12 + $0x2b8] sm:$0xff]
    %v3926 = vld [vmem:[#allocation12 + $0x2c0] sm:$0xff]
    %v3927 = vld [vmem:[#allocation12 + $0x2c8] sm:$0xff]
    %v3928 = vld [vmem:[#allocation12 + $0x2d0] sm:$0xff]
    %v3929 = vld [vmem:[#allocation12 + $0x2d8] sm:$0xff]
    %v3930 = vld [vmem:[#allocation12 + $0x2e0] sm:$0xff]
    %v3931 = vld [vmem:[#allocation12 + $0x2e8] sm:$0xff]
    %v3932 = vld [vmem:[#allocation12 + $0x2f0] sm:$0xff]
    %v3933 = vld [vmem:[#allocation12 + $0x2f8] sm:$0xff]
    %v3934 = vld [vmem:[#allocation12 + $0x300] sm:$0xff]
    %v3935 = vld [vmem:[#allocation12 + $0x308] sm:$0xff]
    %v3936 = vld [vmem:[#allocation12 + $0x310] sm:$0xff]
    %v3937 = vld [vmem:[#allocation12 + $0x318] sm:$0xff]
    %v3938 = vld [vmem:[#allocation12 + $0x320] sm:$0xff]
    %v3939 = vld [vmem:[#allocation12 + $0x328] sm:$0xff]
    %v3940 = vld [vmem:[#allocation12 + $0x330] sm:$0xff]
    %v3941 = vld [vmem:[#allocation12 + $0x338] sm:$0xff]
    %v3942 = vld [vmem:[#allocation12 + $0x340] sm:$0xff]
    %v3943 = vld [vmem:[#allocation12 + $0x348] sm:$0xff]
    %v3944 = vld [vmem:[#allocation12 + $0x350] sm:$0xff]
    %v3945 = vld [vmem:[#allocation12 + $0x358] sm:$0xff]
    %v3946 = vld [vmem:[#allocation12 + $0x360] sm:$0xff]
    %v3947 = vld [vmem:[#allocation12 + $0x368] sm:$0xff]
    %v3948 = vld [vmem:[#allocation12 + $0x370] sm:$0xff]
    %v3949 = vld [vmem:[#allocation12 + $0x378] sm:$0xff]
    %v3950 = vld [vmem:[#allocation12 + $0x380] sm:$0xff]
    %v3951 = vld [vmem:[#allocation12 + $0x388] sm:$0xff]
    %v3952 = vld [vmem:[#allocation12 + $0x390] sm:$0xff]
    %v3953 = vld [vmem:[#allocation12 + $0x398] sm:$0xff]
    %v3954 = vld [vmem:[#allocation12 + $0x3a0] sm:$0xff]
    %v3955 = vld [vmem:[#allocation12 + $0x3a8] sm:$0xff]
    %v3956 = vld [vmem:[#allocation12 + $0x3b0] sm:$0xff]
    %v3957 = vld [vmem:[#allocation12 + $0x3b8] sm:$0xff]
    %v3958 = vld [vmem:[#allocation12 + $0x3c0] sm:$0xff]
    %v3959 = vld [vmem:[#allocation12 + $0x3c8] sm:$0xff]
    %v3960 = vld [vmem:[#allocation12 + $0x3d0] sm:$0xff]
    %v3961 = vld [vmem:[#allocation12 + $0x3d8] sm:$0xff]
    %v3962 = vld [vmem:[#allocation12 + $0x3e0] sm:$0xff]
    %v3963 = vld [vmem:[#allocation12 + $0x3e8] sm:$0xff]
    %v3964 = vld [vmem:[#allocation12 + $0x3f0] sm:$0xff]
    %v3965 = vld [vmem:[#allocation12 + $0x3f8] sm:$0xff]
    %3966 = vmatprep.subr.mxu0 %v3839
    %3967 = vmatpush1.msra.mxu0 %v3838
    %3968 = vmatprep.subr.mxu0 %v3843
    %3969 = vmatpush1.msra.mxu0 %v3842
    %3970 = vmatprep.subr.mxu0 %v3847
    %3971 = vmatpush1.msra.mxu0 %v3846
    %3972 = vmatprep.subr.mxu0 %v3851
    %3973 = vmatpush1.msra.mxu0 %v3850
    %3974 = vmatprep.subr.mxu0 %v3855
    %3975 = vmatpush1.msra.mxu0 %v3854
    %3976 = vmatprep.subr.mxu0 %v3859
    %3977 = vmatpush1.msra.mxu0 %v3858
    %3978 = vmatprep.subr.mxu0 %v3863
    %3979 = vmatpush1.msra.mxu0 %v3862
    %3980 = vmatprep.subr.mxu0 %v3867
    %3981 = vmatpush1.msra.mxu0 %v3866
    %3982 = vmatprep.subr.mxu0 %v3871
    %3983 = vmatpush1.msra.mxu0 %v3870
    %3984 = vmatprep.subr.mxu0 %v3875
    %3985 = vmatpush1.msra.mxu0 %v3874
    %3986 = vmatprep.subr.mxu0 %v3879
    %3987 = vmatpush1.msra.mxu0 %v3878
    %3988 = vmatprep.subr.mxu0 %v3883
    %3989 = vmatpush1.msra.mxu0 %v3882
    %3990 = vmatprep.subr.mxu0 %v3887
    %3991 = vmatpush1.msra.mxu0 %v3886
    %3992 = vmatprep.subr.mxu0 %v3891
    %3993 = vmatpush1.msra.mxu0 %v3890
    %3994 = vmatprep.subr.mxu0 %v3895
    %3995 = vmatpush1.msra.mxu0 %v3894
    %3996 = vmatprep.subr.mxu0 %v3899
    %3997 = vmatpush1.msra.mxu0 %v3898
    %3998 = vmatprep.subr.mxu0 %v3903
    %3999 = vmatpush1.msra.mxu0 %v3902
    %4000 = vmatprep.subr.mxu0 %v3907
    %4001 = vmatpush1.msra.mxu0 %v3906
    %4002 = vmatprep.subr.mxu0 %v3911
    %4003 = vmatpush1.msra.mxu0 %v3910
    %4004 = vmatprep.subr.mxu0 %v3915
    %4005 = vmatpush1.msra.mxu0 %v3914
    %4006 = vmatprep.subr.mxu0 %v3919
    %4007 = vmatpush1.msra.mxu0 %v3918
    %4008 = vmatprep.subr.mxu0 %v3923
    %4009 = vmatpush1.msra.mxu0 %v3922
    %4010 = vmatprep.subr.mxu0 %v3927
    %4011 = vmatpush1.msra.mxu0 %v3926
    %4012 = vmatprep.subr.mxu0 %v3931
    %4013 = vmatpush1.msra.mxu0 %v3930
    %4014 = vmatprep.subr.mxu0 %v3935
    %4015 = vmatpush1.msra.mxu0 %v3934
    %4016 = vmatprep.subr.mxu0 %v3939
    %4017 = vmatpush1.msra.mxu0 %v3938
    %4018 = vmatprep.subr.mxu0 %v3943
    %4019 = vmatpush1.msra.mxu0 %v3942
    %4020 = vmatprep.subr.mxu0 %v3947
    %4021 = vmatpush1.msra.mxu0 %v3946
    %4022 = vmatprep.subr.mxu0 %v3951
    %4023 = vmatpush1.msra.mxu0 %v3950
    %4024 = vmatprep.subr.mxu0 %v3955
    %4025 = vmatpush1.msra.mxu0 %v3954
    %4026 = vmatprep.subr.mxu0 %v3959
    %4027 = vmatpush1.msra.mxu0 %v3958
    %4028 = vmatprep.subr.mxu0 %v3963
    %4029 = vmatpush1.msra.mxu0 %v3962
    %4030 = vmatprep.mubr.f32.mxu0 %v3334
    %4031 = vmatmul.mubr.f32.gmra.mrb[0].mxu0 %v3547
    %v4032 = vpop.f32.mrb[0].mxu0
    %v4033 = vadd.f32 %v466, %v4032
    %v4034 = vpop.f32.mrb[0].mxu0
    %v4035 = vadd.f32 %v470, %v4034
    %4036 = vdwg.mxu0
    %4037 = vmatprep.subr.mxu0 %v3841
    %4038 = vmatpush1.msra.mxu0 %v3840
    %4039 = vmatprep.subr.mxu0 %v3845
    %4040 = vmatpush1.msra.mxu0 %v3844
    %4041 = vmatprep.subr.mxu0 %v3849
    %4042 = vmatpush1.msra.mxu0 %v3848
    %4043 = vmatprep.subr.mxu0 %v3853
    %4044 = vmatpush1.msra.mxu0 %v3852
    %4045 = vmatprep.subr.mxu0 %v3857
    %4046 = vmatpush1.msra.mxu0 %v3856
    %4047 = vmatprep.subr.mxu0 %v3861
    %4048 = vmatpush1.msra.mxu0 %v3860
    %4049 = vmatprep.subr.mxu0 %v3865
    %4050 = vmatpush1.msra.mxu0 %v3864
    %4051 = vmatprep.subr.mxu0 %v3869
    %4052 = vmatpush1.msra.mxu0 %v3868
    %4053 = vmatprep.subr.mxu0 %v3873
    %4054 = vmatpush1.msra.mxu0 %v3872
    %4055 = vmatprep.subr.mxu0 %v3877
    %4056 = vmatpush1.msra.mxu0 %v3876
    %4057 = vmatprep.subr.mxu0 %v3881
    %4058 = vmatpush1.msra.mxu0 %v3880
    %4059 = vmatprep.subr.mxu0 %v3885
    %4060 = vmatpush1.msra.mxu0 %v3884
    %4061 = vmatprep.subr.mxu0 %v3889
    %4062 = vmatpush1.msra.mxu0 %v3888
    %4063 = vmatprep.subr.mxu0 %v3893
    %4064 = vmatpush1.msra.mxu0 %v3892
    %4065 = vmatprep.subr.mxu0 %v3897
    %4066 = vmatpush1.msra.mxu0 %v3896
    %4067 = vmatprep.subr.mxu0 %v3901
    %4068 = vmatpush1.msra.mxu0 %v3900
    %4069 = vmatprep.subr.mxu0 %v3905
    %4070 = vmatpush1.msra.mxu0 %v3904
    %4071 = vmatprep.subr.mxu0 %v3909
    %4072 = vmatpush1.msra.mxu0 %v3908
    %4073 = vmatprep.subr.mxu0 %v3913
    %4074 = vmatpush1.msra.mxu0 %v3912
    %4075 = vmatprep.subr.mxu0 %v3917
    %4076 = vmatpush1.msra.mxu0 %v3916
    %4077 = vmatprep.subr.mxu0 %v3921
    %4078 = vmatpush1.msra.mxu0 %v3920
    %4079 = vmatprep.subr.mxu0 %v3925
    %4080 = vmatpush1.msra.mxu0 %v3924
    %4081 = vmatprep.subr.mxu0 %v3929
    %4082 = vmatpush1.msra.mxu0 %v3928
    %4083 = vmatprep.subr.mxu0 %v3933
    %4084 = vmatpush1.msra.mxu0 %v3932
    %4085 = vmatprep.subr.mxu0 %v3937
    %4086 = vmatpush1.msra.mxu0 %v3936
    %4087 = vmatprep.subr.mxu0 %v3941
    %4088 = vmatpush1.msra.mxu0 %v3940
    %4089 = vmatprep.subr.mxu0 %v3945
    %4090 = vmatpush1.msra.mxu0 %v3944
    %4091 = vmatprep.subr.mxu0 %v3949
    %4092 = vmatpush1.msra.mxu0 %v3948
    %4093 = vmatprep.subr.mxu0 %v3953
    %4094 = vmatpush1.msra.mxu0 %v3952
    %4095 = vmatprep.subr.mxu0 %v3957
    %4096 = vmatpush1.msra.mxu0 %v3956
    %4097 = vmatprep.subr.mxu0 %v3961
    %4098 = vmatpush1.msra.mxu0 %v3960
    %4099 = vmatprep.subr.mxu0 %v3965
    %4100 = vmatpush1.msra.mxu0 %v3964
    %4101 = vmatprep.mubr.f32.mxu0 %v3334
    %4102 = vmatmul.mubr.f32.gmra.mrb[0].mxu0 %v3547
    %v4103 = vpop.f32.mrb[0].mxu0
    %v4104 = vadd.f32 %v474, %v4103
    %v4105 = vpop.f32.mrb[0].mxu0
    %v4106 = vadd.f32 %v478, %v4105
    %4107 = vdwg.mxu0
    %v4108 = vxor.u32 %v4033, 2147483648
    %v4109 = vmul.f32 %v4108, 1.442695
    %v4110 = vpow.pop %v4109
    %v4111 = vadd.f32 %v4110, 1.0
    %v4112 = vrcp.pop %v4111
    %v4113 = vmul.f32 1.0, %v4112
    %v4114 = vxor.u32 %v4035, 2147483648
    %v4115 = vmul.f32 %v4114, 1.442695
    %v4116 = vpow.pop %v4115
    %v4117 = vadd.f32 %v4116, 1.0
    %v4118 = vrcp.pop %v4117
    %v4119 = vmul.f32 1.0, %v4118
    %v4120 = vmul.f32 %v4113, %v4106
    %v4121 = vadd.f32 %v4104, %v4120
    %v4122 = vtanh.pop %v4121
    %v4123 = vsub.f32 1.0, %v4119
    %v4124 = vmul.f32 %v4123, %v4122
    %v4125 = vmul.f32 %v4119, %v3334
    %v4126 = vadd.f32 %v4124, %v4125
    %v4127 = vld [vmem:[#allocation2 + $0x78] sm:$0xff]
    %v4128 = vld [vmem:[#allocation2 + $0x80] sm:$0xff]
    %v4129 = vld [vmem:[#allocation2 + $0x88] sm:$0xff]
    %v4130 = vld [vmem:[#allocation9] sm:$0xff]
    %v4131 = vld [vmem:[#allocation9 + $0x8] sm:$0xff]
    %v4132 = vld [vmem:[#allocation9 + $0x10] sm:$0xff]
    %v4133 = vld [vmem:[#allocation9 + $0x18] sm:$0xff]
    %v4134 = vld [vmem:[#allocation9 + $0x20] sm:$0xff]
    %v4135 = vld [vmem:[#allocation9 + $0x28] sm:$0xff]
    %v4136 = vld [vmem:[#allocation9 + $0x30] sm:$0xff]
    %v4137 = vld [vmem:[#allocation9 + $0x38] sm:$0xff]
    %v4138 = vld [vmem:[#allocation9 + $0x40] sm:$0xff]
    %v4139 = vld [vmem:[#allocation9 + $0x48] sm:$0xff]
    %v4140 = vld [vmem:[#allocation9 + $0x50] sm:$0xff]
    %v4141 = vld [vmem:[#allocation9 + $0x58] sm:$0xff]
    %v4142 = vld [vmem:[#allocation9 + $0x60] sm:$0xff]
    %v4143 = vld [vmem:[#allocation9 + $0x68] sm:$0xff]
    %v4144 = vld [vmem:[#allocation9 + $0x70] sm:$0xff]
    %v4145 = vld [vmem:[#allocation9 + $0x78] sm:$0xff]
    %v4146 = vld [vmem:[#allocation9 + $0x80] sm:$0xff]
    %v4147 = vld [vmem:[#allocation9 + $0x88] sm:$0xff]
    %v4148 = vld [vmem:[#allocation9 + $0x90] sm:$0xff]
    %v4149 = vld [vmem:[#allocation9 + $0x98] sm:$0xff]
    %v4150 = vld [vmem:[#allocation9 + $0xa0] sm:$0xff]
    %v4151 = vld [vmem:[#allocation9 + $0xa8] sm:$0xff]
    %v4152 = vld [vmem:[#allocation9 + $0xb0] sm:$0xff]
    %v4153 = vld [vmem:[#allocation9 + $0xb8] sm:$0xff]
    %v4154 = vld [vmem:[#allocation9 + $0xc0] sm:$0xff]
    %v4155 = vld [vmem:[#allocation9 + $0xc8] sm:$0xff]
    %v4156 = vld [vmem:[#allocation9 + $0xd0] sm:$0xff]
    %v4157 = vld [vmem:[#allocation9 + $0xd8] sm:$0xff]
    %v4158 = vld [vmem:[#allocation9 + $0xe0] sm:$0xff]
    %v4159 = vld [vmem:[#allocation9 + $0xe8] sm:$0xff]
    %v4160 = vld [vmem:[#allocation9 + $0xf0] sm:$0xff]
    %v4161 = vld [vmem:[#allocation9 + $0xf8] sm:$0xff]
    %v4162 = vld [vmem:[#allocation9 + $0x100] sm:$0xff]
    %v4163 = vld [vmem:[#allocation9 + $0x108] sm:$0xff]
    %v4164 = vld [vmem:[#allocation9 + $0x110] sm:$0xff]
    %v4165 = vld [vmem:[#allocation9 + $0x118] sm:$0xff]
    %v4166 = vld [vmem:[#allocation9 + $0x120] sm:$0xff]
    %v4167 = vld [vmem:[#allocation9 + $0x128] sm:$0xff]
    %v4168 = vld [vmem:[#allocation9 + $0x130] sm:$0xff]
    %v4169 = vld [vmem:[#allocation9 + $0x138] sm:$0xff]
    %v4170 = vld [vmem:[#allocation9 + $0x140] sm:$0xff]
    %v4171 = vld [vmem:[#allocation9 + $0x148] sm:$0xff]
    %v4172 = vld [vmem:[#allocation9 + $0x150] sm:$0xff]
    %v4173 = vld [vmem:[#allocation9 + $0x158] sm:$0xff]
    %v4174 = vld [vmem:[#allocation9 + $0x160] sm:$0xff]
    %v4175 = vld [vmem:[#allocation9 + $0x168] sm:$0xff]
    %v4176 = vld [vmem:[#allocation9 + $0x170] sm:$0xff]
    %v4177 = vld [vmem:[#allocation9 + $0x178] sm:$0xff]
    %4178 = vmatprep.subr.mxu0 %v4131
    %4179 = vmatpush1.msra.mxu0 %v4130
    %4180 = vmatprep.subr.mxu0 %v4134
    %4181 = vmatpush1.msra.mxu0 %v4133
    %4182 = vmatprep.subr.mxu0 %v4137
    %4183 = vmatpush1.msra.mxu0 %v4136
    %4184 = vmatprep.subr.mxu0 %v4140
    %4185 = vmatpush1.msra.mxu0 %v4139
    %4186 = vmatprep.subr.mxu0 %v4143
    %4187 = vmatpush1.msra.mxu0 %v4142
    %4188 = vmatprep.subr.mxu0 %v4146
    %4189 = vmatpush1.msra.mxu0 %v4145
    %4190 = vmatprep.subr.mxu0 %v4149
    %4191 = vmatpush1.msra.mxu0 %v4148
    %4192 = vmatprep.subr.mxu0 %v4152
    %4193 = vmatpush1.msra.mxu0 %v4151
    %4194 = vmatprep.subr.mxu0 %v4155
    %4195 = vmatpush1.msra.mxu0 %v4154
    %4196 = vmatprep.subr.mxu0 %v4158
    %4197 = vmatpush1.msra.mxu0 %v4157
    %4198 = vmatprep.subr.mxu0 %v4161
    %4199 = vmatpush1.msra.mxu0 %v4160
    %4200 = vmatprep.subr.mxu0 %v4164
    %4201 = vmatpush1.msra.mxu0 %v4163
    %4202 = vmatprep.subr.mxu0 %v4167
    %4203 = vmatpush1.msra.mxu0 %v4166
    %4204 = vmatprep.subr.mxu0 %v4170
    %4205 = vmatpush1.msra.mxu0 %v4169
    %4206 = vmatprep.subr.mxu0 %v4173
    %4207 = vmatpush1.msra.mxu0 %v4172
    %4208 = vmatprep.subr.mxu0 %v4176
    %4209 = vmatpush1.msra.mxu0 %v4175
    %4210 = vmatprep.subr.mxu0 0.0
    %4211 = vmatpush1.msra.mxu0 0.0
    %4212 = vmatprep.subr.mxu0 0.0
    %4213 = vmatpush1.msra.mxu0 0.0
    %4214 = vmatprep.subr.mxu0 0.0
    %4215 = vmatpush1.msra.mxu0 0.0
    %4216 = vmatprep.subr.mxu0 0.0
    %4217 = vmatpush1.msra.mxu0 0.0
    %4218 = vmatprep.subr.mxu0 0.0
    %4219 = vmatpush1.msra.mxu0 0.0
    %4220 = vmatprep.subr.mxu0 0.0
    %4221 = vmatpush1.msra.mxu0 0.0
    %4222 = vmatprep.subr.mxu0 0.0
    %4223 = vmatpush1.msra.mxu0 0.0
    %4224 = vmatprep.subr.mxu0 0.0
    %4225 = vmatpush1.msra.mxu0 0.0
    %4226 = vmatprep.subr.mxu0 0.0
    %4227 = vmatpush1.msra.mxu0 0.0
    %4228 = vmatprep.subr.mxu0 0.0
    %4229 = vmatpush1.msra.mxu0 0.0
    %4230 = vmatprep.subr.mxu0 0.0
    %4231 = vmatpush1.msra.mxu0 0.0
    %4232 = vmatprep.subr.mxu0 0.0
    %4233 = vmatpush1.msra.mxu0 0.0
    %4234 = vmatprep.subr.mxu0 0.0
    %4235 = vmatpush1.msra.mxu0 0.0
    %4236 = vmatprep.subr.mxu0 0.0
    %4237 = vmatpush1.msra.mxu0 0.0
    %4238 = vmatprep.subr.mxu0 0.0
    %4239 = vmatpush1.msra.mxu0 0.0
    %4240 = vmatprep.subr.mxu0 0.0
    %4241 = vmatpush1.msra.mxu0 0.0
    %4242 = vmatprep.mubr.f32.mxu0 0.0
    %4243 = vmatmul.mubr.f32.gmra.mrb[0].mxu0 %v3547
    %v4244 = vpop.f32.mrb[0].mxu0
    %v4245 = vadd.f32 %v449, %v4244
    %v4246 = vpop.f32.mrb[0].mxu0
    %v4247 = vadd.f32 %v453, %v4246
    %4248 = vdwg.mxu0
    %4249 = vmatprep.subr.mxu0 0.0
    %4250 = vmatpush1.msra.mxu0 %v4132
    %4251 = vmatprep.subr.mxu0 0.0
    %4252 = vmatpush1.msra.mxu0 %v4135
    %4253 = vmatprep.subr.mxu0 0.0
    %4254 = vmatpush1.msra.mxu0 %v4138
    %4255 = vmatprep.subr.mxu0 0.0
    %4256 = vmatpush1.msra.mxu0 %v4141
    %4257 = vmatprep.subr.mxu0 0.0
    %4258 = vmatpush1.msra.mxu0 %v4144
    %4259 = vmatprep.subr.mxu0 0.0
    %4260 = vmatpush1.msra.mxu0 %v4147
    %4261 = vmatprep.subr.mxu0 0.0
    %4262 = vmatpush1.msra.mxu0 %v4150
    %4263 = vmatprep.subr.mxu0 0.0
    %4264 = vmatpush1.msra.mxu0 %v4153
    %4265 = vmatprep.subr.mxu0 0.0
    %4266 = vmatpush1.msra.mxu0 %v4156
    %4267 = vmatprep.subr.mxu0 0.0
    %4268 = vmatpush1.msra.mxu0 %v4159
    %4269 = vmatprep.subr.mxu0 0.0
    %4270 = vmatpush1.msra.mxu0 %v4162
    %4271 = vmatprep.subr.mxu0 0.0
    %4272 = vmatpush1.msra.mxu0 %v4165
    %4273 = vmatprep.subr.mxu0 0.0
    %4274 = vmatpush1.msra.mxu0 %v4168
    %4275 = vmatprep.subr.mxu0 0.0
    %4276 = vmatpush1.msra.mxu0 %v4171
    %4277 = vmatprep.subr.mxu0 0.0
    %4278 = vmatpush1.msra.mxu0 %v4174
    %4279 = vmatprep.subr.mxu0 0.0
    %4280 = vmatpush1.msra.mxu0 %v4177
    %4281 = vmatprep.subr.mxu0 0.0
    %4282 = vmatpush1.msra.mxu0 0.0
    %4283 = vmatprep.subr.mxu0 0.0
    %4284 = vmatpush1.msra.mxu0 0.0
    %4285 = vmatprep.subr.mxu0 0.0
    %4286 = vmatpush1.msra.mxu0 0.0
    %4287 = vmatprep.subr.mxu0 0.0
    %4288 = vmatpush1.msra.mxu0 0.0
    %4289 = vmatprep.subr.mxu0 0.0
    %4290 = vmatpush1.msra.mxu0 0.0
    %4291 = vmatprep.subr.mxu0 0.0
    %4292 = vmatpush1.msra.mxu0 0.0
    %4293 = vmatprep.subr.mxu0 0.0
    %4294 = vmatpush1.msra.mxu0 0.0
    %4295 = vmatprep.subr.mxu0 0.0
    %4296 = vmatpush1.msra.mxu0 0.0
    %4297 = vmatprep.subr.mxu0 0.0
    %4298 = vmatpush1.msra.mxu0 0.0
    %4299 = vmatprep.subr.mxu0 0.0
    %4300 = vmatpush1.msra.mxu0 0.0
    %4301 = vmatprep.subr.mxu0 0.0
    %4302 = vmatpush1.msra.mxu0 0.0
    %4303 = vmatprep.subr.mxu0 0.0
    %4304 = vmatpush1.msra.mxu0 0.0
    %4305 = vmatprep.subr.mxu0 0.0
    %4306 = vmatpush1.msra.mxu0 0.0
    %4307 = vmatprep.subr.mxu0 0.0
    %4308 = vmatpush1.msra.mxu0 0.0
    %4309 = vmatprep.subr.mxu0 0.0
    %4310 = vmatpush1.msra.mxu0 0.0
    %4311 = vmatprep.subr.mxu0 0.0
    %4312 = vmatpush1.msra.mxu0 0.0
    %4313 = vmatprep.mubr.f32.mxu0 0.0
    %4314 = vmatmul.mubr.f32.gmra.mrb[0].mxu0 %v3547
    %v4315 = vpop.f32.mrb[0].mxu0
    %v4316 = vadd.f32 %v457, %v4315
    %v4317 = vpop.f32.mrb[0].mxu0
    %4318 = vdwg.mxu0
    %v4319 = vadd.f32 %v4127, %v4245
    %v4320 = vxor.u32 %v4319, 2147483648
    %v4321 = vmul.f32 %v4320, 1.442695
    %v4322 = vpow.pop %v4321
    %v4323 = vadd.f32 %v4322, 1.0
    %v4324 = vrcp.pop %v4323
    %v4325 = vmul.f32 1.0, %v4324
    %v4326 = vadd.f32 %v4128, %v4247
    %v4327 = vxor.u32 %v4326, 2147483648
    %v4328 = vmul.f32 %v4327, 1.442695
    %v4329 = vpow.pop %v4328
    %v4330 = vadd.f32 %v4329, 1.0
    %v4331 = vrcp.pop %v4330
    %v4332 = vmul.f32 1.0, %v4331
    %v4333 = vmul.f32 %v4325, %v4316
    %v4334 = vadd.f32 %v4129, %v4333
    %v4335 = vtanh.pop %v4334
    %v4336 = vsub.f32 1.0, %v4332
    %v4337 = vmul.f32 %v4336, %v4335
    %v4338 = vmul.f32 %v4332, %v3547
    %v4339 = vadd.f32 %v4337, %v4338
    %v4340 = vld [vmem:[#allocation15] sm:$0xff]
    %v4341 = vld [vmem:[#allocation15 + $0x8] sm:$0xff]
    %v4342 = vld [vmem:[#allocation15 + $0x10] sm:$0xff]
    %v4343 = vld [vmem:[#allocation15 + $0x18] sm:$0xff]
    %v4344 = vld [vmem:[#allocation15 + $0x20] sm:$0xff]
    %v4345 = vld [vmem:[#allocation15 + $0x28] sm:$0xff]
    %v4346 = vld [vmem:[#allocation15 + $0x30] sm:$0xff]
    %v4347 = vld [vmem:[#allocation15 + $0x38] sm:$0xff]
    %v4348 = vld [vmem:[#allocation15 + $0x40] sm:$0xff]
    %v4349 = vld [vmem:[#allocation15 + $0x48] sm:$0xff]
    %v4350 = vld [vmem:[#allocation15 + $0x50] sm:$0xff]
    %v4351 = vld [vmem:[#allocation15 + $0x58] sm:$0xff]
    %v4352 = vld [vmem:[#allocation15 + $0x60] sm:$0xff]
    %v4353 = vld [vmem:[#allocation15 + $0x68] sm:$0xff]
    %v4354 = vld [vmem:[#allocation15 + $0x70] sm:$0xff]
    %v4355 = vld [vmem:[#allocation15 + $0x78] sm:$0xff]
    %v4356 = vld [vmem:[#allocation15 + $0x80] sm:$0xff]
    %v4357 = vld [vmem:[#allocation15 + $0x88] sm:$0xff]
    %v4358 = vld [vmem:[#allocation15 + $0x90] sm:$0xff]
    %v4359 = vld [vmem:[#allocation15 + $0x98] sm:$0xff]
    %v4360 = vld [vmem:[#allocation15 + $0xa0] sm:$0xff]
    %v4361 = vld [vmem:[#allocation15 + $0xa8] sm:$0xff]
    %v4362 = vld [vmem:[#allocation15 + $0xb0] sm:$0xff]
    %v4363 = vld [vmem:[#allocation15 + $0xb8] sm:$0xff]
    %v4364 = vld [vmem:[#allocation15 + $0xc0] sm:$0xff]
    %v4365 = vld [vmem:[#allocation15 + $0xc8] sm:$0xff]
    %v4366 = vld [vmem:[#allocation15 + $0xd0] sm:$0xff]
    %v4367 = vld [vmem:[#allocation15 + $0xd8] sm:$0xff]
    %v4368 = vld [vmem:[#allocation15 + $0xe0] sm:$0xff]
    %v4369 = vld [vmem:[#allocation15 + $0xe8] sm:$0xff]
    %v4370 = vld [vmem:[#allocation15 + $0xf0] sm:$0xff]
    %v4371 = vld [vmem:[#allocation15 + $0xf8] sm:$0xff]
    %v4372 = vld [vmem:[#allocation15 + $0x100] sm:$0xff]
    %v4373 = vld [vmem:[#allocation15 + $0x108] sm:$0xff]
    %v4374 = vld [vmem:[#allocation15 + $0x110] sm:$0xff]
    %v4375 = vld [vmem:[#allocation15 + $0x118] sm:$0xff]
    %v4376 = vld [vmem:[#allocation15 + $0x120] sm:$0xff]
    %v4377 = vld [vmem:[#allocation15 + $0x128] sm:$0xff]
    %v4378 = vld [vmem:[#allocation15 + $0x130] sm:$0xff]
    %v4379 = vld [vmem:[#allocation15 + $0x138] sm:$0xff]
    %v4380 = vld [vmem:[#allocation15 + $0x140] sm:$0xff]
    %v4381 = vld [vmem:[#allocation15 + $0x148] sm:$0xff]
    %v4382 = vld [vmem:[#allocation15 + $0x150] sm:$0xff]
    %v4383 = vld [vmem:[#allocation15 + $0x158] sm:$0xff]
    %v4384 = vld [vmem:[#allocation15 + $0x160] sm:$0xff]
    %v4385 = vld [vmem:[#allocation15 + $0x168] sm:$0xff]
    %v4386 = vld [vmem:[#allocation15 + $0x170] sm:$0xff]
    %v4387 = vld [vmem:[#allocation15 + $0x178] sm:$0xff]
    %v4388 = vld [vmem:[#allocation15 + $0x180] sm:$0xff]
    %v4389 = vld [vmem:[#allocation15 + $0x188] sm:$0xff]
    %v4390 = vld [vmem:[#allocation15 + $0x190] sm:$0xff]
    %v4391 = vld [vmem:[#allocation15 + $0x198] sm:$0xff]
    %v4392 = vld [vmem:[#allocation15 + $0x1a0] sm:$0xff]
    %v4393 = vld [vmem:[#allocation15 + $0x1a8] sm:$0xff]
    %v4394 = vld [vmem:[#allocation15 + $0x1b0] sm:$0xff]
    %v4395 = vld [vmem:[#allocation15 + $0x1b8] sm:$0xff]
    %v4396 = vld [vmem:[#allocation15 + $0x1c0] sm:$0xff]
    %v4397 = vld [vmem:[#allocation15 + $0x1c8] sm:$0xff]
    %v4398 = vld [vmem:[#allocation15 + $0x1d0] sm:$0xff]
    %v4399 = vld [vmem:[#allocation15 + $0x1d8] sm:$0xff]
    %v4400 = vld [vmem:[#allocation15 + $0x1e0] sm:$0xff]
    %v4401 = vld [vmem:[#allocation15 + $0x1e8] sm:$0xff]
    %v4402 = vld [vmem:[#allocation15 + $0x1f0] sm:$0xff]
    %v4403 = vld [vmem:[#allocation15 + $0x1f8] sm:$0xff]
    %v4404 = vld [vmem:[#allocation15 + $0x200] sm:$0xff]
    %v4405 = vld [vmem:[#allocation15 + $0x208] sm:$0xff]
    %v4406 = vld [vmem:[#allocation15 + $0x210] sm:$0xff]
    %v4407 = vld [vmem:[#allocation15 + $0x218] sm:$0xff]
    %v4408 = vld [vmem:[#allocation15 + $0x220] sm:$0xff]
    %v4409 = vld [vmem:[#allocation15 + $0x228] sm:$0xff]
    %v4410 = vld [vmem:[#allocation15 + $0x230] sm:$0xff]
    %v4411 = vld [vmem:[#allocation15 + $0x238] sm:$0xff]
    %v4412 = vld [vmem:[#allocation15 + $0x240] sm:$0xff]
    %v4413 = vld [vmem:[#allocation15 + $0x248] sm:$0xff]
    %v4414 = vld [vmem:[#allocation15 + $0x250] sm:$0xff]
    %v4415 = vld [vmem:[#allocation15 + $0x258] sm:$0xff]
    %v4416 = vld [vmem:[#allocation15 + $0x260] sm:$0xff]
    %v4417 = vld [vmem:[#allocation15 + $0x268] sm:$0xff]
    %v4418 = vld [vmem:[#allocation15 + $0x270] sm:$0xff]
    %v4419 = vld [vmem:[#allocation15 + $0x278] sm:$0xff]
    %v4420 = vld [vmem:[#allocation15 + $0x280] sm:$0xff]
    %v4421 = vld [vmem:[#allocation15 + $0x288] sm:$0xff]
    %v4422 = vld [vmem:[#allocation15 + $0x290] sm:$0xff]
    %v4423 = vld [vmem:[#allocation15 + $0x298] sm:$0xff]
    %v4424 = vld [vmem:[#allocation15 + $0x2a0] sm:$0xff]
    %v4425 = vld [vmem:[#allocation15 + $0x2a8] sm:$0xff]
    %v4426 = vld [vmem:[#allocation15 + $0x2b0] sm:$0xff]
    %v4427 = vld [vmem:[#allocation15 + $0x2b8] sm:$0xff]
    %v4428 = vld [vmem:[#allocation15 + $0x2c0] sm:$0xff]
    %v4429 = vld [vmem:[#allocation15 + $0x2c8] sm:$0xff]
    %v4430 = vld [vmem:[#allocation15 + $0x2d0] sm:$0xff]
    %v4431 = vld [vmem:[#allocation15 + $0x2d8] sm:$0xff]
    %v4432 = vld [vmem:[#allocation15 + $0x2e0] sm:$0xff]
    %v4433 = vld [vmem:[#allocation15 + $0x2e8] sm:$0xff]
    %v4434 = vld [vmem:[#allocation15 + $0x2f0] sm:$0xff]
    %v4435 = vld [vmem:[#allocation15 + $0x2f8] sm:$0xff]
    %v4436 = vld [vmem:[#allocation15 + $0x300] sm:$0xff]
    %v4437 = vld [vmem:[#allocation15 + $0x308] sm:$0xff]
    %v4438 = vld [vmem:[#allocation15 + $0x310] sm:$0xff]
    %v4439 = vld [vmem:[#allocation15 + $0x318] sm:$0xff]
    %v4440 = vld [vmem:[#allocation15 + $0x320] sm:$0xff]
    %v4441 = vld [vmem:[#allocation15 + $0x328] sm:$0xff]
    %v4442 = vld [vmem:[#allocation15 + $0x330] sm:$0xff]
    %v4443 = vld [vmem:[#allocation15 + $0x338] sm:$0xff]
    %v4444 = vld [vmem:[#allocation15 + $0x340] sm:$0xff]
    %v4445 = vld [vmem:[#allocation15 + $0x348] sm:$0xff]
    %v4446 = vld [vmem:[#allocation15 + $0x350] sm:$0xff]
    %v4447 = vld [vmem:[#allocation15 + $0x358] sm:$0xff]
    %v4448 = vld [vmem:[#allocation15 + $0x360] sm:$0xff]
    %v4449 = vld [vmem:[#allocation15 + $0x368] sm:$0xff]
    %v4450 = vld [vmem:[#allocation15 + $0x370] sm:$0xff]
    %v4451 = vld [vmem:[#allocation15 + $0x378] sm:$0xff]
    %v4452 = vld [vmem:[#allocation15 + $0x380] sm:$0xff]
    %v4453 = vld [vmem:[#allocation15 + $0x388] sm:$0xff]
    %v4454 = vld [vmem:[#allocation15 + $0x390] sm:$0xff]
    %v4455 = vld [vmem:[#allocation15 + $0x398] sm:$0xff]
    %v4456 = vld [vmem:[#allocation15 + $0x3a0] sm:$0xff]
    %v4457 = vld [vmem:[#allocation15 + $0x3a8] sm:$0xff]
    %v4458 = vld [vmem:[#allocation15 + $0x3b0] sm:$0xff]
    %v4459 = vld [vmem:[#allocation15 + $0x3b8] sm:$0xff]
    %v4460 = vld [vmem:[#allocation15 + $0x3c0] sm:$0xff]
    %v4461 = vld [vmem:[#allocation15 + $0x3c8] sm:$0xff]
    %v4462 = vld [vmem:[#allocation15 + $0x3d0] sm:$0xff]
    %v4463 = vld [vmem:[#allocation15 + $0x3d8] sm:$0xff]
    %v4464 = vld [vmem:[#allocation15 + $0x3e0] sm:$0xff]
    %v4465 = vld [vmem:[#allocation15 + $0x3e8] sm:$0xff]
    %v4466 = vld [vmem:[#allocation15 + $0x3f0] sm:$0xff]
    %v4467 = vld [vmem:[#allocation15 + $0x3f8] sm:$0xff]
    %4468 = vmatprep.subr.mxu0 %v4341
    %4469 = vmatpush1.msra.mxu0 %v4340
    %4470 = vmatprep.subr.mxu0 %v4345
    %4471 = vmatpush1.msra.mxu0 %v4344
    %4472 = vmatprep.subr.mxu0 %v4349
    %4473 = vmatpush1.msra.mxu0 %v4348
    %4474 = vmatprep.subr.mxu0 %v4353
    %4475 = vmatpush1.msra.mxu0 %v4352
    %4476 = vmatprep.subr.mxu0 %v4357
    %4477 = vmatpush1.msra.mxu0 %v4356
    %4478 = vmatprep.subr.mxu0 %v4361
    %4479 = vmatpush1.msra.mxu0 %v4360
    %4480 = vmatprep.subr.mxu0 %v4365
    %4481 = vmatpush1.msra.mxu0 %v4364
    %4482 = vmatprep.subr.mxu0 %v4369
    %4483 = vmatpush1.msra.mxu0 %v4368
    %4484 = vmatprep.subr.mxu0 %v4373
    %4485 = vmatpush1.msra.mxu0 %v4372
    %4486 = vmatprep.subr.mxu0 %v4377
    %4487 = vmatpush1.msra.mxu0 %v4376
    %4488 = vmatprep.subr.mxu0 %v4381
    %4489 = vmatpush1.msra.mxu0 %v4380
    %4490 = vmatprep.subr.mxu0 %v4385
    %4491 = vmatpush1.msra.mxu0 %v4384
    %4492 = vmatprep.subr.mxu0 %v4389
    %4493 = vmatpush1.msra.mxu0 %v4388
    %4494 = vmatprep.subr.mxu0 %v4393
    %4495 = vmatpush1.msra.mxu0 %v4392
    %4496 = vmatprep.subr.mxu0 %v4397
    %4497 = vmatpush1.msra.mxu0 %v4396
    %4498 = vmatprep.subr.mxu0 %v4401
    %4499 = vmatpush1.msra.mxu0 %v4400
    %4500 = vmatprep.subr.mxu0 %v4405
    %4501 = vmatpush1.msra.mxu0 %v4404
    %4502 = vmatprep.subr.mxu0 %v4409
    %4503 = vmatpush1.msra.mxu0 %v4408
    %4504 = vmatprep.subr.mxu0 %v4413
    %4505 = vmatpush1.msra.mxu0 %v4412
    %4506 = vmatprep.subr.mxu0 %v4417
    %4507 = vmatpush1.msra.mxu0 %v4416
    %4508 = vmatprep.subr.mxu0 %v4421
    %4509 = vmatpush1.msra.mxu0 %v4420
    %4510 = vmatprep.subr.mxu0 %v4425
    %4511 = vmatpush1.msra.mxu0 %v4424
    %4512 = vmatprep.subr.mxu0 %v4429
    %4513 = vmatpush1.msra.mxu0 %v4428
    %4514 = vmatprep.subr.mxu0 %v4433
    %4515 = vmatpush1.msra.mxu0 %v4432
    %4516 = vmatprep.subr.mxu0 %v4437
    %4517 = vmatpush1.msra.mxu0 %v4436
    %4518 = vmatprep.subr.mxu0 %v4441
    %4519 = vmatpush1.msra.mxu0 %v4440
    %4520 = vmatprep.subr.mxu0 %v4445
    %4521 = vmatpush1.msra.mxu0 %v4444
    %4522 = vmatprep.subr.mxu0 %v4449
    %4523 = vmatpush1.msra.mxu0 %v4448
    %4524 = vmatprep.subr.mxu0 %v4453
    %4525 = vmatpush1.msra.mxu0 %v4452
    %4526 = vmatprep.subr.mxu0 %v4457
    %4527 = vmatpush1.msra.mxu0 %v4456
    %4528 = vmatprep.subr.mxu0 %v4461
    %4529 = vmatpush1.msra.mxu0 %v4460
    %4530 = vmatprep.subr.mxu0 %v4465
    %4531 = vmatpush1.msra.mxu0 %v4464
    %4532 = vmatprep.mubr.f32.mxu0 %v3836
    %4533 = vmatmul.mubr.f32.gmra.mrb[0].mxu0 %v4126
    %v4534 = vpop.f32.mrb[0].mxu0
    %v4535 = vadd.f32 %v488, %v4534
    %v4536 = vpop.f32.mrb[0].mxu0
    %v4537 = vadd.f32 %v492, %v4536
    %4538 = vdwg.mxu0
    %4539 = vmatprep.subr.mxu0 %v4343
    %4540 = vmatpush1.msra.mxu0 %v4342
    %4541 = vmatprep.subr.mxu0 %v4347
    %4542 = vmatpush1.msra.mxu0 %v4346
    %4543 = vmatprep.subr.mxu0 %v4351
    %4544 = vmatpush1.msra.mxu0 %v4350
    %4545 = vmatprep.subr.mxu0 %v4355
    %4546 = vmatpush1.msra.mxu0 %v4354
    %4547 = vmatprep.subr.mxu0 %v4359
    %4548 = vmatpush1.msra.mxu0 %v4358
    %4549 = vmatprep.subr.mxu0 %v4363
    %4550 = vmatpush1.msra.mxu0 %v4362
    %4551 = vmatprep.subr.mxu0 %v4367
    %4552 = vmatpush1.msra.mxu0 %v4366
    %4553 = vmatprep.subr.mxu0 %v4371
    %4554 = vmatpush1.msra.mxu0 %v4370
    %4555 = vmatprep.subr.mxu0 %v4375
    %4556 = vmatpush1.msra.mxu0 %v4374
    %4557 = vmatprep.subr.mxu0 %v4379
    %4558 = vmatpush1.msra.mxu0 %v4378
    %4559 = vmatprep.subr.mxu0 %v4383
    %4560 = vmatpush1.msra.mxu0 %v4382
    %4561 = vmatprep.subr.mxu0 %v4387
    %4562 = vmatpush1.msra.mxu0 %v4386
    %4563 = vmatprep.subr.mxu0 %v4391
    %4564 = vmatpush1.msra.mxu0 %v4390
    %4565 = vmatprep.subr.mxu0 %v4395
    %4566 = vmatpush1.msra.mxu0 %v4394
    %4567 = vmatprep.subr.mxu0 %v4399
    %4568 = vmatpush1.msra.mxu0 %v4398
    %4569 = vmatprep.subr.mxu0 %v4403
    %4570 = vmatpush1.msra.mxu0 %v4402
    %4571 = vmatprep.subr.mxu0 %v4407
    %4572 = vmatpush1.msra.mxu0 %v4406
    %4573 = vmatprep.subr.mxu0 %v4411
    %4574 = vmatpush1.msra.mxu0 %v4410
    %4575 = vmatprep.subr.mxu0 %v4415
    %4576 = vmatpush1.msra.mxu0 %v4414
    %4577 = vmatprep.subr.mxu0 %v4419
    %4578 = vmatpush1.msra.mxu0 %v4418
    %4579 = vmatprep.subr.mxu0 %v4423
    %4580 = vmatpush1.msra.mxu0 %v4422
    %4581 = vmatprep.subr.mxu0 %v4427
    %4582 = vmatpush1.msra.mxu0 %v4426
    %4583 = vmatprep.subr.mxu0 %v4431
    %4584 = vmatpush1.msra.mxu0 %v4430
    %4585 = vmatprep.subr.mxu0 %v4435
    %4586 = vmatpush1.msra.mxu0 %v4434
    %4587 = vmatprep.subr.mxu0 %v4439
    %4588 = vmatpush1.msra.mxu0 %v4438
    %4589 = vmatprep.subr.mxu0 %v4443
    %4590 = vmatpush1.msra.mxu0 %v4442
    %4591 = vmatprep.subr.mxu0 %v4447
    %4592 = vmatpush1.msra.mxu0 %v4446
    %4593 = vmatprep.subr.mxu0 %v4451
    %4594 = vmatpush1.msra.mxu0 %v4450
    %4595 = vmatprep.subr.mxu0 %v4455
    %4596 = vmatpush1.msra.mxu0 %v4454
    %4597 = vmatprep.subr.mxu0 %v4459
    %4598 = vmatpush1.msra.mxu0 %v4458
    %4599 = vmatprep.subr.mxu0 %v4463
    %4600 = vmatpush1.msra.mxu0 %v4462
    %4601 = vmatprep.subr.mxu0 %v4467
    %4602 = vmatpush1.msra.mxu0 %v4466
    %4603 = vmatprep.mubr.f32.mxu0 %v3836
    %4604 = vmatmul.mubr.f32.gmra.mrb[0].mxu0 %v4126
    %v4605 = vpop.f32.mrb[0].mxu0
    %v4606 = vadd.f32 %v496, %v4605
    %v4607 = vpop.f32.mrb[0].mxu0
    %v4608 = vadd.f32 %v500, %v4607
    %4609 = vdwg.mxu0
    %v4610 = vxor.u32 %v4535, 2147483648
    %v4611 = vmul.f32 %v4610, 1.442695
    %v4612 = vpow.pop %v4611
    %v4613 = vadd.f32 %v4612, 1.0
    %v4614 = vrcp.pop %v4613
    %v4615 = vmul.f32 1.0, %v4614
    %v4616 = vxor.u32 %v4537, 2147483648
    %v4617 = vmul.f32 %v4616, 1.442695
    %v4618 = vpow.pop %v4617
    %v4619 = vadd.f32 %v4618, 1.0
    %v4620 = vrcp.pop %v4619
    %v4621 = vmul.f32 1.0, %v4620
    %v4622 = vmul.f32 %v4615, %v4608
    %v4623 = vadd.f32 %v4606, %v4622
    %v4624 = vtanh.pop %v4623
    %v4625 = vsub.f32 1.0, %v4621
    %v4626 = vmul.f32 %v4625, %v4624
    %v4627 = vmul.f32 %v4621, %v3836
    %v4628 = vadd.f32 %v4626, %v4627
    %4629 = vst [vmem:[#allocation3 + $0x20] sm:$0xff] %v4628
    %v4630 = vld [vmem:[#allocation12] sm:$0xff]
    %v4631 = vld [vmem:[#allocation12 + $0x8] sm:$0xff]
    %v4632 = vld [vmem:[#allocation12 + $0x10] sm:$0xff]
    %v4633 = vld [vmem:[#allocation12 + $0x18] sm:$0xff]
    %v4634 = vld [vmem:[#allocation12 + $0x20] sm:$0xff]
    %v4635 = vld [vmem:[#allocation12 + $0x28] sm:$0xff]
    %v4636 = vld [vmem:[#allocation12 + $0x30] sm:$0xff]
    %v4637 = vld [vmem:[#allocation12 + $0x38] sm:$0xff]
    %v4638 = vld [vmem:[#allocation12 + $0x40] sm:$0xff]
    %v4639 = vld [vmem:[#allocation12 + $0x48] sm:$0xff]
    %v4640 = vld [vmem:[#allocation12 + $0x50] sm:$0xff]
    %v4641 = vld [vmem:[#allocation12 + $0x58] sm:$0xff]
    %v4642 = vld [vmem:[#allocation12 + $0x60] sm:$0xff]
    %v4643 = vld [vmem:[#allocation12 + $0x68] sm:$0xff]
    %v4644 = vld [vmem:[#allocation12 + $0x70] sm:$0xff]
    %v4645 = vld [vmem:[#allocation12 + $0x78] sm:$0xff]
    %v4646 = vld [vmem:[#allocation12 + $0x80] sm:$0xff]
    %v4647 = vld [vmem:[#allocation12 + $0x88] sm:$0xff]
    %v4648 = vld [vmem:[#allocation12 + $0x90] sm:$0xff]
    %v4649 = vld [vmem:[#allocation12 + $0x98] sm:$0xff]
    %v4650 = vld [vmem:[#allocation12 + $0xa0] sm:$0xff]
    %v4651 = vld [vmem:[#allocation12 + $0xa8] sm:$0xff]
    %v4652 = vld [vmem:[#allocation12 + $0xb0] sm:$0xff]
    %v4653 = vld [vmem:[#allocation12 + $0xb8] sm:$0xff]
    %v4654 = vld [vmem:[#allocation12 + $0xc0] sm:$0xff]
    %v4655 = vld [vmem:[#allocation12 + $0xc8] sm:$0xff]
    %v4656 = vld [vmem:[#allocation12 + $0xd0] sm:$0xff]
    %v4657 = vld [vmem:[#allocation12 + $0xd8] sm:$0xff]
    %v4658 = vld [vmem:[#allocation12 + $0xe0] sm:$0xff]
    %v4659 = vld [vmem:[#allocation12 + $0xe8] sm:$0xff]
    %v4660 = vld [vmem:[#allocation12 + $0xf0] sm:$0xff]
    %v4661 = vld [vmem:[#allocation12 + $0xf8] sm:$0xff]
    %v4662 = vld [vmem:[#allocation12 + $0x100] sm:$0xff]
    %v4663 = vld [vmem:[#allocation12 + $0x108] sm:$0xff]
    %v4664 = vld [vmem:[#allocation12 + $0x110] sm:$0xff]
    %v4665 = vld [vmem:[#allocation12 + $0x118] sm:$0xff]
    %v4666 = vld [vmem:[#allocation12 + $0x120] sm:$0xff]
    %v4667 = vld [vmem:[#allocation12 + $0x128] sm:$0xff]
    %v4668 = vld [vmem:[#allocation12 + $0x130] sm:$0xff]
    %v4669 = vld [vmem:[#allocation12 + $0x138] sm:$0xff]
    %v4670 = vld [vmem:[#allocation12 + $0x140] sm:$0xff]
    %v4671 = vld [vmem:[#allocation12 + $0x148] sm:$0xff]
    %v4672 = vld [vmem:[#allocation12 + $0x150] sm:$0xff]
    %v4673 = vld [vmem:[#allocation12 + $0x158] sm:$0xff]
    %v4674 = vld [vmem:[#allocation12 + $0x160] sm:$0xff]
    %v4675 = vld [vmem:[#allocation12 + $0x168] sm:$0xff]
    %v4676 = vld [vmem:[#allocation12 + $0x170] sm:$0xff]
    %v4677 = vld [vmem:[#allocation12 + $0x178] sm:$0xff]
    %v4678 = vld [vmem:[#allocation12 + $0x180] sm:$0xff]
    %v4679 = vld [vmem:[#allocation12 + $0x188] sm:$0xff]
    %v4680 = vld [vmem:[#allocation12 + $0x190] sm:$0xff]
    %v4681 = vld [vmem:[#allocation12 + $0x198] sm:$0xff]
    %v4682 = vld [vmem:[#allocation12 + $0x1a0] sm:$0xff]
    %v4683 = vld [vmem:[#allocation12 + $0x1a8] sm:$0xff]
    %v4684 = vld [vmem:[#allocation12 + $0x1b0] sm:$0xff]
    %v4685 = vld [vmem:[#allocation12 + $0x1b8] sm:$0xff]
    %v4686 = vld [vmem:[#allocation12 + $0x1c0] sm:$0xff]
    %v4687 = vld [vmem:[#allocation12 + $0x1c8] sm:$0xff]
    %v4688 = vld [vmem:[#allocation12 + $0x1d0] sm:$0xff]
    %v4689 = vld [vmem:[#allocation12 + $0x1d8] sm:$0xff]
    %v4690 = vld [vmem:[#allocation12 + $0x1e0] sm:$0xff]
    %v4691 = vld [vmem:[#allocation12 + $0x1e8] sm:$0xff]
    %v4692 = vld [vmem:[#allocation12 + $0x1f0] sm:$0xff]
    %v4693 = vld [vmem:[#allocation12 + $0x1f8] sm:$0xff]
    %v4694 = vld [vmem:[#allocation12 + $0x200] sm:$0xff]
    %v4695 = vld [vmem:[#allocation12 + $0x208] sm:$0xff]
    %v4696 = vld [vmem:[#allocation12 + $0x210] sm:$0xff]
    %v4697 = vld [vmem:[#allocation12 + $0x218] sm:$0xff]
    %v4698 = vld [vmem:[#allocation12 + $0x220] sm:$0xff]
    %v4699 = vld [vmem:[#allocation12 + $0x228] sm:$0xff]
    %v4700 = vld [vmem:[#allocation12 + $0x230] sm:$0xff]
    %v4701 = vld [vmem:[#allocation12 + $0x238] sm:$0xff]
    %v4702 = vld [vmem:[#allocation12 + $0x240] sm:$0xff]
    %v4703 = vld [vmem:[#allocation12 + $0x248] sm:$0xff]
    %v4704 = vld [vmem:[#allocation12 + $0x250] sm:$0xff]
    %v4705 = vld [vmem:[#allocation12 + $0x258] sm:$0xff]
    %v4706 = vld [vmem:[#allocation12 + $0x260] sm:$0xff]
    %v4707 = vld [vmem:[#allocation12 + $0x268] sm:$0xff]
    %v4708 = vld [vmem:[#allocation12 + $0x270] sm:$0xff]
    %v4709 = vld [vmem:[#allocation12 + $0x278] sm:$0xff]
    %v4710 = vld [vmem:[#allocation12 + $0x280] sm:$0xff]
    %v4711 = vld [vmem:[#allocation12 + $0x288] sm:$0xff]
    %v4712 = vld [vmem:[#allocation12 + $0x290] sm:$0xff]
    %v4713 = vld [vmem:[#allocation12 + $0x298] sm:$0xff]
    %v4714 = vld [vmem:[#allocation12 + $0x2a0] sm:$0xff]
    %v4715 = vld [vmem:[#allocation12 + $0x2a8] sm:$0xff]
    %v4716 = vld [vmem:[#allocation12 + $0x2b0] sm:$0xff]
    %v4717 = vld [vmem:[#allocation12 + $0x2b8] sm:$0xff]
    %v4718 = vld [vmem:[#allocation12 + $0x2c0] sm:$0xff]
    %v4719 = vld [vmem:[#allocation12 + $0x2c8] sm:$0xff]
    %v4720 = vld [vmem:[#allocation12 + $0x2d0] sm:$0xff]
    %v4721 = vld [vmem:[#allocation12 + $0x2d8] sm:$0xff]
    %v4722 = vld [vmem:[#allocation12 + $0x2e0] sm:$0xff]
    %v4723 = vld [vmem:[#allocation12 + $0x2e8] sm:$0xff]
    %v4724 = vld [vmem:[#allocation12 + $0x2f0] sm:$0xff]
    %v4725 = vld [vmem:[#allocation12 + $0x2f8] sm:$0xff]
    %v4726 = vld [vmem:[#allocation12 + $0x300] sm:$0xff]
    %v4727 = vld [vmem:[#allocation12 + $0x308] sm:$0xff]
    %v4728 = vld [vmem:[#allocation12 + $0x310] sm:$0xff]
    %v4729 = vld [vmem:[#allocation12 + $0x318] sm:$0xff]
    %v4730 = vld [vmem:[#allocation12 + $0x320] sm:$0xff]
    %v4731 = vld [vmem:[#allocation12 + $0x328] sm:$0xff]
    %v4732 = vld [vmem:[#allocation12 + $0x330] sm:$0xff]
    %v4733 = vld [vmem:[#allocation12 + $0x338] sm:$0xff]
    %v4734 = vld [vmem:[#allocation12 + $0x340] sm:$0xff]
    %v4735 = vld [vmem:[#allocation12 + $0x348] sm:$0xff]
    %v4736 = vld [vmem:[#allocation12 + $0x350] sm:$0xff]
    %v4737 = vld [vmem:[#allocation12 + $0x358] sm:$0xff]
    %v4738 = vld [vmem:[#allocation12 + $0x360] sm:$0xff]
    %v4739 = vld [vmem:[#allocation12 + $0x368] sm:$0xff]
    %v4740 = vld [vmem:[#allocation12 + $0x370] sm:$0xff]
    %v4741 = vld [vmem:[#allocation12 + $0x378] sm:$0xff]
    %v4742 = vld [vmem:[#allocation12 + $0x380] sm:$0xff]
    %v4743 = vld [vmem:[#allocation12 + $0x388] sm:$0xff]
    %v4744 = vld [vmem:[#allocation12 + $0x390] sm:$0xff]
    %v4745 = vld [vmem:[#allocation12 + $0x398] sm:$0xff]
    %v4746 = vld [vmem:[#allocation12 + $0x3a0] sm:$0xff]
    %v4747 = vld [vmem:[#allocation12 + $0x3a8] sm:$0xff]
    %v4748 = vld [vmem:[#allocation12 + $0x3b0] sm:$0xff]
    %v4749 = vld [vmem:[#allocation12 + $0x3b8] sm:$0xff]
    %v4750 = vld [vmem:[#allocation12 + $0x3c0] sm:$0xff]
    %v4751 = vld [vmem:[#allocation12 + $0x3c8] sm:$0xff]
    %v4752 = vld [vmem:[#allocation12 + $0x3d0] sm:$0xff]
    %v4753 = vld [vmem:[#allocation12 + $0x3d8] sm:$0xff]
    %v4754 = vld [vmem:[#allocation12 + $0x3e0] sm:$0xff]
    %v4755 = vld [vmem:[#allocation12 + $0x3e8] sm:$0xff]
    %v4756 = vld [vmem:[#allocation12 + $0x3f0] sm:$0xff]
    %v4757 = vld [vmem:[#allocation12 + $0x3f8] sm:$0xff]
    %4758 = vmatprep.subr.mxu0 %v4631
    %4759 = vmatpush1.msra.mxu0 %v4630
    %4760 = vmatprep.subr.mxu0 %v4635
    %4761 = vmatpush1.msra.mxu0 %v4634
    %4762 = vmatprep.subr.mxu0 %v4639
    %4763 = vmatpush1.msra.mxu0 %v4638
    %4764 = vmatprep.subr.mxu0 %v4643
    %4765 = vmatpush1.msra.mxu0 %v4642
    %4766 = vmatprep.subr.mxu0 %v4647
    %4767 = vmatpush1.msra.mxu0 %v4646
    %4768 = vmatprep.subr.mxu0 %v4651
    %4769 = vmatpush1.msra.mxu0 %v4650
    %4770 = vmatprep.subr.mxu0 %v4655
    %4771 = vmatpush1.msra.mxu0 %v4654
    %4772 = vmatprep.subr.mxu0 %v4659
    %4773 = vmatpush1.msra.mxu0 %v4658
    %4774 = vmatprep.subr.mxu0 %v4663
    %4775 = vmatpush1.msra.mxu0 %v4662
    %4776 = vmatprep.subr.mxu0 %v4667
    %4777 = vmatpush1.msra.mxu0 %v4666
    %4778 = vmatprep.subr.mxu0 %v4671
    %4779 = vmatpush1.msra.mxu0 %v4670
    %4780 = vmatprep.subr.mxu0 %v4675
    %4781 = vmatpush1.msra.mxu0 %v4674
    %4782 = vmatprep.subr.mxu0 %v4679
    %4783 = vmatpush1.msra.mxu0 %v4678
    %4784 = vmatprep.subr.mxu0 %v4683
    %4785 = vmatpush1.msra.mxu0 %v4682
    %4786 = vmatprep.subr.mxu0 %v4687
    %4787 = vmatpush1.msra.mxu0 %v4686
    %4788 = vmatprep.subr.mxu0 %v4691
    %4789 = vmatpush1.msra.mxu0 %v4690
    %4790 = vmatprep.subr.mxu0 %v4695
    %4791 = vmatpush1.msra.mxu0 %v4694
    %4792 = vmatprep.subr.mxu0 %v4699
    %4793 = vmatpush1.msra.mxu0 %v4698
    %4794 = vmatprep.subr.mxu0 %v4703
    %4795 = vmatpush1.msra.mxu0 %v4702
    %4796 = vmatprep.subr.mxu0 %v4707
    %4797 = vmatpush1.msra.mxu0 %v4706
    %4798 = vmatprep.subr.mxu0 %v4711
    %4799 = vmatpush1.msra.mxu0 %v4710
    %4800 = vmatprep.subr.mxu0 %v4715
    %4801 = vmatpush1.msra.mxu0 %v4714
    %4802 = vmatprep.subr.mxu0 %v4719
    %4803 = vmatpush1.msra.mxu0 %v4718
    %4804 = vmatprep.subr.mxu0 %v4723
    %4805 = vmatpush1.msra.mxu0 %v4722
    %4806 = vmatprep.subr.mxu0 %v4727
    %4807 = vmatpush1.msra.mxu0 %v4726
    %4808 = vmatprep.subr.mxu0 %v4731
    %4809 = vmatpush1.msra.mxu0 %v4730
    %4810 = vmatprep.subr.mxu0 %v4735
    %4811 = vmatpush1.msra.mxu0 %v4734
    %4812 = vmatprep.subr.mxu0 %v4739
    %4813 = vmatpush1.msra.mxu0 %v4738
    %4814 = vmatprep.subr.mxu0 %v4743
    %4815 = vmatpush1.msra.mxu0 %v4742
    %4816 = vmatprep.subr.mxu0 %v4747
    %4817 = vmatpush1.msra.mxu0 %v4746
    %4818 = vmatprep.subr.mxu0 %v4751
    %4819 = vmatpush1.msra.mxu0 %v4750
    %4820 = vmatprep.subr.mxu0 %v4755
    %4821 = vmatpush1.msra.mxu0 %v4754
    %4822 = vmatprep.mubr.f32.mxu0 %v4126
    %4823 = vmatmul.mubr.f32.gmra.mrb[0].mxu0 %v4339
    %v4824 = vpop.f32.mrb[0].mxu0
    %v4825 = vadd.f32 %v466, %v4824
    %v4826 = vpop.f32.mrb[0].mxu0
    %v4827 = vadd.f32 %v470, %v4826
    %4828 = vdwg.mxu0
    %4829 = vmatprep.subr.mxu0 %v4633
    %4830 = vmatpush1.msra.mxu0 %v4632
    %4831 = vmatprep.subr.mxu0 %v4637
    %4832 = vmatpush1.msra.mxu0 %v4636
    %4833 = vmatprep.subr.mxu0 %v4641
    %4834 = vmatpush1.msra.mxu0 %v4640
    %4835 = vmatprep.subr.mxu0 %v4645
    %4836 = vmatpush1.msra.mxu0 %v4644
    %4837 = vmatprep.subr.mxu0 %v4649
    %4838 = vmatpush1.msra.mxu0 %v4648
    %4839 = vmatprep.subr.mxu0 %v4653
    %4840 = vmatpush1.msra.mxu0 %v4652
    %4841 = vmatprep.subr.mxu0 %v4657
    %4842 = vmatpush1.msra.mxu0 %v4656
    %4843 = vmatprep.subr.mxu0 %v4661
    %4844 = vmatpush1.msra.mxu0 %v4660
    %4845 = vmatprep.subr.mxu0 %v4665
    %4846 = vmatpush1.msra.mxu0 %v4664
    %4847 = vmatprep.subr.mxu0 %v4669
    %4848 = vmatpush1.msra.mxu0 %v4668
    %4849 = vmatprep.subr.mxu0 %v4673
    %4850 = vmatpush1.msra.mxu0 %v4672
    %4851 = vmatprep.subr.mxu0 %v4677
    %4852 = vmatpush1.msra.mxu0 %v4676
    %4853 = vmatprep.subr.mxu0 %v4681
    %4854 = vmatpush1.msra.mxu0 %v4680
    %4855 = vmatprep.subr.mxu0 %v4685
    %4856 = vmatpush1.msra.mxu0 %v4684
    %4857 = vmatprep.subr.mxu0 %v4689
    %4858 = vmatpush1.msra.mxu0 %v4688
    %4859 = vmatprep.subr.mxu0 %v4693
    %4860 = vmatpush1.msra.mxu0 %v4692
    %4861 = vmatprep.subr.mxu0 %v4697
    %4862 = vmatpush1.msra.mxu0 %v4696
    %4863 = vmatprep.subr.mxu0 %v4701
    %4864 = vmatpush1.msra.mxu0 %v4700
    %4865 = vmatprep.subr.mxu0 %v4705
    %4866 = vmatpush1.msra.mxu0 %v4704
    %4867 = vmatprep.subr.mxu0 %v4709
    %4868 = vmatpush1.msra.mxu0 %v4708
    %4869 = vmatprep.subr.mxu0 %v4713
    %4870 = vmatpush1.msra.mxu0 %v4712
    %4871 = vmatprep.subr.mxu0 %v4717
    %4872 = vmatpush1.msra.mxu0 %v4716
    %4873 = vmatprep.subr.mxu0 %v4721
    %4874 = vmatpush1.msra.mxu0 %v4720
    %4875 = vmatprep.subr.mxu0 %v4725
    %4876 = vmatpush1.msra.mxu0 %v4724
    %4877 = vmatprep.subr.mxu0 %v4729
    %4878 = vmatpush1.msra.mxu0 %v4728
    %4879 = vmatprep.subr.mxu0 %v4733
    %4880 = vmatpush1.msra.mxu0 %v4732
    %4881 = vmatprep.subr.mxu0 %v4737
    %4882 = vmatpush1.msra.mxu0 %v4736
    %4883 = vmatprep.subr.mxu0 %v4741
    %4884 = vmatpush1.msra.mxu0 %v4740
    %4885 = vmatprep.subr.mxu0 %v4745
    %4886 = vmatpush1.msra.mxu0 %v4744
    %4887 = vmatprep.subr.mxu0 %v4749
    %4888 = vmatpush1.msra.mxu0 %v4748
    %4889 = vmatprep.subr.mxu0 %v4753
    %4890 = vmatpush1.msra.mxu0 %v4752
    %4891 = vmatprep.subr.mxu0 %v4757
    %4892 = vmatpush1.msra.mxu0 %v4756
    %4893 = vmatprep.mubr.f32.mxu0 %v4126
    %4894 = vmatmul.mubr.f32.gmra.mrb[0].mxu0 %v4339
    %v4895 = vpop.f32.mrb[0].mxu0
    %v4896 = vadd.f32 %v474, %v4895
    %v4897 = vpop.f32.mrb[0].mxu0
    %v4898 = vadd.f32 %v478, %v4897
    %4899 = vdwg.mxu0
    %v4900 = vxor.u32 %v4825, 2147483648
    %v4901 = vmul.f32 %v4900, 1.442695
    %v4902 = vpow.pop %v4901
    %v4903 = vadd.f32 %v4902, 1.0
    %v4904 = vrcp.pop %v4903
    %v4905 = vmul.f32 1.0, %v4904
    %v4906 = vxor.u32 %v4827, 2147483648
    %v4907 = vmul.f32 %v4906, 1.442695
    %v4908 = vpow.pop %v4907
    %v4909 = vadd.f32 %v4908, 1.0
    %v4910 = vrcp.pop %v4909
    %v4911 = vmul.f32 1.0, %v4910
    %v4912 = vmul.f32 %v4905, %v4898
    %v4913 = vadd.f32 %v4896, %v4912
    %v4914 = vtanh.pop %v4913
    %v4915 = vsub.f32 1.0, %v4911
    %v4916 = vmul.f32 %v4915, %v4914
    %v4917 = vmul.f32 %v4911, %v4126
    %v4918 = vadd.f32 %v4916, %v4917
    %v4919 = vld [vmem:[#allocation2 + $0x90] sm:$0xff]
    %v4920 = vld [vmem:[#allocation2 + $0x98] sm:$0xff]
    %v4921 = vld [vmem:[#allocation2 + $0xa0] sm:$0xff]
    %v4922 = vld [vmem:[#allocation9] sm:$0xff]
    %v4923 = vld [vmem:[#allocation9 + $0x8] sm:$0xff]
    %v4924 = vld [vmem:[#allocation9 + $0x10] sm:$0xff]
    %v4925 = vld [vmem:[#allocation9 + $0x18] sm:$0xff]
    %v4926 = vld [vmem:[#allocation9 + $0x20] sm:$0xff]
    %v4927 = vld [vmem:[#allocation9 + $0x28] sm:$0xff]
    %v4928 = vld [vmem:[#allocation9 + $0x30] sm:$0xff]
    %v4929 = vld [vmem:[#allocation9 + $0x38] sm:$0xff]
    %v4930 = vld [vmem:[#allocation9 + $0x40] sm:$0xff]
    %v4931 = vld [vmem:[#allocation9 + $0x48] sm:$0xff]
    %v4932 = vld [vmem:[#allocation9 + $0x50] sm:$0xff]
    %v4933 = vld [vmem:[#allocation9 + $0x58] sm:$0xff]
    %v4934 = vld [vmem:[#allocation9 + $0x60] sm:$0xff]
    %v4935 = vld [vmem:[#allocation9 + $0x68] sm:$0xff]
    %v4936 = vld [vmem:[#allocation9 + $0x70] sm:$0xff]
    %v4937 = vld [vmem:[#allocation9 + $0x78] sm:$0xff]
    %v4938 = vld [vmem:[#allocation9 + $0x80] sm:$0xff]
    %v4939 = vld [vmem:[#allocation9 + $0x88] sm:$0xff]
    %v4940 = vld [vmem:[#allocation9 + $0x90] sm:$0xff]
    %v4941 = vld [vmem:[#allocation9 + $0x98] sm:$0xff]
    %v4942 = vld [vmem:[#allocation9 + $0xa0] sm:$0xff]
    %v4943 = vld [vmem:[#allocation9 + $0xa8] sm:$0xff]
    %v4944 = vld [vmem:[#allocation9 + $0xb0] sm:$0xff]
    %v4945 = vld [vmem:[#allocation9 + $0xb8] sm:$0xff]
    %v4946 = vld [vmem:[#allocation9 + $0xc0] sm:$0xff]
    %v4947 = vld [vmem:[#allocation9 + $0xc8] sm:$0xff]
    %v4948 = vld [vmem:[#allocation9 + $0xd0] sm:$0xff]
    %v4949 = vld [vmem:[#allocation9 + $0xd8] sm:$0xff]
    %v4950 = vld [vmem:[#allocation9 + $0xe0] sm:$0xff]
    %v4951 = vld [vmem:[#allocation9 + $0xe8] sm:$0xff]
    %v4952 = vld [vmem:[#allocation9 + $0xf0] sm:$0xff]
    %v4953 = vld [vmem:[#allocation9 + $0xf8] sm:$0xff]
    %v4954 = vld [vmem:[#allocation9 + $0x100] sm:$0xff]
    %v4955 = vld [vmem:[#allocation9 + $0x108] sm:$0xff]
    %v4956 = vld [vmem:[#allocation9 + $0x110] sm:$0xff]
    %v4957 = vld [vmem:[#allocation9 + $0x118] sm:$0xff]
    %v4958 = vld [vmem:[#allocation9 + $0x120] sm:$0xff]
    %v4959 = vld [vmem:[#allocation9 + $0x128] sm:$0xff]
    %v4960 = vld [vmem:[#allocation9 + $0x130] sm:$0xff]
    %v4961 = vld [vmem:[#allocation9 + $0x138] sm:$0xff]
    %v4962 = vld [vmem:[#allocation9 + $0x140] sm:$0xff]
    %v4963 = vld [vmem:[#allocation9 + $0x148] sm:$0xff]
    %v4964 = vld [vmem:[#allocation9 + $0x150] sm:$0xff]
    %v4965 = vld [vmem:[#allocation9 + $0x158] sm:$0xff]
    %v4966 = vld [vmem:[#allocation9 + $0x160] sm:$0xff]
    %v4967 = vld [vmem:[#allocation9 + $0x168] sm:$0xff]
    %v4968 = vld [vmem:[#allocation9 + $0x170] sm:$0xff]
    %v4969 = vld [vmem:[#allocation9 + $0x178] sm:$0xff]
    %4970 = vmatprep.subr.mxu0 %v4923
    %4971 = vmatpush1.msra.mxu0 %v4922
    %4972 = vmatprep.subr.mxu0 %v4926
    %4973 = vmatpush1.msra.mxu0 %v4925
    %4974 = vmatprep.subr.mxu0 %v4929
    %4975 = vmatpush1.msra.mxu0 %v4928
    %4976 = vmatprep.subr.mxu0 %v4932
    %4977 = vmatpush1.msra.mxu0 %v4931
    %4978 = vmatprep.subr.mxu0 %v4935
    %4979 = vmatpush1.msra.mxu0 %v4934
    %4980 = vmatprep.subr.mxu0 %v4938
    %4981 = vmatpush1.msra.mxu0 %v4937
    %4982 = vmatprep.subr.mxu0 %v4941
    %4983 = vmatpush1.msra.mxu0 %v4940
    %4984 = vmatprep.subr.mxu0 %v4944
    %4985 = vmatpush1.msra.mxu0 %v4943
    %4986 = vmatprep.subr.mxu0 %v4947
    %4987 = vmatpush1.msra.mxu0 %v4946
    %4988 = vmatprep.subr.mxu0 %v4950
    %4989 = vmatpush1.msra.mxu0 %v4949
    %4990 = vmatprep.subr.mxu0 %v4953
    %4991 = vmatpush1.msra.mxu0 %v4952
    %4992 = vmatprep.subr.mxu0 %v4956
    %4993 = vmatpush1.msra.mxu0 %v4955
    %4994 = vmatprep.subr.mxu0 %v4959
    %4995 = vmatpush1.msra.mxu0 %v4958
    %4996 = vmatprep.subr.mxu0 %v4962
    %4997 = vmatpush1.msra.mxu0 %v4961
    %4998 = vmatprep.subr.mxu0 %v4965
    %4999 = vmatpush1.msra.mxu0 %v4964
    %5000 = vmatprep.subr.mxu0 %v4968
    %5001 = vmatpush1.msra.mxu0 %v4967
    %5002 = vmatprep.subr.mxu0 0.0
    %5003 = vmatpush1.msra.mxu0 0.0
    %5004 = vmatprep.subr.mxu0 0.0
    %5005 = vmatpush1.msra.mxu0 0.0
    %5006 = vmatprep.subr.mxu0 0.0
    %5007 = vmatpush1.msra.mxu0 0.0
    %5008 = vmatprep.subr.mxu0 0.0
    %5009 = vmatpush1.msra.mxu0 0.0
    %5010 = vmatprep.subr.mxu0 0.0
    %5011 = vmatpush1.msra.mxu0 0.0
    %5012 = vmatprep.subr.mxu0 0.0
    %5013 = vmatpush1.msra.mxu0 0.0
    %5014 = vmatprep.subr.mxu0 0.0
    %5015 = vmatpush1.msra.mxu0 0.0
    %5016 = vmatprep.subr.mxu0 0.0
    %5017 = vmatpush1.msra.mxu0 0.0
    %5018 = vmatprep.subr.mxu0 0.0
    %5019 = vmatpush1.msra.mxu0 0.0
    %5020 = vmatprep.subr.mxu0 0.0
    %5021 = vmatpush1.msra.mxu0 0.0
    %5022 = vmatprep.subr.mxu0 0.0
    %5023 = vmatpush1.msra.mxu0 0.0
    %5024 = vmatprep.subr.mxu0 0.0
    %5025 = vmatpush1.msra.mxu0 0.0
    %5026 = vmatprep.subr.mxu0 0.0
    %5027 = vmatpush1.msra.mxu0 0.0
    %5028 = vmatprep.subr.mxu0 0.0
    %5029 = vmatpush1.msra.mxu0 0.0
    %5030 = vmatprep.subr.mxu0 0.0
    %5031 = vmatpush1.msra.mxu0 0.0
    %5032 = vmatprep.subr.mxu0 0.0
    %5033 = vmatpush1.msra.mxu0 0.0
    %5034 = vmatprep.mubr.f32.mxu0 0.0
    %5035 = vmatmul.mubr.f32.gmra.mrb[0].mxu0 %v4339
    %v5036 = vpop.f32.mrb[0].mxu0
    %v5037 = vadd.f32 %v449, %v5036
    %v5038 = vpop.f32.mrb[0].mxu0
    %v5039 = vadd.f32 %v453, %v5038
    %5040 = vdwg.mxu0
    %5041 = vmatprep.subr.mxu0 0.0
    %5042 = vmatpush1.msra.mxu0 %v4924
    %5043 = vmatprep.subr.mxu0 0.0
    %5044 = vmatpush1.msra.mxu0 %v4927
    %5045 = vmatprep.subr.mxu0 0.0
    %5046 = vmatpush1.msra.mxu0 %v4930
    %5047 = vmatprep.subr.mxu0 0.0
    %5048 = vmatpush1.msra.mxu0 %v4933
    %5049 = vmatprep.subr.mxu0 0.0
    %5050 = vmatpush1.msra.mxu0 %v4936
    %5051 = vmatprep.subr.mxu0 0.0
    %5052 = vmatpush1.msra.mxu0 %v4939
    %5053 = vmatprep.subr.mxu0 0.0
    %5054 = vmatpush1.msra.mxu0 %v4942
    %5055 = vmatprep.subr.mxu0 0.0
    %5056 = vmatpush1.msra.mxu0 %v4945
    %5057 = vmatprep.subr.mxu0 0.0
    %5058 = vmatpush1.msra.mxu0 %v4948
    %5059 = vmatprep.subr.mxu0 0.0
    %5060 = vmatpush1.msra.mxu0 %v4951
    %5061 = vmatprep.subr.mxu0 0.0
    %5062 = vmatpush1.msra.mxu0 %v4954
    %5063 = vmatprep.subr.mxu0 0.0
    %5064 = vmatpush1.msra.mxu0 %v4957
    %5065 = vmatprep.subr.mxu0 0.0
    %5066 = vmatpush1.msra.mxu0 %v4960
    %5067 = vmatprep.subr.mxu0 0.0
    %5068 = vmatpush1.msra.mxu0 %v4963
    %5069 = vmatprep.subr.mxu0 0.0
    %5070 = vmatpush1.msra.mxu0 %v4966
    %5071 = vmatprep.subr.mxu0 0.0
    %5072 = vmatpush1.msra.mxu0 %v4969
    %5073 = vmatprep.subr.mxu0 0.0
    %5074 = vmatpush1.msra.mxu0 0.0
    %5075 = vmatprep.subr.mxu0 0.0
    %5076 = vmatpush1.msra.mxu0 0.0
    %5077 = vmatprep.subr.mxu0 0.0
    %5078 = vmatpush1.msra.mxu0 0.0
    %5079 = vmatprep.subr.mxu0 0.0
    %5080 = vmatpush1.msra.mxu0 0.0
    %5081 = vmatprep.subr.mxu0 0.0
    %5082 = vmatpush1.msra.mxu0 0.0
    %5083 = vmatprep.subr.mxu0 0.0
    %5084 = vmatpush1.msra.mxu0 0.0
    %5085 = vmatprep.subr.mxu0 0.0
    %5086 = vmatpush1.msra.mxu0 0.0
    %5087 = vmatprep.subr.mxu0 0.0
    %5088 = vmatpush1.msra.mxu0 0.0
    %5089 = vmatprep.subr.mxu0 0.0
    %5090 = vmatpush1.msra.mxu0 0.0
    %5091 = vmatprep.subr.mxu0 0.0
    %5092 = vmatpush1.msra.mxu0 0.0
    %5093 = vmatprep.subr.mxu0 0.0
    %5094 = vmatpush1.msra.mxu0 0.0
    %5095 = vmatprep.subr.mxu0 0.0
    %5096 = vmatpush1.msra.mxu0 0.0
    %5097 = vmatprep.subr.mxu0 0.0
    %5098 = vmatpush1.msra.mxu0 0.0
    %5099 = vmatprep.subr.mxu0 0.0
    %5100 = vmatpush1.msra.mxu0 0.0
    %5101 = vmatprep.subr.mxu0 0.0
    %5102 = vmatpush1.msra.mxu0 0.0
    %5103 = vmatprep.subr.mxu0 0.0
    %5104 = vmatpush1.msra.mxu0 0.0
    %5105 = vmatprep.mubr.f32.mxu0 0.0
    %5106 = vmatmul.mubr.f32.gmra.mrb[0].mxu0 %v4339
    %v5107 = vpop.f32.mrb[0].mxu0
    %v5108 = vadd.f32 %v457, %v5107
    %v5109 = vpop.f32.mrb[0].mxu0
    %5110 = vdwg.mxu0
    %v5111 = vadd.f32 %v4919, %v5037
    %v5112 = vxor.u32 %v5111, 2147483648
    %v5113 = vmul.f32 %v5112, 1.442695
    %v5114 = vpow.pop %v5113
    %v5115 = vadd.f32 %v5114, 1.0
    %v5116 = vrcp.pop %v5115
    %v5117 = vmul.f32 1.0, %v5116
    %v5118 = vadd.f32 %v4920, %v5039
    %v5119 = vxor.u32 %v5118, 2147483648
    %v5120 = vmul.f32 %v5119, 1.442695
    %v5121 = vpow.pop %v5120
    %v5122 = vadd.f32 %v5121, 1.0
    %v5123 = vrcp.pop %v5122
    %v5124 = vmul.f32 1.0, %v5123
    %v5125 = vmul.f32 %v5117, %v5108
    %v5126 = vadd.f32 %v4921, %v5125
    %v5127 = vtanh.pop %v5126
    %v5128 = vsub.f32 1.0, %v5124
    %v5129 = vmul.f32 %v5128, %v5127
    %v5130 = vmul.f32 %v5124, %v4339
    %v5131 = vadd.f32 %v5129, %v5130
    %v5132 = vld [vmem:[#allocation15] sm:$0xff]
    %v5133 = vld [vmem:[#allocation15 + $0x8] sm:$0xff]
    %v5134 = vld [vmem:[#allocation15 + $0x10] sm:$0xff]
    %v5135 = vld [vmem:[#allocation15 + $0x18] sm:$0xff]
    %v5136 = vld [vmem:[#allocation15 + $0x20] sm:$0xff]
    %v5137 = vld [vmem:[#allocation15 + $0x28] sm:$0xff]
    %v5138 = vld [vmem:[#allocation15 + $0x30] sm:$0xff]
    %v5139 = vld [vmem:[#allocation15 + $0x38] sm:$0xff]
    %v5140 = vld [vmem:[#allocation15 + $0x40] sm:$0xff]
    %v5141 = vld [vmem:[#allocation15 + $0x48] sm:$0xff]
    %v5142 = vld [vmem:[#allocation15 + $0x50] sm:$0xff]
    %v5143 = vld [vmem:[#allocation15 + $0x58] sm:$0xff]
    %v5144 = vld [vmem:[#allocation15 + $0x60] sm:$0xff]
    %v5145 = vld [vmem:[#allocation15 + $0x68] sm:$0xff]
    %v5146 = vld [vmem:[#allocation15 + $0x70] sm:$0xff]
    %v5147 = vld [vmem:[#allocation15 + $0x78] sm:$0xff]
    %v5148 = vld [vmem:[#allocation15 + $0x80] sm:$0xff]
    %v5149 = vld [vmem:[#allocation15 + $0x88] sm:$0xff]
    %v5150 = vld [vmem:[#allocation15 + $0x90] sm:$0xff]
    %v5151 = vld [vmem:[#allocation15 + $0x98] sm:$0xff]
    %v5152 = vld [vmem:[#allocation15 + $0xa0] sm:$0xff]
    %v5153 = vld [vmem:[#allocation15 + $0xa8] sm:$0xff]
    %v5154 = vld [vmem:[#allocation15 + $0xb0] sm:$0xff]
    %v5155 = vld [vmem:[#allocation15 + $0xb8] sm:$0xff]
    %v5156 = vld [vmem:[#allocation15 + $0xc0] sm:$0xff]
    %v5157 = vld [vmem:[#allocation15 + $0xc8] sm:$0xff]
    %v5158 = vld [vmem:[#allocation15 + $0xd0] sm:$0xff]
    %v5159 = vld [vmem:[#allocation15 + $0xd8] sm:$0xff]
    %v5160 = vld [vmem:[#allocation15 + $0xe0] sm:$0xff]
    %v5161 = vld [vmem:[#allocation15 + $0xe8] sm:$0xff]
    %v5162 = vld [vmem:[#allocation15 + $0xf0] sm:$0xff]
    %v5163 = vld [vmem:[#allocation15 + $0xf8] sm:$0xff]
    %v5164 = vld [vmem:[#allocation15 + $0x100] sm:$0xff]
    %v5165 = vld [vmem:[#allocation15 + $0x108] sm:$0xff]
    %v5166 = vld [vmem:[#allocation15 + $0x110] sm:$0xff]
    %v5167 = vld [vmem:[#allocation15 + $0x118] sm:$0xff]
    %v5168 = vld [vmem:[#allocation15 + $0x120] sm:$0xff]
    %v5169 = vld [vmem:[#allocation15 + $0x128] sm:$0xff]
    %v5170 = vld [vmem:[#allocation15 + $0x130] sm:$0xff]
    %v5171 = vld [vmem:[#allocation15 + $0x138] sm:$0xff]
    %v5172 = vld [vmem:[#allocation15 + $0x140] sm:$0xff]
    %v5173 = vld [vmem:[#allocation15 + $0x148] sm:$0xff]
    %v5174 = vld [vmem:[#allocation15 + $0x150] sm:$0xff]
    %v5175 = vld [vmem:[#allocation15 + $0x158] sm:$0xff]
    %v5176 = vld [vmem:[#allocation15 + $0x160] sm:$0xff]
    %v5177 = vld [vmem:[#allocation15 + $0x168] sm:$0xff]
    %v5178 = vld [vmem:[#allocation15 + $0x170] sm:$0xff]
    %v5179 = vld [vmem:[#allocation15 + $0x178] sm:$0xff]
    %v5180 = vld [vmem:[#allocation15 + $0x180] sm:$0xff]
    %v5181 = vld [vmem:[#allocation15 + $0x188] sm:$0xff]
    %v5182 = vld [vmem:[#allocation15 + $0x190] sm:$0xff]
    %v5183 = vld [vmem:[#allocation15 + $0x198] sm:$0xff]
    %v5184 = vld [vmem:[#allocation15 + $0x1a0] sm:$0xff]
    %v5185 = vld [vmem:[#allocation15 + $0x1a8] sm:$0xff]
    %v5186 = vld [vmem:[#allocation15 + $0x1b0] sm:$0xff]
    %v5187 = vld [vmem:[#allocation15 + $0x1b8] sm:$0xff]
    %v5188 = vld [vmem:[#allocation15 + $0x1c0] sm:$0xff]
    %v5189 = vld [vmem:[#allocation15 + $0x1c8] sm:$0xff]
    %v5190 = vld [vmem:[#allocation15 + $0x1d0] sm:$0xff]
    %v5191 = vld [vmem:[#allocation15 + $0x1d8] sm:$0xff]
    %v5192 = vld [vmem:[#allocation15 + $0x1e0] sm:$0xff]
    %v5193 = vld [vmem:[#allocation15 + $0x1e8] sm:$0xff]
    %v5194 = vld [vmem:[#allocation15 + $0x1f0] sm:$0xff]
    %v5195 = vld [vmem:[#allocation15 + $0x1f8] sm:$0xff]
    %v5196 = vld [vmem:[#allocation15 + $0x200] sm:$0xff]
    %v5197 = vld [vmem:[#allocation15 + $0x208] sm:$0xff]
    %v5198 = vld [vmem:[#allocation15 + $0x210] sm:$0xff]
    %v5199 = vld [vmem:[#allocation15 + $0x218] sm:$0xff]
    %v5200 = vld [vmem:[#allocation15 + $0x220] sm:$0xff]
    %v5201 = vld [vmem:[#allocation15 + $0x228] sm:$0xff]
    %v5202 = vld [vmem:[#allocation15 + $0x230] sm:$0xff]
    %v5203 = vld [vmem:[#allocation15 + $0x238] sm:$0xff]
    %v5204 = vld [vmem:[#allocation15 + $0x240] sm:$0xff]
    %v5205 = vld [vmem:[#allocation15 + $0x248] sm:$0xff]
    %v5206 = vld [vmem:[#allocation15 + $0x250] sm:$0xff]
    %v5207 = vld [vmem:[#allocation15 + $0x258] sm:$0xff]
    %v5208 = vld [vmem:[#allocation15 + $0x260] sm:$0xff]
    %v5209 = vld [vmem:[#allocation15 + $0x268] sm:$0xff]
    %v5210 = vld [vmem:[#allocation15 + $0x270] sm:$0xff]
    %v5211 = vld [vmem:[#allocation15 + $0x278] sm:$0xff]
    %v5212 = vld [vmem:[#allocation15 + $0x280] sm:$0xff]
    %v5213 = vld [vmem:[#allocation15 + $0x288] sm:$0xff]
    %v5214 = vld [vmem:[#allocation15 + $0x290] sm:$0xff]
    %v5215 = vld [vmem:[#allocation15 + $0x298] sm:$0xff]
    %v5216 = vld [vmem:[#allocation15 + $0x2a0] sm:$0xff]
    %v5217 = vld [vmem:[#allocation15 + $0x2a8] sm:$0xff]
    %v5218 = vld [vmem:[#allocation15 + $0x2b0] sm:$0xff]
    %v5219 = vld [vmem:[#allocation15 + $0x2b8] sm:$0xff]
    %v5220 = vld [vmem:[#allocation15 + $0x2c0] sm:$0xff]
    %v5221 = vld [vmem:[#allocation15 + $0x2c8] sm:$0xff]
    %v5222 = vld [vmem:[#allocation15 + $0x2d0] sm:$0xff]
    %v5223 = vld [vmem:[#allocation15 + $0x2d8] sm:$0xff]
    %v5224 = vld [vmem:[#allocation15 + $0x2e0] sm:$0xff]
    %v5225 = vld [vmem:[#allocation15 + $0x2e8] sm:$0xff]
    %v5226 = vld [vmem:[#allocation15 + $0x2f0] sm:$0xff]
    %v5227 = vld [vmem:[#allocation15 + $0x2f8] sm:$0xff]
    %v5228 = vld [vmem:[#allocation15 + $0x300] sm:$0xff]
    %v5229 = vld [vmem:[#allocation15 + $0x308] sm:$0xff]
    %v5230 = vld [vmem:[#allocation15 + $0x310] sm:$0xff]
    %v5231 = vld [vmem:[#allocation15 + $0x318] sm:$0xff]
    %v5232 = vld [vmem:[#allocation15 + $0x320] sm:$0xff]
    %v5233 = vld [vmem:[#allocation15 + $0x328] sm:$0xff]
    %v5234 = vld [vmem:[#allocation15 + $0x330] sm:$0xff]
    %v5235 = vld [vmem:[#allocation15 + $0x338] sm:$0xff]
    %v5236 = vld [vmem:[#allocation15 + $0x340] sm:$0xff]
    %v5237 = vld [vmem:[#allocation15 + $0x348] sm:$0xff]
    %v5238 = vld [vmem:[#allocation15 + $0x350] sm:$0xff]
    %v5239 = vld [vmem:[#allocation15 + $0x358] sm:$0xff]
    %v5240 = vld [vmem:[#allocation15 + $0x360] sm:$0xff]
    %v5241 = vld [vmem:[#allocation15 + $0x368] sm:$0xff]
    %v5242 = vld [vmem:[#allocation15 + $0x370] sm:$0xff]
    %v5243 = vld [vmem:[#allocation15 + $0x378] sm:$0xff]
    %v5244 = vld [vmem:[#allocation15 + $0x380] sm:$0xff]
    %v5245 = vld [vmem:[#allocation15 + $0x388] sm:$0xff]
    %v5246 = vld [vmem:[#allocation15 + $0x390] sm:$0xff]
    %v5247 = vld [vmem:[#allocation15 + $0x398] sm:$0xff]
    %v5248 = vld [vmem:[#allocation15 + $0x3a0] sm:$0xff]
    %v5249 = vld [vmem:[#allocation15 + $0x3a8] sm:$0xff]
    %v5250 = vld [vmem:[#allocation15 + $0x3b0] sm:$0xff]
    %v5251 = vld [vmem:[#allocation15 + $0x3b8] sm:$0xff]
    %v5252 = vld [vmem:[#allocation15 + $0x3c0] sm:$0xff]
    %v5253 = vld [vmem:[#allocation15 + $0x3c8] sm:$0xff]
    %v5254 = vld [vmem:[#allocation15 + $0x3d0] sm:$0xff]
    %v5255 = vld [vmem:[#allocation15 + $0x3d8] sm:$0xff]
    %v5256 = vld [vmem:[#allocation15 + $0x3e0] sm:$0xff]
    %v5257 = vld [vmem:[#allocation15 + $0x3e8] sm:$0xff]
    %v5258 = vld [vmem:[#allocation15 + $0x3f0] sm:$0xff]
    %v5259 = vld [vmem:[#allocation15 + $0x3f8] sm:$0xff]
    %5260 = vmatprep.subr.mxu0 %v5133
    %5261 = vmatpush1.msra.mxu0 %v5132
    %5262 = vmatprep.subr.mxu0 %v5137
    %5263 = vmatpush1.msra.mxu0 %v5136
    %5264 = vmatprep.subr.mxu0 %v5141
    %5265 = vmatpush1.msra.mxu0 %v5140
    %5266 = vmatprep.subr.mxu0 %v5145
    %5267 = vmatpush1.msra.mxu0 %v5144
    %5268 = vmatprep.subr.mxu0 %v5149
    %5269 = vmatpush1.msra.mxu0 %v5148
    %5270 = vmatprep.subr.mxu0 %v5153
    %5271 = vmatpush1.msra.mxu0 %v5152
    %5272 = vmatprep.subr.mxu0 %v5157
    %5273 = vmatpush1.msra.mxu0 %v5156
    %5274 = vmatprep.subr.mxu0 %v5161
    %5275 = vmatpush1.msra.mxu0 %v5160
    %5276 = vmatprep.subr.mxu0 %v5165
    %5277 = vmatpush1.msra.mxu0 %v5164
    %5278 = vmatprep.subr.mxu0 %v5169
    %5279 = vmatpush1.msra.mxu0 %v5168
    %5280 = vmatprep.subr.mxu0 %v5173
    %5281 = vmatpush1.msra.mxu0 %v5172
    %5282 = vmatprep.subr.mxu0 %v5177
    %5283 = vmatpush1.msra.mxu0 %v5176
    %5284 = vmatprep.subr.mxu0 %v5181
    %5285 = vmatpush1.msra.mxu0 %v5180
    %5286 = vmatprep.subr.mxu0 %v5185
    %5287 = vmatpush1.msra.mxu0 %v5184
    %5288 = vmatprep.subr.mxu0 %v5189
    %5289 = vmatpush1.msra.mxu0 %v5188
    %5290 = vmatprep.subr.mxu0 %v5193
    %5291 = vmatpush1.msra.mxu0 %v5192
    %5292 = vmatprep.subr.mxu0 %v5197
    %5293 = vmatpush1.msra.mxu0 %v5196
    %5294 = vmatprep.subr.mxu0 %v5201
    %5295 = vmatpush1.msra.mxu0 %v5200
    %5296 = vmatprep.subr.mxu0 %v5205
    %5297 = vmatpush1.msra.mxu0 %v5204
    %5298 = vmatprep.subr.mxu0 %v5209
    %5299 = vmatpush1.msra.mxu0 %v5208
    %5300 = vmatprep.subr.mxu0 %v5213
    %5301 = vmatpush1.msra.mxu0 %v5212
    %5302 = vmatprep.subr.mxu0 %v5217
    %5303 = vmatpush1.msra.mxu0 %v5216
    %5304 = vmatprep.subr.mxu0 %v5221
    %5305 = vmatpush1.msra.mxu0 %v5220
    %5306 = vmatprep.subr.mxu0 %v5225
    %5307 = vmatpush1.msra.mxu0 %v5224
    %5308 = vmatprep.subr.mxu0 %v5229
    %5309 = vmatpush1.msra.mxu0 %v5228
    %5310 = vmatprep.subr.mxu0 %v5233
    %5311 = vmatpush1.msra.mxu0 %v5232
    %5312 = vmatprep.subr.mxu0 %v5237
    %5313 = vmatpush1.msra.mxu0 %v5236
    %5314 = vmatprep.subr.mxu0 %v5241
    %5315 = vmatpush1.msra.mxu0 %v5240
    %5316 = vmatprep.subr.mxu0 %v5245
    %5317 = vmatpush1.msra.mxu0 %v5244
    %5318 = vmatprep.subr.mxu0 %v5249
    %5319 = vmatpush1.msra.mxu0 %v5248
    %5320 = vmatprep.subr.mxu0 %v5253
    %5321 = vmatpush1.msra.mxu0 %v5252
    %5322 = vmatprep.subr.mxu0 %v5257
    %5323 = vmatpush1.msra.mxu0 %v5256
    %5324 = vmatprep.mubr.f32.mxu0 %v4628
    %5325 = vmatmul.mubr.f32.gmra.mrb[0].mxu0 %v4918
    %v5326 = vpop.f32.mrb[0].mxu0
    %v5327 = vadd.f32 %v488, %v5326
    %v5328 = vpop.f32.mrb[0].mxu0
    %v5329 = vadd.f32 %v492, %v5328
    %5330 = vdwg.mxu0
    %5331 = vmatprep.subr.mxu0 %v5135
    %5332 = vmatpush1.msra.mxu0 %v5134
    %5333 = vmatprep.subr.mxu0 %v5139
    %5334 = vmatpush1.msra.mxu0 %v5138
    %5335 = vmatprep.subr.mxu0 %v5143
    %5336 = vmatpush1.msra.mxu0 %v5142
    %5337 = vmatprep.subr.mxu0 %v5147
    %5338 = vmatpush1.msra.mxu0 %v5146
    %5339 = vmatprep.subr.mxu0 %v5151
    %5340 = vmatpush1.msra.mxu0 %v5150
    %5341 = vmatprep.subr.mxu0 %v5155
    %5342 = vmatpush1.msra.mxu0 %v5154
    %5343 = vmatprep.subr.mxu0 %v5159
    %5344 = vmatpush1.msra.mxu0 %v5158
    %5345 = vmatprep.subr.mxu0 %v5163
    %5346 = vmatpush1.msra.mxu0 %v5162
    %5347 = vmatprep.subr.mxu0 %v5167
    %5348 = vmatpush1.msra.mxu0 %v5166
    %5349 = vmatprep.subr.mxu0 %v5171
    %5350 = vmatpush1.msra.mxu0 %v5170
    %5351 = vmatprep.subr.mxu0 %v5175
    %5352 = vmatpush1.msra.mxu0 %v5174
    %5353 = vmatprep.subr.mxu0 %v5179
    %5354 = vmatpush1.msra.mxu0 %v5178
    %5355 = vmatprep.subr.mxu0 %v5183
    %5356 = vmatpush1.msra.mxu0 %v5182
    %5357 = vmatprep.subr.mxu0 %v5187
    %5358 = vmatpush1.msra.mxu0 %v5186
    %5359 = vmatprep.subr.mxu0 %v5191
    %5360 = vmatpush1.msra.mxu0 %v5190
    %5361 = vmatprep.subr.mxu0 %v5195
    %5362 = vmatpush1.msra.mxu0 %v5194
    %5363 = vmatprep.subr.mxu0 %v5199
    %5364 = vmatpush1.msra.mxu0 %v5198
    %5365 = vmatprep.subr.mxu0 %v5203
    %5366 = vmatpush1.msra.mxu0 %v5202
    %5367 = vmatprep.subr.mxu0 %v5207
    %5368 = vmatpush1.msra.mxu0 %v5206
    %5369 = vmatprep.subr.mxu0 %v5211
    %5370 = vmatpush1.msra.mxu0 %v5210
    %5371 = vmatprep.subr.mxu0 %v5215
    %5372 = vmatpush1.msra.mxu0 %v5214
    %5373 = vmatprep.subr.mxu0 %v5219
    %5374 = vmatpush1.msra.mxu0 %v5218
    %5375 = vmatprep.subr.mxu0 %v5223
    %5376 = vmatpush1.msra.mxu0 %v5222
    %5377 = vmatprep.subr.mxu0 %v5227
    %5378 = vmatpush1.msra.mxu0 %v5226
    %5379 = vmatprep.subr.mxu0 %v5231
    %5380 = vmatpush1.msra.mxu0 %v5230
    %5381 = vmatprep.subr.mxu0 %v5235
    %5382 = vmatpush1.msra.mxu0 %v5234
    %5383 = vmatprep.subr.mxu0 %v5239
    %5384 = vmatpush1.msra.mxu0 %v5238
    %5385 = vmatprep.subr.mxu0 %v5243
    %5386 = vmatpush1.msra.mxu0 %v5242
    %5387 = vmatprep.subr.mxu0 %v5247
    %5388 = vmatpush1.msra.mxu0 %v5246
    %5389 = vmatprep.subr.mxu0 %v5251
    %5390 = vmatpush1.msra.mxu0 %v5250
    %5391 = vmatprep.subr.mxu0 %v5255
    %5392 = vmatpush1.msra.mxu0 %v5254
    %5393 = vmatprep.subr.mxu0 %v5259
    %5394 = vmatpush1.msra.mxu0 %v5258
    %5395 = vmatprep.mubr.f32.mxu0 %v4628
    %5396 = vmatmul.mubr.f32.gmra.mrb[0].mxu0 %v4918
    %v5397 = vpop.f32.mrb[0].mxu0
    %v5398 = vadd.f32 %v496, %v5397
    %v5399 = vpop.f32.mrb[0].mxu0
    %v5400 = vadd.f32 %v500, %v5399
    %5401 = vdwg.mxu0
    %v5402 = vxor.u32 %v5327, 2147483648
    %v5403 = vmul.f32 %v5402, 1.442695
    %v5404 = vpow.pop %v5403
    %v5405 = vadd.f32 %v5404, 1.0
    %v5406 = vrcp.pop %v5405
    %v5407 = vmul.f32 1.0, %v5406
    %v5408 = vxor.u32 %v5329, 2147483648
    %v5409 = vmul.f32 %v5408, 1.442695
    %v5410 = vpow.pop %v5409
    %v5411 = vadd.f32 %v5410, 1.0
    %v5412 = vrcp.pop %v5411
    %v5413 = vmul.f32 1.0, %v5412
    %v5414 = vmul.f32 %v5407, %v5400
    %v5415 = vadd.f32 %v5398, %v5414
    %v5416 = vtanh.pop %v5415
    %v5417 = vsub.f32 1.0, %v5413
    %v5418 = vmul.f32 %v5417, %v5416
    %v5419 = vmul.f32 %v5413, %v4628
    %v5420 = vadd.f32 %v5418, %v5419
    %5421 = vst [vmem:[#allocation3 + $0x28] sm:$0xff] %v5420
    %v5422 = vld [vmem:[#allocation12] sm:$0xff]
    %v5423 = vld [vmem:[#allocation12 + $0x8] sm:$0xff]
    %v5424 = vld [vmem:[#allocation12 + $0x10] sm:$0xff]
    %v5425 = vld [vmem:[#allocation12 + $0x18] sm:$0xff]
    %v5426 = vld [vmem:[#allocation12 + $0x20] sm:$0xff]
    %v5427 = vld [vmem:[#allocation12 + $0x28] sm:$0xff]
    %v5428 = vld [vmem:[#allocation12 + $0x30] sm:$0xff]
    %v5429 = vld [vmem:[#allocation12 + $0x38] sm:$0xff]
    %v5430 = vld [vmem:[#allocation12 + $0x40] sm:$0xff]
    %v5431 = vld [vmem:[#allocation12 + $0x48] sm:$0xff]
    %v5432 = vld [vmem:[#allocation12 + $0x50] sm:$0xff]
    %v5433 = vld [vmem:[#allocation12 + $0x58] sm:$0xff]
    %v5434 = vld [vmem:[#allocation12 + $0x60] sm:$0xff]
    %v5435 = vld [vmem:[#allocation12 + $0x68] sm:$0xff]
    %v5436 = vld [vmem:[#allocation12 + $0x70] sm:$0xff]
    %v5437 = vld [vmem:[#allocation12 + $0x78] sm:$0xff]
    %v5438 = vld [vmem:[#allocation12 + $0x80] sm:$0xff]
    %v5439 = vld [vmem:[#allocation12 + $0x88] sm:$0xff]
    %v5440 = vld [vmem:[#allocation12 + $0x90] sm:$0xff]
    %v5441 = vld [vmem:[#allocation12 + $0x98] sm:$0xff]
    %v5442 = vld [vmem:[#allocation12 + $0xa0] sm:$0xff]
    %v5443 = vld [vmem:[#allocation12 + $0xa8] sm:$0xff]
    %v5444 = vld [vmem:[#allocation12 + $0xb0] sm:$0xff]
    %v5445 = vld [vmem:[#allocation12 + $0xb8] sm:$0xff]
    %v5446 = vld [vmem:[#allocation12 + $0xc0] sm:$0xff]
    %v5447 = vld [vmem:[#allocation12 + $0xc8] sm:$0xff]
    %v5448 = vld [vmem:[#allocation12 + $0xd0] sm:$0xff]
    %v5449 = vld [vmem:[#allocation12 + $0xd8] sm:$0xff]
    %v5450 = vld [vmem:[#allocation12 + $0xe0] sm:$0xff]
    %v5451 = vld [vmem:[#allocation12 + $0xe8] sm:$0xff]
    %v5452 = vld [vmem:[#allocation12 + $0xf0] sm:$0xff]
    %v5453 = vld [vmem:[#allocation12 + $0xf8] sm:$0xff]
    %v5454 = vld [vmem:[#allocation12 + $0x100] sm:$0xff]
    %v5455 = vld [vmem:[#allocation12 + $0x108] sm:$0xff]
    %v5456 = vld [vmem:[#allocation12 + $0x110] sm:$0xff]
    %v5457 = vld [vmem:[#allocation12 + $0x118] sm:$0xff]
    %v5458 = vld [vmem:[#allocation12 + $0x120] sm:$0xff]
    %v5459 = vld [vmem:[#allocation12 + $0x128] sm:$0xff]
    %v5460 = vld [vmem:[#allocation12 + $0x130] sm:$0xff]
    %v5461 = vld [vmem:[#allocation12 + $0x138] sm:$0xff]
    %v5462 = vld [vmem:[#allocation12 + $0x140] sm:$0xff]
    %v5463 = vld [vmem:[#allocation12 + $0x148] sm:$0xff]
    %v5464 = vld [vmem:[#allocation12 + $0x150] sm:$0xff]
    %v5465 = vld [vmem:[#allocation12 + $0x158] sm:$0xff]
    %v5466 = vld [vmem:[#allocation12 + $0x160] sm:$0xff]
    %v5467 = vld [vmem:[#allocation12 + $0x168] sm:$0xff]
    %v5468 = vld [vmem:[#allocation12 + $0x170] sm:$0xff]
    %v5469 = vld [vmem:[#allocation12 + $0x178] sm:$0xff]
    %v5470 = vld [vmem:[#allocation12 + $0x180] sm:$0xff]
    %v5471 = vld [vmem:[#allocation12 + $0x188] sm:$0xff]
    %v5472 = vld [vmem:[#allocation12 + $0x190] sm:$0xff]
    %v5473 = vld [vmem:[#allocation12 + $0x198] sm:$0xff]
    %v5474 = vld [vmem:[#allocation12 + $0x1a0] sm:$0xff]
    %v5475 = vld [vmem:[#allocation12 + $0x1a8] sm:$0xff]
    %v5476 = vld [vmem:[#allocation12 + $0x1b0] sm:$0xff]
    %v5477 = vld [vmem:[#allocation12 + $0x1b8] sm:$0xff]
    %v5478 = vld [vmem:[#allocation12 + $0x1c0] sm:$0xff]
    %v5479 = vld [vmem:[#allocation12 + $0x1c8] sm:$0xff]
    %v5480 = vld [vmem:[#allocation12 + $0x1d0] sm:$0xff]
    %v5481 = vld [vmem:[#allocation12 + $0x1d8] sm:$0xff]
    %v5482 = vld [vmem:[#allocation12 + $0x1e0] sm:$0xff]
    %v5483 = vld [vmem:[#allocation12 + $0x1e8] sm:$0xff]
    %v5484 = vld [vmem:[#allocation12 + $0x1f0] sm:$0xff]
    %v5485 = vld [vmem:[#allocation12 + $0x1f8] sm:$0xff]
    %v5486 = vld [vmem:[#allocation12 + $0x200] sm:$0xff]
    %v5487 = vld [vmem:[#allocation12 + $0x208] sm:$0xff]
    %v5488 = vld [vmem:[#allocation12 + $0x210] sm:$0xff]
    %v5489 = vld [vmem:[#allocation12 + $0x218] sm:$0xff]
    %v5490 = vld [vmem:[#allocation12 + $0x220] sm:$0xff]
    %v5491 = vld [vmem:[#allocation12 + $0x228] sm:$0xff]
    %v5492 = vld [vmem:[#allocation12 + $0x230] sm:$0xff]
    %v5493 = vld [vmem:[#allocation12 + $0x238] sm:$0xff]
    %v5494 = vld [vmem:[#allocation12 + $0x240] sm:$0xff]
    %v5495 = vld [vmem:[#allocation12 + $0x248] sm:$0xff]
    %v5496 = vld [vmem:[#allocation12 + $0x250] sm:$0xff]
    %v5497 = vld [vmem:[#allocation12 + $0x258] sm:$0xff]
    %v5498 = vld [vmem:[#allocation12 + $0x260] sm:$0xff]
    %v5499 = vld [vmem:[#allocation12 + $0x268] sm:$0xff]
    %v5500 = vld [vmem:[#allocation12 + $0x270] sm:$0xff]
    %v5501 = vld [vmem:[#allocation12 + $0x278] sm:$0xff]
    %v5502 = vld [vmem:[#allocation12 + $0x280] sm:$0xff]
    %v5503 = vld [vmem:[#allocation12 + $0x288] sm:$0xff]
    %v5504 = vld [vmem:[#allocation12 + $0x290] sm:$0xff]
    %v5505 = vld [vmem:[#allocation12 + $0x298] sm:$0xff]
    %v5506 = vld [vmem:[#allocation12 + $0x2a0] sm:$0xff]
    %v5507 = vld [vmem:[#allocation12 + $0x2a8] sm:$0xff]
    %v5508 = vld [vmem:[#allocation12 + $0x2b0] sm:$0xff]
    %v5509 = vld [vmem:[#allocation12 + $0x2b8] sm:$0xff]
    %v5510 = vld [vmem:[#allocation12 + $0x2c0] sm:$0xff]
    %v5511 = vld [vmem:[#allocation12 + $0x2c8] sm:$0xff]
    %v5512 = vld [vmem:[#allocation12 + $0x2d0] sm:$0xff]
    %v5513 = vld [vmem:[#allocation12 + $0x2d8] sm:$0xff]
    %v5514 = vld [vmem:[#allocation12 + $0x2e0] sm:$0xff]
    %v5515 = vld [vmem:[#allocation12 + $0x2e8] sm:$0xff]
    %v5516 = vld [vmem:[#allocation12 + $0x2f0] sm:$0xff]
    %v5517 = vld [vmem:[#allocation12 + $0x2f8] sm:$0xff]
    %v5518 = vld [vmem:[#allocation12 + $0x300] sm:$0xff]
    %v5519 = vld [vmem:[#allocation12 + $0x308] sm:$0xff]
    %v5520 = vld [vmem:[#allocation12 + $0x310] sm:$0xff]
    %v5521 = vld [vmem:[#allocation12 + $0x318] sm:$0xff]
    %v5522 = vld [vmem:[#allocation12 + $0x320] sm:$0xff]
    %v5523 = vld [vmem:[#allocation12 + $0x328] sm:$0xff]
    %v5524 = vld [vmem:[#allocation12 + $0x330] sm:$0xff]
    %v5525 = vld [vmem:[#allocation12 + $0x338] sm:$0xff]
    %v5526 = vld [vmem:[#allocation12 + $0x340] sm:$0xff]
    %v5527 = vld [vmem:[#allocation12 + $0x348] sm:$0xff]
    %v5528 = vld [vmem:[#allocation12 + $0x350] sm:$0xff]
    %v5529 = vld [vmem:[#allocation12 + $0x358] sm:$0xff]
    %v5530 = vld [vmem:[#allocation12 + $0x360] sm:$0xff]
    %v5531 = vld [vmem:[#allocation12 + $0x368] sm:$0xff]
    %v5532 = vld [vmem:[#allocation12 + $0x370] sm:$0xff]
    %v5533 = vld [vmem:[#allocation12 + $0x378] sm:$0xff]
    %v5534 = vld [vmem:[#allocation12 + $0x380] sm:$0xff]
    %v5535 = vld [vmem:[#allocation12 + $0x388] sm:$0xff]
    %v5536 = vld [vmem:[#allocation12 + $0x390] sm:$0xff]
    %v5537 = vld [vmem:[#allocation12 + $0x398] sm:$0xff]
    %v5538 = vld [vmem:[#allocation12 + $0x3a0] sm:$0xff]
    %v5539 = vld [vmem:[#allocation12 + $0x3a8] sm:$0xff]
    %v5540 = vld [vmem:[#allocation12 + $0x3b0] sm:$0xff]
    %v5541 = vld [vmem:[#allocation12 + $0x3b8] sm:$0xff]
    %v5542 = vld [vmem:[#allocation12 + $0x3c0] sm:$0xff]
    %v5543 = vld [vmem:[#allocation12 + $0x3c8] sm:$0xff]
    %v5544 = vld [vmem:[#allocation12 + $0x3d0] sm:$0xff]
    %v5545 = vld [vmem:[#allocation12 + $0x3d8] sm:$0xff]
    %v5546 = vld [vmem:[#allocation12 + $0x3e0] sm:$0xff]
    %v5547 = vld [vmem:[#allocation12 + $0x3e8] sm:$0xff]
    %v5548 = vld [vmem:[#allocation12 + $0x3f0] sm:$0xff]
    %v5549 = vld [vmem:[#allocation12 + $0x3f8] sm:$0xff]
    %5550 = vmatprep.subr.mxu0 %v5423
    %5551 = vmatpush1.msra.mxu0 %v5422
    %5552 = vmatprep.subr.mxu0 %v5427
    %5553 = vmatpush1.msra.mxu0 %v5426
    %5554 = vmatprep.subr.mxu0 %v5431
    %5555 = vmatpush1.msra.mxu0 %v5430
    %5556 = vmatprep.subr.mxu0 %v5435
    %5557 = vmatpush1.msra.mxu0 %v5434
    %5558 = vmatprep.subr.mxu0 %v5439
    %5559 = vmatpush1.msra.mxu0 %v5438
    %5560 = vmatprep.subr.mxu0 %v5443
    %5561 = vmatpush1.msra.mxu0 %v5442
    %5562 = vmatprep.subr.mxu0 %v5447
    %5563 = vmatpush1.msra.mxu0 %v5446
    %5564 = vmatprep.subr.mxu0 %v5451
    %5565 = vmatpush1.msra.mxu0 %v5450
    %5566 = vmatprep.subr.mxu0 %v5455
    %5567 = vmatpush1.msra.mxu0 %v5454
    %5568 = vmatprep.subr.mxu0 %v5459
    %5569 = vmatpush1.msra.mxu0 %v5458
    %5570 = vmatprep.subr.mxu0 %v5463
    %5571 = vmatpush1.msra.mxu0 %v5462
    %5572 = vmatprep.subr.mxu0 %v5467
    %5573 = vmatpush1.msra.mxu0 %v5466
    %5574 = vmatprep.subr.mxu0 %v5471
    %5575 = vmatpush1.msra.mxu0 %v5470
    %5576 = vmatprep.subr.mxu0 %v5475
    %5577 = vmatpush1.msra.mxu0 %v5474
    %5578 = vmatprep.subr.mxu0 %v5479
    %5579 = vmatpush1.msra.mxu0 %v5478
    %5580 = vmatprep.subr.mxu0 %v5483
    %5581 = vmatpush1.msra.mxu0 %v5482
    %5582 = vmatprep.subr.mxu0 %v5487
    %5583 = vmatpush1.msra.mxu0 %v5486
    %5584 = vmatprep.subr.mxu0 %v5491
    %5585 = vmatpush1.msra.mxu0 %v5490
    %5586 = vmatprep.subr.mxu0 %v5495
    %5587 = vmatpush1.msra.mxu0 %v5494
    %5588 = vmatprep.subr.mxu0 %v5499
    %5589 = vmatpush1.msra.mxu0 %v5498
    %5590 = vmatprep.subr.mxu0 %v5503
    %5591 = vmatpush1.msra.mxu0 %v5502
    %5592 = vmatprep.subr.mxu0 %v5507
    %5593 = vmatpush1.msra.mxu0 %v5506
    %5594 = vmatprep.subr.mxu0 %v5511
    %5595 = vmatpush1.msra.mxu0 %v5510
    %5596 = vmatprep.subr.mxu0 %v5515
    %5597 = vmatpush1.msra.mxu0 %v5514
    %5598 = vmatprep.subr.mxu0 %v5519
    %5599 = vmatpush1.msra.mxu0 %v5518
    %5600 = vmatprep.subr.mxu0 %v5523
    %5601 = vmatpush1.msra.mxu0 %v5522
    %5602 = vmatprep.subr.mxu0 %v5527
    %5603 = vmatpush1.msra.mxu0 %v5526
    %5604 = vmatprep.subr.mxu0 %v5531
    %5605 = vmatpush1.msra.mxu0 %v5530
    %5606 = vmatprep.subr.mxu0 %v5535
    %5607 = vmatpush1.msra.mxu0 %v5534
    %5608 = vmatprep.subr.mxu0 %v5539
    %5609 = vmatpush1.msra.mxu0 %v5538
    %5610 = vmatprep.subr.mxu0 %v5543
    %5611 = vmatpush1.msra.mxu0 %v5542
    %5612 = vmatprep.subr.mxu0 %v5547
    %5613 = vmatpush1.msra.mxu0 %v5546
    %5614 = vmatprep.mubr.f32.mxu0 %v4918
    %5615 = vmatmul.mubr.f32.gmra.mrb[0].mxu0 %v5131
    %v5616 = vpop.f32.mrb[0].mxu0
    %v5617 = vadd.f32 %v466, %v5616
    %v5618 = vpop.f32.mrb[0].mxu0
    %v5619 = vadd.f32 %v470, %v5618
    %5620 = vdwg.mxu0
    %5621 = vmatprep.subr.mxu0 %v5425
    %5622 = vmatpush1.msra.mxu0 %v5424
    %5623 = vmatprep.subr.mxu0 %v5429
    %5624 = vmatpush1.msra.mxu0 %v5428
    %5625 = vmatprep.subr.mxu0 %v5433
    %5626 = vmatpush1.msra.mxu0 %v5432
    %5627 = vmatprep.subr.mxu0 %v5437
    %5628 = vmatpush1.msra.mxu0 %v5436
    %5629 = vmatprep.subr.mxu0 %v5441
    %5630 = vmatpush1.msra.mxu0 %v5440
    %5631 = vmatprep.subr.mxu0 %v5445
    %5632 = vmatpush1.msra.mxu0 %v5444
    %5633 = vmatprep.subr.mxu0 %v5449
    %5634 = vmatpush1.msra.mxu0 %v5448
    %5635 = vmatprep.subr.mxu0 %v5453
    %5636 = vmatpush1.msra.mxu0 %v5452
    %5637 = vmatprep.subr.mxu0 %v5457
    %5638 = vmatpush1.msra.mxu0 %v5456
    %5639 = vmatprep.subr.mxu0 %v5461
    %5640 = vmatpush1.msra.mxu0 %v5460
    %5641 = vmatprep.subr.mxu0 %v5465
    %5642 = vmatpush1.msra.mxu0 %v5464
    %5643 = vmatprep.subr.mxu0 %v5469
    %5644 = vmatpush1.msra.mxu0 %v5468
    %5645 = vmatprep.subr.mxu0 %v5473
    %5646 = vmatpush1.msra.mxu0 %v5472
    %5647 = vmatprep.subr.mxu0 %v5477
    %5648 = vmatpush1.msra.mxu0 %v5476
    %5649 = vmatprep.subr.mxu0 %v5481
    %5650 = vmatpush1.msra.mxu0 %v5480
    %5651 = vmatprep.subr.mxu0 %v5485
    %5652 = vmatpush1.msra.mxu0 %v5484
    %5653 = vmatprep.subr.mxu0 %v5489
    %5654 = vmatpush1.msra.mxu0 %v5488
    %5655 = vmatprep.subr.mxu0 %v5493
    %5656 = vmatpush1.msra.mxu0 %v5492
    %5657 = vmatprep.subr.mxu0 %v5497
    %5658 = vmatpush1.msra.mxu0 %v5496
    %5659 = vmatprep.subr.mxu0 %v5501
    %5660 = vmatpush1.msra.mxu0 %v5500
    %5661 = vmatprep.subr.mxu0 %v5505
    %5662 = vmatpush1.msra.mxu0 %v5504
    %5663 = vmatprep.subr.mxu0 %v5509
    %5664 = vmatpush1.msra.mxu0 %v5508
    %5665 = vmatprep.subr.mxu0 %v5513
    %5666 = vmatpush1.msra.mxu0 %v5512
    %5667 = vmatprep.subr.mxu0 %v5517
    %5668 = vmatpush1.msra.mxu0 %v5516
    %5669 = vmatprep.subr.mxu0 %v5521
    %5670 = vmatpush1.msra.mxu0 %v5520
    %5671 = vmatprep.subr.mxu0 %v5525
    %5672 = vmatpush1.msra.mxu0 %v5524
    %5673 = vmatprep.subr.mxu0 %v5529
    %5674 = vmatpush1.msra.mxu0 %v5528
    %5675 = vmatprep.subr.mxu0 %v5533
    %5676 = vmatpush1.msra.mxu0 %v5532
    %5677 = vmatprep.subr.mxu0 %v5537
    %5678 = vmatpush1.msra.mxu0 %v5536
    %5679 = vmatprep.subr.mxu0 %v5541
    %5680 = vmatpush1.msra.mxu0 %v5540
    %5681 = vmatprep.subr.mxu0 %v5545
    %5682 = vmatpush1.msra.mxu0 %v5544
    %5683 = vmatprep.subr.mxu0 %v5549
    %5684 = vmatpush1.msra.mxu0 %v5548
    %5685 = vmatprep.mubr.f32.mxu0 %v4918
    %5686 = vmatmul.mubr.f32.gmra.mrb[0].mxu0 %v5131
    %v5687 = vpop.f32.mrb[0].mxu0
    %v5688 = vadd.f32 %v474, %v5687
    %v5689 = vpop.f32.mrb[0].mxu0
    %v5690 = vadd.f32 %v478, %v5689
    %5691 = vdwg.mxu0
    %v5692 = vxor.u32 %v5617, 2147483648
    %v5693 = vmul.f32 %v5692, 1.442695
    %v5694 = vpow.pop %v5693
    %v5695 = vadd.f32 %v5694, 1.0
    %v5696 = vrcp.pop %v5695
    %v5697 = vmul.f32 1.0, %v5696
    %v5698 = vxor.u32 %v5619, 2147483648
    %v5699 = vmul.f32 %v5698, 1.442695
    %v5700 = vpow.pop %v5699
    %v5701 = vadd.f32 %v5700, 1.0
    %v5702 = vrcp.pop %v5701
    %v5703 = vmul.f32 1.0, %v5702
    %v5704 = vmul.f32 %v5697, %v5690
    %v5705 = vadd.f32 %v5688, %v5704
    %v5706 = vtanh.pop %v5705
    %v5707 = vsub.f32 1.0, %v5703
    %v5708 = vmul.f32 %v5707, %v5706
    %v5709 = vmul.f32 %v5703, %v4918
    %v5710 = vadd.f32 %v5708, %v5709
    %v5711 = vld [vmem:[#allocation2 + $0xa8] sm:$0xff]
    %v5712 = vld [vmem:[#allocation2 + $0xb0] sm:$0xff]
    %v5713 = vld [vmem:[#allocation2 + $0xb8] sm:$0xff]
    %v5714 = vld [vmem:[#allocation9] sm:$0xff]
    %v5715 = vld [vmem:[#allocation9 + $0x8] sm:$0xff]
    %v5716 = vld [vmem:[#allocation9 + $0x10] sm:$0xff]
    %v5717 = vld [vmem:[#allocation9 + $0x18] sm:$0xff]
    %v5718 = vld [vmem:[#allocation9 + $0x20] sm:$0xff]
    %v5719 = vld [vmem:[#allocation9 + $0x28] sm:$0xff]
    %v5720 = vld [vmem:[#allocation9 + $0x30] sm:$0xff]
    %v5721 = vld [vmem:[#allocation9 + $0x38] sm:$0xff]
    %v5722 = vld [vmem:[#allocation9 + $0x40] sm:$0xff]
    %v5723 = vld [vmem:[#allocation9 + $0x48] sm:$0xff]
    %v5724 = vld [vmem:[#allocation9 + $0x50] sm:$0xff]
    %v5725 = vld [vmem:[#allocation9 + $0x58] sm:$0xff]
    %v5726 = vld [vmem:[#allocation9 + $0x60] sm:$0xff]
    %v5727 = vld [vmem:[#allocation9 + $0x68] sm:$0xff]
    %v5728 = vld [vmem:[#allocation9 + $0x70] sm:$0xff]
    %v5729 = vld [vmem:[#allocation9 + $0x78] sm:$0xff]
    %v5730 = vld [vmem:[#allocation9 + $0x80] sm:$0xff]
    %v5731 = vld [vmem:[#allocation9 + $0x88] sm:$0xff]
    %v5732 = vld [vmem:[#allocation9 + $0x90] sm:$0xff]
    %v5733 = vld [vmem:[#allocation9 + $0x98] sm:$0xff]
    %v5734 = vld [vmem:[#allocation9 + $0xa0] sm:$0xff]
    %v5735 = vld [vmem:[#allocation9 + $0xa8] sm:$0xff]
    %v5736 = vld [vmem:[#allocation9 + $0xb0] sm:$0xff]
    %v5737 = vld [vmem:[#allocation9 + $0xb8] sm:$0xff]
    %v5738 = vld [vmem:[#allocation9 + $0xc0] sm:$0xff]
    %v5739 = vld [vmem:[#allocation9 + $0xc8] sm:$0xff]
    %v5740 = vld [vmem:[#allocation9 + $0xd0] sm:$0xff]
    %v5741 = vld [vmem:[#allocation9 + $0xd8] sm:$0xff]
    %v5742 = vld [vmem:[#allocation9 + $0xe0] sm:$0xff]
    %v5743 = vld [vmem:[#allocation9 + $0xe8] sm:$0xff]
    %v5744 = vld [vmem:[#allocation9 + $0xf0] sm:$0xff]
    %v5745 = vld [vmem:[#allocation9 + $0xf8] sm:$0xff]
    %v5746 = vld [vmem:[#allocation9 + $0x100] sm:$0xff]
    %v5747 = vld [vmem:[#allocation9 + $0x108] sm:$0xff]
    %v5748 = vld [vmem:[#allocation9 + $0x110] sm:$0xff]
    %v5749 = vld [vmem:[#allocation9 + $0x118] sm:$0xff]
    %v5750 = vld [vmem:[#allocation9 + $0x120] sm:$0xff]
    %v5751 = vld [vmem:[#allocation9 + $0x128] sm:$0xff]
    %v5752 = vld [vmem:[#allocation9 + $0x130] sm:$0xff]
    %v5753 = vld [vmem:[#allocation9 + $0x138] sm:$0xff]
    %v5754 = vld [vmem:[#allocation9 + $0x140] sm:$0xff]
    %v5755 = vld [vmem:[#allocation9 + $0x148] sm:$0xff]
    %v5756 = vld [vmem:[#allocation9 + $0x150] sm:$0xff]
    %v5757 = vld [vmem:[#allocation9 + $0x158] sm:$0xff]
    %v5758 = vld [vmem:[#allocation9 + $0x160] sm:$0xff]
    %v5759 = vld [vmem:[#allocation9 + $0x168] sm:$0xff]
    %v5760 = vld [vmem:[#allocation9 + $0x170] sm:$0xff]
    %v5761 = vld [vmem:[#allocation9 + $0x178] sm:$0xff]
    %5762 = vmatprep.subr.mxu0 %v5715
    %5763 = vmatpush1.msra.mxu0 %v5714
    %5764 = vmatprep.subr.mxu0 %v5718
    %5765 = vmatpush1.msra.mxu0 %v5717
    %5766 = vmatprep.subr.mxu0 %v5721
    %5767 = vmatpush1.msra.mxu0 %v5720
    %5768 = vmatprep.subr.mxu0 %v5724
    %5769 = vmatpush1.msra.mxu0 %v5723
    %5770 = vmatprep.subr.mxu0 %v5727
    %5771 = vmatpush1.msra.mxu0 %v5726
    %5772 = vmatprep.subr.mxu0 %v5730
    %5773 = vmatpush1.msra.mxu0 %v5729
    %5774 = vmatprep.subr.mxu0 %v5733
    %5775 = vmatpush1.msra.mxu0 %v5732
    %5776 = vmatprep.subr.mxu0 %v5736
    %5777 = vmatpush1.msra.mxu0 %v5735
    %5778 = vmatprep.subr.mxu0 %v5739
    %5779 = vmatpush1.msra.mxu0 %v5738
    %5780 = vmatprep.subr.mxu0 %v5742
    %5781 = vmatpush1.msra.mxu0 %v5741
    %5782 = vmatprep.subr.mxu0 %v5745
    %5783 = vmatpush1.msra.mxu0 %v5744
    %5784 = vmatprep.subr.mxu0 %v5748
    %5785 = vmatpush1.msra.mxu0 %v5747
    %5786 = vmatprep.subr.mxu0 %v5751
    %5787 = vmatpush1.msra.mxu0 %v5750
    %5788 = vmatprep.subr.mxu0 %v5754
    %5789 = vmatpush1.msra.mxu0 %v5753
    %5790 = vmatprep.subr.mxu0 %v5757
    %5791 = vmatpush1.msra.mxu0 %v5756
    %5792 = vmatprep.subr.mxu0 %v5760
    %5793 = vmatpush1.msra.mxu0 %v5759
    %5794 = vmatprep.subr.mxu0 0.0
    %5795 = vmatpush1.msra.mxu0 0.0
    %5796 = vmatprep.subr.mxu0 0.0
    %5797 = vmatpush1.msra.mxu0 0.0
    %5798 = vmatprep.subr.mxu0 0.0
    %5799 = vmatpush1.msra.mxu0 0.0
    %5800 = vmatprep.subr.mxu0 0.0
    %5801 = vmatpush1.msra.mxu0 0.0
    %5802 = vmatprep.subr.mxu0 0.0
    %5803 = vmatpush1.msra.mxu0 0.0
    %5804 = vmatprep.subr.mxu0 0.0
    %5805 = vmatpush1.msra.mxu0 0.0
    %5806 = vmatprep.subr.mxu0 0.0
    %5807 = vmatpush1.msra.mxu0 0.0
    %5808 = vmatprep.subr.mxu0 0.0
    %5809 = vmatpush1.msra.mxu0 0.0
    %5810 = vmatprep.subr.mxu0 0.0
    %5811 = vmatpush1.msra.mxu0 0.0
    %5812 = vmatprep.subr.mxu0 0.0
    %5813 = vmatpush1.msra.mxu0 0.0
    %5814 = vmatprep.subr.mxu0 0.0
    %5815 = vmatpush1.msra.mxu0 0.0
    %5816 = vmatprep.subr.mxu0 0.0
    %5817 = vmatpush1.msra.mxu0 0.0
    %5818 = vmatprep.subr.mxu0 0.0
    %5819 = vmatpush1.msra.mxu0 0.0
    %5820 = vmatprep.subr.mxu0 0.0
    %5821 = vmatpush1.msra.mxu0 0.0
    %5822 = vmatprep.subr.mxu0 0.0
    %5823 = vmatpush1.msra.mxu0 0.0
    %5824 = vmatprep.subr.mxu0 0.0
    %5825 = vmatpush1.msra.mxu0 0.0
    %5826 = vmatprep.mubr.f32.mxu0 0.0
    %5827 = vmatmul.mubr.f32.gmra.mrb[0].mxu0 %v5131
    %v5828 = vpop.f32.mrb[0].mxu0
    %v5829 = vadd.f32 %v449, %v5828
    %v5830 = vpop.f32.mrb[0].mxu0
    %v5831 = vadd.f32 %v453, %v5830
    %5832 = vdwg.mxu0
    %5833 = vmatprep.subr.mxu0 0.0
    %5834 = vmatpush1.msra.mxu0 %v5716
    %5835 = vmatprep.subr.mxu0 0.0
    %5836 = vmatpush1.msra.mxu0 %v5719
    %5837 = vmatprep.subr.mxu0 0.0
    %5838 = vmatpush1.msra.mxu0 %v5722
    %5839 = vmatprep.subr.mxu0 0.0
    %5840 = vmatpush1.msra.mxu0 %v5725
    %5841 = vmatprep.subr.mxu0 0.0
    %5842 = vmatpush1.msra.mxu0 %v5728
    %5843 = vmatprep.subr.mxu0 0.0
    %5844 = vmatpush1.msra.mxu0 %v5731
    %5845 = vmatprep.subr.mxu0 0.0
    %5846 = vmatpush1.msra.mxu0 %v5734
    %5847 = vmatprep.subr.mxu0 0.0
    %5848 = vmatpush1.msra.mxu0 %v5737
    %5849 = vmatprep.subr.mxu0 0.0
    %5850 = vmatpush1.msra.mxu0 %v5740
    %5851 = vmatprep.subr.mxu0 0.0
    %5852 = vmatpush1.msra.mxu0 %v5743
    %5853 = vmatprep.subr.mxu0 0.0
    %5854 = vmatpush1.msra.mxu0 %v5746
    %5855 = vmatprep.subr.mxu0 0.0
    %5856 = vmatpush1.msra.mxu0 %v5749
    %5857 = vmatprep.subr.mxu0 0.0
    %5858 = vmatpush1.msra.mxu0 %v5752
    %5859 = vmatprep.subr.mxu0 0.0
    %5860 = vmatpush1.msra.mxu0 %v5755
    %5861 = vmatprep.subr.mxu0 0.0
    %5862 = vmatpush1.msra.mxu0 %v5758
    %5863 = vmatprep.subr.mxu0 0.0
    %5864 = vmatpush1.msra.mxu0 %v5761
    %5865 = vmatprep.subr.mxu0 0.0
    %5866 = vmatpush1.msra.mxu0 0.0
    %5867 = vmatprep.subr.mxu0 0.0
    %5868 = vmatpush1.msra.mxu0 0.0
    %5869 = vmatprep.subr.mxu0 0.0
    %5870 = vmatpush1.msra.mxu0 0.0
    %5871 = vmatprep.subr.mxu0 0.0
    %5872 = vmatpush1.msra.mxu0 0.0
    %5873 = vmatprep.subr.mxu0 0.0
    %5874 = vmatpush1.msra.mxu0 0.0
    %5875 = vmatprep.subr.mxu0 0.0
    %5876 = vmatpush1.msra.mxu0 0.0
    %5877 = vmatprep.subr.mxu0 0.0
    %5878 = vmatpush1.msra.mxu0 0.0
    %5879 = vmatprep.subr.mxu0 0.0
    %5880 = vmatpush1.msra.mxu0 0.0
    %5881 = vmatprep.subr.mxu0 0.0
    %5882 = vmatpush1.msra.mxu0 0.0
    %5883 = vmatprep.subr.mxu0 0.0
    %5884 = vmatpush1.msra.mxu0 0.0
    %5885 = vmatprep.subr.mxu0 0.0
    %5886 = vmatpush1.msra.mxu0 0.0
    %5887 = vmatprep.subr.mxu0 0.0
    %5888 = vmatpush1.msra.mxu0 0.0
    %5889 = vmatprep.subr.mxu0 0.0
    %5890 = vmatpush1.msra.mxu0 0.0
    %5891 = vmatprep.subr.mxu0 0.0
    %5892 = vmatpush1.msra.mxu0 0.0
    %5893 = vmatprep.subr.mxu0 0.0
    %5894 = vmatpush1.msra.mxu0 0.0
    %5895 = vmatprep.subr.mxu0 0.0
    %5896 = vmatpush1.msra.mxu0 0.0
    %5897 = vmatprep.mubr.f32.mxu0 0.0
    %5898 = vmatmul.mubr.f32.gmra.mrb[0].mxu0 %v5131
    %v5899 = vpop.f32.mrb[0].mxu0
    %v5900 = vadd.f32 %v457, %v5899
    %v5901 = vpop.f32.mrb[0].mxu0
    %5902 = vdwg.mxu0
    %v5903 = vadd.f32 %v5711, %v5829
    %v5904 = vxor.u32 %v5903, 2147483648
    %v5905 = vmul.f32 %v5904, 1.442695
    %v5906 = vpow.pop %v5905
    %v5907 = vadd.f32 %v5906, 1.0
    %v5908 = vrcp.pop %v5907
    %v5909 = vmul.f32 1.0, %v5908
    %v5910 = vadd.f32 %v5712, %v5831
    %v5911 = vxor.u32 %v5910, 2147483648
    %v5912 = vmul.f32 %v5911, 1.442695
    %v5913 = vpow.pop %v5912
    %v5914 = vadd.f32 %v5913, 1.0
    %v5915 = vrcp.pop %v5914
    %v5916 = vmul.f32 1.0, %v5915
    %v5917 = vmul.f32 %v5909, %v5900
    %v5918 = vadd.f32 %v5713, %v5917
    %v5919 = vtanh.pop %v5918
    %v5920 = vsub.f32 1.0, %v5916
    %v5921 = vmul.f32 %v5920, %v5919
    %v5922 = vmul.f32 %v5916, %v5131
    %v5923 = vadd.f32 %v5921, %v5922
    %v5924 = vld [vmem:[#allocation15] sm:$0xff]
    %v5925 = vld [vmem:[#allocation15 + $0x8] sm:$0xff]
    %v5926 = vld [vmem:[#allocation15 + $0x10] sm:$0xff]
    %v5927 = vld [vmem:[#allocation15 + $0x18] sm:$0xff]
    %v5928 = vld [vmem:[#allocation15 + $0x20] sm:$0xff]
    %v5929 = vld [vmem:[#allocation15 + $0x28] sm:$0xff]
    %v5930 = vld [vmem:[#allocation15 + $0x30] sm:$0xff]
    %v5931 = vld [vmem:[#allocation15 + $0x38] sm:$0xff]
    %v5932 = vld [vmem:[#allocation15 + $0x40] sm:$0xff]
    %v5933 = vld [vmem:[#allocation15 + $0x48] sm:$0xff]
    %v5934 = vld [vmem:[#allocation15 + $0x50] sm:$0xff]
    %v5935 = vld [vmem:[#allocation15 + $0x58] sm:$0xff]
    %v5936 = vld [vmem:[#allocation15 + $0x60] sm:$0xff]
    %v5937 = vld [vmem:[#allocation15 + $0x68] sm:$0xff]
    %v5938 = vld [vmem:[#allocation15 + $0x70] sm:$0xff]
    %v5939 = vld [vmem:[#allocation15 + $0x78] sm:$0xff]
    %v5940 = vld [vmem:[#allocation15 + $0x80] sm:$0xff]
    %v5941 = vld [vmem:[#allocation15 + $0x88] sm:$0xff]
    %v5942 = vld [vmem:[#allocation15 + $0x90] sm:$0xff]
    %v5943 = vld [vmem:[#allocation15 + $0x98] sm:$0xff]
    %v5944 = vld [vmem:[#allocation15 + $0xa0] sm:$0xff]
    %v5945 = vld [vmem:[#allocation15 + $0xa8] sm:$0xff]
    %v5946 = vld [vmem:[#allocation15 + $0xb0] sm:$0xff]
    %v5947 = vld [vmem:[#allocation15 + $0xb8] sm:$0xff]
    %v5948 = vld [vmem:[#allocation15 + $0xc0] sm:$0xff]
    %v5949 = vld [vmem:[#allocation15 + $0xc8] sm:$0xff]
    %v5950 = vld [vmem:[#allocation15 + $0xd0] sm:$0xff]
    %v5951 = vld [vmem:[#allocation15 + $0xd8] sm:$0xff]
    %v5952 = vld [vmem:[#allocation15 + $0xe0] sm:$0xff]
    %v5953 = vld [vmem:[#allocation15 + $0xe8] sm:$0xff]
    %v5954 = vld [vmem:[#allocation15 + $0xf0] sm:$0xff]
    %v5955 = vld [vmem:[#allocation15 + $0xf8] sm:$0xff]
    %v5956 = vld [vmem:[#allocation15 + $0x100] sm:$0xff]
    %v5957 = vld [vmem:[#allocation15 + $0x108] sm:$0xff]
    %v5958 = vld [vmem:[#allocation15 + $0x110] sm:$0xff]
    %v5959 = vld [vmem:[#allocation15 + $0x118] sm:$0xff]
    %v5960 = vld [vmem:[#allocation15 + $0x120] sm:$0xff]
    %v5961 = vld [vmem:[#allocation15 + $0x128] sm:$0xff]
    %v5962 = vld [vmem:[#allocation15 + $0x130] sm:$0xff]
    %v5963 = vld [vmem:[#allocation15 + $0x138] sm:$0xff]
    %v5964 = vld [vmem:[#allocation15 + $0x140] sm:$0xff]
    %v5965 = vld [vmem:[#allocation15 + $0x148] sm:$0xff]
    %v5966 = vld [vmem:[#allocation15 + $0x150] sm:$0xff]
    %v5967 = vld [vmem:[#allocation15 + $0x158] sm:$0xff]
    %v5968 = vld [vmem:[#allocation15 + $0x160] sm:$0xff]
    %v5969 = vld [vmem:[#allocation15 + $0x168] sm:$0xff]
    %v5970 = vld [vmem:[#allocation15 + $0x170] sm:$0xff]
    %v5971 = vld [vmem:[#allocation15 + $0x178] sm:$0xff]
    %v5972 = vld [vmem:[#allocation15 + $0x180] sm:$0xff]
    %v5973 = vld [vmem:[#allocation15 + $0x188] sm:$0xff]
    %v5974 = vld [vmem:[#allocation15 + $0x190] sm:$0xff]
    %v5975 = vld [vmem:[#allocation15 + $0x198] sm:$0xff]
    %v5976 = vld [vmem:[#allocation15 + $0x1a0] sm:$0xff]
    %v5977 = vld [vmem:[#allocation15 + $0x1a8] sm:$0xff]
    %v5978 = vld [vmem:[#allocation15 + $0x1b0] sm:$0xff]
    %v5979 = vld [vmem:[#allocation15 + $0x1b8] sm:$0xff]
    %v5980 = vld [vmem:[#allocation15 + $0x1c0] sm:$0xff]
    %v5981 = vld [vmem:[#allocation15 + $0x1c8] sm:$0xff]
    %v5982 = vld [vmem:[#allocation15 + $0x1d0] sm:$0xff]
    %v5983 = vld [vmem:[#allocation15 + $0x1d8] sm:$0xff]
    %v5984 = vld [vmem:[#allocation15 + $0x1e0] sm:$0xff]
    %v5985 = vld [vmem:[#allocation15 + $0x1e8] sm:$0xff]
    %v5986 = vld [vmem:[#allocation15 + $0x1f0] sm:$0xff]
    %v5987 = vld [vmem:[#allocation15 + $0x1f8] sm:$0xff]
    %v5988 = vld [vmem:[#allocation15 + $0x200] sm:$0xff]
    %v5989 = vld [vmem:[#allocation15 + $0x208] sm:$0xff]
    %v5990 = vld [vmem:[#allocation15 + $0x210] sm:$0xff]
    %v5991 = vld [vmem:[#allocation15 + $0x218] sm:$0xff]
    %v5992 = vld [vmem:[#allocation15 + $0x220] sm:$0xff]
    %v5993 = vld [vmem:[#allocation15 + $0x228] sm:$0xff]
    %v5994 = vld [vmem:[#allocation15 + $0x230] sm:$0xff]
    %v5995 = vld [vmem:[#allocation15 + $0x238] sm:$0xff]
    %v5996 = vld [vmem:[#allocation15 + $0x240] sm:$0xff]
    %v5997 = vld [vmem:[#allocation15 + $0x248] sm:$0xff]
    %v5998 = vld [vmem:[#allocation15 + $0x250] sm:$0xff]
    %v5999 = vld [vmem:[#allocation15 + $0x258] sm:$0xff]
    %v6000 = vld [vmem:[#allocation15 + $0x260] sm:$0xff]
    %v6001 = vld [vmem:[#allocation15 + $0x268] sm:$0xff]
    %v6002 = vld [vmem:[#allocation15 + $0x270] sm:$0xff]
    %v6003 = vld [vmem:[#allocation15 + $0x278] sm:$0xff]
    %v6004 = vld [vmem:[#allocation15 + $0x280] sm:$0xff]
    %v6005 = vld [vmem:[#allocation15 + $0x288] sm:$0xff]
    %v6006 = vld [vmem:[#allocation15 + $0x290] sm:$0xff]
    %v6007 = vld [vmem:[#allocation15 + $0x298] sm:$0xff]
    %v6008 = vld [vmem:[#allocation15 + $0x2a0] sm:$0xff]
    %v6009 = vld [vmem:[#allocation15 + $0x2a8] sm:$0xff]
    %v6010 = vld [vmem:[#allocation15 + $0x2b0] sm:$0xff]
    %v6011 = vld [vmem:[#allocation15 + $0x2b8] sm:$0xff]
    %v6012 = vld [vmem:[#allocation15 + $0x2c0] sm:$0xff]
    %v6013 = vld [vmem:[#allocation15 + $0x2c8] sm:$0xff]
    %v6014 = vld [vmem:[#allocation15 + $0x2d0] sm:$0xff]
    %v6015 = vld [vmem:[#allocation15 + $0x2d8] sm:$0xff]
    %v6016 = vld [vmem:[#allocation15 + $0x2e0] sm:$0xff]
    %v6017 = vld [vmem:[#allocation15 + $0x2e8] sm:$0xff]
    %v6018 = vld [vmem:[#allocation15 + $0x2f0] sm:$0xff]
    %v6019 = vld [vmem:[#allocation15 + $0x2f8] sm:$0xff]
    %v6020 = vld [vmem:[#allocation15 + $0x300] sm:$0xff]
    %v6021 = vld [vmem:[#allocation15 + $0x308] sm:$0xff]
    %v6022 = vld [vmem:[#allocation15 + $0x310] sm:$0xff]
    %v6023 = vld [vmem:[#allocation15 + $0x318] sm:$0xff]
    %v6024 = vld [vmem:[#allocation15 + $0x320] sm:$0xff]
    %v6025 = vld [vmem:[#allocation15 + $0x328] sm:$0xff]
    %v6026 = vld [vmem:[#allocation15 + $0x330] sm:$0xff]
    %v6027 = vld [vmem:[#allocation15 + $0x338] sm:$0xff]
    %v6028 = vld [vmem:[#allocation15 + $0x340] sm:$0xff]
    %v6029 = vld [vmem:[#allocation15 + $0x348] sm:$0xff]
    %v6030 = vld [vmem:[#allocation15 + $0x350] sm:$0xff]
    %v6031 = vld [vmem:[#allocation15 + $0x358] sm:$0xff]
    %v6032 = vld [vmem:[#allocation15 + $0x360] sm:$0xff]
    %v6033 = vld [vmem:[#allocation15 + $0x368] sm:$0xff]
    %v6034 = vld [vmem:[#allocation15 + $0x370] sm:$0xff]
    %v6035 = vld [vmem:[#allocation15 + $0x378] sm:$0xff]
    %v6036 = vld [vmem:[#allocation15 + $0x380] sm:$0xff]
    %v6037 = vld [vmem:[#allocation15 + $0x388] sm:$0xff]
    %v6038 = vld [vmem:[#allocation15 + $0x390] sm:$0xff]
    %v6039 = vld [vmem:[#allocation15 + $0x398] sm:$0xff]
    %v6040 = vld [vmem:[#allocation15 + $0x3a0] sm:$0xff]
    %v6041 = vld [vmem:[#allocation15 + $0x3a8] sm:$0xff]
    %v6042 = vld [vmem:[#allocation15 + $0x3b0] sm:$0xff]
    %v6043 = vld [vmem:[#allocation15 + $0x3b8] sm:$0xff]
    %v6044 = vld [vmem:[#allocation15 + $0x3c0] sm:$0xff]
    %v6045 = vld [vmem:[#allocation15 + $0x3c8] sm:$0xff]
    %v6046 = vld [vmem:[#allocation15 + $0x3d0] sm:$0xff]
    %v6047 = vld [vmem:[#allocation15 + $0x3d8] sm:$0xff]
    %v6048 = vld [vmem:[#allocation15 + $0x3e0] sm:$0xff]
    %v6049 = vld [vmem:[#allocation15 + $0x3e8] sm:$0xff]
    %v6050 = vld [vmem:[#allocation15 + $0x3f0] sm:$0xff]
    %v6051 = vld [vmem:[#allocation15 + $0x3f8] sm:$0xff]
    %6052 = vmatprep.subr.mxu0 %v5925
    %6053 = vmatpush1.msra.mxu0 %v5924
    %6054 = vmatprep.subr.mxu0 %v5929
    %6055 = vmatpush1.msra.mxu0 %v5928
    %6056 = vmatprep.subr.mxu0 %v5933
    %6057 = vmatpush1.msra.mxu0 %v5932
    %6058 = vmatprep.subr.mxu0 %v5937
    %6059 = vmatpush1.msra.mxu0 %v5936
    %6060 = vmatprep.subr.mxu0 %v5941
    %6061 = vmatpush1.msra.mxu0 %v5940
    %6062 = vmatprep.subr.mxu0 %v5945
    %6063 = vmatpush1.msra.mxu0 %v5944
    %6064 = vmatprep.subr.mxu0 %v5949
    %6065 = vmatpush1.msra.mxu0 %v5948
    %6066 = vmatprep.subr.mxu0 %v5953
    %6067 = vmatpush1.msra.mxu0 %v5952
    %6068 = vmatprep.subr.mxu0 %v5957
    %6069 = vmatpush1.msra.mxu0 %v5956
    %6070 = vmatprep.subr.mxu0 %v5961
    %6071 = vmatpush1.msra.mxu0 %v5960
    %6072 = vmatprep.subr.mxu0 %v5965
    %6073 = vmatpush1.msra.mxu0 %v5964
    %6074 = vmatprep.subr.mxu0 %v5969
    %6075 = vmatpush1.msra.mxu0 %v5968
    %6076 = vmatprep.subr.mxu0 %v5973
    %6077 = vmatpush1.msra.mxu0 %v5972
    %6078 = vmatprep.subr.mxu0 %v5977
    %6079 = vmatpush1.msra.mxu0 %v5976
    %6080 = vmatprep.subr.mxu0 %v5981
    %6081 = vmatpush1.msra.mxu0 %v5980
    %6082 = vmatprep.subr.mxu0 %v5985
    %6083 = vmatpush1.msra.mxu0 %v5984
    %6084 = vmatprep.subr.mxu0 %v5989
    %6085 = vmatpush1.msra.mxu0 %v5988
    %6086 = vmatprep.subr.mxu0 %v5993
    %6087 = vmatpush1.msra.mxu0 %v5992
    %6088 = vmatprep.subr.mxu0 %v5997
    %6089 = vmatpush1.msra.mxu0 %v5996
    %6090 = vmatprep.subr.mxu0 %v6001
    %6091 = vmatpush1.msra.mxu0 %v6000
    %6092 = vmatprep.subr.mxu0 %v6005
    %6093 = vmatpush1.msra.mxu0 %v6004
    %6094 = vmatprep.subr.mxu0 %v6009
    %6095 = vmatpush1.msra.mxu0 %v6008
    %6096 = vmatprep.subr.mxu0 %v6013
    %6097 = vmatpush1.msra.mxu0 %v6012
    %6098 = vmatprep.subr.mxu0 %v6017
    %6099 = vmatpush1.msra.mxu0 %v6016
    %6100 = vmatprep.subr.mxu0 %v6021
    %6101 = vmatpush1.msra.mxu0 %v6020
    %6102 = vmatprep.subr.mxu0 %v6025
    %6103 = vmatpush1.msra.mxu0 %v6024
    %6104 = vmatprep.subr.mxu0 %v6029
    %6105 = vmatpush1.msra.mxu0 %v6028
    %6106 = vmatprep.subr.mxu0 %v6033
    %6107 = vmatpush1.msra.mxu0 %v6032
    %6108 = vmatprep.subr.mxu0 %v6037
    %6109 = vmatpush1.msra.mxu0 %v6036
    %6110 = vmatprep.subr.mxu0 %v6041
    %6111 = vmatpush1.msra.mxu0 %v6040
    %6112 = vmatprep.subr.mxu0 %v6045
    %6113 = vmatpush1.msra.mxu0 %v6044
    %6114 = vmatprep.subr.mxu0 %v6049
    %6115 = vmatpush1.msra.mxu0 %v6048
    %6116 = vmatprep.mubr.f32.mxu0 %v5420
    %6117 = vmatmul.mubr.f32.gmra.mrb[0].mxu0 %v5710
    %v6118 = vpop.f32.mrb[0].mxu0
    %v6119 = vadd.f32 %v488, %v6118
    %v6120 = vpop.f32.mrb[0].mxu0
    %v6121 = vadd.f32 %v492, %v6120
    %6122 = vdwg.mxu0
    %6123 = vmatprep.subr.mxu0 %v5927
    %6124 = vmatpush1.msra.mxu0 %v5926
    %6125 = vmatprep.subr.mxu0 %v5931
    %6126 = vmatpush1.msra.mxu0 %v5930
    %6127 = vmatprep.subr.mxu0 %v5935
    %6128 = vmatpush1.msra.mxu0 %v5934
    %6129 = vmatprep.subr.mxu0 %v5939
    %6130 = vmatpush1.msra.mxu0 %v5938
    %6131 = vmatprep.subr.mxu0 %v5943
    %6132 = vmatpush1.msra.mxu0 %v5942
    %6133 = vmatprep.subr.mxu0 %v5947
    %6134 = vmatpush1.msra.mxu0 %v5946
    %6135 = vmatprep.subr.mxu0 %v5951
    %6136 = vmatpush1.msra.mxu0 %v5950
    %6137 = vmatprep.subr.mxu0 %v5955
    %6138 = vmatpush1.msra.mxu0 %v5954
    %6139 = vmatprep.subr.mxu0 %v5959
    %6140 = vmatpush1.msra.mxu0 %v5958
    %6141 = vmatprep.subr.mxu0 %v5963
    %6142 = vmatpush1.msra.mxu0 %v5962
    %6143 = vmatprep.subr.mxu0 %v5967
    %6144 = vmatpush1.msra.mxu0 %v5966
    %6145 = vmatprep.subr.mxu0 %v5971
    %6146 = vmatpush1.msra.mxu0 %v5970
    %6147 = vmatprep.subr.mxu0 %v5975
    %6148 = vmatpush1.msra.mxu0 %v5974
    %6149 = vmatprep.subr.mxu0 %v5979
    %6150 = vmatpush1.msra.mxu0 %v5978
    %6151 = vmatprep.subr.mxu0 %v5983
    %6152 = vmatpush1.msra.mxu0 %v5982
    %6153 = vmatprep.subr.mxu0 %v5987
    %6154 = vmatpush1.msra.mxu0 %v5986
    %6155 = vmatprep.subr.mxu0 %v5991
    %6156 = vmatpush1.msra.mxu0 %v5990
    %6157 = vmatprep.subr.mxu0 %v5995
    %6158 = vmatpush1.msra.mxu0 %v5994
    %6159 = vmatprep.subr.mxu0 %v5999
    %6160 = vmatpush1.msra.mxu0 %v5998
    %6161 = vmatprep.subr.mxu0 %v6003
    %6162 = vmatpush1.msra.mxu0 %v6002
    %6163 = vmatprep.subr.mxu0 %v6007
    %6164 = vmatpush1.msra.mxu0 %v6006
    %6165 = vmatprep.subr.mxu0 %v6011
    %6166 = vmatpush1.msra.mxu0 %v6010
    %6167 = vmatprep.subr.mxu0 %v6015
    %6168 = vmatpush1.msra.mxu0 %v6014
    %6169 = vmatprep.subr.mxu0 %v6019
    %6170 = vmatpush1.msra.mxu0 %v6018
    %6171 = vmatprep.subr.mxu0 %v6023
    %6172 = vmatpush1.msra.mxu0 %v6022
    %6173 = vmatprep.subr.mxu0 %v6027
    %6174 = vmatpush1.msra.mxu0 %v6026
    %6175 = vmatprep.subr.mxu0 %v6031
    %6176 = vmatpush1.msra.mxu0 %v6030
    %6177 = vmatprep.subr.mxu0 %v6035
    %6178 = vmatpush1.msra.mxu0 %v6034
    %6179 = vmatprep.subr.mxu0 %v6039
    %6180 = vmatpush1.msra.mxu0 %v6038
    %6181 = vmatprep.subr.mxu0 %v6043
    %6182 = vmatpush1.msra.mxu0 %v6042
    %6183 = vmatprep.subr.mxu0 %v6047
    %6184 = vmatpush1.msra.mxu0 %v6046
    %6185 = vmatprep.subr.mxu0 %v6051
    %6186 = vmatpush1.msra.mxu0 %v6050
    %6187 = vmatprep.mubr.f32.mxu0 %v5420
    %6188 = vmatmul.mubr.f32.gmra.mrb[0].mxu0 %v5710
    %v6189 = vpop.f32.mrb[0].mxu0
    %v6190 = vadd.f32 %v496, %v6189
    %v6191 = vpop.f32.mrb[0].mxu0
    %v6192 = vadd.f32 %v500, %v6191
    %6193 = vdwg.mxu0
    %v6194 = vxor.u32 %v6119, 2147483648
    %v6195 = vmul.f32 %v6194, 1.442695
    %v6196 = vpow.pop %v6195
    %v6197 = vadd.f32 %v6196, 1.0
    %v6198 = vrcp.pop %v6197
    %v6199 = vmul.f32 1.0, %v6198
    %v6200 = vxor.u32 %v6121, 2147483648
    %v6201 = vmul.f32 %v6200, 1.442695
    %v6202 = vpow.pop %v6201
    %v6203 = vadd.f32 %v6202, 1.0
    %v6204 = vrcp.pop %v6203
    %v6205 = vmul.f32 1.0, %v6204
    %v6206 = vmul.f32 %v6199, %v6192
    %v6207 = vadd.f32 %v6190, %v6206
    %v6208 = vtanh.pop %v6207
    %v6209 = vsub.f32 1.0, %v6205
    %v6210 = vmul.f32 %v6209, %v6208
    %v6211 = vmul.f32 %v6205, %v5420
    %v6212 = vadd.f32 %v6210, %v6211
    %6213 = vst [vmem:[#allocation3 + $0x30] sm:$0xff] %v6212
    %v6214 = vld [vmem:[#allocation12] sm:$0xff]
    %v6215 = vld [vmem:[#allocation12 + $0x8] sm:$0xff]
    %v6216 = vld [vmem:[#allocation12 + $0x10] sm:$0xff]
    %v6217 = vld [vmem:[#allocation12 + $0x18] sm:$0xff]
    %v6218 = vld [vmem:[#allocation12 + $0x20] sm:$0xff]
    %v6219 = vld [vmem:[#allocation12 + $0x28] sm:$0xff]
    %v6220 = vld [vmem:[#allocation12 + $0x30] sm:$0xff]
    %v6221 = vld [vmem:[#allocation12 + $0x38] sm:$0xff]
    %v6222 = vld [vmem:[#allocation12 + $0x40] sm:$0xff]
    %v6223 = vld [vmem:[#allocation12 + $0x48] sm:$0xff]
    %v6224 = vld [vmem:[#allocation12 + $0x50] sm:$0xff]
    %v6225 = vld [vmem:[#allocation12 + $0x58] sm:$0xff]
    %v6226 = vld [vmem:[#allocation12 + $0x60] sm:$0xff]
    %v6227 = vld [vmem:[#allocation12 + $0x68] sm:$0xff]
    %v6228 = vld [vmem:[#allocation12 + $0x70] sm:$0xff]
    %v6229 = vld [vmem:[#allocation12 + $0x78] sm:$0xff]
    %v6230 = vld [vmem:[#allocation12 + $0x80] sm:$0xff]
    %v6231 = vld [vmem:[#allocation12 + $0x88] sm:$0xff]
    %v6232 = vld [vmem:[#allocation12 + $0x90] sm:$0xff]
    %v6233 = vld [vmem:[#allocation12 + $0x98] sm:$0xff]
    %v6234 = vld [vmem:[#allocation12 + $0xa0] sm:$0xff]
    %v6235 = vld [vmem:[#allocation12 + $0xa8] sm:$0xff]
    %v6236 = vld [vmem:[#allocation12 + $0xb0] sm:$0xff]
    %v6237 = vld [vmem:[#allocation12 + $0xb8] sm:$0xff]
    %v6238 = vld [vmem:[#allocation12 + $0xc0] sm:$0xff]
    %v6239 = vld [vmem:[#allocation12 + $0xc8] sm:$0xff]
    %v6240 = vld [vmem:[#allocation12 + $0xd0] sm:$0xff]
    %v6241 = vld [vmem:[#allocation12 + $0xd8] sm:$0xff]
    %v6242 = vld [vmem:[#allocation12 + $0xe0] sm:$0xff]
    %v6243 = vld [vmem:[#allocation12 + $0xe8] sm:$0xff]
    %v6244 = vld [vmem:[#allocation12 + $0xf0] sm:$0xff]
    %v6245 = vld [vmem:[#allocation12 + $0xf8] sm:$0xff]
    %v6246 = vld [vmem:[#allocation12 + $0x100] sm:$0xff]
    %v6247 = vld [vmem:[#allocation12 + $0x108] sm:$0xff]
    %v6248 = vld [vmem:[#allocation12 + $0x110] sm:$0xff]
    %v6249 = vld [vmem:[#allocation12 + $0x118] sm:$0xff]
    %v6250 = vld [vmem:[#allocation12 + $0x120] sm:$0xff]
    %v6251 = vld [vmem:[#allocation12 + $0x128] sm:$0xff]
    %v6252 = vld [vmem:[#allocation12 + $0x130] sm:$0xff]
    %v6253 = vld [vmem:[#allocation12 + $0x138] sm:$0xff]
    %v6254 = vld [vmem:[#allocation12 + $0x140] sm:$0xff]
    %v6255 = vld [vmem:[#allocation12 + $0x148] sm:$0xff]
    %v6256 = vld [vmem:[#allocation12 + $0x150] sm:$0xff]
    %v6257 = vld [vmem:[#allocation12 + $0x158] sm:$0xff]
    %v6258 = vld [vmem:[#allocation12 + $0x160] sm:$0xff]
    %v6259 = vld [vmem:[#allocation12 + $0x168] sm:$0xff]
    %v6260 = vld [vmem:[#allocation12 + $0x170] sm:$0xff]
    %v6261 = vld [vmem:[#allocation12 + $0x178] sm:$0xff]
    %v6262 = vld [vmem:[#allocation12 + $0x180] sm:$0xff]
    %v6263 = vld [vmem:[#allocation12 + $0x188] sm:$0xff]
    %v6264 = vld [vmem:[#allocation12 + $0x190] sm:$0xff]
    %v6265 = vld [vmem:[#allocation12 + $0x198] sm:$0xff]
    %v6266 = vld [vmem:[#allocation12 + $0x1a0] sm:$0xff]
    %v6267 = vld [vmem:[#allocation12 + $0x1a8] sm:$0xff]
    %v6268 = vld [vmem:[#allocation12 + $0x1b0] sm:$0xff]
    %v6269 = vld [vmem:[#allocation12 + $0x1b8] sm:$0xff]
    %v6270 = vld [vmem:[#allocation12 + $0x1c0] sm:$0xff]
    %v6271 = vld [vmem:[#allocation12 + $0x1c8] sm:$0xff]
    %v6272 = vld [vmem:[#allocation12 + $0x1d0] sm:$0xff]
    %v6273 = vld [vmem:[#allocation12 + $0x1d8] sm:$0xff]
    %v6274 = vld [vmem:[#allocation12 + $0x1e0] sm:$0xff]
    %v6275 = vld [vmem:[#allocation12 + $0x1e8] sm:$0xff]
    %v6276 = vld [vmem:[#allocation12 + $0x1f0] sm:$0xff]
    %v6277 = vld [vmem:[#allocation12 + $0x1f8] sm:$0xff]
    %v6278 = vld [vmem:[#allocation12 + $0x200] sm:$0xff]
    %v6279 = vld [vmem:[#allocation12 + $0x208] sm:$0xff]
    %v6280 = vld [vmem:[#allocation12 + $0x210] sm:$0xff]
    %v6281 = vld [vmem:[#allocation12 + $0x218] sm:$0xff]
    %v6282 = vld [vmem:[#allocation12 + $0x220] sm:$0xff]
    %v6283 = vld [vmem:[#allocation12 + $0x228] sm:$0xff]
    %v6284 = vld [vmem:[#allocation12 + $0x230] sm:$0xff]
    %v6285 = vld [vmem:[#allocation12 + $0x238] sm:$0xff]
    %v6286 = vld [vmem:[#allocation12 + $0x240] sm:$0xff]
    %v6287 = vld [vmem:[#allocation12 + $0x248] sm:$0xff]
    %v6288 = vld [vmem:[#allocation12 + $0x250] sm:$0xff]
    %v6289 = vld [vmem:[#allocation12 + $0x258] sm:$0xff]
    %v6290 = vld [vmem:[#allocation12 + $0x260] sm:$0xff]
    %v6291 = vld [vmem:[#allocation12 + $0x268] sm:$0xff]
    %v6292 = vld [vmem:[#allocation12 + $0x270] sm:$0xff]
    %v6293 = vld [vmem:[#allocation12 + $0x278] sm:$0xff]
    %v6294 = vld [vmem:[#allocation12 + $0x280] sm:$0xff]
    %v6295 = vld [vmem:[#allocation12 + $0x288] sm:$0xff]
    %v6296 = vld [vmem:[#allocation12 + $0x290] sm:$0xff]
    %v6297 = vld [vmem:[#allocation12 + $0x298] sm:$0xff]
    %v6298 = vld [vmem:[#allocation12 + $0x2a0] sm:$0xff]
    %v6299 = vld [vmem:[#allocation12 + $0x2a8] sm:$0xff]
    %v6300 = vld [vmem:[#allocation12 + $0x2b0] sm:$0xff]
    %v6301 = vld [vmem:[#allocation12 + $0x2b8] sm:$0xff]
    %v6302 = vld [vmem:[#allocation12 + $0x2c0] sm:$0xff]
    %v6303 = vld [vmem:[#allocation12 + $0x2c8] sm:$0xff]
    %v6304 = vld [vmem:[#allocation12 + $0x2d0] sm:$0xff]
    %v6305 = vld [vmem:[#allocation12 + $0x2d8] sm:$0xff]
    %v6306 = vld [vmem:[#allocation12 + $0x2e0] sm:$0xff]
    %v6307 = vld [vmem:[#allocation12 + $0x2e8] sm:$0xff]
    %v6308 = vld [vmem:[#allocation12 + $0x2f0] sm:$0xff]
    %v6309 = vld [vmem:[#allocation12 + $0x2f8] sm:$0xff]
    %v6310 = vld [vmem:[#allocation12 + $0x300] sm:$0xff]
    %v6311 = vld [vmem:[#allocation12 + $0x308] sm:$0xff]
    %v6312 = vld [vmem:[#allocation12 + $0x310] sm:$0xff]
    %v6313 = vld [vmem:[#allocation12 + $0x318] sm:$0xff]
    %v6314 = vld [vmem:[#allocation12 + $0x320] sm:$0xff]
    %v6315 = vld [vmem:[#allocation12 + $0x328] sm:$0xff]
    %v6316 = vld [vmem:[#allocation12 + $0x330] sm:$0xff]
    %v6317 = vld [vmem:[#allocation12 + $0x338] sm:$0xff]
    %v6318 = vld [vmem:[#allocation12 + $0x340] sm:$0xff]
    %v6319 = vld [vmem:[#allocation12 + $0x348] sm:$0xff]
    %v6320 = vld [vmem:[#allocation12 + $0x350] sm:$0xff]
    %v6321 = vld [vmem:[#allocation12 + $0x358] sm:$0xff]
    %v6322 = vld [vmem:[#allocation12 + $0x360] sm:$0xff]
    %v6323 = vld [vmem:[#allocation12 + $0x368] sm:$0xff]
    %v6324 = vld [vmem:[#allocation12 + $0x370] sm:$0xff]
    %v6325 = vld [vmem:[#allocation12 + $0x378] sm:$0xff]
    %v6326 = vld [vmem:[#allocation12 + $0x380] sm:$0xff]
    %v6327 = vld [vmem:[#allocation12 + $0x388] sm:$0xff]
    %v6328 = vld [vmem:[#allocation12 + $0x390] sm:$0xff]
    %v6329 = vld [vmem:[#allocation12 + $0x398] sm:$0xff]
    %v6330 = vld [vmem:[#allocation12 + $0x3a0] sm:$0xff]
    %v6331 = vld [vmem:[#allocation12 + $0x3a8] sm:$0xff]
    %v6332 = vld [vmem:[#allocation12 + $0x3b0] sm:$0xff]
    %v6333 = vld [vmem:[#allocation12 + $0x3b8] sm:$0xff]
    %v6334 = vld [vmem:[#allocation12 + $0x3c0] sm:$0xff]
    %v6335 = vld [vmem:[#allocation12 + $0x3c8] sm:$0xff]
    %v6336 = vld [vmem:[#allocation12 + $0x3d0] sm:$0xff]
    %v6337 = vld [vmem:[#allocation12 + $0x3d8] sm:$0xff]
    %v6338 = vld [vmem:[#allocation12 + $0x3e0] sm:$0xff]
    %v6339 = vld [vmem:[#allocation12 + $0x3e8] sm:$0xff]
    %v6340 = vld [vmem:[#allocation12 + $0x3f0] sm:$0xff]
    %v6341 = vld [vmem:[#allocation12 + $0x3f8] sm:$0xff]
    %6342 = vmatprep.subr.mxu0 %v6215
    %6343 = vmatpush1.msra.mxu0 %v6214
    %6344 = vmatprep.subr.mxu0 %v6219
    %6345 = vmatpush1.msra.mxu0 %v6218
    %6346 = vmatprep.subr.mxu0 %v6223
    %6347 = vmatpush1.msra.mxu0 %v6222
    %6348 = vmatprep.subr.mxu0 %v6227
    %6349 = vmatpush1.msra.mxu0 %v6226
    %6350 = vmatprep.subr.mxu0 %v6231
    %6351 = vmatpush1.msra.mxu0 %v6230
    %6352 = vmatprep.subr.mxu0 %v6235
    %6353 = vmatpush1.msra.mxu0 %v6234
    %6354 = vmatprep.subr.mxu0 %v6239
    %6355 = vmatpush1.msra.mxu0 %v6238
    %6356 = vmatprep.subr.mxu0 %v6243
    %6357 = vmatpush1.msra.mxu0 %v6242
    %6358 = vmatprep.subr.mxu0 %v6247
    %6359 = vmatpush1.msra.mxu0 %v6246
    %6360 = vmatprep.subr.mxu0 %v6251
    %6361 = vmatpush1.msra.mxu0 %v6250
    %6362 = vmatprep.subr.mxu0 %v6255
    %6363 = vmatpush1.msra.mxu0 %v6254
    %6364 = vmatprep.subr.mxu0 %v6259
    %6365 = vmatpush1.msra.mxu0 %v6258
    %6366 = vmatprep.subr.mxu0 %v6263
    %6367 = vmatpush1.msra.mxu0 %v6262
    %6368 = vmatprep.subr.mxu0 %v6267
    %6369 = vmatpush1.msra.mxu0 %v6266
    %6370 = vmatprep.subr.mxu0 %v6271
    %6371 = vmatpush1.msra.mxu0 %v6270
    %6372 = vmatprep.subr.mxu0 %v6275
    %6373 = vmatpush1.msra.mxu0 %v6274
    %6374 = vmatprep.subr.mxu0 %v6279
    %6375 = vmatpush1.msra.mxu0 %v6278
    %6376 = vmatprep.subr.mxu0 %v6283
    %6377 = vmatpush1.msra.mxu0 %v6282
    %6378 = vmatprep.subr.mxu0 %v6287
    %6379 = vmatpush1.msra.mxu0 %v6286
    %6380 = vmatprep.subr.mxu0 %v6291
    %6381 = vmatpush1.msra.mxu0 %v6290
    %6382 = vmatprep.subr.mxu0 %v6295
    %6383 = vmatpush1.msra.mxu0 %v6294
    %6384 = vmatprep.subr.mxu0 %v6299
    %6385 = vmatpush1.msra.mxu0 %v6298
    %6386 = vmatprep.subr.mxu0 %v6303
    %6387 = vmatpush1.msra.mxu0 %v6302
    %6388 = vmatprep.subr.mxu0 %v6307
    %6389 = vmatpush1.msra.mxu0 %v6306
    %6390 = vmatprep.subr.mxu0 %v6311
    %6391 = vmatpush1.msra.mxu0 %v6310
    %6392 = vmatprep.subr.mxu0 %v6315
    %6393 = vmatpush1.msra.mxu0 %v6314
    %6394 = vmatprep.subr.mxu0 %v6319
    %6395 = vmatpush1.msra.mxu0 %v6318
    %6396 = vmatprep.subr.mxu0 %v6323
    %6397 = vmatpush1.msra.mxu0 %v6322
    %6398 = vmatprep.subr.mxu0 %v6327
    %6399 = vmatpush1.msra.mxu0 %v6326
    %6400 = vmatprep.subr.mxu0 %v6331
    %6401 = vmatpush1.msra.mxu0 %v6330
    %6402 = vmatprep.subr.mxu0 %v6335
    %6403 = vmatpush1.msra.mxu0 %v6334
    %6404 = vmatprep.subr.mxu0 %v6339
    %6405 = vmatpush1.msra.mxu0 %v6338
    %6406 = vmatprep.mubr.f32.mxu0 %v5710
    %6407 = vmatmul.mubr.f32.gmra.mrb[0].mxu0 %v5923
    %v6408 = vpop.f32.mrb[0].mxu0
    %v6409 = vadd.f32 %v466, %v6408
    %v6410 = vpop.f32.mrb[0].mxu0
    %v6411 = vadd.f32 %v470, %v6410
    %6412 = vdwg.mxu0
    %6413 = vmatprep.subr.mxu0 %v6217
    %6414 = vmatpush1.msra.mxu0 %v6216
    %6415 = vmatprep.subr.mxu0 %v6221
    %6416 = vmatpush1.msra.mxu0 %v6220
    %6417 = vmatprep.subr.mxu0 %v6225
    %6418 = vmatpush1.msra.mxu0 %v6224
    %6419 = vmatprep.subr.mxu0 %v6229
    %6420 = vmatpush1.msra.mxu0 %v6228
    %6421 = vmatprep.subr.mxu0 %v6233
    %6422 = vmatpush1.msra.mxu0 %v6232
    %6423 = vmatprep.subr.mxu0 %v6237
    %6424 = vmatpush1.msra.mxu0 %v6236
    %6425 = vmatprep.subr.mxu0 %v6241
    %6426 = vmatpush1.msra.mxu0 %v6240
    %6427 = vmatprep.subr.mxu0 %v6245
    %6428 = vmatpush1.msra.mxu0 %v6244
    %6429 = vmatprep.subr.mxu0 %v6249
    %6430 = vmatpush1.msra.mxu0 %v6248
    %6431 = vmatprep.subr.mxu0 %v6253
    %6432 = vmatpush1.msra.mxu0 %v6252
    %6433 = vmatprep.subr.mxu0 %v6257
    %6434 = vmatpush1.msra.mxu0 %v6256
    %6435 = vmatprep.subr.mxu0 %v6261
    %6436 = vmatpush1.msra.mxu0 %v6260
    %6437 = vmatprep.subr.mxu0 %v6265
    %6438 = vmatpush1.msra.mxu0 %v6264
    %6439 = vmatprep.subr.mxu0 %v6269
    %6440 = vmatpush1.msra.mxu0 %v6268
    %6441 = vmatprep.subr.mxu0 %v6273
    %6442 = vmatpush1.msra.mxu0 %v6272
    %6443 = vmatprep.subr.mxu0 %v6277
    %6444 = vmatpush1.msra.mxu0 %v6276
    %6445 = vmatprep.subr.mxu0 %v6281
    %6446 = vmatpush1.msra.mxu0 %v6280
    %6447 = vmatprep.subr.mxu0 %v6285
    %6448 = vmatpush1.msra.mxu0 %v6284
    %6449 = vmatprep.subr.mxu0 %v6289
    %6450 = vmatpush1.msra.mxu0 %v6288
    %6451 = vmatprep.subr.mxu0 %v6293
    %6452 = vmatpush1.msra.mxu0 %v6292
    %6453 = vmatprep.subr.mxu0 %v6297
    %6454 = vmatpush1.msra.mxu0 %v6296
    %6455 = vmatprep.subr.mxu0 %v6301
    %6456 = vmatpush1.msra.mxu0 %v6300
    %6457 = vmatprep.subr.mxu0 %v6305
    %6458 = vmatpush1.msra.mxu0 %v6304
    %6459 = vmatprep.subr.mxu0 %v6309
    %6460 = vmatpush1.msra.mxu0 %v6308
    %6461 = vmatprep.subr.mxu0 %v6313
    %6462 = vmatpush1.msra.mxu0 %v6312
    %6463 = vmatprep.subr.mxu0 %v6317
    %6464 = vmatpush1.msra.mxu0 %v6316
    %6465 = vmatprep.subr.mxu0 %v6321
    %6466 = vmatpush1.msra.mxu0 %v6320
    %6467 = vmatprep.subr.mxu0 %v6325
    %6468 = vmatpush1.msra.mxu0 %v6324
    %6469 = vmatprep.subr.mxu0 %v6329
    %6470 = vmatpush1.msra.mxu0 %v6328
    %6471 = vmatprep.subr.mxu0 %v6333
    %6472 = vmatpush1.msra.mxu0 %v6332
    %6473 = vmatprep.subr.mxu0 %v6337
    %6474 = vmatpush1.msra.mxu0 %v6336
    %6475 = vmatprep.subr.mxu0 %v6341
    %6476 = vmatpush1.msra.mxu0 %v6340
    %6477 = vmatprep.mubr.f32.mxu0 %v5710
    %6478 = vmatmul.mubr.f32.gmra.mrb[0].mxu0 %v5923
    %v6479 = vpop.f32.mrb[0].mxu0
    %v6480 = vadd.f32 %v474, %v6479
    %v6481 = vpop.f32.mrb[0].mxu0
    %v6482 = vadd.f32 %v478, %v6481
    %6483 = vdwg.mxu0
    %v6484 = vxor.u32 %v6409, 2147483648
    %v6485 = vmul.f32 %v6484, 1.442695
    %v6486 = vpow.pop %v6485
    %v6487 = vadd.f32 %v6486, 1.0
    %v6488 = vrcp.pop %v6487
    %v6489 = vmul.f32 1.0, %v6488
    %v6490 = vxor.u32 %v6411, 2147483648
    %v6491 = vmul.f32 %v6490, 1.442695
    %v6492 = vpow.pop %v6491
    %v6493 = vadd.f32 %v6492, 1.0
    %v6494 = vrcp.pop %v6493
    %v6495 = vmul.f32 1.0, %v6494
    %v6496 = vmul.f32 %v6489, %v6482
    %v6497 = vadd.f32 %v6480, %v6496
    %v6498 = vtanh.pop %v6497
    %v6499 = vsub.f32 1.0, %v6495
    %v6500 = vmul.f32 %v6499, %v6498
    %v6501 = vmul.f32 %v6495, %v5710
    %v6502 = vadd.f32 %v6500, %v6501
    %v6503 = vld [vmem:[#allocation15] sm:$0xff]
    %v6504 = vld [vmem:[#allocation15 + $0x8] sm:$0xff]
    %v6505 = vld [vmem:[#allocation15 + $0x10] sm:$0xff]
    %v6506 = vld [vmem:[#allocation15 + $0x18] sm:$0xff]
    %v6507 = vld [vmem:[#allocation15 + $0x20] sm:$0xff]
    %v6508 = vld [vmem:[#allocation15 + $0x28] sm:$0xff]
    %v6509 = vld [vmem:[#allocation15 + $0x30] sm:$0xff]
    %v6510 = vld [vmem:[#allocation15 + $0x38] sm:$0xff]
    %v6511 = vld [vmem:[#allocation15 + $0x40] sm:$0xff]
    %v6512 = vld [vmem:[#allocation15 + $0x48] sm:$0xff]
    %v6513 = vld [vmem:[#allocation15 + $0x50] sm:$0xff]
    %v6514 = vld [vmem:[#allocation15 + $0x58] sm:$0xff]
    %v6515 = vld [vmem:[#allocation15 + $0x60] sm:$0xff]
    %v6516 = vld [vmem:[#allocation15 + $0x68] sm:$0xff]
    %v6517 = vld [vmem:[#allocation15 + $0x70] sm:$0xff]
    %v6518 = vld [vmem:[#allocation15 + $0x78] sm:$0xff]
    %v6519 = vld [vmem:[#allocation15 + $0x80] sm:$0xff]
    %v6520 = vld [vmem:[#allocation15 + $0x88] sm:$0xff]
    %v6521 = vld [vmem:[#allocation15 + $0x90] sm:$0xff]
    %v6522 = vld [vmem:[#allocation15 + $0x98] sm:$0xff]
    %v6523 = vld [vmem:[#allocation15 + $0xa0] sm:$0xff]
    %v6524 = vld [vmem:[#allocation15 + $0xa8] sm:$0xff]
    %v6525 = vld [vmem:[#allocation15 + $0xb0] sm:$0xff]
    %v6526 = vld [vmem:[#allocation15 + $0xb8] sm:$0xff]
    %v6527 = vld [vmem:[#allocation15 + $0xc0] sm:$0xff]
    %v6528 = vld [vmem:[#allocation15 + $0xc8] sm:$0xff]
    %v6529 = vld [vmem:[#allocation15 + $0xd0] sm:$0xff]
    %v6530 = vld [vmem:[#allocation15 + $0xd8] sm:$0xff]
    %v6531 = vld [vmem:[#allocation15 + $0xe0] sm:$0xff]
    %v6532 = vld [vmem:[#allocation15 + $0xe8] sm:$0xff]
    %v6533 = vld [vmem:[#allocation15 + $0xf0] sm:$0xff]
    %v6534 = vld [vmem:[#allocation15 + $0xf8] sm:$0xff]
    %v6535 = vld [vmem:[#allocation15 + $0x100] sm:$0xff]
    %v6536 = vld [vmem:[#allocation15 + $0x108] sm:$0xff]
    %v6537 = vld [vmem:[#allocation15 + $0x110] sm:$0xff]
    %v6538 = vld [vmem:[#allocation15 + $0x118] sm:$0xff]
    %v6539 = vld [vmem:[#allocation15 + $0x120] sm:$0xff]
    %v6540 = vld [vmem:[#allocation15 + $0x128] sm:$0xff]
    %v6541 = vld [vmem:[#allocation15 + $0x130] sm:$0xff]
    %v6542 = vld [vmem:[#allocation15 + $0x138] sm:$0xff]
    %v6543 = vld [vmem:[#allocation15 + $0x140] sm:$0xff]
    %v6544 = vld [vmem:[#allocation15 + $0x148] sm:$0xff]
    %v6545 = vld [vmem:[#allocation15 + $0x150] sm:$0xff]
    %v6546 = vld [vmem:[#allocation15 + $0x158] sm:$0xff]
    %v6547 = vld [vmem:[#allocation15 + $0x160] sm:$0xff]
    %v6548 = vld [vmem:[#allocation15 + $0x168] sm:$0xff]
    %v6549 = vld [vmem:[#allocation15 + $0x170] sm:$0xff]
    %v6550 = vld [vmem:[#allocation15 + $0x178] sm:$0xff]
    %v6551 = vld [vmem:[#allocation15 + $0x180] sm:$0xff]
    %v6552 = vld [vmem:[#allocation15 + $0x188] sm:$0xff]
    %v6553 = vld [vmem:[#allocation15 + $0x190] sm:$0xff]
    %v6554 = vld [vmem:[#allocation15 + $0x198] sm:$0xff]
    %v6555 = vld [vmem:[#allocation15 + $0x1a0] sm:$0xff]
    %v6556 = vld [vmem:[#allocation15 + $0x1a8] sm:$0xff]
    %v6557 = vld [vmem:[#allocation15 + $0x1b0] sm:$0xff]
    %v6558 = vld [vmem:[#allocation15 + $0x1b8] sm:$0xff]
    %v6559 = vld [vmem:[#allocation15 + $0x1c0] sm:$0xff]
    %v6560 = vld [vmem:[#allocation15 + $0x1c8] sm:$0xff]
    %v6561 = vld [vmem:[#allocation15 + $0x1d0] sm:$0xff]
    %v6562 = vld [vmem:[#allocation15 + $0x1d8] sm:$0xff]
    %v6563 = vld [vmem:[#allocation15 + $0x1e0] sm:$0xff]
    %v6564 = vld [vmem:[#allocation15 + $0x1e8] sm:$0xff]
    %v6565 = vld [vmem:[#allocation15 + $0x1f0] sm:$0xff]
    %v6566 = vld [vmem:[#allocation15 + $0x1f8] sm:$0xff]
    %v6567 = vld [vmem:[#allocation15 + $0x200] sm:$0xff]
    %v6568 = vld [vmem:[#allocation15 + $0x208] sm:$0xff]
    %v6569 = vld [vmem:[#allocation15 + $0x210] sm:$0xff]
    %v6570 = vld [vmem:[#allocation15 + $0x218] sm:$0xff]
    %v6571 = vld [vmem:[#allocation15 + $0x220] sm:$0xff]
    %v6572 = vld [vmem:[#allocation15 + $0x228] sm:$0xff]
    %v6573 = vld [vmem:[#allocation15 + $0x230] sm:$0xff]
    %v6574 = vld [vmem:[#allocation15 + $0x238] sm:$0xff]
    %v6575 = vld [vmem:[#allocation15 + $0x240] sm:$0xff]
    %v6576 = vld [vmem:[#allocation15 + $0x248] sm:$0xff]
    %v6577 = vld [vmem:[#allocation15 + $0x250] sm:$0xff]
    %v6578 = vld [vmem:[#allocation15 + $0x258] sm:$0xff]
    %v6579 = vld [vmem:[#allocation15 + $0x260] sm:$0xff]
    %v6580 = vld [vmem:[#allocation15 + $0x268] sm:$0xff]
    %v6581 = vld [vmem:[#allocation15 + $0x270] sm:$0xff]
    %v6582 = vld [vmem:[#allocation15 + $0x278] sm:$0xff]
    %v6583 = vld [vmem:[#allocation15 + $0x280] sm:$0xff]
    %v6584 = vld [vmem:[#allocation15 + $0x288] sm:$0xff]
    %v6585 = vld [vmem:[#allocation15 + $0x290] sm:$0xff]
    %v6586 = vld [vmem:[#allocation15 + $0x298] sm:$0xff]
    %v6587 = vld [vmem:[#allocation15 + $0x2a0] sm:$0xff]
    %v6588 = vld [vmem:[#allocation15 + $0x2a8] sm:$0xff]
    %v6589 = vld [vmem:[#allocation15 + $0x2b0] sm:$0xff]
    %v6590 = vld [vmem:[#allocation15 + $0x2b8] sm:$0xff]
    %v6591 = vld [vmem:[#allocation15 + $0x2c0] sm:$0xff]
    %v6592 = vld [vmem:[#allocation15 + $0x2c8] sm:$0xff]
    %v6593 = vld [vmem:[#allocation15 + $0x2d0] sm:$0xff]
    %v6594 = vld [vmem:[#allocation15 + $0x2d8] sm:$0xff]
    %v6595 = vld [vmem:[#allocation15 + $0x2e0] sm:$0xff]
    %v6596 = vld [vmem:[#allocation15 + $0x2e8] sm:$0xff]
    %v6597 = vld [vmem:[#allocation15 + $0x2f0] sm:$0xff]
    %v6598 = vld [vmem:[#allocation15 + $0x2f8] sm:$0xff]
    %v6599 = vld [vmem:[#allocation15 + $0x300] sm:$0xff]
    %v6600 = vld [vmem:[#allocation15 + $0x308] sm:$0xff]
    %v6601 = vld [vmem:[#allocation15 + $0x310] sm:$0xff]
    %v6602 = vld [vmem:[#allocation15 + $0x318] sm:$0xff]
    %v6603 = vld [vmem:[#allocation15 + $0x320] sm:$0xff]
    %v6604 = vld [vmem:[#allocation15 + $0x328] sm:$0xff]
    %v6605 = vld [vmem:[#allocation15 + $0x330] sm:$0xff]
    %v6606 = vld [vmem:[#allocation15 + $0x338] sm:$0xff]
    %v6607 = vld [vmem:[#allocation15 + $0x340] sm:$0xff]
    %v6608 = vld [vmem:[#allocation15 + $0x348] sm:$0xff]
    %v6609 = vld [vmem:[#allocation15 + $0x350] sm:$0xff]
    %v6610 = vld [vmem:[#allocation15 + $0x358] sm:$0xff]
    %v6611 = vld [vmem:[#allocation15 + $0x360] sm:$0xff]
    %v6612 = vld [vmem:[#allocation15 + $0x368] sm:$0xff]
    %v6613 = vld [vmem:[#allocation15 + $0x370] sm:$0xff]
    %v6614 = vld [vmem:[#allocation15 + $0x378] sm:$0xff]
    %v6615 = vld [vmem:[#allocation15 + $0x380] sm:$0xff]
    %v6616 = vld [vmem:[#allocation15 + $0x388] sm:$0xff]
    %v6617 = vld [vmem:[#allocation15 + $0x390] sm:$0xff]
    %v6618 = vld [vmem:[#allocation15 + $0x398] sm:$0xff]
    %v6619 = vld [vmem:[#allocation15 + $0x3a0] sm:$0xff]
    %v6620 = vld [vmem:[#allocation15 + $0x3a8] sm:$0xff]
    %v6621 = vld [vmem:[#allocation15 + $0x3b0] sm:$0xff]
    %v6622 = vld [vmem:[#allocation15 + $0x3b8] sm:$0xff]
    %v6623 = vld [vmem:[#allocation15 + $0x3c0] sm:$0xff]
    %v6624 = vld [vmem:[#allocation15 + $0x3c8] sm:$0xff]
    %v6625 = vld [vmem:[#allocation15 + $0x3d0] sm:$0xff]
    %v6626 = vld [vmem:[#allocation15 + $0x3d8] sm:$0xff]
    %v6627 = vld [vmem:[#allocation15 + $0x3e0] sm:$0xff]
    %v6628 = vld [vmem:[#allocation15 + $0x3e8] sm:$0xff]
    %v6629 = vld [vmem:[#allocation15 + $0x3f0] sm:$0xff]
    %v6630 = vld [vmem:[#allocation15 + $0x3f8] sm:$0xff]
    %6631 = vmatprep.subr.mxu0 %v6504
    %6632 = vmatpush1.msra.mxu0 %v6503
    %6633 = vmatprep.subr.mxu0 %v6508
    %6634 = vmatpush1.msra.mxu0 %v6507
    %6635 = vmatprep.subr.mxu0 %v6512
    %6636 = vmatpush1.msra.mxu0 %v6511
    %6637 = vmatprep.subr.mxu0 %v6516
    %6638 = vmatpush1.msra.mxu0 %v6515
    %6639 = vmatprep.subr.mxu0 %v6520
    %6640 = vmatpush1.msra.mxu0 %v6519
    %6641 = vmatprep.subr.mxu0 %v6524
    %6642 = vmatpush1.msra.mxu0 %v6523
    %6643 = vmatprep.subr.mxu0 %v6528
    %6644 = vmatpush1.msra.mxu0 %v6527
    %6645 = vmatprep.subr.mxu0 %v6532
    %6646 = vmatpush1.msra.mxu0 %v6531
    %6647 = vmatprep.subr.mxu0 %v6536
    %6648 = vmatpush1.msra.mxu0 %v6535
    %6649 = vmatprep.subr.mxu0 %v6540
    %6650 = vmatpush1.msra.mxu0 %v6539
    %6651 = vmatprep.subr.mxu0 %v6544
    %6652 = vmatpush1.msra.mxu0 %v6543
    %6653 = vmatprep.subr.mxu0 %v6548
    %6654 = vmatpush1.msra.mxu0 %v6547
    %6655 = vmatprep.subr.mxu0 %v6552
    %6656 = vmatpush1.msra.mxu0 %v6551
    %6657 = vmatprep.subr.mxu0 %v6556
    %6658 = vmatpush1.msra.mxu0 %v6555
    %6659 = vmatprep.subr.mxu0 %v6560
    %6660 = vmatpush1.msra.mxu0 %v6559
    %6661 = vmatprep.subr.mxu0 %v6564
    %6662 = vmatpush1.msra.mxu0 %v6563
    %6663 = vmatprep.subr.mxu0 %v6568
    %6664 = vmatpush1.msra.mxu0 %v6567
    %6665 = vmatprep.subr.mxu0 %v6572
    %6666 = vmatpush1.msra.mxu0 %v6571
    %6667 = vmatprep.subr.mxu0 %v6576
    %6668 = vmatpush1.msra.mxu0 %v6575
    %6669 = vmatprep.subr.mxu0 %v6580
    %6670 = vmatpush1.msra.mxu0 %v6579
    %6671 = vmatprep.subr.mxu0 %v6584
    %6672 = vmatpush1.msra.mxu0 %v6583
    %6673 = vmatprep.subr.mxu0 %v6588
    %6674 = vmatpush1.msra.mxu0 %v6587
    %6675 = vmatprep.subr.mxu0 %v6592
    %6676 = vmatpush1.msra.mxu0 %v6591
    %6677 = vmatprep.subr.mxu0 %v6596
    %6678 = vmatpush1.msra.mxu0 %v6595
    %6679 = vmatprep.subr.mxu0 %v6600
    %6680 = vmatpush1.msra.mxu0 %v6599
    %6681 = vmatprep.subr.mxu0 %v6604
    %6682 = vmatpush1.msra.mxu0 %v6603
    %6683 = vmatprep.subr.mxu0 %v6608
    %6684 = vmatpush1.msra.mxu0 %v6607
    %6685 = vmatprep.subr.mxu0 %v6612
    %6686 = vmatpush1.msra.mxu0 %v6611
    %6687 = vmatprep.subr.mxu0 %v6616
    %6688 = vmatpush1.msra.mxu0 %v6615
    %6689 = vmatprep.subr.mxu0 %v6620
    %6690 = vmatpush1.msra.mxu0 %v6619
    %6691 = vmatprep.subr.mxu0 %v6624
    %6692 = vmatpush1.msra.mxu0 %v6623
    %6693 = vmatprep.subr.mxu0 %v6628
    %6694 = vmatpush1.msra.mxu0 %v6627
    %6695 = vmatprep.mubr.f32.mxu0 %v6212
    %6696 = vmatmul.mubr.f32.gmra.mrb[0].mxu0 %v6502
    %v6697 = vpop.f32.mrb[0].mxu0
    %v6698 = vadd.f32 %v488, %v6697
    %v6699 = vpop.f32.mrb[0].mxu0
    %v6700 = vadd.f32 %v492, %v6699
    %6701 = vdwg.mxu0
    %6702 = vmatprep.subr.mxu0 %v6506
    %6703 = vmatpush1.msra.mxu0 %v6505
    %6704 = vmatprep.subr.mxu0 %v6510
    %6705 = vmatpush1.msra.mxu0 %v6509
    %6706 = vmatprep.subr.mxu0 %v6514
    %6707 = vmatpush1.msra.mxu0 %v6513
    %6708 = vmatprep.subr.mxu0 %v6518
    %6709 = vmatpush1.msra.mxu0 %v6517
    %6710 = vmatprep.subr.mxu0 %v6522
    %6711 = vmatpush1.msra.mxu0 %v6521
    %6712 = vmatprep.subr.mxu0 %v6526
    %6713 = vmatpush1.msra.mxu0 %v6525
    %6714 = vmatprep.subr.mxu0 %v6530
    %6715 = vmatpush1.msra.mxu0 %v6529
    %6716 = vmatprep.subr.mxu0 %v6534
    %6717 = vmatpush1.msra.mxu0 %v6533
    %6718 = vmatprep.subr.mxu0 %v6538
    %6719 = vmatpush1.msra.mxu0 %v6537
    %6720 = vmatprep.subr.mxu0 %v6542
    %6721 = vmatpush1.msra.mxu0 %v6541
    %6722 = vmatprep.subr.mxu0 %v6546
    %6723 = vmatpush1.msra.mxu0 %v6545
    %6724 = vmatprep.subr.mxu0 %v6550
    %6725 = vmatpush1.msra.mxu0 %v6549
    %6726 = vmatprep.subr.mxu0 %v6554
    %6727 = vmatpush1.msra.mxu0 %v6553
    %6728 = vmatprep.subr.mxu0 %v6558
    %6729 = vmatpush1.msra.mxu0 %v6557
    %6730 = vmatprep.subr.mxu0 %v6562
    %6731 = vmatpush1.msra.mxu0 %v6561
    %6732 = vmatprep.subr.mxu0 %v6566
    %6733 = vmatpush1.msra.mxu0 %v6565
    %6734 = vmatprep.subr.mxu0 %v6570
    %6735 = vmatpush1.msra.mxu0 %v6569
    %6736 = vmatprep.subr.mxu0 %v6574
    %6737 = vmatpush1.msra.mxu0 %v6573
    %6738 = vmatprep.subr.mxu0 %v6578
    %6739 = vmatpush1.msra.mxu0 %v6577
    %6740 = vmatprep.subr.mxu0 %v6582
    %6741 = vmatpush1.msra.mxu0 %v6581
    %6742 = vmatprep.subr.mxu0 %v6586
    %6743 = vmatpush1.msra.mxu0 %v6585
    %6744 = vmatprep.subr.mxu0 %v6590
    %6745 = vmatpush1.msra.mxu0 %v6589
    %6746 = vmatprep.subr.mxu0 %v6594
    %6747 = vmatpush1.msra.mxu0 %v6593
    %6748 = vmatprep.subr.mxu0 %v6598
    %6749 = vmatpush1.msra.mxu0 %v6597
    %6750 = vmatprep.subr.mxu0 %v6602
    %6751 = vmatpush1.msra.mxu0 %v6601
    %6752 = vmatprep.subr.mxu0 %v6606
    %6753 = vmatpush1.msra.mxu0 %v6605
    %6754 = vmatprep.subr.mxu0 %v6610
    %6755 = vmatpush1.msra.mxu0 %v6609
    %6756 = vmatprep.subr.mxu0 %v6614
    %6757 = vmatpush1.msra.mxu0 %v6613
    %6758 = vmatprep.subr.mxu0 %v6618
    %6759 = vmatpush1.msra.mxu0 %v6617
    %6760 = vmatprep.subr.mxu0 %v6622
    %6761 = vmatpush1.msra.mxu0 %v6621
    %6762 = vmatprep.subr.mxu0 %v6626
    %6763 = vmatpush1.msra.mxu0 %v6625
    %6764 = vmatprep.subr.mxu0 %v6630
    %6765 = vmatpush1.msra.mxu0 %v6629
    %6766 = vmatprep.mubr.f32.mxu0 %v6212
    %6767 = vmatmul.mubr.f32.gmra.mrb[0].mxu0 %v6502
    %v6768 = vpop.f32.mrb[0].mxu0
    %v6769 = vadd.f32 %v496, %v6768
    %v6770 = vpop.f32.mrb[0].mxu0
    %v6771 = vadd.f32 %v500, %v6770
    %6772 = vdwg.mxu0
    %v6773 = vxor.u32 %v6698, 2147483648
    %v6774 = vmul.f32 %v6773, 1.442695
    %v6775 = vpow.pop %v6774
    %v6776 = vadd.f32 %v6775, 1.0
    %v6777 = vrcp.pop %v6776
    %v6778 = vmul.f32 1.0, %v6777
    %v6779 = vxor.u32 %v6700, 2147483648
    %v6780 = vmul.f32 %v6779, 1.442695
    %v6781 = vpow.pop %v6780
    %v6782 = vadd.f32 %v6781, 1.0
    %v6783 = vrcp.pop %v6782
    %v6784 = vmul.f32 1.0, %v6783
    %v6785 = vmul.f32 %v6778, %v6771
    %v6786 = vadd.f32 %v6769, %v6785
    %v6787 = vtanh.pop %v6786
    %v6788 = vsub.f32 1.0, %v6784
    %v6789 = vmul.f32 %v6788, %v6787
    %v6790 = vmul.f32 %v6784, %v6212
    %v6791 = vadd.f32 %v6789, %v6790
    %6792 = vst [vmem:[#allocation3 + $0x38] sm:$0xff] %v6791
    %v6793 = vld [vmem:[#allocation3] sm:$0xff]
    %v6794 = vld [vmem:[#allocation3 + $0x8] sm:$0xff]
    %v6795 = vld [vmem:[#allocation3 + $0x10] sm:$0xff]
    %v6796 = vld [vmem:[#allocation3 + $0x18] sm:$0xff]
    %v6797 = vld [vmem:[#allocation3 + $0x20] sm:$0xff]
    %v6798 = vld [vmem:[#allocation3 + $0x28] sm:$0xff]
    %v6799 = vld [vmem:[#allocation3 + $0x30] sm:$0xff]
    %v6800 = vld [vmem:[#allocation3 + $0x38] sm:$0xff]
    %v6801 = vld [vmem:[%s9] sm:$0xff]
    %v6802 = vld [vmem:[%s9 + $0x8] sm:$0xff]
    %v6803 = vld [vmem:[%s9 + $0x10] sm:$0xff]
    %v6804 = vld [vmem:[%s9 + $0x18] sm:$0xff]
    %v6805 = vld [vmem:[%s9 + $0x20] sm:$0xff]
    %v6806 = vld [vmem:[%s9 + $0x28] sm:$0xff]
    %v6807 = vld [vmem:[%s9 + $0x30] sm:$0xff]
    %v6808 = vld [vmem:[%s9 + $0x38] sm:$0xff]
    %v6809 = vld [vmem:[%s9 + $0x40] sm:$0xff]
    %v6810 = vld [vmem:[%s9 + $0x48] sm:$0xff]
    %v6811 = vld [vmem:[%s9 + $0x50] sm:$0xff]
    %v6812 = vld [vmem:[%s9 + $0x58] sm:$0xff]
    %v6813 = vld [vmem:[%s9 + $0x60] sm:$0xff]
    %v6814 = vld [vmem:[%s9 + $0x68] sm:$0xff]
    %v6815 = vld [vmem:[%s9 + $0x70] sm:$0xff]
    %v6816 = vld [vmem:[%s9 + $0x78] sm:$0xff]
    %v6817 = vld [vmem:[%s10] sm:$0x1]
    %v6819 = vlaneseq
    %v6820 = vshrl.u32 %v6819, 7
    %v6821 = vsub.s32 0, %v6820
    %v6822 = vrot.slane %v6817, %v6821
    %6824 = vmatprep.subr.mxu0 0.0
    %6825 = vmatpush1.msra.mxu0 %v6801
    %6826 = vmatprep.subr.mxu0 0.0
    %6827 = vmatpush1.msra.mxu0 %v6802
    %6828 = vmatprep.subr.mxu0 0.0
    %6829 = vmatpush1.msra.mxu0 %v6803
    %6830 = vmatprep.subr.mxu0 0.0
    %6831 = vmatpush1.msra.mxu0 %v6804
    %6832 = vmatprep.subr.mxu0 0.0
    %6833 = vmatpush1.msra.mxu0 %v6805
    %6834 = vmatprep.subr.mxu0 0.0
    %6835 = vmatpush1.msra.mxu0 %v6806
    %6836 = vmatprep.subr.mxu0 0.0
    %6837 = vmatpush1.msra.mxu0 %v6807
    %6838 = vmatprep.subr.mxu0 0.0
    %6839 = vmatpush1.msra.mxu0 %v6808
    %6840 = vmatprep.subr.mxu0 0.0
    %6841 = vmatpush1.msra.mxu0 %v6809
    %6842 = vmatprep.subr.mxu0 0.0
    %6843 = vmatpush1.msra.mxu0 %v6810
    %6844 = vmatprep.subr.mxu0 0.0
    %6845 = vmatpush1.msra.mxu0 %v6811
    %6846 = vmatprep.subr.mxu0 0.0
    %6847 = vmatpush1.msra.mxu0 %v6812
    %6848 = vmatprep.subr.mxu0 0.0
    %6849 = vmatpush1.msra.mxu0 %v6813
    %6850 = vmatprep.subr.mxu0 0.0
    %6851 = vmatpush1.msra.mxu0 %v6814
    %6852 = vmatprep.subr.mxu0 0.0
    %6853 = vmatpush1.msra.mxu0 %v6815
    %6854 = vmatprep.subr.mxu0 0.0
    %6855 = vmatpush1.msra.mxu0 %v6816
    %6856 = vmatprep.subr.mxu0 0.0
    %6857 = vmatpush1.msra.mxu0 0.0
    %6858 = vmatprep.subr.mxu0 0.0
    %6859 = vmatpush1.msra.mxu0 0.0
    %6860 = vmatprep.subr.mxu0 0.0
    %6861 = vmatpush1.msra.mxu0 0.0
    %6862 = vmatprep.subr.mxu0 0.0
    %6863 = vmatpush1.msra.mxu0 0.0
    %6864 = vmatprep.subr.mxu0 0.0
    %6865 = vmatpush1.msra.mxu0 0.0
    %6866 = vmatprep.subr.mxu0 0.0
    %6867 = vmatpush1.msra.mxu0 0.0
    %6868 = vmatprep.subr.mxu0 0.0
    %6869 = vmatpush1.msra.mxu0 0.0
    %6870 = vmatprep.subr.mxu0 0.0
    %6871 = vmatpush1.msra.mxu0 0.0
    %6872 = vmatprep.subr.mxu0 0.0
    %6873 = vmatpush1.msra.mxu0 0.0
    %6874 = vmatprep.subr.mxu0 0.0
    %6875 = vmatpush1.msra.mxu0 0.0
    %6876 = vmatprep.subr.mxu0 0.0
    %6877 = vmatpush1.msra.mxu0 0.0
    %6878 = vmatprep.subr.mxu0 0.0
    %6879 = vmatpush1.msra.mxu0 0.0
    %6880 = vmatprep.subr.mxu0 0.0
    %6881 = vmatpush1.msra.mxu0 0.0
    %6882 = vmatprep.subr.mxu0 0.0
    %6883 = vmatpush1.msra.mxu0 0.0
    %6884 = vmatprep.subr.mxu0 0.0
    %6885 = vmatpush1.msra.mxu0 0.0
    %6886 = vmatprep.subr.mxu0 0.0
    %6887 = vmatpush1.msra.mxu0 0.0
    %6888 = vmatprep.mubr.f32.mxu0 0.0
    %6889 = vmatmul.mubr.f32.gmra.mrb[0].mxu0 %v6793
    %v6890 = vpop.f32.mrb[0].mxu0
    %v6891 = vadd.f32 %v6822, %v6890
    %v6892 = vpop.f32.mrb[0].mxu0
    %6893 = vmatprep.mubr.f32.mxu0 0.0
    %6894 = vmatmul.mubr.f32.gmra.mrb[0].mxu0 %v6794
    %v6895 = vpop.f32.mrb[0].mxu0
    %v6896 = vadd.f32 %v6822, %v6895
    %v6897 = vpop.f32.mrb[0].mxu0
    %6898 = vmatprep.mubr.f32.mxu0 0.0
    %6899 = vmatmul.mubr.f32.gmra.mrb[0].mxu0 %v6795
    %v6900 = vpop.f32.mrb[0].mxu0
    %v6901 = vadd.f32 %v6822, %v6900
    %v6902 = vpop.f32.mrb[0].mxu0
    %6903 = vmatprep.mubr.f32.mxu0 0.0
    %6904 = vmatmul.mubr.f32.gmra.mrb[0].mxu0 %v6796
    %v6905 = vpop.f32.mrb[0].mxu0
    %v6906 = vadd.f32 %v6822, %v6905
    %v6907 = vpop.f32.mrb[0].mxu0
    %6908 = vmatprep.mubr.f32.mxu0 0.0
    %6909 = vmatmul.mubr.f32.gmra.mrb[0].mxu0 %v6797
    %v6910 = vpop.f32.mrb[0].mxu0
    %v6911 = vadd.f32 %v6822, %v6910
    %v6912 = vpop.f32.mrb[0].mxu0
    %6913 = vmatprep.mubr.f32.mxu0 0.0
    %6914 = vmatmul.mubr.f32.gmra.mrb[0].mxu0 %v6798
    %v6915 = vpop.f32.mrb[0].mxu0
    %v6916 = vadd.f32 %v6822, %v6915
    %v6917 = vpop.f32.mrb[0].mxu0
    %6918 = vmatprep.mubr.f32.mxu0 0.0
    %6919 = vmatmul.mubr.f32.gmra.mrb[0].mxu0 %v6799
    %v6920 = vpop.f32.mrb[0].mxu0
    %v6921 = vadd.f32 %v6822, %v6920
    %v6922 = vpop.f32.mrb[0].mxu0
    %6923 = vmatprep.mubr.f32.mxu0 0.0
    %6924 = vmatmul.mubr.f32.gmra.mrb[0].mxu0 %v6800
    %v6925 = vpop.f32.mrb[0].mxu0
    %v6926 = vadd.f32 %v6822, %v6925
    %v6927 = vpop.f32.mrb[0].mxu0
    %6928 = vdwg.mxu0
    %6929 = vst [vmem:[#allocation18] sm:$0xff] %v6891
    %6930 = vst [vmem:[#allocation18 + $0x8] sm:$0xff] %v6896
    %6931 = vst [vmem:[#allocation18 + $0x10] sm:$0xff] %v6901
    %6932 = vst [vmem:[#allocation18 + $0x18] sm:$0xff] %v6906
    %6933 = vst [vmem:[#allocation18 + $0x20] sm:$0xff] %v6911
    %6934 = vst [vmem:[#allocation18 + $0x28] sm:$0xff] %v6916
    %6935 = vst [vmem:[#allocation18 + $0x30] sm:$0xff] %v6921
    %6936 = vst [vmem:[#allocation18 + $0x38] sm:$0xff] %v6926
    // Predicated region
    $region78: #{tpu_custom_call.1} parent=1 // pred_check
      _
    $region79: #{tpu_custom_call.1} parent=1 // pred_check_branch
      %6938 = sbr.rel (0) target = $region81
    $region80: #{tpu_custom_call.1} parent=1 // pred_region
      %s6940 = ssub.s32 1024, 1024
      %6941 = vsyncadd [#allocation6], %s6940
      %s6942 = sshll.u32 [#allocation18], 4
      %s6943 = int_to_ptr.vmem [resolvable:$true] %s6942
      %6948 = dma.vmem_to_hbm [thread:$0]  %s6943, 1024, %s11, [#allocation6], 128, 128, 8
    $region81: #{tpu_custom_call.1} parent=1 // pred_fallthru
      _
    // Predicated region
    $region82: #{tpu_custom_call.1} parent=1 // pred_check
      _
    $region83: #{tpu_custom_call.1} parent=1 // pred_check_branch
      %6950 = sbr.rel (0) target = $region85
    $region84: #{tpu_custom_call.1} parent=1 // pred_region
      %6951 = dma.done [#allocation6], 1024
    $region85: #{tpu_custom_call.1} parent=1 // pred_fallthru
      _
    %6952 = vsyncpa [#allocation5], 1
    %6953 = vsyncpa [#allocation8], 1
    %6954 = vsyncpa [#allocation11], 1
    %6955 = vsyncpa [#allocation14], 1
    %6956 = vsyncpa [#allocation17], 1
    %6957 = vsyncpa [#allocation6], 1

</llo_original>
